<compile_context>
chip_gen: v5e
topology: v5e:2x2
jax: 0.10.0
libtpu: 0.0.40
codegen_flags: <defaults>
</compile_context>

<pallas_src>
import functools

import jax
import jax.numpy as jnp
from jax.experimental import pallas as pl
from jax.experimental.pallas import tpu as pltpu

BN_EPS_CONVBNACT = 1e-5          # nn.BatchNorm2d default used inside ConvBnAct
BN_EPS_RCSP = 1e-3               # ReversedCSP.bn(eps=0.001)

_HW_CFG = None                   # (vmem_limit_bytes, tile_target), lazily filled


def _round_up(v, m):
    return ((v + m - 1) // m) * m


def _hw_config():
    """Generation-dependent VMEM budget / lane-tile target."""
    global _HW_CFG
    if _HW_CFG is None:
        vmem = None
        try:
            info = pltpu.get_tpu_info()
            vmem = getattr(info, "vmem_capacity_bytes", None)
        except Exception:
            vmem = None
        if vmem is None:
            vmem = 64 * 1024 * 1024                      # conservative (v7x-like)
        if vmem >= 100 * 1024 * 1024:                    # v5e / v6e: 128 MiB VMEM
            _HW_CFG = (96 * 1024 * 1024, 4096)
        else:                                            # v7x: 64 MiB per TC
            _HW_CFG = (32 * 1024 * 1024, 2048)
    return _HW_CFG


def _tile_m(m, target, unit=128):
    """~Even split of round_up(m, unit) into <= target-wide multiples of unit."""
    m_u = _round_up(m, unit)
    k = max(1, -(-m_u // target))
    return _round_up(-(-m_u // k), unit)


def _compiler_params(semantics, vmem_limit):
    return pltpu.CompilerParams(dimension_semantics=semantics,
                                vmem_limit_bytes=vmem_limit)


# ----------------------------- in-kernel math ------------------------------------


def _mish_f32(x):
    # mish(x) = x * tanh(softplus(x)) = x * (t^2 + 2t) / (t^2 + 2t + 2),  t = e^x
    # -> one EUP exp + an approx reciprocal refined with one Newton step (VPU),
    #    instead of exp + log1p + tanh (3 EUP ops).
    t = jnp.exp(jnp.minimum(x, 20.0))      # for x >= 20, mish(x) == x in f32
    num = t * (t + 2.0)
    den = num + 2.0                        # den >= 2, never zero
    r = pl.reciprocal(den, approx=True)
    r = r * (2.0 - den * r)                # one Newton iteration
    return x * num * r


def _bn_prologue(sweep, t, s_ref, ss_ref):
    @pl.when((sweep == 0) & (t == 0))
    def _():
        s_ref[...] = jnp.zeros_like(s_ref)
        ss_ref[...] = jnp.zeros_like(ss_ref)


def _bn_finalize_scale_shift(sweep, t, s_ref, ss_ref, gamma_ref, beta_ref,
                             eps, inv_count):
    # At the first tile of sweep 1, turn (sum, sumsq) into (scale, shift) once and
    # cache them in the same scratch (removes per-tile rsqrt + extra operands).
    @pl.when((sweep == 1) & (t == 0))
    def _():
        mean = s_ref[...] * inv_count
        var = jnp.maximum(ss_ref[...] * inv_count - mean * mean, 0.0)
        scale = gamma_ref[...] * jax.lax.rsqrt(var + eps)
        s_ref[...] = scale
        ss_ref[...] = beta_ref[...] - mean * scale


# ----------------------------- fused kernels -------------------------------------


def _make_conv1x1_fused_kernel(n_in, eps, inv_count):
    """1x1 conv (optionally multi-input, i.e. split-Cin concat) + BN + Mish,
    fused via a 2-sweep grid: sweep 0 = matmul + stats, sweep 1 = matmul + apply."""

    def kernel(*refs):
        x_refs = refs[:n_in]
        w_refs = refs[n_in:2 * n_in]
        gamma_ref, beta_ref, o_ref, s_ref, ss_ref = refs[2 * n_in:]
        sweep = pl.program_id(0)
        t = pl.program_id(1)

        _bn_prologue(sweep, t, s_ref, ss_ref)

        y = jnp.dot(w_refs[0][...], x_refs[0][...],
                    preferred_element_type=jnp.float32)
        for i in range(1, n_in):
            y = y + jnp.dot(w_refs[i][...], x_refs[i][...],
                            preferred_element_type=jnp.float32)

        @pl.when(sweep == 0)
        def _():
            s_ref[...] += jnp.sum(y, axis=1, keepdims=True)
            ss_ref[...] += jnp.sum(y * y, axis=1, keepdims=True)

        _bn_finalize_scale_shift(sweep, t, s_ref, ss_ref, gamma_ref, beta_ref,
                                 eps, inv_count)

        @pl.when(sweep == 1)
        def _():
            o_ref[...] = _mish_f32(y * s_ref[...] + ss_ref[...]).astype(o_ref.dtype)

    return kernel


def _conv3x3_fused_kernel(xa_ref, xb_ref, w_ref, mask_ref, gamma_ref, beta_ref,
                          o_ref, s_ref, ss_ref, tap_ref, *, wp, tl, eps, inv_count):
    """3x3 conv over the zero-padded, row-flattened batch (stride-P images) + BN
    + Mish, fused with the 2-sweep pattern.  The 9 shifted taps are staged into a
    (9*Cin, TL) VMEM scratch so the conv is a single deep-K MXU matmul."""
    sweep = pl.program_id(0)
    t = pl.program_id(1)
    cin = xa_ref.shape[0]

    _bn_prologue(sweep, t, s_ref, ss_ref)

    # Stage taps (stays on-chip; no im2col in HBM).  xb is the 128-aligned halo
    # block immediately following this tile.
    for kh in range(3):
        for kw in range(3):
            off = kh * wp + kw                       # static tap offset
            r0 = (3 * kh + kw) * cin
            if off == 0:
                tap_ref[r0:r0 + cin, :] = xa_ref[...]
            else:
                tap_ref[r0:r0 + cin, 0:tl - off] = xa_ref[:, off:tl]
                tap_ref[r0:r0 + cin, tl - off:tl] = xb_ref[:, 0:off]

    y = jnp.dot(w_ref[...], tap_ref[...], preferred_element_type=jnp.float32)

    @pl.when(sweep == 0)
    def _():
        m = mask_ref[...]                            # 1.0 on real output pixels
        ym = y * m
        s_ref[...] += jnp.sum(ym, axis=1, keepdims=True)
        ss_ref[...] += jnp.sum(ym * y, axis=1, keepdims=True)

    _bn_finalize_scale_shift(sweep, t, s_ref, ss_ref, gamma_ref, beta_ref,
                             eps, inv_count)

    @pl.when(sweep == 1)
    def _():
        o_ref[...] = _mish_f32(y * s_ref[...] + ss_ref[...]).astype(o_ref.dtype)


def _bn_mish_fused_kernel(x_ref, gamma_ref, beta_ref, o_ref, s_ref, ss_ref,
                          *, eps, inv_count):
    """Stats + BN + Mish of an existing activation (ReversedCSP cat-BN main half)."""
    sweep = pl.program_id(0)
    t = pl.program_id(1)

    _bn_prologue(sweep, t, s_ref, ss_ref)

    x = x_ref[...].astype(jnp.float32)

    @pl.when(sweep == 0)
    def _():
        s_ref[...] += jnp.sum(x, axis=1, keepdims=True)
        ss_ref[...] += jnp.sum(x * x, axis=1, keepdims=True)

    _bn_finalize_scale_shift(sweep, t, s_ref, ss_ref, gamma_ref, beta_ref,
                             eps, inv_count)

    @pl.when(sweep == 1)
    def _():
        o_ref[...] = _mish_f32(x * s_ref[...] + ss_ref[...]).astype(o_ref.dtype)


# ----------------------------- pallas_call wrappers ------------------------------


def conv1x1_bn_mish(xs, ws, gamma, beta, eps, out_dtype=jnp.bfloat16):
    """xs: list of (Cin_i, M) bf16, ws: list of (Cout, Cin_i) bf16 -> (Cout, M)."""
    n_in = len(xs)
    cout = ws[0].shape[0]
    m = xs[0].shape[1]
    vmem_limit, target = _hw_config()

    tm = _tile_m(m, target)
    mp = _round_up(m, tm)
    if mp != m:
        # zero lanes do not perturb the BN stats (true element count is used below)
        xs = [jnp.pad(x, ((0, 0), (0, mp - m))) for x in xs]

    in_specs = ([pl.BlockSpec((x.shape[0], tm), lambda s, t: (0, t)) for x in xs] +
                [pl.BlockSpec((cout, w.shape[1]), lambda s, t: (0, 0)) for w in ws] +
                [pl.BlockSpec((cout, 1), lambda s, t: (0, 0)),
                 pl.BlockSpec((cout, 1), lambda s, t: (0, 0))])

    kernel = _make_conv1x1_fused_kernel(n_in, eps, 1.0 / m)
    out = pl.pallas_call(
        kernel,
        out_shape=jax.ShapeDtypeStruct((cout, mp), out_dtype),
        grid=(2, mp // tm),
        in_specs=in_specs,
        # (0, t*s): output stays resident during sweep 0 (no garbage write-back),
        # then streams out once with the sweep-1 bf16 result.
        out_specs=pl.BlockSpec((cout, tm), lambda s, t: (0, t * s)),
        scratch_shapes=[pltpu.VMEM((cout, 1), jnp.float32),
                        pltpu.VMEM((cout, 1), jnp.float32)],
        compiler_params=_compiler_params(("arbitrary", "arbitrary"), vmem_limit),
    )(*xs, *ws,
      gamma.reshape(cout, 1).astype(jnp.float32),
      beta.reshape(cout, 1).astype(jnp.float32))
    return out[:, :m] if mp != m else out


def conv3x3_bn_mish(x_cnhw, w_flat, gamma, beta, eps, out_dtype=jnp.bfloat16):
    """x: (Cin, N, H, W) bf16, w_flat: (Cout, 9*Cin) bf16 -> (Cout, N, H, W)."""
    cin, n, h, w = x_cnhw.shape
    cout = w_flat.shape[0]
    hp, wp = h + 2, w + 2
    p_img = hp * wp                                   # per-image padded length
    total = n * p_img
    vmem_limit, target = _hw_config()

    halo = _round_up(2 * wp + 2, 128)                 # max tap offset, lane aligned
    tl = _tile_m(total, target, unit=halo)            # lane tile, multiple of halo
    l_out = _round_up(total, tl)
    l_in = l_out + tl                                 # zero slack so halo block exists
    t_tiles = l_out // tl
    hb = tl // halo                                   # halo blocks per tile

    # One zero-padded row-flattened copy of the activation (single pad chain).
    xp = jnp.pad(x_cnhw, ((0, 0), (0, 0), (1, 1), (1, 1))).reshape(cin, total)
    xp = jnp.pad(xp, ((0, 0), (0, l_in - total)))

    # Validity mask over the flattened grid (excludes pad / wrap lanes for stats).
    g = jnp.arange(l_out, dtype=jnp.int32)
    q = g % p_img
    valid = (g < total) & (q < h * wp) & ((q % wp) < w)
    mask = valid.astype(jnp.float32).reshape(1, l_out)

    kernel = functools.partial(_conv3x3_fused_kernel, wp=wp, tl=tl,
                               eps=eps, inv_count=1.0 / (n * h * w))
    out = pl.pallas_call(
        kernel,
        out_shape=jax.ShapeDtypeStruct((cout, l_out), out_dtype),
        grid=(2, t_tiles),
        in_specs=[pl.BlockSpec((cin, tl), lambda s, t: (0, t)),
                  pl.BlockSpec((cin, halo), lambda s, t: (0, (t + 1) * hb)),
                  pl.BlockSpec((cout, 9 * cin), lambda s, t: (0, 0)),
                  pl.BlockSpec((1, tl), lambda s, t: (0, t)),
                  pl.BlockSpec((cout, 1), lambda s, t: (0, 0)),
                  pl.BlockSpec((cout, 1), lambda s, t: (0, 0))],
        out_specs=pl.BlockSpec((cout, tl), lambda s, t: (0, t * s)),
        scratch_shapes=[pltpu.VMEM((cout, 1), jnp.float32),
                        pltpu.VMEM((cout, 1), jnp.float32),
                        pltpu.VMEM((9 * cin, tl), jnp.bfloat16)],
        compiler_params=_compiler_params(("arbitrary", "arbitrary"), vmem_limit),
    )(xp, xp, w_flat, mask,
      gamma.reshape(cout, 1).astype(jnp.float32),
      beta.reshape(cout, 1).astype(jnp.float32))

    # Drop the zero-border / padded lanes of the flattened-grid layout.
    out = out[:, :total].reshape(cout, n, hp, wp)[:, :, :h, :w]
    return out                                         # (Cout, N, H, W)


def bn_mish(x_cm, gamma, beta, eps, out_dtype=jnp.bfloat16):
    """Batch-stats BN + Mish of an existing (C, M) activation (fused 2-sweep)."""
    c, m = x_cm.shape
    vmem_limit, target = _hw_config()
    tm = _tile_m(m, target)
    mp = _round_up(m, tm)
    x = jnp.pad(x_cm, ((0, 0), (0, mp - m))) if mp != m else x_cm

    kernel = functools.partial(_bn_mish_fused_kernel, eps=eps, inv_count=1.0 / m)
    out = pl.pallas_call(
        kernel,
        out_shape=jax.ShapeDtypeStruct((c, mp), out_dtype),
        grid=(2, mp // tm),
        in_specs=[pl.BlockSpec((c, tm), lambda s, t: (0, t)),
                  pl.BlockSpec((c, 1), lambda s, t: (0, 0)),
                  pl.BlockSpec((c, 1), lambda s, t: (0, 0))],
        out_specs=pl.BlockSpec((c, tm), lambda s, t: (0, t * s)),
        scratch_shapes=[pltpu.VMEM((c, 1), jnp.float32),
                        pltpu.VMEM((c, 1), jnp.float32)],
        compiler_params=_compiler_params(("arbitrary", "arbitrary"), vmem_limit),
    )(x,
      gamma.reshape(c, 1).astype(jnp.float32),
      beta.reshape(c, 1).astype(jnp.float32))
    return out[:, :m] if mp != m else out


# ----------------------------- module forward ------------------------------------


def _w1x1(p):
    return p["w"][:, :, 0, 0].astype(jnp.bfloat16)


def _w3x3(p):
    cout, cin = p["w"].shape[:2]
    # row index = (3*kh + kw)*cin + ci  (matches the kernel's tap staging order)
    return jnp.transpose(p["w"], (0, 2, 3, 1)).reshape(cout, 9 * cin).astype(jnp.bfloat16)


def csp_up_block_forward(params, x1_nchw, x2_nchw):
    n, c1, h1, w1 = x1_nchw.shape
    n2, c2, h2, w2 = x2_nchw.shape
    assert n == n2 and h2 == 2 * h1 and w2 == 2 * w1
    c = params["in_conv1"]["w"].shape[0]
    m1 = n * h1 * w1
    m2 = n * h2 * w2

    # channel-major, lane-dense layout (C, N*H*W)
    x1 = jnp.transpose(x1_nchw, (1, 0, 2, 3)).reshape(c1, m1).astype(jnp.bfloat16)
    x2 = jnp.transpose(x2_nchw, (1, 0, 2, 3)).reshape(c2, m2).astype(jnp.bfloat16)

    p1, p2 = params["in_conv1"], params["in_conv2"]
    a1 = conv1x1_bn_mish([x1], [_w1x1(p1)], p1["gamma"], p1["beta"], BN_EPS_CONVBNACT)
    # nearest 2x upsample as a single broadcast+reshape materialization
    a1 = a1.reshape(c, n, h1, 1, w1, 1)
    a1 = jnp.broadcast_to(a1, (c, n, h1, 2, w1, 2)).reshape(c, m2)

    a2 = conv1x1_bn_mish([x2], [_w1x1(p2)], p2["gamma"], p2["beta"], BN_EPS_CONVBNACT)

    # ReversedCSP.  cat([h2, h1], dim=1) is never materialized: the in_conv weight
    # is split along Cin and both activations are passed to one fused kernel.
    r = params["rcsp"]
    w_in = _w1x1(r["in_conv"])
    xin = conv1x1_bn_mish([a2, a1], [w_in[:, :c], w_in[:, c:]],
                          r["in_conv"]["gamma"], r["in_conv"]["beta"],
                          BN_EPS_CONVBNACT)                        # (C, M2) bf16

    z = xin
    for blk in r["main"]:
        z = conv1x1_bn_mish([z], [_w1x1(blk["conv1"])],
                            blk["conv1"]["gamma"], blk["conv1"]["beta"],
                            BN_EPS_CONVBNACT)
        z = conv3x3_bn_mish(z.reshape(c, n, h2, w2), _w3x3(blk["conv3"]),
                            blk["conv3"]["gamma"], blk["conv3"]["beta"],
                            BN_EPS_CONVBNACT)
        z = z.reshape(c, m2)

    # cat([h1, h2]) -> BN(2C, eps=1e-3) -> Mish, split per channel half (BN is
    # per-channel): main half = stats+BN+Mish, bypass half = fused conv+BN+Mish.
    gamma_bn, beta_bn = r["bn_gamma"], r["bn_beta"]
    h1n = bn_mish(z, gamma_bn[:c], beta_bn[:c], BN_EPS_RCSP)
    h2n = conv1x1_bn_mish([xin], [r["bypass_w"][:, :, 0, 0].astype(jnp.bfloat16)],
                          gamma_bn[c:], beta_bn[c:], BN_EPS_RCSP)

    # out_conv consumes cat([h1n, h2n]) -> split weight again (no concat in HBM).
    w_out = _w1x1(r["out_conv"])
    out = conv1x1_bn_mish([h1n, h2n], [w_out[:, :c], w_out[:, c:]],
                          r["out_conv"]["gamma"], r["out_conv"]["beta"],
                          BN_EPS_CONVBNACT, out_dtype=jnp.float32)
    out = out.reshape(c, n, h2, w2)
    return jnp.transpose(out, (1, 0, 2, 3))                        # NCHW


# ----------------------------- parameter init ------------------------------------


def _init_cba(key, cin, cout, k):
    kw, kg, kb = jax.random.split(key, 3)
    fan_in = cin * k * k
    return {
        # nn.Conv2d layout (Cout, Cin, KH, KW).  The conv bias is omitted: a
        # per-channel constant is exactly cancelled by the training-mode BN mean.
        "w": jax.random.normal(kw, (cout, cin, k, k), jnp.float32) / jnp.sqrt(fan_in),
        "gamma": 1.0 + 0.1 * jax.random.normal(kg, (cout,), jnp.float32),
        "beta": 0.1 * jax.random.normal(kb, (cout,), jnp.float32),
    }


def init_csp_up_block(key, in_channels, out_channels, depth):
    c1, c2 = in_channels
    keys = jax.random.split(key, 7 + 2 * depth)
    params = {
        "in_conv1": _init_cba(keys[0], c1, out_channels, 1),
        "in_conv2": _init_cba(keys[1], c2, out_channels, 1),
        "rcsp": {
            "in_conv": _init_cba(keys[2], 2 * out_channels, out_channels, 1),
            "main": [],
            "bypass_w": jax.random.normal(keys[3], (out_channels, out_channels, 1, 1),
                                          jnp.float32) / jnp.sqrt(out_channels),
            "bn_gamma": 1.0 + 0.1 * jax.random.normal(keys[4], (2 * out_channels,),
                                                      jnp.float32),
            "bn_beta": 0.1 * jax.random.normal(keys[5], (2 * out_channels,), jnp.float32),
            "out_conv": _init_cba(keys[6], 2 * out_channels, out_channels, 1),
        },
    }
    for d in range(depth):
        params["rcsp"]["main"].append({
            "conv1": _init_cba(keys[7 + 2 * d], out_channels, out_channels, 1),
            "conv3": _init_cba(keys[8 + 2 * d], out_channels, out_channels, 3),
        })
    return params


# ----------------------------- plain-JAX reference -------------------------------


def _ref_mish(x):
    return x * jnp.tanh(jax.nn.softplus(x))


def _ref_bn_mish(y, gamma, beta, eps):
    mean = jnp.mean(y, axis=(0, 2, 3), keepdims=True)
    var = jnp.mean(jnp.square(y - mean), axis=(0, 2, 3), keepdims=True)
    yn = (y - mean) * jax.lax.rsqrt(var + eps)
    yn = yn * gamma.reshape(1, -1, 1, 1) + beta.reshape(1, -1, 1, 1)
    return _ref_mish(yn)


def _ref_conv(x_nchw, w, pad):
    return jax.lax.conv_general_dilated(
        x_nchw.astype(jnp.bfloat16), w.astype(jnp.bfloat16),
        window_strides=(1, 1), padding=[(pad, pad), (pad, pad)],
        dimension_numbers=("NCHW", "OIHW", "NCHW"),
        preferred_element_type=jnp.float32)


def _ref_cba(x_nchw, p, eps=BN_EPS_CONVBNACT):
    k = p["w"].shape[-1]
    return _ref_bn_mish(_ref_conv(x_nchw, p["w"], k // 2), p["gamma"], p["beta"], eps)


def csp_up_block_reference(params, x1, x2):
    a1 = _ref_cba(x1, params["in_conv1"])
    a1 = jnp.repeat(jnp.repeat(a1, 2, axis=2), 2, axis=3)
    a2 = _ref_cba(x2, params["in_conv2"])
    h = jnp.concatenate([a2, a1], axis=1)
    r = params["rcsp"]
    xin = _ref_cba(h, r["in_conv"])
    z = xin
    for blk in r["main"]:
        z = _ref_cba(z, blk["conv1"])
        z = _ref_cba(z, blk["conv3"])
    z = z.astype(jnp.bfloat16).astype(jnp.float32)   # match inter-layer bf16 storage
    h2 = _ref_conv(xin, r["bypass_w"], 0)
    hcat = jnp.concatenate([z, h2], axis=1)
    hb = _ref_bn_mish(hcat, r["bn_gamma"], r["bn_beta"], BN_EPS_RCSP)
    return _ref_cba(hb, r["out_conv"])


# ----------------------------- main ------------------------------------------------


if __name__ == "__main__":
    key = jax.random.PRNGKey(0)
    k_p, k_x1, k_x2 = jax.random.split(key, 3)

    N = 2
    in_channels = (8, 4)
    out_channels = 8
    depth = 1
    H1, W1 = 8, 8              # low-res input (gets nearest-upsampled 2x)
    H2, W2 = 16, 16            # high-res input

    params = init_csp_up_block(k_p, in_channels, out_channels, depth)
    x1 = jax.random.normal(k_x1, (N, in_channels[0], H1, W1), jnp.float32)
    x2 = jax.random.normal(k_x2, (N, in_channels[1], H2, W2), jnp.float32)

    fwd = jax.jit(csp_up_block_forward)
    out = fwd(params, x1, x2)
    jax.block_until_ready(out)
    assert out.shape == (N, out_channels, H2, W2), out.shape

    # sanity check vs a plain-JAX reference (bf16 matmuls, f32 BN/Mish)
    ref = csp_up_block_reference(params, x1, x2)
    assert bool(jnp.allclose(out, ref, rtol=5e-2, atol=5e-2)), (
        "max abs diff = %f" % float(jnp.max(jnp.abs(out - ref))))

    print("KERNEL_OK")
</pallas_src>

<mosaic_0001>
module attributes {stable_mosaic.version = 11 : i64} {
  func.func @kernel(%arg0: i32, %arg1: i32, %arg2: memref<4x512xbf16, #tpu.memory_space<vmem>>, %arg3: memref<8x4xbf16, #tpu.memory_space<vmem>>, %arg4: memref<8x1xf32, #tpu.memory_space<vmem>>, %arg5: memref<8x1xf32, #tpu.memory_space<vmem>>, %arg6: memref<8x512xbf16, #tpu.memory_space<vmem>>, %arg7: memref<8x1xf32, #tpu.memory_space<vmem>>, %arg8: memref<8x1xf32, #tpu.memory_space<vmem>>) attributes {dimension_semantics = [#tpu.dimension_semantics<arbitrary>, #tpu.dimension_semantics<arbitrary>], iteration_bounds = array<i64: 2, 1>, scalar_prefetch = 0 : i64, scratch_operands = 2 : i64, tpu.core_type = #tpu.core_type<tc>, window_params = [{transform_indices = @transform_0, window_bounds = array<i64: 4, 512>}, {pipeline_mode = #tpu.pipeline_mode<synchronous>, transform_indices = @transform_1, window_bounds = array<i64: 8, 4>}, {pipeline_mode = #tpu.pipeline_mode<synchronous>, transform_indices = @transform_2, window_bounds = array<i64: 8, 1>}, {pipeline_mode = #tpu.pipeline_mode<synchronous>, transform_indices = @transform_3, window_bounds = array<i64: 8, 1>}, {transform_indices = @transform_4, window_bounds = array<i64: 8, 512>}]} {
    %c0_i32 = arith.constant 0 : i32
    %0 = arith.cmpi eq, %arg0, %c0_i32 : i32
    %c0_i32_0 = arith.constant 0 : i32
    %1 = arith.cmpi eq, %arg1, %c0_i32_0 : i32
    %2 = arith.andi %0, %1 : i1
    %3 = arith.extui %2 : i1 to i32
    %c0_i32_1 = arith.constant 0 : i32
    %4 = arith.cmpi ne, %3, %c0_i32_1 : i32
    scf.if %4 {
      %cst_11 = arith.constant 0.000000e+00 : f32
      %19 = vector.broadcast %cst_11 : f32 to vector<8x1xf32>
      %c0_12 = arith.constant 0 : index
      %c0_13 = arith.constant 0 : index
      %20 = vector.load %arg7[%c0_12, %c0_13] : memref<8x1xf32, #tpu.memory_space<vmem>>, vector<8x1xf32>
      tpu.vector_store %arg7[%c0_12, %c0_13], %19 {strides = array<i32>} : memref<8x1xf32, #tpu.memory_space<vmem>>, vector<8x1xf32>,
      %cst_14 = arith.constant 0.000000e+00 : f32
      %21 = vector.broadcast %cst_14 : f32 to vector<8x1xf32>
      %c0_15 = arith.constant 0 : index
      %c0_16 = arith.constant 0 : index
      %22 = vector.load %arg8[%c0_15, %c0_16] : memref<8x1xf32, #tpu.memory_space<vmem>>, vector<8x1xf32>
      tpu.vector_store %arg8[%c0_15, %c0_16], %21 {strides = array<i32>} : memref<8x1xf32, #tpu.memory_space<vmem>>, vector<8x1xf32>,
    } else {
    }
    %c0 = arith.constant 0 : index
    %c0_2 = arith.constant 0 : index
    %5 = vector.load %arg3[%c0, %c0_2] : memref<8x4xbf16, #tpu.memory_space<vmem>>, vector<8x4xbf16>
    %c0_3 = arith.constant 0 : index
    %c0_4 = arith.constant 0 : index
    %6 = vector.load %arg2[%c0_3, %c0_4] : memref<4x512xbf16, #tpu.memory_space<vmem>>, vector<4x512xbf16>
    %cst = arith.constant dense<0.000000e+00> : vector<8x512xf32>
    %7 = tpu.matmul %5, %6, %cst {dimension_numbers = #tpu.dot_dimension_numbers<[1], [0], [0], [1], [0, 0, 1, 1], [], []>} : vector<8x4xbf16>, vector<4x512xbf16>, vector<8x512xf32> -> vector<8x512xf32>
    %c0_i32_5 = arith.constant 0 : i32
    %8 = arith.cmpi eq, %arg0, %c0_i32_5 : i32
    %9 = arith.extui %8 : i1 to i32
    %c0_i32_6 = arith.constant 0 : i32
    %10 = arith.cmpi ne, %9, %c0_i32_6 : i32
    scf.if %10 {
      %c0_11 = arith.constant 0 : index
      %c0_12 = arith.constant 0 : index
      %19 = vector.load %arg7[%c0_11, %c0_12] : memref<8x1xf32, #tpu.memory_space<vmem>>, vector<8x1xf32>
      %cst_13 = arith.constant dense<0.000000e+00> : vector<8xf32>
      %20 = vector.multi_reduction <add>, %7, %cst_13 [1] : vector<8x512xf32> to vector<8xf32>
      %21 = vector.shape_cast %20 : vector<8xf32> to vector<8x1xf32>
      %22 = arith.addf %19, %21 : vector<8x1xf32>
      %c0_14 = arith.constant 0 : index
      %c0_15 = arith.constant 0 : index
      %23 = vector.load %arg7[%c0_14, %c0_15] : memref<8x1xf32, #tpu.memory_space<vmem>>, vector<8x1xf32>
      tpu.vector_store %arg7[%c0_14, %c0_15], %22 {strides = array<i32>} : memref<8x1xf32, #tpu.memory_space<vmem>>, vector<8x1xf32>,
      %c0_16 = arith.constant 0 : index
      %c0_17 = arith.constant 0 : index
      %24 = vector.load %arg8[%c0_16, %c0_17] : memref<8x1xf32, #tpu.memory_space<vmem>>, vector<8x1xf32>
      %25 = arith.mulf %7, %7 : vector<8x512xf32>
      %cst_18 = arith.constant dense<0.000000e+00> : vector<8xf32>
      %26 = vector.multi_reduction <add>, %25, %cst_18 [1] : vector<8x512xf32> to vector<8xf32>
      %27 = vector.shape_cast %26 : vector<8xf32> to vector<8x1xf32>
      %28 = arith.addf %24, %27 : vector<8x1xf32>
      %c0_19 = arith.constant 0 : index
      %c0_20 = arith.constant 0 : index
      %29 = vector.load %arg8[%c0_19, %c0_20] : memref<8x1xf32, #tpu.memory_space<vmem>>, vector<8x1xf32>
      tpu.vector_store %arg8[%c0_19, %c0_20], %28 {strides = array<i32>} : memref<8x1xf32, #tpu.memory_space<vmem>>, vector<8x1xf32>,
    } else {
    }
    %c1_i32 = arith.constant 1 : i32
    %11 = arith.cmpi eq, %arg0, %c1_i32 : i32
    %c0_i32_7 = arith.constant 0 : i32
    %12 = arith.cmpi eq, %arg1, %c0_i32_7 : i32
    %13 = arith.andi %11, %12 : i1
    %14 = arith.extui %13 : i1 to i32
    %c0_i32_8 = arith.constant 0 : i32
    %15 = arith.cmpi ne, %14, %c0_i32_8 : i32
    scf.if %15 {
      %c0_11 = arith.constant 0 : index
      %c0_12 = arith.constant 0 : index
      %19 = vector.load %arg7[%c0_11, %c0_12] : memref<8x1xf32, #tpu.memory_space<vmem>>, vector<8x1xf32>
      %cst_13 = arith.constant 0.001953125 : f32
      %20 = vector.broadcast %cst_13 : f32 to vector<8x1xf32>
      %21 = arith.mulf %19, %20 : vector<8x1xf32>
      %c0_14 = arith.constant 0 : index
      %c0_15 = arith.constant 0 : index
      %22 = vector.load %arg8[%c0_14, %c0_15] : memref<8x1xf32, #tpu.memory_space<vmem>>, vector<8x1xf32>
      %cst_16 = arith.constant 0.001953125 : f32
      %23 = vector.broadcast %cst_16 : f32 to vector<8x1xf32>
      %24 = arith.mulf %22, %23 : vector<8x1xf32>
      %25 = arith.mulf %21, %21 : vector<8x1xf32>
      %26 = arith.subf %24, %25 : vector<8x1xf32>
      %cst_17 = arith.constant 0.000000e+00 : f32
      %27 = vector.broadcast %cst_17 : f32 to vector<8x1xf32>
      %28 = arith.maximumf %26, %27 : vector<8x1xf32>
      %c0_18 = arith.constant 0 : index
      %c0_19 = arith.constant 0 : index
      %29 = vector.load %arg4[%c0_18, %c0_19] : memref<8x1xf32, #tpu.memory_space<vmem>>, vector<8x1xf32>
      %cst_20 = arith.constant 9.99999974E-6 : f32
      %30 = vector.broadcast %cst_20 : f32 to vector<8x1xf32>
      %31 = arith.addf %28, %30 : vector<8x1xf32>
      %32 = math.rsqrt %31 : vector<8x1xf32>
      %33 = arith.mulf %29, %32 : vector<8x1xf32>
      %c0_21 = arith.constant 0 : index
      %c0_22 = arith.constant 0 : index
      %34 = vector.load %arg7[%c0_21, %c0_22] : memref<8x1xf32, #tpu.memory_space<vmem>>, vector<8x1xf32>
      tpu.vector_store %arg7[%c0_21, %c0_22], %33 {strides = array<i32>} : memref<8x1xf32, #tpu.memory_space<vmem>>, vector<8x1xf32>,
      %c0_23 = arith.constant 0 : index
      %c0_24 = arith.constant 0 : index
      %35 = vector.load %arg5[%c0_23, %c0_24] : memref<8x1xf32, #tpu.memory_space<vmem>>, vector<8x1xf32>
      %36 = arith.mulf %21, %33 : vector<8x1xf32>
      %37 = arith.subf %35, %36 : vector<8x1xf32>
      %c0_25 = arith.constant 0 : index
      %c0_26 = arith.constant 0 : index
      %38 = vector.load %arg8[%c0_25, %c0_26] : memref<8x1xf32, #tpu.memory_space<vmem>>, vector<8x1xf32>
      tpu.vector_store %arg8[%c0_25, %c0_26], %37 {strides = array<i32>} : memref<8x1xf32, #tpu.memory_space<vmem>>, vector<8x1xf32>,
    } else {
    }
    %c1_i32_9 = arith.constant 1 : i32
    %16 = arith.cmpi eq, %arg0, %c1_i32_9 : i32
    %17 = arith.extui %16 : i1 to i32
    %c0_i32_10 = arith.constant 0 : i32
    %18 = arith.cmpi ne, %17, %c0_i32_10 : i32
    scf.if %18 {
      %c0_11 = arith.constant 0 : index
      %c0_12 = arith.constant 0 : index
      %19 = vector.load %arg7[%c0_11, %c0_12] : memref<8x1xf32, #tpu.memory_space<vmem>>, vector<8x1xf32>
      %20 = vector.broadcast %19 : vector<8x1xf32> to vector<8x512xf32>
      %21 = arith.mulf %7, %20 : vector<8x512xf32>
      %c0_13 = arith.constant 0 : index
      %c0_14 = arith.constant 0 : index
      %22 = vector.load %arg8[%c0_13, %c0_14] : memref<8x1xf32, #tpu.memory_space<vmem>>, vector<8x1xf32>
      %23 = vector.broadcast %22 : vector<8x1xf32> to vector<8x512xf32>
      %24 = arith.addf %21, %23 : vector<8x512xf32>
      %cst_15 = arith.constant 2.000000e+01 : f32
      %25 = vector.broadcast %cst_15 : f32 to vector<8x512xf32>
      %26 = arith.minimumf %24, %25 : vector<8x512xf32>
      %27 = math.exp %26 : vector<8x512xf32>
      %cst_16 = arith.constant 2.000000e+00 : f32
      %28 = vector.broadcast %cst_16 : f32 to vector<8x512xf32>
      %29 = arith.addf %27, %28 : vector<8x512xf32>
      %30 = arith.mulf %27, %29 : vector<8x512xf32>
      %cst_17 = arith.constant 2.000000e+00 : f32
      %31 = vector.broadcast %cst_17 : f32 to vector<8x512xf32>
      %32 = arith.addf %30, %31 : vector<8x512xf32>
      %33 = tpu.reciprocal %32 {approx = true} : vector<8x512xf32> -> vector<8x512xf32>
      %34 = arith.mulf %32, %33 : vector<8x512xf32>
      %cst_18 = arith.constant 2.000000e+00 : f32
      %35 = vector.broadcast %cst_18 : f32 to vector<8x512xf32>
      %36 = arith.subf %35, %34 : vector<8x512xf32>
      %37 = arith.mulf %33, %36 : vector<8x512xf32>
      %38 = arith.mulf %24, %30 : vector<8x512xf32>
      %39 = arith.mulf %38, %37 : vector<8x512xf32>
      %40 = arith.truncf %39 : vector<8x512xf32> to vector<8x512xbf16>
      %c0_19 = arith.constant 0 : index
      %c0_20 = arith.constant 0 : index
      %41 = vector.load %arg6[%c0_19, %c0_20] : memref<8x512xbf16, #tpu.memory_space<vmem>>, vector<8x512xbf16>
      tpu.vector_store %arg6[%c0_19, %c0_20], %40 {strides = array<i32>} : memref<8x512xbf16, #tpu.memory_space<vmem>>, vector<8x512xbf16>,
    } else {
    }
    return
  }
  func.func @transform_0(%arg0: i32, %arg1: i32) -> (i32, i32) {
    %c0_i32 = arith.constant 0 : i32
    %c0_i32_0 = arith.constant 0 : i32
    return %c0_i32, %arg1 : i32, i32
  }
  func.func @transform_1(%arg0: i32, %arg1: i32) -> (i32, i32) {
    %c0_i32 = arith.constant 0 : i32
    %c0_i32_0 = arith.constant 0 : i32
    %c0_i32_1 = arith.constant 0 : i32
    return %c0_i32, %c0_i32_0 : i32, i32
  }
  func.func @transform_2(%arg0: i32, %arg1: i32) -> (i32, i32) {
    %c0_i32 = arith.constant 0 : i32
    %c0_i32_0 = arith.constant 0 : i32
    %c0_i32_1 = arith.constant 0 : i32
    return %c0_i32, %c0_i32_0 : i32, i32
  }
  func.func @transform_3(%arg0: i32, %arg1: i32) -> (i32, i32) {
    %c0_i32 = arith.constant 0 : i32
    %c0_i32_0 = arith.constant 0 : i32
    %c0_i32_1 = arith.constant 0 : i32
    return %c0_i32, %c0_i32_0 : i32, i32
  }
  func.func @transform_4(%arg0: i32, %arg1: i32) -> (i32, i32) {
    %0 = arith.muli %arg1, %arg0 : i32
    %c0_i32 = arith.constant 0 : i32
    %c0_i32_0 = arith.constant 0 : i32
    return %c0_i32, %0 : i32, i32
  }
}

module attributes {stable_mosaic.version = 11 : i64} {
  func.func @kernel(%arg0: i32, %arg1: i32, %arg2: memref<8x128xbf16, #tpu.memory_space<vmem>>, %arg3: memref<8x8xbf16, #tpu.memory_space<vmem>>, %arg4: memref<8x1xf32, #tpu.memory_space<vmem>>, %arg5: memref<8x1xf32, #tpu.memory_space<vmem>>, %arg6: memref<8x128xbf16, #tpu.memory_space<vmem>>, %arg7: memref<8x1xf32, #tpu.memory_space<vmem>>, %arg8: memref<8x1xf32, #tpu.memory_space<vmem>>) attributes {dimension_semantics = [#tpu.dimension_semantics<arbitrary>, #tpu.dimension_semantics<arbitrary>], iteration_bounds = array<i64: 2, 1>, scalar_prefetch = 0 : i64, scratch_operands = 2 : i64, tpu.core_type = #tpu.core_type<tc>, window_params = [{transform_indices = @transform_0, window_bounds = array<i64: 8, 128>}, {pipeline_mode = #tpu.pipeline_mode<synchronous>, transform_indices = @transform_1, window_bounds = array<i64: 8, 8>}, {pipeline_mode = #tpu.pipeline_mode<synchronous>, transform_indices = @transform_2, window_bounds = array<i64: 8, 1>}, {pipeline_mode = #tpu.pipeline_mode<synchronous>, transform_indices = @transform_3, window_bounds = array<i64: 8, 1>}, {transform_indices = @transform_4, window_bounds = array<i64: 8, 128>}]} {
    %c0_i32 = arith.constant 0 : i32
    %0 = arith.cmpi eq, %arg0, %c0_i32 : i32
    %c0_i32_0 = arith.constant 0 : i32
    %1 = arith.cmpi eq, %arg1, %c0_i32_0 : i32
    %2 = arith.andi %0, %1 : i1
    %3 = arith.extui %2 : i1 to i32
    %c0_i32_1 = arith.constant 0 : i32
    %4 = arith.cmpi ne, %3, %c0_i32_1 : i32
    scf.if %4 {
      %cst_11 = arith.constant 0.000000e+00 : f32
      %19 = vector.broadcast %cst_11 : f32 to vector<8x1xf32>
      %c0_12 = arith.constant 0 : index
      %c0_13 = arith.constant 0 : index
      %20 = vector.load %arg7[%c0_12, %c0_13] : memref<8x1xf32, #tpu.memory_space<vmem>>, vector<8x1xf32>
      tpu.vector_store %arg7[%c0_12, %c0_13], %19 {strides = array<i32>} : memref<8x1xf32, #tpu.memory_space<vmem>>, vector<8x1xf32>,
      %cst_14 = arith.constant 0.000000e+00 : f32
      %21 = vector.broadcast %cst_14 : f32 to vector<8x1xf32>
      %c0_15 = arith.constant 0 : index
      %c0_16 = arith.constant 0 : index
      %22 = vector.load %arg8[%c0_15, %c0_16] : memref<8x1xf32, #tpu.memory_space<vmem>>, vector<8x1xf32>
      tpu.vector_store %arg8[%c0_15, %c0_16], %21 {strides = array<i32>} : memref<8x1xf32, #tpu.memory_space<vmem>>, vector<8x1xf32>,
    } else {
    }
    %c0 = arith.constant 0 : index
    %c0_2 = arith.constant 0 : index
    %5 = vector.load %arg3[%c0, %c0_2] : memref<8x8xbf16, #tpu.memory_space<vmem>>, vector<8x8xbf16>
    %c0_3 = arith.constant 0 : index
    %c0_4 = arith.constant 0 : index
    %6 = vector.load %arg2[%c0_3, %c0_4] : memref<8x128xbf16, #tpu.memory_space<vmem>>, vector<8x128xbf16>
    %cst = arith.constant dense<0.000000e+00> : vector<8x128xf32>
    %7 = tpu.matmul %5, %6, %cst {dimension_numbers = #tpu.dot_dimension_numbers<[1], [0], [0], [1], [0, 0, 1, 1], [], []>} : vector<8x8xbf16>, vector<8x128xbf16>, vector<8x128xf32> -> vector<8x128xf32>
    %c0_i32_5 = arith.constant 0 : i32
    %8 = arith.cmpi eq, %arg0, %c0_i32_5 : i32
    %9 = arith.extui %8 : i1 to i32
    %c0_i32_6 = arith.constant 0 : i32
    %10 = arith.cmpi ne, %9, %c0_i32_6 : i32
    scf.if %10 {
      %c0_11 = arith.constant 0 : index
      %c0_12 = arith.constant 0 : index
      %19 = vector.load %arg7[%c0_11, %c0_12] : memref<8x1xf32, #tpu.memory_space<vmem>>, vector<8x1xf32>
      %cst_13 = arith.constant dense<0.000000e+00> : vector<8xf32>
      %20 = vector.multi_reduction <add>, %7, %cst_13 [1] : vector<8x128xf32> to vector<8xf32>
      %21 = vector.shape_cast %20 : vector<8xf32> to vector<8x1xf32>
      %22 = arith.addf %19, %21 : vector<8x1xf32>
      %c0_14 = arith.constant 0 : index
      %c0_15 = arith.constant 0 : index
      %23 = vector.load %arg7[%c0_14, %c0_15] : memref<8x1xf32, #tpu.memory_space<vmem>>, vector<8x1xf32>
      tpu.vector_store %arg7[%c0_14, %c0_15], %22 {strides = array<i32>} : memref<8x1xf32, #tpu.memory_space<vmem>>, vector<8x1xf32>,
      %c0_16 = arith.constant 0 : index
      %c0_17 = arith.constant 0 : index
      %24 = vector.load %arg8[%c0_16, %c0_17] : memref<8x1xf32, #tpu.memory_space<vmem>>, vector<8x1xf32>
      %25 = arith.mulf %7, %7 : vector<8x128xf32>
      %cst_18 = arith.constant dense<0.000000e+00> : vector<8xf32>
      %26 = vector.multi_reduction <add>, %25, %cst_18 [1] : vector<8x128xf32> to vector<8xf32>
      %27 = vector.shape_cast %26 : vector<8xf32> to vector<8x1xf32>
      %28 = arith.addf %24, %27 : vector<8x1xf32>
      %c0_19 = arith.constant 0 : index
      %c0_20 = arith.constant 0 : index
      %29 = vector.load %arg8[%c0_19, %c0_20] : memref<8x1xf32, #tpu.memory_space<vmem>>, vector<8x1xf32>
      tpu.vector_store %arg8[%c0_19, %c0_20], %28 {strides = array<i32>} : memref<8x1xf32, #tpu.memory_space<vmem>>, vector<8x1xf32>,
    } else {
    }
    %c1_i32 = arith.constant 1 : i32
    %11 = arith.cmpi eq, %arg0, %c1_i32 : i32
    %c0_i32_7 = arith.constant 0 : i32
    %12 = arith.cmpi eq, %arg1, %c0_i32_7 : i32
    %13 = arith.andi %11, %12 : i1
    %14 = arith.extui %13 : i1 to i32
    %c0_i32_8 = arith.constant 0 : i32
    %15 = arith.cmpi ne, %14, %c0_i32_8 : i32
    scf.if %15 {
      %c0_11 = arith.constant 0 : index
      %c0_12 = arith.constant 0 : index
      %19 = vector.load %arg7[%c0_11, %c0_12] : memref<8x1xf32, #tpu.memory_space<vmem>>, vector<8x1xf32>
      %cst_13 = arith.constant 7.812500e-03 : f32
      %20 = vector.broadcast %cst_13 : f32 to vector<8x1xf32>
      %21 = arith.mulf %19, %20 : vector<8x1xf32>
      %c0_14 = arith.constant 0 : index
      %c0_15 = arith.constant 0 : index
      %22 = vector.load %arg8[%c0_14, %c0_15] : memref<8x1xf32, #tpu.memory_space<vmem>>, vector<8x1xf32>
      %cst_16 = arith.constant 7.812500e-03 : f32
      %23 = vector.broadcast %cst_16 : f32 to vector<8x1xf32>
      %24 = arith.mulf %22, %23 : vector<8x1xf32>
      %25 = arith.mulf %21, %21 : vector<8x1xf32>
      %26 = arith.subf %24, %25 : vector<8x1xf32>
      %cst_17 = arith.constant 0.000000e+00 : f32
      %27 = vector.broadcast %cst_17 : f32 to vector<8x1xf32>
      %28 = arith.maximumf %26, %27 : vector<8x1xf32>
      %c0_18 = arith.constant 0 : index
      %c0_19 = arith.constant 0 : index
      %29 = vector.load %arg4[%c0_18, %c0_19] : memref<8x1xf32, #tpu.memory_space<vmem>>, vector<8x1xf32>
      %cst_20 = arith.constant 9.99999974E-6 : f32
      %30 = vector.broadcast %cst_20 : f32 to vector<8x1xf32>
      %31 = arith.addf %28, %30 : vector<8x1xf32>
      %32 = math.rsqrt %31 : vector<8x1xf32>
      %33 = arith.mulf %29, %32 : vector<8x1xf32>
      %c0_21 = arith.constant 0 : index
      %c0_22 = arith.constant 0 : index
      %34 = vector.load %arg7[%c0_21, %c0_22] : memref<8x1xf32, #tpu.memory_space<vmem>>, vector<8x1xf32>
      tpu.vector_store %arg7[%c0_21, %c0_22], %33 {strides = array<i32>} : memref<8x1xf32, #tpu.memory_space<vmem>>, vector<8x1xf32>,
      %c0_23 = arith.constant 0 : index
      %c0_24 = arith.constant 0 : index
      %35 = vector.load %arg5[%c0_23, %c0_24] : memref<8x1xf32, #tpu.memory_space<vmem>>, vector<8x1xf32>
      %36 = arith.mulf %21, %33 : vector<8x1xf32>
      %37 = arith.subf %35, %36 : vector<8x1xf32>
      %c0_25 = arith.constant 0 : index
      %c0_26 = arith.constant 0 : index
      %38 = vector.load %arg8[%c0_25, %c0_26] : memref<8x1xf32, #tpu.memory_space<vmem>>, vector<8x1xf32>
      tpu.vector_store %arg8[%c0_25, %c0_26], %37 {strides = array<i32>} : memref<8x1xf32, #tpu.memory_space<vmem>>, vector<8x1xf32>,
    } else {
    }
    %c1_i32_9 = arith.constant 1 : i32
    %16 = arith.cmpi eq, %arg0, %c1_i32_9 : i32
    %17 = arith.extui %16 : i1 to i32
    %c0_i32_10 = arith.constant 0 : i32
    %18 = arith.cmpi ne, %17, %c0_i32_10 : i32
    scf.if %18 {
      %c0_11 = arith.constant 0 : index
      %c0_12 = arith.constant 0 : index
      %19 = vector.load %arg7[%c0_11, %c0_12] : memref<8x1xf32, #tpu.memory_space<vmem>>, vector<8x1xf32>
      %20 = vector.broadcast %19 : vector<8x1xf32> to vector<8x128xf32>
      %21 = arith.mulf %7, %20 : vector<8x128xf32>
      %c0_13 = arith.constant 0 : index
      %c0_14 = arith.constant 0 : index
      %22 = vector.load %arg8[%c0_13, %c0_14] : memref<8x1xf32, #tpu.memory_space<vmem>>, vector<8x1xf32>
      %23 = vector.broadcast %22 : vector<8x1xf32> to vector<8x128xf32>
      %24 = arith.addf %21, %23 : vector<8x128xf32>
      %cst_15 = arith.constant 2.000000e+01 : f32
      %25 = vector.broadcast %cst_15 : f32 to vector<8x128xf32>
      %26 = arith.minimumf %24, %25 : vector<8x128xf32>
      %27 = math.exp %26 : vector<8x128xf32>
      %cst_16 = arith.constant 2.000000e+00 : f32
      %28 = vector.broadcast %cst_16 : f32 to vector<8x128xf32>
      %29 = arith.addf %27, %28 : vector<8x128xf32>
      %30 = arith.mulf %27, %29 : vector<8x128xf32>
      %cst_17 = arith.constant 2.000000e+00 : f32
      %31 = vector.broadcast %cst_17 : f32 to vector<8x128xf32>
      %32 = arith.addf %30, %31 : vector<8x128xf32>
      %33 = tpu.reciprocal %32 {approx = true} : vector<8x128xf32> -> vector<8x128xf32>
      %34 = arith.mulf %32, %33 : vector<8x128xf32>
      %cst_18 = arith.constant 2.000000e+00 : f32
      %35 = vector.broadcast %cst_18 : f32 to vector<8x128xf32>
      %36 = arith.subf %35, %34 : vector<8x128xf32>
      %37 = arith.mulf %33, %36 : vector<8x128xf32>
      %38 = arith.mulf %24, %30 : vector<8x128xf32>
      %39 = arith.mulf %38, %37 : vector<8x128xf32>
      %40 = arith.truncf %39 : vector<8x128xf32> to vector<8x128xbf16>
      %c0_19 = arith.constant 0 : index
      %c0_20 = arith.constant 0 : index
      %41 = vector.load %arg6[%c0_19, %c0_20] : memref<8x128xbf16, #tpu.memory_space<vmem>>, vector<8x128xbf16>
      tpu.vector_store %arg6[%c0_19, %c0_20], %40 {strides = array<i32>} : memref<8x128xbf16, #tpu.memory_space<vmem>>, vector<8x128xbf16>,
    } else {
    }
    return
  }
  func.func @transform_0(%arg0: i32, %arg1: i32) -> (i32, i32) {
    %c0_i32 = arith.constant 0 : i32
    %c0_i32_0 = arith.constant 0 : i32
    return %c0_i32, %arg1 : i32, i32
  }
  func.func @transform_1(%arg0: i32, %arg1: i32) -> (i32, i32) {
    %c0_i32 = arith.constant 0 : i32
    %c0_i32_0 = arith.constant 0 : i32
    %c0_i32_1 = arith.constant 0 : i32
    return %c0_i32, %c0_i32_0 : i32, i32
  }
  func.func @transform_2(%arg0: i32, %arg1: i32) -> (i32, i32) {
    %c0_i32 = arith.constant 0 : i32
    %c0_i32_0 = arith.constant 0 : i32
    %c0_i32_1 = arith.constant 0 : i32
    return %c0_i32, %c0_i32_0 : i32, i32
  }
  func.func @transform_3(%arg0: i32, %arg1: i32) -> (i32, i32) {
    %c0_i32 = arith.constant 0 : i32
    %c0_i32_0 = arith.constant 0 : i32
    %c0_i32_1 = arith.constant 0 : i32
    return %c0_i32, %c0_i32_0 : i32, i32
  }
  func.func @transform_4(%arg0: i32, %arg1: i32) -> (i32, i32) {
    %0 = arith.muli %arg1, %arg0 : i32
    %c0_i32 = arith.constant 0 : i32
    %c0_i32_0 = arith.constant 0 : i32
    return %c0_i32, %0 : i32, i32
  }
}

module attributes {stable_mosaic.version = 11 : i64} {
  func.func @kernel(%arg0: i32, %arg1: i32, %arg2: memref<8x512xbf16, #tpu.memory_space<vmem>>, %arg3: memref<8x512xbf16, #tpu.memory_space<vmem>>, %arg4: memref<8x8xbf16, #tpu.memory_space<vmem>>, %arg5: memref<8x8xbf16, #tpu.memory_space<vmem>>, %arg6: memref<8x1xf32, #tpu.memory_space<vmem>>, %arg7: memref<8x1xf32, #tpu.memory_space<vmem>>, %arg8: memref<8x512xbf16, #tpu.memory_space<vmem>>, %arg9: memref<8x1xf32, #tpu.memory_space<vmem>>, %arg10: memref<8x1xf32, #tpu.memory_space<vmem>>) attributes {dimension_semantics = [#tpu.dimension_semantics<arbitrary>, #tpu.dimension_semantics<arbitrary>], iteration_bounds = array<i64: 2, 1>, scalar_prefetch = 0 : i64, scratch_operands = 2 : i64, tpu.core_type = #tpu.core_type<tc>, window_params = [{transform_indices = @transform_0, window_bounds = array<i64: 8, 512>}, {transform_indices = @transform_1, window_bounds = array<i64: 8, 512>}, {pipeline_mode = #tpu.pipeline_mode<synchronous>, transform_indices = @transform_2, window_bounds = array<i64: 8, 8>}, {pipeline_mode = #tpu.pipeline_mode<synchronous>, transform_indices = @transform_3, window_bounds = array<i64: 8, 8>}, {pipeline_mode = #tpu.pipeline_mode<synchronous>, transform_indices = @transform_4, window_bounds = array<i64: 8, 1>}, {pipeline_mode = #tpu.pipeline_mode<synchronous>, transform_indices = @transform_5, window_bounds = array<i64: 8, 1>}, {transform_indices = @transform_6, window_bounds = array<i64: 8, 512>}]} {
    %c0_i32 = arith.constant 0 : i32
    %0 = arith.cmpi eq, %arg0, %c0_i32 : i32
    %c0_i32_0 = arith.constant 0 : i32
    %1 = arith.cmpi eq, %arg1, %c0_i32_0 : i32
    %2 = arith.andi %0, %1 : i1
    %3 = arith.extui %2 : i1 to i32
    %c0_i32_1 = arith.constant 0 : i32
    %4 = arith.cmpi ne, %3, %c0_i32_1 : i32
    scf.if %4 {
      %cst_16 = arith.constant 0.000000e+00 : f32
      %23 = vector.broadcast %cst_16 : f32 to vector<8x1xf32>
      %c0_17 = arith.constant 0 : index
      %c0_18 = arith.constant 0 : index
      %24 = vector.load %arg9[%c0_17, %c0_18] : memref<8x1xf32, #tpu.memory_space<vmem>>, vector<8x1xf32>
      tpu.vector_store %arg9[%c0_17, %c0_18], %23 {strides = array<i32>} : memref<8x1xf32, #tpu.memory_space<vmem>>, vector<8x1xf32>,
      %cst_19 = arith.constant 0.000000e+00 : f32
      %25 = vector.broadcast %cst_19 : f32 to vector<8x1xf32>
      %c0_20 = arith.constant 0 : index
      %c0_21 = arith.constant 0 : index
      %26 = vector.load %arg10[%c0_20, %c0_21] : memref<8x1xf32, #tpu.memory_space<vmem>>, vector<8x1xf32>
      tpu.vector_store %arg10[%c0_20, %c0_21], %25 {strides = array<i32>} : memref<8x1xf32, #tpu.memory_space<vmem>>, vector<8x1xf32>,
    } else {
    }
    %c0 = arith.constant 0 : index
    %c0_2 = arith.constant 0 : index
    %5 = vector.load %arg4[%c0, %c0_2] : memref<8x8xbf16, #tpu.memory_space<vmem>>, vector<8x8xbf16>
    %c0_3 = arith.constant 0 : index
    %c0_4 = arith.constant 0 : index
    %6 = vector.load %arg2[%c0_3, %c0_4] : memref<8x512xbf16, #tpu.memory_space<vmem>>, vector<8x512xbf16>
    %cst = arith.constant dense<0.000000e+00> : vector<8x512xf32>
    %7 = tpu.matmul %5, %6, %cst {dimension_numbers = #tpu.dot_dimension_numbers<[1], [0], [0], [1], [0, 0, 1, 1], [], []>} : vector<8x8xbf16>, vector<8x512xbf16>, vector<8x512xf32> -> vector<8x512xf32>
    %c0_5 = arith.constant 0 : index
    %c0_6 = arith.constant 0 : index
    %8 = vector.load %arg5[%c0_5, %c0_6] : memref<8x8xbf16, #tpu.memory_space<vmem>>, vector<8x8xbf16>
    %c0_7 = arith.constant 0 : index
    %c0_8 = arith.constant 0 : index
    %9 = vector.load %arg3[%c0_7, %c0_8] : memref<8x512xbf16, #tpu.memory_space<vmem>>, vector<8x512xbf16>
    %cst_9 = arith.constant dense<0.000000e+00> : vector<8x512xf32>
    %10 = tpu.matmul %8, %9, %cst_9 {dimension_numbers = #tpu.dot_dimension_numbers<[1], [0], [0], [1], [0, 0, 1, 1], [], []>} : vector<8x8xbf16>, vector<8x512xbf16>, vector<8x512xf32> -> vector<8x512xf32>
    %11 = arith.addf %7, %10 : vector<8x512xf32>
    %c0_i32_10 = arith.constant 0 : i32
    %12 = arith.cmpi eq, %arg0, %c0_i32_10 : i32
    %13 = arith.extui %12 : i1 to i32
    %c0_i32_11 = arith.constant 0 : i32
    %14 = arith.cmpi ne, %13, %c0_i32_11 : i32
    scf.if %14 {
      %c0_16 = arith.constant 0 : index
      %c0_17 = arith.constant 0 : index
      %23 = vector.load %arg9[%c0_16, %c0_17] : memref<8x1xf32, #tpu.memory_space<vmem>>, vector<8x1xf32>
      %cst_18 = arith.constant dense<0.000000e+00> : vector<8xf32>
      %24 = vector.multi_reduction <add>, %11, %cst_18 [1] : vector<8x512xf32> to vector<8xf32>
      %25 = vector.shape_cast %24 : vector<8xf32> to vector<8x1xf32>
      %26 = arith.addf %23, %25 : vector<8x1xf32>
      %c0_19 = arith.constant 0 : index
      %c0_20 = arith.constant 0 : index
      %27 = vector.load %arg9[%c0_19, %c0_20] : memref<8x1xf32, #tpu.memory_space<vmem>>, vector<8x1xf32>
      tpu.vector_store %arg9[%c0_19, %c0_20], %26 {strides = array<i32>} : memref<8x1xf32, #tpu.memory_space<vmem>>, vector<8x1xf32>,
      %c0_21 = arith.constant 0 : index
      %c0_22 = arith.constant 0 : index
      %28 = vector.load %arg10[%c0_21, %c0_22] : memref<8x1xf32, #tpu.memory_space<vmem>>, vector<8x1xf32>
      %29 = arith.mulf %11, %11 : vector<8x512xf32>
      %cst_23 = arith.constant dense<0.000000e+00> : vector<8xf32>
      %30 = vector.multi_reduction <add>, %29, %cst_23 [1] : vector<8x512xf32> to vector<8xf32>
      %31 = vector.shape_cast %30 : vector<8xf32> to vector<8x1xf32>
      %32 = arith.addf %28, %31 : vector<8x1xf32>
      %c0_24 = arith.constant 0 : index
      %c0_25 = arith.constant 0 : index
      %33 = vector.load %arg10[%c0_24, %c0_25] : memref<8x1xf32, #tpu.memory_space<vmem>>, vector<8x1xf32>
      tpu.vector_store %arg10[%c0_24, %c0_25], %32 {strides = array<i32>} : memref<8x1xf32, #tpu.memory_space<vmem>>, vector<8x1xf32>,
    } else {
    }
    %c1_i32 = arith.constant 1 : i32
    %15 = arith.cmpi eq, %arg0, %c1_i32 : i32
    %c0_i32_12 = arith.constant 0 : i32
    %16 = arith.cmpi eq, %arg1, %c0_i32_12 : i32
    %17 = arith.andi %15, %16 : i1
    %18 = arith.extui %17 : i1 to i32
    %c0_i32_13 = arith.constant 0 : i32
    %19 = arith.cmpi ne, %18, %c0_i32_13 : i32
    scf.if %19 {
      %c0_16 = arith.constant 0 : index
      %c0_17 = arith.constant 0 : index
      %23 = vector.load %arg9[%c0_16, %c0_17] : memref<8x1xf32, #tpu.memory_space<vmem>>, vector<8x1xf32>
      %cst_18 = arith.constant 0.001953125 : f32
      %24 = vector.broadcast %cst_18 : f32 to vector<8x1xf32>
      %25 = arith.mulf %23, %24 : vector<8x1xf32>
      %c0_19 = arith.constant 0 : index
      %c0_20 = arith.constant 0 : index
      %26 = vector.load %arg10[%c0_19, %c0_20] : memref<8x1xf32, #tpu.memory_space<vmem>>, vector<8x1xf32>
      %cst_21 = arith.constant 0.001953125 : f32
      %27 = vector.broadcast %cst_21 : f32 to vector<8x1xf32>
      %28 = arith.mulf %26, %27 : vector<8x1xf32>
      %29 = arith.mulf %25, %25 : vector<8x1xf32>
      %30 = arith.subf %28, %29 : vector<8x1xf32>
      %cst_22 = arith.constant 0.000000e+00 : f32
      %31 = vector.broadcast %cst_22 : f32 to vector<8x1xf32>
      %32 = arith.maximumf %30, %31 : vector<8x1xf32>
      %c0_23 = arith.constant 0 : index
      %c0_24 = arith.constant 0 : index
      %33 = vector.load %arg6[%c0_23, %c0_24] : memref<8x1xf32, #tpu.memory_space<vmem>>, vector<8x1xf32>
      %cst_25 = arith.constant 9.99999974E-6 : f32
      %34 = vector.broadcast %cst_25 : f32 to vector<8x1xf32>
      %35 = arith.addf %32, %34 : vector<8x1xf32>
      %36 = math.rsqrt %35 : vector<8x1xf32>
      %37 = arith.mulf %33, %36 : vector<8x1xf32>
      %c0_26 = arith.constant 0 : index
      %c0_27 = arith.constant 0 : index
      %38 = vector.load %arg9[%c0_26, %c0_27] : memref<8x1xf32, #tpu.memory_space<vmem>>, vector<8x1xf32>
      tpu.vector_store %arg9[%c0_26, %c0_27], %37 {strides = array<i32>} : memref<8x1xf32, #tpu.memory_space<vmem>>, vector<8x1xf32>,
      %c0_28 = arith.constant 0 : index
      %c0_29 = arith.constant 0 : index
      %39 = vector.load %arg7[%c0_28, %c0_29] : memref<8x1xf32, #tpu.memory_space<vmem>>, vector<8x1xf32>
      %40 = arith.mulf %25, %37 : vector<8x1xf32>
      %41 = arith.subf %39, %40 : vector<8x1xf32>
      %c0_30 = arith.constant 0 : index
      %c0_31 = arith.constant 0 : index
      %42 = vector.load %arg10[%c0_30, %c0_31] : memref<8x1xf32, #tpu.memory_space<vmem>>, vector<8x1xf32>
      tpu.vector_store %arg10[%c0_30, %c0_31], %41 {strides = array<i32>} : memref<8x1xf32, #tpu.memory_space<vmem>>, vector<8x1xf32>,
    } else {
    }
    %c1_i32_14 = arith.constant 1 : i32
    %20 = arith.cmpi eq, %arg0, %c1_i32_14 : i32
    %21 = arith.extui %20 : i1 to i32
    %c0_i32_15 = arith.constant 0 : i32
    %22 = arith.cmpi ne, %21, %c0_i32_15 : i32
    scf.if %22 {
      %c0_16 = arith.constant 0 : index
      %c0_17 = arith.constant 0 : index
      %23 = vector.load %arg9[%c0_16, %c0_17] : memref<8x1xf32, #tpu.memory_space<vmem>>, vector<8x1xf32>
      %24 = vector.broadcast %23 : vector<8x1xf32> to vector<8x512xf32>
      %25 = arith.mulf %11, %24 : vector<8x512xf32>
      %c0_18 = arith.constant 0 : index
      %c0_19 = arith.constant 0 : index
      %26 = vector.load %arg10[%c0_18, %c0_19] : memref<8x1xf32, #tpu.memory_space<vmem>>, vector<8x1xf32>
      %27 = vector.broadcast %26 : vector<8x1xf32> to vector<8x512xf32>
      %28 = arith.addf %25, %27 : vector<8x512xf32>
      %cst_20 = arith.constant 2.000000e+01 : f32
      %29 = vector.broadcast %cst_20 : f32 to vector<8x512xf32>
      %30 = arith.minimumf %28, %29 : vector<8x512xf32>
      %31 = math.exp %30 : vector<8x512xf32>
      %cst_21 = arith.constant 2.000000e+00 : f32
      %32 = vector.broadcast %cst_21 : f32 to vector<8x512xf32>
      %33 = arith.addf %31, %32 : vector<8x512xf32>
      %34 = arith.mulf %31, %33 : vector<8x512xf32>
      %cst_22 = arith.constant 2.000000e+00 : f32
      %35 = vector.broadcast %cst_22 : f32 to vector<8x512xf32>
      %36 = arith.addf %34, %35 : vector<8x512xf32>
      %37 = tpu.reciprocal %36 {approx = true} : vector<8x512xf32> -> vector<8x512xf32>
      %38 = arith.mulf %36, %37 : vector<8x512xf32>
      %cst_23 = arith.constant 2.000000e+00 : f32
      %39 = vector.broadcast %cst_23 : f32 to vector<8x512xf32>
      %40 = arith.subf %39, %38 : vector<8x512xf32>
      %41 = arith.mulf %37, %40 : vector<8x512xf32>
      %42 = arith.mulf %28, %34 : vector<8x512xf32>
      %43 = arith.mulf %42, %41 : vector<8x512xf32>
      %44 = arith.truncf %43 : vector<8x512xf32> to vector<8x512xbf16>
      %c0_24 = arith.constant 0 : index
      %c0_25 = arith.constant 0 : index
      %45 = vector.load %arg8[%c0_24, %c0_25] : memref<8x512xbf16, #tpu.memory_space<vmem>>, vector<8x512xbf16>
      tpu.vector_store %arg8[%c0_24, %c0_25], %44 {strides = array<i32>} : memref<8x512xbf16, #tpu.memory_space<vmem>>, vector<8x512xbf16>,
    } else {
    }
    return
  }
  func.func @transform_0(%arg0: i32, %arg1: i32) -> (i32, i32) {
    %c0_i32 = arith.constant 0 : i32
    %c0_i32_0 = arith.constant 0 : i32
    return %c0_i32, %arg1 : i32, i32
  }
  func.func @transform_1(%arg0: i32, %arg1: i32) -> (i32, i32) {
    %c0_i32 = arith.constant 0 : i32
    %c0_i32_0 = arith.constant 0 : i32
    return %c0_i32, %arg1 : i32, i32
  }
  func.func @transform_2(%arg0: i32, %arg1: i32) -> (i32, i32) {
    %c0_i32 = arith.constant 0 : i32
    %c0_i32_0 = arith.constant 0 : i32
    %c0_i32_1 = arith.constant 0 : i32
    return %c0_i32, %c0_i32_0 : i32, i32
  }
  func.func @transform_3(%arg0: i32, %arg1: i32) -> (i32, i32) {
    %c0_i32 = arith.constant 0 : i32
    %c0_i32_0 = arith.constant 0 : i32
    %c0_i32_1 = arith.constant 0 : i32
    return %c0_i32, %c0_i32_0 : i32, i32
  }
  func.func @transform_4(%arg0: i32, %arg1: i32) -> (i32, i32) {
    %c0_i32 = arith.constant 0 : i32
    %c0_i32_0 = arith.constant 0 : i32
    %c0_i32_1 = arith.constant 0 : i32
    return %c0_i32, %c0_i32_0 : i32, i32
  }
  func.func @transform_5(%arg0: i32, %arg1: i32) -> (i32, i32) {
    %c0_i32 = arith.constant 0 : i32
    %c0_i32_0 = arith.constant 0 : i32
    %c0_i32_1 = arith.constant 0 : i32
    return %c0_i32, %c0_i32_0 : i32, i32
  }
  func.func @transform_6(%arg0: i32, %arg1: i32) -> (i32, i32) {
    %0 = arith.muli %arg1, %arg0 : i32
    %c0_i32 = arith.constant 0 : i32
    %c0_i32_0 = arith.constant 0 : i32
    return %c0_i32, %0 : i32, i32
  }
}

module attributes {stable_mosaic.version = 11 : i64} {
  func.func @kernel(%arg0: i32, %arg1: i32, %arg2: memref<8x512xbf16, #tpu.memory_space<vmem>>, %arg3: memref<8x8xbf16, #tpu.memory_space<vmem>>, %arg4: memref<8x1xf32, #tpu.memory_space<vmem>>, %arg5: memref<8x1xf32, #tpu.memory_space<vmem>>, %arg6: memref<8x512xbf16, #tpu.memory_space<vmem>>, %arg7: memref<8x1xf32, #tpu.memory_space<vmem>>, %arg8: memref<8x1xf32, #tpu.memory_space<vmem>>) attributes {dimension_semantics = [#tpu.dimension_semantics<arbitrary>, #tpu.dimension_semantics<arbitrary>], iteration_bounds = array<i64: 2, 1>, scalar_prefetch = 0 : i64, scratch_operands = 2 : i64, tpu.core_type = #tpu.core_type<tc>, window_params = [{transform_indices = @transform_0, window_bounds = array<i64: 8, 512>}, {pipeline_mode = #tpu.pipeline_mode<synchronous>, transform_indices = @transform_1, window_bounds = array<i64: 8, 8>}, {pipeline_mode = #tpu.pipeline_mode<synchronous>, transform_indices = @transform_2, window_bounds = array<i64: 8, 1>}, {pipeline_mode = #tpu.pipeline_mode<synchronous>, transform_indices = @transform_3, window_bounds = array<i64: 8, 1>}, {transform_indices = @transform_4, window_bounds = array<i64: 8, 512>}]} {
    %c0_i32 = arith.constant 0 : i32
    %0 = arith.cmpi eq, %arg0, %c0_i32 : i32
    %c0_i32_0 = arith.constant 0 : i32
    %1 = arith.cmpi eq, %arg1, %c0_i32_0 : i32
    %2 = arith.andi %0, %1 : i1
    %3 = arith.extui %2 : i1 to i32
    %c0_i32_1 = arith.constant 0 : i32
    %4 = arith.cmpi ne, %3, %c0_i32_1 : i32
    scf.if %4 {
      %cst_11 = arith.constant 0.000000e+00 : f32
      %19 = vector.broadcast %cst_11 : f32 to vector<8x1xf32>
      %c0_12 = arith.constant 0 : index
      %c0_13 = arith.constant 0 : index
      %20 = vector.load %arg7[%c0_12, %c0_13] : memref<8x1xf32, #tpu.memory_space<vmem>>, vector<8x1xf32>
      tpu.vector_store %arg7[%c0_12, %c0_13], %19 {strides = array<i32>} : memref<8x1xf32, #tpu.memory_space<vmem>>, vector<8x1xf32>,
      %cst_14 = arith.constant 0.000000e+00 : f32
      %21 = vector.broadcast %cst_14 : f32 to vector<8x1xf32>
      %c0_15 = arith.constant 0 : index
      %c0_16 = arith.constant 0 : index
      %22 = vector.load %arg8[%c0_15, %c0_16] : memref<8x1xf32, #tpu.memory_space<vmem>>, vector<8x1xf32>
      tpu.vector_store %arg8[%c0_15, %c0_16], %21 {strides = array<i32>} : memref<8x1xf32, #tpu.memory_space<vmem>>, vector<8x1xf32>,
    } else {
    }
    %c0 = arith.constant 0 : index
    %c0_2 = arith.constant 0 : index
    %5 = vector.load %arg3[%c0, %c0_2] : memref<8x8xbf16, #tpu.memory_space<vmem>>, vector<8x8xbf16>
    %c0_3 = arith.constant 0 : index
    %c0_4 = arith.constant 0 : index
    %6 = vector.load %arg2[%c0_3, %c0_4] : memref<8x512xbf16, #tpu.memory_space<vmem>>, vector<8x512xbf16>
    %cst = arith.constant dense<0.000000e+00> : vector<8x512xf32>
    %7 = tpu.matmul %5, %6, %cst {dimension_numbers = #tpu.dot_dimension_numbers<[1], [0], [0], [1], [0, 0, 1, 1], [], []>} : vector<8x8xbf16>, vector<8x512xbf16>, vector<8x512xf32> -> vector<8x512xf32>
    %c0_i32_5 = arith.constant 0 : i32
    %8 = arith.cmpi eq, %arg0, %c0_i32_5 : i32
    %9 = arith.extui %8 : i1 to i32
    %c0_i32_6 = arith.constant 0 : i32
    %10 = arith.cmpi ne, %9, %c0_i32_6 : i32
    scf.if %10 {
      %c0_11 = arith.constant 0 : index
      %c0_12 = arith.constant 0 : index
      %19 = vector.load %arg7[%c0_11, %c0_12] : memref<8x1xf32, #tpu.memory_space<vmem>>, vector<8x1xf32>
      %cst_13 = arith.constant dense<0.000000e+00> : vector<8xf32>
      %20 = vector.multi_reduction <add>, %7, %cst_13 [1] : vector<8x512xf32> to vector<8xf32>
      %21 = vector.shape_cast %20 : vector<8xf32> to vector<8x1xf32>
      %22 = arith.addf %19, %21 : vector<8x1xf32>
      %c0_14 = arith.constant 0 : index
      %c0_15 = arith.constant 0 : index
      %23 = vector.load %arg7[%c0_14, %c0_15] : memref<8x1xf32, #tpu.memory_space<vmem>>, vector<8x1xf32>
      tpu.vector_store %arg7[%c0_14, %c0_15], %22 {strides = array<i32>} : memref<8x1xf32, #tpu.memory_space<vmem>>, vector<8x1xf32>,
      %c0_16 = arith.constant 0 : index
      %c0_17 = arith.constant 0 : index
      %24 = vector.load %arg8[%c0_16, %c0_17] : memref<8x1xf32, #tpu.memory_space<vmem>>, vector<8x1xf32>
      %25 = arith.mulf %7, %7 : vector<8x512xf32>
      %cst_18 = arith.constant dense<0.000000e+00> : vector<8xf32>
      %26 = vector.multi_reduction <add>, %25, %cst_18 [1] : vector<8x512xf32> to vector<8xf32>
      %27 = vector.shape_cast %26 : vector<8xf32> to vector<8x1xf32>
      %28 = arith.addf %24, %27 : vector<8x1xf32>
      %c0_19 = arith.constant 0 : index
      %c0_20 = arith.constant 0 : index
      %29 = vector.load %arg8[%c0_19, %c0_20] : memref<8x1xf32, #tpu.memory_space<vmem>>, vector<8x1xf32>
      tpu.vector_store %arg8[%c0_19, %c0_20], %28 {strides = array<i32>} : memref<8x1xf32, #tpu.memory_space<vmem>>, vector<8x1xf32>,
    } else {
    }
    %c1_i32 = arith.constant 1 : i32
    %11 = arith.cmpi eq, %arg0, %c1_i32 : i32
    %c0_i32_7 = arith.constant 0 : i32
    %12 = arith.cmpi eq, %arg1, %c0_i32_7 : i32
    %13 = arith.andi %11, %12 : i1
    %14 = arith.extui %13 : i1 to i32
    %c0_i32_8 = arith.constant 0 : i32
    %15 = arith.cmpi ne, %14, %c0_i32_8 : i32
    scf.if %15 {
      %c0_11 = arith.constant 0 : index
      %c0_12 = arith.constant 0 : index
      %19 = vector.load %arg7[%c0_11, %c0_12] : memref<8x1xf32, #tpu.memory_space<vmem>>, vector<8x1xf32>
      %cst_13 = arith.constant 0.001953125 : f32
      %20 = vector.broadcast %cst_13 : f32 to vector<8x1xf32>
      %21 = arith.mulf %19, %20 : vector<8x1xf32>
      %c0_14 = arith.constant 0 : index
      %c0_15 = arith.constant 0 : index
      %22 = vector.load %arg8[%c0_14, %c0_15] : memref<8x1xf32, #tpu.memory_space<vmem>>, vector<8x1xf32>
      %cst_16 = arith.constant 0.001953125 : f32
      %23 = vector.broadcast %cst_16 : f32 to vector<8x1xf32>
      %24 = arith.mulf %22, %23 : vector<8x1xf32>
      %25 = arith.mulf %21, %21 : vector<8x1xf32>
      %26 = arith.subf %24, %25 : vector<8x1xf32>
      %cst_17 = arith.constant 0.000000e+00 : f32
      %27 = vector.broadcast %cst_17 : f32 to vector<8x1xf32>
      %28 = arith.maximumf %26, %27 : vector<8x1xf32>
      %c0_18 = arith.constant 0 : index
      %c0_19 = arith.constant 0 : index
      %29 = vector.load %arg4[%c0_18, %c0_19] : memref<8x1xf32, #tpu.memory_space<vmem>>, vector<8x1xf32>
      %cst_20 = arith.constant 1.000000e-03 : f32
      %30 = vector.broadcast %cst_20 : f32 to vector<8x1xf32>
      %31 = arith.addf %28, %30 : vector<8x1xf32>
      %32 = math.rsqrt %31 : vector<8x1xf32>
      %33 = arith.mulf %29, %32 : vector<8x1xf32>
      %c0_21 = arith.constant 0 : index
      %c0_22 = arith.constant 0 : index
      %34 = vector.load %arg7[%c0_21, %c0_22] : memref<8x1xf32, #tpu.memory_space<vmem>>, vector<8x1xf32>
      tpu.vector_store %arg7[%c0_21, %c0_22], %33 {strides = array<i32>} : memref<8x1xf32, #tpu.memory_space<vmem>>, vector<8x1xf32>,
      %c0_23 = arith.constant 0 : index
      %c0_24 = arith.constant 0 : index
      %35 = vector.load %arg5[%c0_23, %c0_24] : memref<8x1xf32, #tpu.memory_space<vmem>>, vector<8x1xf32>
      %36 = arith.mulf %21, %33 : vector<8x1xf32>
      %37 = arith.subf %35, %36 : vector<8x1xf32>
      %c0_25 = arith.constant 0 : index
      %c0_26 = arith.constant 0 : index
      %38 = vector.load %arg8[%c0_25, %c0_26] : memref<8x1xf32, #tpu.memory_space<vmem>>, vector<8x1xf32>
      tpu.vector_store %arg8[%c0_25, %c0_26], %37 {strides = array<i32>} : memref<8x1xf32, #tpu.memory_space<vmem>>, vector<8x1xf32>,
    } else {
    }
    %c1_i32_9 = arith.constant 1 : i32
    %16 = arith.cmpi eq, %arg0, %c1_i32_9 : i32
    %17 = arith.extui %16 : i1 to i32
    %c0_i32_10 = arith.constant 0 : i32
    %18 = arith.cmpi ne, %17, %c0_i32_10 : i32
    scf.if %18 {
      %c0_11 = arith.constant 0 : index
      %c0_12 = arith.constant 0 : index
      %19 = vector.load %arg7[%c0_11, %c0_12] : memref<8x1xf32, #tpu.memory_space<vmem>>, vector<8x1xf32>
      %20 = vector.broadcast %19 : vector<8x1xf32> to vector<8x512xf32>
      %21 = arith.mulf %7, %20 : vector<8x512xf32>
      %c0_13 = arith.constant 0 : index
      %c0_14 = arith.constant 0 : index
      %22 = vector.load %arg8[%c0_13, %c0_14] : memref<8x1xf32, #tpu.memory_space<vmem>>, vector<8x1xf32>
      %23 = vector.broadcast %22 : vector<8x1xf32> to vector<8x512xf32>
      %24 = arith.addf %21, %23 : vector<8x512xf32>
      %cst_15 = arith.constant 2.000000e+01 : f32
      %25 = vector.broadcast %cst_15 : f32 to vector<8x512xf32>
      %26 = arith.minimumf %24, %25 : vector<8x512xf32>
      %27 = math.exp %26 : vector<8x512xf32>
      %cst_16 = arith.constant 2.000000e+00 : f32
      %28 = vector.broadcast %cst_16 : f32 to vector<8x512xf32>
      %29 = arith.addf %27, %28 : vector<8x512xf32>
      %30 = arith.mulf %27, %29 : vector<8x512xf32>
      %cst_17 = arith.constant 2.000000e+00 : f32
      %31 = vector.broadcast %cst_17 : f32 to vector<8x512xf32>
      %32 = arith.addf %30, %31 : vector<8x512xf32>
      %33 = tpu.reciprocal %32 {approx = true} : vector<8x512xf32> -> vector<8x512xf32>
      %34 = arith.mulf %32, %33 : vector<8x512xf32>
      %cst_18 = arith.constant 2.000000e+00 : f32
      %35 = vector.broadcast %cst_18 : f32 to vector<8x512xf32>
      %36 = arith.subf %35, %34 : vector<8x512xf32>
      %37 = arith.mulf %33, %36 : vector<8x512xf32>
      %38 = arith.mulf %24, %30 : vector<8x512xf32>
      %39 = arith.mulf %38, %37 : vector<8x512xf32>
      %40 = arith.truncf %39 : vector<8x512xf32> to vector<8x512xbf16>
      %c0_19 = arith.constant 0 : index
      %c0_20 = arith.constant 0 : index
      %41 = vector.load %arg6[%c0_19, %c0_20] : memref<8x512xbf16, #tpu.memory_space<vmem>>, vector<8x512xbf16>
      tpu.vector_store %arg6[%c0_19, %c0_20], %40 {strides = array<i32>} : memref<8x512xbf16, #tpu.memory_space<vmem>>, vector<8x512xbf16>,
    } else {
    }
    return
  }
  func.func @transform_0(%arg0: i32, %arg1: i32) -> (i32, i32) {
    %c0_i32 = arith.constant 0 : i32
    %c0_i32_0 = arith.constant 0 : i32
    return %c0_i32, %arg1 : i32, i32
  }
  func.func @transform_1(%arg0: i32, %arg1: i32) -> (i32, i32) {
    %c0_i32 = arith.constant 0 : i32
    %c0_i32_0 = arith.constant 0 : i32
    %c0_i32_1 = arith.constant 0 : i32
    return %c0_i32, %c0_i32_0 : i32, i32
  }
  func.func @transform_2(%arg0: i32, %arg1: i32) -> (i32, i32) {
    %c0_i32 = arith.constant 0 : i32
    %c0_i32_0 = arith.constant 0 : i32
    %c0_i32_1 = arith.constant 0 : i32
    return %c0_i32, %c0_i32_0 : i32, i32
  }
  func.func @transform_3(%arg0: i32, %arg1: i32) -> (i32, i32) {
    %c0_i32 = arith.constant 0 : i32
    %c0_i32_0 = arith.constant 0 : i32
    %c0_i32_1 = arith.constant 0 : i32
    return %c0_i32, %c0_i32_0 : i32, i32
  }
  func.func @transform_4(%arg0: i32, %arg1: i32) -> (i32, i32) {
    %0 = arith.muli %arg1, %arg0 : i32
    %c0_i32 = arith.constant 0 : i32
    %c0_i32_0 = arith.constant 0 : i32
    return %c0_i32, %0 : i32, i32
  }
}

module attributes {stable_mosaic.version = 11 : i64} {
  func.func @kernel(%arg0: i32, %arg1: i32, %arg2: memref<8x512xbf16, #tpu.memory_space<vmem>>, %arg3: memref<8x8xbf16, #tpu.memory_space<vmem>>, %arg4: memref<8x1xf32, #tpu.memory_space<vmem>>, %arg5: memref<8x1xf32, #tpu.memory_space<vmem>>, %arg6: memref<8x512xbf16, #tpu.memory_space<vmem>>, %arg7: memref<8x1xf32, #tpu.memory_space<vmem>>, %arg8: memref<8x1xf32, #tpu.memory_space<vmem>>) attributes {dimension_semantics = [#tpu.dimension_semantics<arbitrary>, #tpu.dimension_semantics<arbitrary>], iteration_bounds = array<i64: 2, 1>, scalar_prefetch = 0 : i64, scratch_operands = 2 : i64, tpu.core_type = #tpu.core_type<tc>, window_params = [{transform_indices = @transform_0, window_bounds = array<i64: 8, 512>}, {pipeline_mode = #tpu.pipeline_mode<synchronous>, transform_indices = @transform_1, window_bounds = array<i64: 8, 8>}, {pipeline_mode = #tpu.pipeline_mode<synchronous>, transform_indices = @transform_2, window_bounds = array<i64: 8, 1>}, {pipeline_mode = #tpu.pipeline_mode<synchronous>, transform_indices = @transform_3, window_bounds = array<i64: 8, 1>}, {transform_indices = @transform_4, window_bounds = array<i64: 8, 512>}]} {
    %c0_i32 = arith.constant 0 : i32
    %0 = arith.cmpi eq, %arg0, %c0_i32 : i32
    %c0_i32_0 = arith.constant 0 : i32
    %1 = arith.cmpi eq, %arg1, %c0_i32_0 : i32
    %2 = arith.andi %0, %1 : i1
    %3 = arith.extui %2 : i1 to i32
    %c0_i32_1 = arith.constant 0 : i32
    %4 = arith.cmpi ne, %3, %c0_i32_1 : i32
    scf.if %4 {
      %cst_11 = arith.constant 0.000000e+00 : f32
      %19 = vector.broadcast %cst_11 : f32 to vector<8x1xf32>
      %c0_12 = arith.constant 0 : index
      %c0_13 = arith.constant 0 : index
      %20 = vector.load %arg7[%c0_12, %c0_13] : memref<8x1xf32, #tpu.memory_space<vmem>>, vector<8x1xf32>
      tpu.vector_store %arg7[%c0_12, %c0_13], %19 {strides = array<i32>} : memref<8x1xf32, #tpu.memory_space<vmem>>, vector<8x1xf32>,
      %cst_14 = arith.constant 0.000000e+00 : f32
      %21 = vector.broadcast %cst_14 : f32 to vector<8x1xf32>
      %c0_15 = arith.constant 0 : index
      %c0_16 = arith.constant 0 : index
      %22 = vector.load %arg8[%c0_15, %c0_16] : memref<8x1xf32, #tpu.memory_space<vmem>>, vector<8x1xf32>
      tpu.vector_store %arg8[%c0_15, %c0_16], %21 {strides = array<i32>} : memref<8x1xf32, #tpu.memory_space<vmem>>, vector<8x1xf32>,
    } else {
    }
    %c0 = arith.constant 0 : index
    %c0_2 = arith.constant 0 : index
    %5 = vector.load %arg3[%c0, %c0_2] : memref<8x8xbf16, #tpu.memory_space<vmem>>, vector<8x8xbf16>
    %c0_3 = arith.constant 0 : index
    %c0_4 = arith.constant 0 : index
    %6 = vector.load %arg2[%c0_3, %c0_4] : memref<8x512xbf16, #tpu.memory_space<vmem>>, vector<8x512xbf16>
    %cst = arith.constant dense<0.000000e+00> : vector<8x512xf32>
    %7 = tpu.matmul %5, %6, %cst {dimension_numbers = #tpu.dot_dimension_numbers<[1], [0], [0], [1], [0, 0, 1, 1], [], []>} : vector<8x8xbf16>, vector<8x512xbf16>, vector<8x512xf32> -> vector<8x512xf32>
    %c0_i32_5 = arith.constant 0 : i32
    %8 = arith.cmpi eq, %arg0, %c0_i32_5 : i32
    %9 = arith.extui %8 : i1 to i32
    %c0_i32_6 = arith.constant 0 : i32
    %10 = arith.cmpi ne, %9, %c0_i32_6 : i32
    scf.if %10 {
      %c0_11 = arith.constant 0 : index
      %c0_12 = arith.constant 0 : index
      %19 = vector.load %arg7[%c0_11, %c0_12] : memref<8x1xf32, #tpu.memory_space<vmem>>, vector<8x1xf32>
      %cst_13 = arith.constant dense<0.000000e+00> : vector<8xf32>
      %20 = vector.multi_reduction <add>, %7, %cst_13 [1] : vector<8x512xf32> to vector<8xf32>
      %21 = vector.shape_cast %20 : vector<8xf32> to vector<8x1xf32>
      %22 = arith.addf %19, %21 : vector<8x1xf32>
      %c0_14 = arith.constant 0 : index
      %c0_15 = arith.constant 0 : index
      %23 = vector.load %arg7[%c0_14, %c0_15] : memref<8x1xf32, #tpu.memory_space<vmem>>, vector<8x1xf32>
      tpu.vector_store %arg7[%c0_14, %c0_15], %22 {strides = array<i32>} : memref<8x1xf32, #tpu.memory_space<vmem>>, vector<8x1xf32>,
      %c0_16 = arith.constant 0 : index
      %c0_17 = arith.constant 0 : index
      %24 = vector.load %arg8[%c0_16, %c0_17] : memref<8x1xf32, #tpu.memory_space<vmem>>, vector<8x1xf32>
      %25 = arith.mulf %7, %7 : vector<8x512xf32>
      %cst_18 = arith.constant dense<0.000000e+00> : vector<8xf32>
      %26 = vector.multi_reduction <add>, %25, %cst_18 [1] : vector<8x512xf32> to vector<8xf32>
      %27 = vector.shape_cast %26 : vector<8xf32> to vector<8x1xf32>
      %28 = arith.addf %24, %27 : vector<8x1xf32>
      %c0_19 = arith.constant 0 : index
      %c0_20 = arith.constant 0 : index
      %29 = vector.load %arg8[%c0_19, %c0_20] : memref<8x1xf32, #tpu.memory_space<vmem>>, vector<8x1xf32>
      tpu.vector_store %arg8[%c0_19, %c0_20], %28 {strides = array<i32>} : memref<8x1xf32, #tpu.memory_space<vmem>>, vector<8x1xf32>,
    } else {
    }
    %c1_i32 = arith.constant 1 : i32
    %11 = arith.cmpi eq, %arg0, %c1_i32 : i32
    %c0_i32_7 = arith.constant 0 : i32
    %12 = arith.cmpi eq, %arg1, %c0_i32_7 : i32
    %13 = arith.andi %11, %12 : i1
    %14 = arith.extui %13 : i1 to i32
    %c0_i32_8 = arith.constant 0 : i32
    %15 = arith.cmpi ne, %14, %c0_i32_8 : i32
    scf.if %15 {
      %c0_11 = arith.constant 0 : index
      %c0_12 = arith.constant 0 : index
      %19 = vector.load %arg7[%c0_11, %c0_12] : memref<8x1xf32, #tpu.memory_space<vmem>>, vector<8x1xf32>
      %cst_13 = arith.constant 0.001953125 : f32
      %20 = vector.broadcast %cst_13 : f32 to vector<8x1xf32>
      %21 = arith.mulf %19, %20 : vector<8x1xf32>
      %c0_14 = arith.constant 0 : index
      %c0_15 = arith.constant 0 : index
      %22 = vector.load %arg8[%c0_14, %c0_15] : memref<8x1xf32, #tpu.memory_space<vmem>>, vector<8x1xf32>
      %cst_16 = arith.constant 0.001953125 : f32
      %23 = vector.broadcast %cst_16 : f32 to vector<8x1xf32>
      %24 = arith.mulf %22, %23 : vector<8x1xf32>
      %25 = arith.mulf %21, %21 : vector<8x1xf32>
      %26 = arith.subf %24, %25 : vector<8x1xf32>
      %cst_17 = arith.constant 0.000000e+00 : f32
      %27 = vector.broadcast %cst_17 : f32 to vector<8x1xf32>
      %28 = arith.maximumf %26, %27 : vector<8x1xf32>
      %c0_18 = arith.constant 0 : index
      %c0_19 = arith.constant 0 : index
      %29 = vector.load %arg4[%c0_18, %c0_19] : memref<8x1xf32, #tpu.memory_space<vmem>>, vector<8x1xf32>
      %cst_20 = arith.constant 9.99999974E-6 : f32
      %30 = vector.broadcast %cst_20 : f32 to vector<8x1xf32>
      %31 = arith.addf %28, %30 : vector<8x1xf32>
      %32 = math.rsqrt %31 : vector<8x1xf32>
      %33 = arith.mulf %29, %32 : vector<8x1xf32>
      %c0_21 = arith.constant 0 : index
      %c0_22 = arith.constant 0 : index
      %34 = vector.load %arg7[%c0_21, %c0_22] : memref<8x1xf32, #tpu.memory_space<vmem>>, vector<8x1xf32>
      tpu.vector_store %arg7[%c0_21, %c0_22], %33 {strides = array<i32>} : memref<8x1xf32, #tpu.memory_space<vmem>>, vector<8x1xf32>,
      %c0_23 = arith.constant 0 : index
      %c0_24 = arith.constant 0 : index
      %35 = vector.load %arg5[%c0_23, %c0_24] : memref<8x1xf32, #tpu.memory_space<vmem>>, vector<8x1xf32>
      %36 = arith.mulf %21, %33 : vector<8x1xf32>
      %37 = arith.subf %35, %36 : vector<8x1xf32>
      %c0_25 = arith.constant 0 : index
      %c0_26 = arith.constant 0 : index
      %38 = vector.load %arg8[%c0_25, %c0_26] : memref<8x1xf32, #tpu.memory_space<vmem>>, vector<8x1xf32>
      tpu.vector_store %arg8[%c0_25, %c0_26], %37 {strides = array<i32>} : memref<8x1xf32, #tpu.memory_space<vmem>>, vector<8x1xf32>,
    } else {
    }
    %c1_i32_9 = arith.constant 1 : i32
    %16 = arith.cmpi eq, %arg0, %c1_i32_9 : i32
    %17 = arith.extui %16 : i1 to i32
    %c0_i32_10 = arith.constant 0 : i32
    %18 = arith.cmpi ne, %17, %c0_i32_10 : i32
    scf.if %18 {
      %c0_11 = arith.constant 0 : index
      %c0_12 = arith.constant 0 : index
      %19 = vector.load %arg7[%c0_11, %c0_12] : memref<8x1xf32, #tpu.memory_space<vmem>>, vector<8x1xf32>
      %20 = vector.broadcast %19 : vector<8x1xf32> to vector<8x512xf32>
      %21 = arith.mulf %7, %20 : vector<8x512xf32>
      %c0_13 = arith.constant 0 : index
      %c0_14 = arith.constant 0 : index
      %22 = vector.load %arg8[%c0_13, %c0_14] : memref<8x1xf32, #tpu.memory_space<vmem>>, vector<8x1xf32>
      %23 = vector.broadcast %22 : vector<8x1xf32> to vector<8x512xf32>
      %24 = arith.addf %21, %23 : vector<8x512xf32>
      %cst_15 = arith.constant 2.000000e+01 : f32
      %25 = vector.broadcast %cst_15 : f32 to vector<8x512xf32>
      %26 = arith.minimumf %24, %25 : vector<8x512xf32>
      %27 = math.exp %26 : vector<8x512xf32>
      %cst_16 = arith.constant 2.000000e+00 : f32
      %28 = vector.broadcast %cst_16 : f32 to vector<8x512xf32>
      %29 = arith.addf %27, %28 : vector<8x512xf32>
      %30 = arith.mulf %27, %29 : vector<8x512xf32>
      %cst_17 = arith.constant 2.000000e+00 : f32
      %31 = vector.broadcast %cst_17 : f32 to vector<8x512xf32>
      %32 = arith.addf %30, %31 : vector<8x512xf32>
      %33 = tpu.reciprocal %32 {approx = true} : vector<8x512xf32> -> vector<8x512xf32>
      %34 = arith.mulf %32, %33 : vector<8x512xf32>
      %cst_18 = arith.constant 2.000000e+00 : f32
      %35 = vector.broadcast %cst_18 : f32 to vector<8x512xf32>
      %36 = arith.subf %35, %34 : vector<8x512xf32>
      %37 = arith.mulf %33, %36 : vector<8x512xf32>
      %38 = arith.mulf %24, %30 : vector<8x512xf32>
      %39 = arith.mulf %38, %37 : vector<8x512xf32>
      %40 = arith.truncf %39 : vector<8x512xf32> to vector<8x512xbf16>
      %c0_19 = arith.constant 0 : index
      %c0_20 = arith.constant 0 : index
      %41 = vector.load %arg6[%c0_19, %c0_20] : memref<8x512xbf16, #tpu.memory_space<vmem>>, vector<8x512xbf16>
      tpu.vector_store %arg6[%c0_19, %c0_20], %40 {strides = array<i32>} : memref<8x512xbf16, #tpu.memory_space<vmem>>, vector<8x512xbf16>,
    } else {
    }
    return
  }
  func.func @transform_0(%arg0: i32, %arg1: i32) -> (i32, i32) {
    %c0_i32 = arith.constant 0 : i32
    %c0_i32_0 = arith.constant 0 : i32
    return %c0_i32, %arg1 : i32, i32
  }
  func.func @transform_1(%arg0: i32, %arg1: i32) -> (i32, i32) {
    %c0_i32 = arith.constant 0 : i32
    %c0_i32_0 = arith.constant 0 : i32
    %c0_i32_1 = arith.constant 0 : i32
    return %c0_i32, %c0_i32_0 : i32, i32
  }
  func.func @transform_2(%arg0: i32, %arg1: i32) -> (i32, i32) {
    %c0_i32 = arith.constant 0 : i32
    %c0_i32_0 = arith.constant 0 : i32
    %c0_i32_1 = arith.constant 0 : i32
    return %c0_i32, %c0_i32_0 : i32, i32
  }
  func.func @transform_3(%arg0: i32, %arg1: i32) -> (i32, i32) {
    %c0_i32 = arith.constant 0 : i32
    %c0_i32_0 = arith.constant 0 : i32
    %c0_i32_1 = arith.constant 0 : i32
    return %c0_i32, %c0_i32_0 : i32, i32
  }
  func.func @transform_4(%arg0: i32, %arg1: i32) -> (i32, i32) {
    %0 = arith.muli %arg1, %arg0 : i32
    %c0_i32 = arith.constant 0 : i32
    %c0_i32_0 = arith.constant 0 : i32
    return %c0_i32, %0 : i32, i32
  }
}

module attributes {stable_mosaic.version = 11 : i64} {
  func.func @_conv3x3_fused_kernel(%arg0: i32, %arg1: i32, %arg2: memref<8x768xbf16, #tpu.memory_space<vmem>>, %arg3: memref<8x128xbf16, #tpu.memory_space<vmem>>, %arg4: memref<8x72xbf16, #tpu.memory_space<vmem>>, %arg5: memref<1x768xf32, #tpu.memory_space<vmem>>, %arg6: memref<8x1xf32, #tpu.memory_space<vmem>>, %arg7: memref<8x1xf32, #tpu.memory_space<vmem>>, %arg8: memref<8x768xbf16, #tpu.memory_space<vmem>>, %arg9: memref<8x1xf32, #tpu.memory_space<vmem>>, %arg10: memref<8x1xf32, #tpu.memory_space<vmem>>, %arg11: memref<72x768xbf16, #tpu.memory_space<vmem>>) attributes {dimension_semantics = [#tpu.dimension_semantics<arbitrary>, #tpu.dimension_semantics<arbitrary>], iteration_bounds = array<i64: 2, 1>, scalar_prefetch = 0 : i64, scratch_operands = 3 : i64, tpu.core_type = #tpu.core_type<tc>, window_params = [{transform_indices = @transform_0, window_bounds = array<i64: 8, 768>}, {transform_indices = @transform_1, window_bounds = array<i64: 8, 128>}, {pipeline_mode = #tpu.pipeline_mode<synchronous>, transform_indices = @transform_2, window_bounds = array<i64: 8, 72>}, {transform_indices = @transform_3, window_bounds = array<i64: 1, 768>}, {pipeline_mode = #tpu.pipeline_mode<synchronous>, transform_indices = @transform_4, window_bounds = array<i64: 8, 1>}, {pipeline_mode = #tpu.pipeline_mode<synchronous>, transform_indices = @transform_5, window_bounds = array<i64: 8, 1>}, {transform_indices = @transform_6, window_bounds = array<i64: 8, 768>}]} {
    %c0_i32 = arith.constant 0 : i32
    %0 = arith.cmpi eq, %arg0, %c0_i32 : i32
    %c0_i32_0 = arith.constant 0 : i32
    %1 = arith.cmpi eq, %arg1, %c0_i32_0 : i32
    %2 = arith.andi %0, %1 : i1
    %3 = arith.extui %2 : i1 to i32
    %c0_i32_1 = arith.constant 0 : i32
    %4 = arith.cmpi ne, %3, %c0_i32_1 : i32
    scf.if %4 {
      %cst_55 = arith.constant 0.000000e+00 : f32
      %53 = vector.broadcast %cst_55 : f32 to vector<8x1xf32>
      %c0_56 = arith.constant 0 : index
      %c0_57 = arith.constant 0 : index
      %54 = vector.load %arg9[%c0_56, %c0_57] : memref<8x1xf32, #tpu.memory_space<vmem>>, vector<8x1xf32>
      tpu.vector_store %arg9[%c0_56, %c0_57], %53 {strides = array<i32>} : memref<8x1xf32, #tpu.memory_space<vmem>>, vector<8x1xf32>,
      %cst_58 = arith.constant 0.000000e+00 : f32
      %55 = vector.broadcast %cst_58 : f32 to vector<8x1xf32>
      %c0_59 = arith.constant 0 : index
      %c0_60 = arith.constant 0 : index
      %56 = vector.load %arg10[%c0_59, %c0_60] : memref<8x1xf32, #tpu.memory_space<vmem>>, vector<8x1xf32>
      tpu.vector_store %arg10[%c0_59, %c0_60], %55 {strides = array<i32>} : memref<8x1xf32, #tpu.memory_space<vmem>>, vector<8x1xf32>,
    } else {
    }
    %c0 = arith.constant 0 : index
    %c0_2 = arith.constant 0 : index
    %5 = vector.load %arg2[%c0, %c0_2] : memref<8x768xbf16, #tpu.memory_space<vmem>>, vector<8x768xbf16>
    %c0_3 = arith.constant 0 : index
    %c0_4 = arith.constant 0 : index
    %6 = vector.load %arg11[%c0_3, %c0_4] : memref<72x768xbf16, #tpu.memory_space<vmem>>, vector<8x768xbf16>
    tpu.vector_store %arg11[%c0_3, %c0_4], %5 {strides = array<i32>} : memref<72x768xbf16, #tpu.memory_space<vmem>>, vector<8x768xbf16>,
    %c0_5 = arith.constant 0 : index
    %c1 = arith.constant 1 : index
    %7 = vector.load %arg2[%c0_5, %c1] : memref<8x768xbf16, #tpu.memory_space<vmem>>, vector<8x767xbf16>
    %c8 = arith.constant 8 : index
    %c0_6 = arith.constant 0 : index
    %8 = vector.load %arg11[%c8, %c0_6] : memref<72x768xbf16, #tpu.memory_space<vmem>>, vector<8x767xbf16>
    tpu.vector_store %arg11[%c8, %c0_6], %7 {strides = array<i32>} : memref<72x768xbf16, #tpu.memory_space<vmem>>, vector<8x767xbf16>,
    %c0_7 = arith.constant 0 : index
    %c0_8 = arith.constant 0 : index
    %9 = vector.load %arg3[%c0_7, %c0_8] : memref<8x128xbf16, #tpu.memory_space<vmem>>, vector<8x1xbf16>
    %c8_9 = arith.constant 8 : index
    %c767 = arith.constant 767 : index
    %10 = vector.load %arg11[%c8_9, %c767] : memref<72x768xbf16, #tpu.memory_space<vmem>>, vector<8x1xbf16>
    tpu.vector_store %arg11[%c8_9, %c767], %9 {strides = array<i32>} : memref<72x768xbf16, #tpu.memory_space<vmem>>, vector<8x1xbf16>,
    %c0_10 = arith.constant 0 : index
    %c2 = arith.constant 2 : index
    %11 = vector.load %arg2[%c0_10, %c2] : memref<8x768xbf16, #tpu.memory_space<vmem>>, vector<8x766xbf16>
    %c16 = arith.constant 16 : index
    %c0_11 = arith.constant 0 : index
    %12 = vector.load %arg11[%c16, %c0_11] : memref<72x768xbf16, #tpu.memory_space<vmem>>, vector<8x766xbf16>
    tpu.vector_store %arg11[%c16, %c0_11], %11 {strides = array<i32>} : memref<72x768xbf16, #tpu.memory_space<vmem>>, vector<8x766xbf16>,
    %c0_12 = arith.constant 0 : index
    %c0_13 = arith.constant 0 : index
    %13 = vector.load %arg3[%c0_12, %c0_13] : memref<8x128xbf16, #tpu.memory_space<vmem>>, vector<8x2xbf16>
    %c16_14 = arith.constant 16 : index
    %c766 = arith.constant 766 : index
    %14 = vector.load %arg11[%c16_14, %c766] : memref<72x768xbf16, #tpu.memory_space<vmem>>, vector<8x2xbf16>
    tpu.vector_store %arg11[%c16_14, %c766], %13 {strides = array<i32>} : memref<72x768xbf16, #tpu.memory_space<vmem>>, vector<8x2xbf16>,
    %c0_15 = arith.constant 0 : index
    %c18 = arith.constant 18 : index
    %15 = vector.load %arg2[%c0_15, %c18] : memref<8x768xbf16, #tpu.memory_space<vmem>>, vector<8x750xbf16>
    %c24 = arith.constant 24 : index
    %c0_16 = arith.constant 0 : index
    %16 = vector.load %arg11[%c24, %c0_16] : memref<72x768xbf16, #tpu.memory_space<vmem>>, vector<8x750xbf16>
    tpu.vector_store %arg11[%c24, %c0_16], %15 {strides = array<i32>} : memref<72x768xbf16, #tpu.memory_space<vmem>>, vector<8x750xbf16>,
    %c0_17 = arith.constant 0 : index
    %c0_18 = arith.constant 0 : index
    %17 = vector.load %arg3[%c0_17, %c0_18] : memref<8x128xbf16, #tpu.memory_space<vmem>>, vector<8x18xbf16>
    %c24_19 = arith.constant 24 : index
    %c750 = arith.constant 750 : index
    %18 = vector.load %arg11[%c24_19, %c750] : memref<72x768xbf16, #tpu.memory_space<vmem>>, vector<8x18xbf16>
    tpu.vector_store %arg11[%c24_19, %c750], %17 {strides = array<i32>} : memref<72x768xbf16, #tpu.memory_space<vmem>>, vector<8x18xbf16>,
    %c0_20 = arith.constant 0 : index
    %c19 = arith.constant 19 : index
    %19 = vector.load %arg2[%c0_20, %c19] : memref<8x768xbf16, #tpu.memory_space<vmem>>, vector<8x749xbf16>
    %c32 = arith.constant 32 : index
    %c0_21 = arith.constant 0 : index
    %20 = vector.load %arg11[%c32, %c0_21] : memref<72x768xbf16, #tpu.memory_space<vmem>>, vector<8x749xbf16>
    tpu.vector_store %arg11[%c32, %c0_21], %19 {strides = array<i32>} : memref<72x768xbf16, #tpu.memory_space<vmem>>, vector<8x749xbf16>,
    %c0_22 = arith.constant 0 : index
    %c0_23 = arith.constant 0 : index
    %21 = vector.load %arg3[%c0_22, %c0_23] : memref<8x128xbf16, #tpu.memory_space<vmem>>, vector<8x19xbf16>
    %c32_24 = arith.constant 32 : index
    %c749 = arith.constant 749 : index
    %22 = vector.load %arg11[%c32_24, %c749] : memref<72x768xbf16, #tpu.memory_space<vmem>>, vector<8x19xbf16>
    tpu.vector_store %arg11[%c32_24, %c749], %21 {strides = array<i32>} : memref<72x768xbf16, #tpu.memory_space<vmem>>, vector<8x19xbf16>,
    %c0_25 = arith.constant 0 : index
    %c20 = arith.constant 20 : index
    %23 = vector.load %arg2[%c0_25, %c20] : memref<8x768xbf16, #tpu.memory_space<vmem>>, vector<8x748xbf16>
    %c40 = arith.constant 40 : index
    %c0_26 = arith.constant 0 : index
    %24 = vector.load %arg11[%c40, %c0_26] : memref<72x768xbf16, #tpu.memory_space<vmem>>, vector<8x748xbf16>
    tpu.vector_store %arg11[%c40, %c0_26], %23 {strides = array<i32>} : memref<72x768xbf16, #tpu.memory_space<vmem>>, vector<8x748xbf16>,
    %c0_27 = arith.constant 0 : index
    %c0_28 = arith.constant 0 : index
    %25 = vector.load %arg3[%c0_27, %c0_28] : memref<8x128xbf16, #tpu.memory_space<vmem>>, vector<8x20xbf16>
    %c40_29 = arith.constant 40 : index
    %c748 = arith.constant 748 : index
    %26 = vector.load %arg11[%c40_29, %c748] : memref<72x768xbf16, #tpu.memory_space<vmem>>, vector<8x20xbf16>
    tpu.vector_store %arg11[%c40_29, %c748], %25 {strides = array<i32>} : memref<72x768xbf16, #tpu.memory_space<vmem>>, vector<8x20xbf16>,
    %c0_30 = arith.constant 0 : index
    %c36 = arith.constant 36 : index
    %27 = vector.load %arg2[%c0_30, %c36] : memref<8x768xbf16, #tpu.memory_space<vmem>>, vector<8x732xbf16>
    %c48 = arith.constant 48 : index
    %c0_31 = arith.constant 0 : index
    %28 = vector.load %arg11[%c48, %c0_31] : memref<72x768xbf16, #tpu.memory_space<vmem>>, vector<8x732xbf16>
    tpu.vector_store %arg11[%c48, %c0_31], %27 {strides = array<i32>} : memref<72x768xbf16, #tpu.memory_space<vmem>>, vector<8x732xbf16>,
    %c0_32 = arith.constant 0 : index
    %c0_33 = arith.constant 0 : index
    %29 = vector.load %arg3[%c0_32, %c0_33] : memref<8x128xbf16, #tpu.memory_space<vmem>>, vector<8x36xbf16>
    %c48_34 = arith.constant 48 : index
    %c732 = arith.constant 732 : index
    %30 = vector.load %arg11[%c48_34, %c732] : memref<72x768xbf16, #tpu.memory_space<vmem>>, vector<8x36xbf16>
    tpu.vector_store %arg11[%c48_34, %c732], %29 {strides = array<i32>} : memref<72x768xbf16, #tpu.memory_space<vmem>>, vector<8x36xbf16>,
    %c0_35 = arith.constant 0 : index
    %c37 = arith.constant 37 : index
    %31 = vector.load %arg2[%c0_35, %c37] : memref<8x768xbf16, #tpu.memory_space<vmem>>, vector<8x731xbf16>
    %c56 = arith.constant 56 : index
    %c0_36 = arith.constant 0 : index
    %32 = vector.load %arg11[%c56, %c0_36] : memref<72x768xbf16, #tpu.memory_space<vmem>>, vector<8x731xbf16>
    tpu.vector_store %arg11[%c56, %c0_36], %31 {strides = array<i32>} : memref<72x768xbf16, #tpu.memory_space<vmem>>, vector<8x731xbf16>,
    %c0_37 = arith.constant 0 : index
    %c0_38 = arith.constant 0 : index
    %33 = vector.load %arg3[%c0_37, %c0_38] : memref<8x128xbf16, #tpu.memory_space<vmem>>, vector<8x37xbf16>
    %c56_39 = arith.constant 56 : index
    %c731 = arith.constant 731 : index
    %34 = vector.load %arg11[%c56_39, %c731] : memref<72x768xbf16, #tpu.memory_space<vmem>>, vector<8x37xbf16>
    tpu.vector_store %arg11[%c56_39, %c731], %33 {strides = array<i32>} : memref<72x768xbf16, #tpu.memory_space<vmem>>, vector<8x37xbf16>,
    %c0_40 = arith.constant 0 : index
    %c38 = arith.constant 38 : index
    %35 = vector.load %arg2[%c0_40, %c38] : memref<8x768xbf16, #tpu.memory_space<vmem>>, vector<8x730xbf16>
    %c64 = arith.constant 64 : index
    %c0_41 = arith.constant 0 : index
    %36 = vector.load %arg11[%c64, %c0_41] : memref<72x768xbf16, #tpu.memory_space<vmem>>, vector<8x730xbf16>
    tpu.vector_store %arg11[%c64, %c0_41], %35 {strides = array<i32>} : memref<72x768xbf16, #tpu.memory_space<vmem>>, vector<8x730xbf16>,
    %c0_42 = arith.constant 0 : index
    %c0_43 = arith.constant 0 : index
    %37 = vector.load %arg3[%c0_42, %c0_43] : memref<8x128xbf16, #tpu.memory_space<vmem>>, vector<8x38xbf16>
    %c64_44 = arith.constant 64 : index
    %c730 = arith.constant 730 : index
    %38 = vector.load %arg11[%c64_44, %c730] : memref<72x768xbf16, #tpu.memory_space<vmem>>, vector<8x38xbf16>
    tpu.vector_store %arg11[%c64_44, %c730], %37 {strides = array<i32>} : memref<72x768xbf16, #tpu.memory_space<vmem>>, vector<8x38xbf16>,
    %c0_45 = arith.constant 0 : index
    %c0_46 = arith.constant 0 : index
    %39 = vector.load %arg4[%c0_45, %c0_46] : memref<8x72xbf16, #tpu.memory_space<vmem>>, vector<8x72xbf16>
    %c0_47 = arith.constant 0 : index
    %c0_48 = arith.constant 0 : index
    %40 = vector.load %arg11[%c0_47, %c0_48] : memref<72x768xbf16, #tpu.memory_space<vmem>>, vector<72x768xbf16>
    %cst = arith.constant dense<0.000000e+00> : vector<8x768xf32>
    %41 = tpu.matmul %39, %40, %cst {dimension_numbers = #tpu.dot_dimension_numbers<[1], [0], [0], [1], [0, 0, 1, 1], [], []>} : vector<8x72xbf16>, vector<72x768xbf16>, vector<8x768xf32> -> vector<8x768xf32>
    %c0_i32_49 = arith.constant 0 : i32
    %42 = arith.cmpi eq, %arg0, %c0_i32_49 : i32
    %43 = arith.extui %42 : i1 to i32
    %c0_i32_50 = arith.constant 0 : i32
    %44 = arith.cmpi ne, %43, %c0_i32_50 : i32
    scf.if %44 {
      %c0_55 = arith.constant 0 : index
      %c0_56 = arith.constant 0 : index
      %53 = vector.load %arg5[%c0_55, %c0_56] : memref<1x768xf32, #tpu.memory_space<vmem>>, vector<1x768xf32>
      %54 = vector.broadcast %53 : vector<1x768xf32> to vector<8x768xf32>
      %55 = arith.mulf %41, %54 : vector<8x768xf32>
      %c0_57 = arith.constant 0 : index
      %c0_58 = arith.constant 0 : index
      %56 = vector.load %arg9[%c0_57, %c0_58] : memref<8x1xf32, #tpu.memory_space<vmem>>, vector<8x1xf32>
      %cst_59 = arith.constant dense<0.000000e+00> : vector<8xf32>
      %57 = vector.multi_reduction <add>, %55, %cst_59 [1] : vector<8x768xf32> to vector<8xf32>
      %58 = vector.shape_cast %57 : vector<8xf32> to vector<8x1xf32>
      %59 = arith.addf %56, %58 : vector<8x1xf32>
      %c0_60 = arith.constant 0 : index
      %c0_61 = arith.constant 0 : index
      %60 = vector.load %arg9[%c0_60, %c0_61] : memref<8x1xf32, #tpu.memory_space<vmem>>, vector<8x1xf32>
      tpu.vector_store %arg9[%c0_60, %c0_61], %59 {strides = array<i32>} : memref<8x1xf32, #tpu.memory_space<vmem>>, vector<8x1xf32>,
      %c0_62 = arith.constant 0 : index
      %c0_63 = arith.constant 0 : index
      %61 = vector.load %arg10[%c0_62, %c0_63] : memref<8x1xf32, #tpu.memory_space<vmem>>, vector<8x1xf32>
      %62 = arith.mulf %55, %41 : vector<8x768xf32>
      %cst_64 = arith.constant dense<0.000000e+00> : vector<8xf32>
      %63 = vector.multi_reduction <add>, %62, %cst_64 [1] : vector<8x768xf32> to vector<8xf32>
      %64 = vector.shape_cast %63 : vector<8xf32> to vector<8x1xf32>
      %65 = arith.addf %61, %64 : vector<8x1xf32>
      %c0_65 = arith.constant 0 : index
      %c0_66 = arith.constant 0 : index
      %66 = vector.load %arg10[%c0_65, %c0_66] : memref<8x1xf32, #tpu.memory_space<vmem>>, vector<8x1xf32>
      tpu.vector_store %arg10[%c0_65, %c0_66], %65 {strides = array<i32>} : memref<8x1xf32, #tpu.memory_space<vmem>>, vector<8x1xf32>,
    } else {
    }
    %c1_i32 = arith.constant 1 : i32
    %45 = arith.cmpi eq, %arg0, %c1_i32 : i32
    %c0_i32_51 = arith.constant 0 : i32
    %46 = arith.cmpi eq, %arg1, %c0_i32_51 : i32
    %47 = arith.andi %45, %46 : i1
    %48 = arith.extui %47 : i1 to i32
    %c0_i32_52 = arith.constant 0 : i32
    %49 = arith.cmpi ne, %48, %c0_i32_52 : i32
    scf.if %49 {
      %c0_55 = arith.constant 0 : index
      %c0_56 = arith.constant 0 : index
      %53 = vector.load %arg9[%c0_55, %c0_56] : memref<8x1xf32, #tpu.memory_space<vmem>>, vector<8x1xf32>
      %cst_57 = arith.constant 0.001953125 : f32
      %54 = vector.broadcast %cst_57 : f32 to vector<8x1xf32>
      %55 = arith.mulf %53, %54 : vector<8x1xf32>
      %c0_58 = arith.constant 0 : index
      %c0_59 = arith.constant 0 : index
      %56 = vector.load %arg10[%c0_58, %c0_59] : memref<8x1xf32, #tpu.memory_space<vmem>>, vector<8x1xf32>
      %cst_60 = arith.constant 0.001953125 : f32
      %57 = vector.broadcast %cst_60 : f32 to vector<8x1xf32>
      %58 = arith.mulf %56, %57 : vector<8x1xf32>
      %59 = arith.mulf %55, %55 : vector<8x1xf32>
      %60 = arith.subf %58, %59 : vector<8x1xf32>
      %cst_61 = arith.constant 0.000000e+00 : f32
      %61 = vector.broadcast %cst_61 : f32 to vector<8x1xf32>
      %62 = arith.maximumf %60, %61 : vector<8x1xf32>
      %c0_62 = arith.constant 0 : index
      %c0_63 = arith.constant 0 : index
      %63 = vector.load %arg6[%c0_62, %c0_63] : memref<8x1xf32, #tpu.memory_space<vmem>>, vector<8x1xf32>
      %cst_64 = arith.constant 9.99999974E-6 : f32
      %64 = vector.broadcast %cst_64 : f32 to vector<8x1xf32>
      %65 = arith.addf %62, %64 : vector<8x1xf32>
      %66 = math.rsqrt %65 : vector<8x1xf32>
      %67 = arith.mulf %63, %66 : vector<8x1xf32>
      %c0_65 = arith.constant 0 : index
      %c0_66 = arith.constant 0 : index
      %68 = vector.load %arg9[%c0_65, %c0_66] : memref<8x1xf32, #tpu.memory_space<vmem>>, vector<8x1xf32>
      tpu.vector_store %arg9[%c0_65, %c0_66], %67 {strides = array<i32>} : memref<8x1xf32, #tpu.memory_space<vmem>>, vector<8x1xf32>,
      %c0_67 = arith.constant 0 : index
      %c0_68 = arith.constant 0 : index
      %69 = vector.load %arg7[%c0_67, %c0_68] : memref<8x1xf32, #tpu.memory_space<vmem>>, vector<8x1xf32>
      %70 = arith.mulf %55, %67 : vector<8x1xf32>
      %71 = arith.subf %69, %70 : vector<8x1xf32>
      %c0_69 = arith.constant 0 : index
      %c0_70 = arith.constant 0 : index
      %72 = vector.load %arg10[%c0_69, %c0_70] : memref<8x1xf32, #tpu.memory_space<vmem>>, vector<8x1xf32>
      tpu.vector_store %arg10[%c0_69, %c0_70], %71 {strides = array<i32>} : memref<8x1xf32, #tpu.memory_space<vmem>>, vector<8x1xf32>,
    } else {
    }
    %c1_i32_53 = arith.constant 1 : i32
    %50 = arith.cmpi eq, %arg0, %c1_i32_53 : i32
    %51 = arith.extui %50 : i1 to i32
    %c0_i32_54 = arith.constant 0 : i32
    %52 = arith.cmpi ne, %51, %c0_i32_54 : i32
    scf.if %52 {
      %c0_55 = arith.constant 0 : index
      %c0_56 = arith.constant 0 : index
      %53 = vector.load %arg9[%c0_55, %c0_56] : memref<8x1xf32, #tpu.memory_space<vmem>>, vector<8x1xf32>
      %54 = vector.broadcast %53 : vector<8x1xf32> to vector<8x768xf32>
      %55 = arith.mulf %41, %54 : vector<8x768xf32>
      %c0_57 = arith.constant 0 : index
      %c0_58 = arith.constant 0 : index
      %56 = vector.load %arg10[%c0_57, %c0_58] : memref<8x1xf32, #tpu.memory_space<vmem>>, vector<8x1xf32>
      %57 = vector.broadcast %56 : vector<8x1xf32> to vector<8x768xf32>
      %58 = arith.addf %55, %57 : vector<8x768xf32>
      %cst_59 = arith.constant 2.000000e+01 : f32
      %59 = vector.broadcast %cst_59 : f32 to vector<8x768xf32>
      %60 = arith.minimumf %58, %59 : vector<8x768xf32>
      %61 = math.exp %60 : vector<8x768xf32>
      %cst_60 = arith.constant 2.000000e+00 : f32
      %62 = vector.broadcast %cst_60 : f32 to vector<8x768xf32>
      %63 = arith.addf %61, %62 : vector<8x768xf32>
      %64 = arith.mulf %61, %63 : vector<8x768xf32>
      %cst_61 = arith.constant 2.000000e+00 : f32
      %65 = vector.broadcast %cst_61 : f32 to vector<8x768xf32>
      %66 = arith.addf %64, %65 : vector<8x768xf32>
      %67 = tpu.reciprocal %66 {approx = true} : vector<8x768xf32> -> vector<8x768xf32>
      %68 = arith.mulf %66, %67 : vector<8x768xf32>
      %cst_62 = arith.constant 2.000000e+00 : f32
      %69 = vector.broadcast %cst_62 : f32 to vector<8x768xf32>
      %70 = arith.subf %69, %68 : vector<8x768xf32>
      %71 = arith.mulf %67, %70 : vector<8x768xf32>
      %72 = arith.mulf %58, %64 : vector<8x768xf32>
      %73 = arith.mulf %72, %71 : vector<8x768xf32>
      %74 = arith.truncf %73 : vector<8x768xf32> to vector<8x768xbf16>
      %c0_63 = arith.constant 0 : index
      %c0_64 = arith.constant 0 : index
      %75 = vector.load %arg8[%c0_63, %c0_64] : memref<8x768xbf16, #tpu.memory_space<vmem>>, vector<8x768xbf16>
      tpu.vector_store %arg8[%c0_63, %c0_64], %74 {strides = array<i32>} : memref<8x768xbf16, #tpu.memory_space<vmem>>, vector<8x768xbf16>,
    } else {
    }
    return
  }
  func.func @transform_0(%arg0: i32, %arg1: i32) -> (i32, i32) {
    %c0_i32 = arith.constant 0 : i32
    %c0_i32_0 = arith.constant 0 : i32
    return %c0_i32, %arg1 : i32, i32
  }
  func.func @transform_1(%arg0: i32, %arg1: i32) -> (i32, i32) {
    %c1_i32 = arith.constant 1 : i32
    %0 = arith.addi %arg1, %c1_i32 : i32
    %c6_i32 = arith.constant 6 : i32
    %1 = arith.muli %0, %c6_i32 : i32
    %c0_i32 = arith.constant 0 : i32
    %c0_i32_0 = arith.constant 0 : i32
    return %c0_i32, %1 : i32, i32
  }
  func.func @transform_2(%arg0: i32, %arg1: i32) -> (i32, i32) {
    %c0_i32 = arith.constant 0 : i32
    %c0_i32_0 = arith.constant 0 : i32
    %c0_i32_1 = arith.constant 0 : i32
    return %c0_i32, %c0_i32_0 : i32, i32
  }
  func.func @transform_3(%arg0: i32, %arg1: i32) -> (i32, i32) {
    %c0_i32 = arith.constant 0 : i32
    %c0_i32_0 = arith.constant 0 : i32
    return %c0_i32, %arg1 : i32, i32
  }
  func.func @transform_4(%arg0: i32, %arg1: i32) -> (i32, i32) {
    %c0_i32 = arith.constant 0 : i32
    %c0_i32_0 = arith.constant 0 : i32
    %c0_i32_1 = arith.constant 0 : i32
    return %c0_i32, %c0_i32_0 : i32, i32
  }
  func.func @transform_5(%arg0: i32, %arg1: i32) -> (i32, i32) {
    %c0_i32 = arith.constant 0 : i32
    %c0_i32_0 = arith.constant 0 : i32
    %c0_i32_1 = arith.constant 0 : i32
    return %c0_i32, %c0_i32_0 : i32, i32
  }
  func.func @transform_6(%arg0: i32, %arg1: i32) -> (i32, i32) {
    %0 = arith.muli %arg1, %arg0 : i32
    %c0_i32 = arith.constant 0 : i32
    %c0_i32_0 = arith.constant 0 : i32
    return %c0_i32, %0 : i32, i32
  }
}

module attributes {stable_mosaic.version = 11 : i64} {
  func.func @kernel(%arg0: i32, %arg1: i32, %arg2: memref<8x512xbf16, #tpu.memory_space<vmem>>, %arg3: memref<8x512xbf16, #tpu.memory_space<vmem>>, %arg4: memref<8x8xbf16, #tpu.memory_space<vmem>>, %arg5: memref<8x8xbf16, #tpu.memory_space<vmem>>, %arg6: memref<8x1xf32, #tpu.memory_space<vmem>>, %arg7: memref<8x1xf32, #tpu.memory_space<vmem>>, %arg8: memref<8x512xf32, #tpu.memory_space<vmem>>, %arg9: memref<8x1xf32, #tpu.memory_space<vmem>>, %arg10: memref<8x1xf32, #tpu.memory_space<vmem>>) attributes {dimension_semantics = [#tpu.dimension_semantics<arbitrary>, #tpu.dimension_semantics<arbitrary>], iteration_bounds = array<i64: 2, 1>, scalar_prefetch = 0 : i64, scratch_operands = 2 : i64, tpu.core_type = #tpu.core_type<tc>, window_params = [{transform_indices = @transform_0, window_bounds = array<i64: 8, 512>}, {transform_indices = @transform_1, window_bounds = array<i64: 8, 512>}, {pipeline_mode = #tpu.pipeline_mode<synchronous>, transform_indices = @transform_2, window_bounds = array<i64: 8, 8>}, {pipeline_mode = #tpu.pipeline_mode<synchronous>, transform_indices = @transform_3, window_bounds = array<i64: 8, 8>}, {pipeline_mode = #tpu.pipeline_mode<synchronous>, transform_indices = @transform_4, window_bounds = array<i64: 8, 1>}, {pipeline_mode = #tpu.pipeline_mode<synchronous>, transform_indices = @transform_5, window_bounds = array<i64: 8, 1>}, {transform_indices = @transform_6, window_bounds = array<i64: 8, 512>}]} {
    %c0_i32 = arith.constant 0 : i32
    %0 = arith.cmpi eq, %arg0, %c0_i32 : i32
    %c0_i32_0 = arith.constant 0 : i32
    %1 = arith.cmpi eq, %arg1, %c0_i32_0 : i32
    %2 = arith.andi %0, %1 : i1
    %3 = arith.extui %2 : i1 to i32
    %c0_i32_1 = arith.constant 0 : i32
    %4 = arith.cmpi ne, %3, %c0_i32_1 : i32
    scf.if %4 {
      %cst_16 = arith.constant 0.000000e+00 : f32
      %23 = vector.broadcast %cst_16 : f32 to vector<8x1xf32>
      %c0_17 = arith.constant 0 : index
      %c0_18 = arith.constant 0 : index
      %24 = vector.load %arg9[%c0_17, %c0_18] : memref<8x1xf32, #tpu.memory_space<vmem>>, vector<8x1xf32>
      tpu.vector_store %arg9[%c0_17, %c0_18], %23 {strides = array<i32>} : memref<8x1xf32, #tpu.memory_space<vmem>>, vector<8x1xf32>,
      %cst_19 = arith.constant 0.000000e+00 : f32
      %25 = vector.broadcast %cst_19 : f32 to vector<8x1xf32>
      %c0_20 = arith.constant 0 : index
      %c0_21 = arith.constant 0 : index
      %26 = vector.load %arg10[%c0_20, %c0_21] : memref<8x1xf32, #tpu.memory_space<vmem>>, vector<8x1xf32>
      tpu.vector_store %arg10[%c0_20, %c0_21], %25 {strides = array<i32>} : memref<8x1xf32, #tpu.memory_space<vmem>>, vector<8x1xf32>,
    } else {
    }
    %c0 = arith.constant 0 : index
    %c0_2 = arith.constant 0 : index
    %5 = vector.load %arg4[%c0, %c0_2] : memref<8x8xbf16, #tpu.memory_space<vmem>>, vector<8x8xbf16>
    %c0_3 = arith.constant 0 : index
    %c0_4 = arith.constant 0 : index
    %6 = vector.load %arg2[%c0_3, %c0_4] : memref<8x512xbf16, #tpu.memory_space<vmem>>, vector<8x512xbf16>
    %cst = arith.constant dense<0.000000e+00> : vector<8x512xf32>
    %7 = tpu.matmul %5, %6, %cst {dimension_numbers = #tpu.dot_dimension_numbers<[1], [0], [0], [1], [0, 0, 1, 1], [], []>} : vector<8x8xbf16>, vector<8x512xbf16>, vector<8x512xf32> -> vector<8x512xf32>
    %c0_5 = arith.constant 0 : index
    %c0_6 = arith.constant 0 : index
    %8 = vector.load %arg5[%c0_5, %c0_6] : memref<8x8xbf16, #tpu.memory_space<vmem>>, vector<8x8xbf16>
    %c0_7 = arith.constant 0 : index
    %c0_8 = arith.constant 0 : index
    %9 = vector.load %arg3[%c0_7, %c0_8] : memref<8x512xbf16, #tpu.memory_space<vmem>>, vector<8x512xbf16>
    %cst_9 = arith.constant dense<0.000000e+00> : vector<8x512xf32>
    %10 = tpu.matmul %8, %9, %cst_9 {dimension_numbers = #tpu.dot_dimension_numbers<[1], [0], [0], [1], [0, 0, 1, 1], [], []>} : vector<8x8xbf16>, vector<8x512xbf16>, vector<8x512xf32> -> vector<8x512xf32>
    %11 = arith.addf %7, %10 : vector<8x512xf32>
    %c0_i32_10 = arith.constant 0 : i32
    %12 = arith.cmpi eq, %arg0, %c0_i32_10 : i32
    %13 = arith.extui %12 : i1 to i32
    %c0_i32_11 = arith.constant 0 : i32
    %14 = arith.cmpi ne, %13, %c0_i32_11 : i32
    scf.if %14 {
      %c0_16 = arith.constant 0 : index
      %c0_17 = arith.constant 0 : index
      %23 = vector.load %arg9[%c0_16, %c0_17] : memref<8x1xf32, #tpu.memory_space<vmem>>, vector<8x1xf32>
      %cst_18 = arith.constant dense<0.000000e+00> : vector<8xf32>
      %24 = vector.multi_reduction <add>, %11, %cst_18 [1] : vector<8x512xf32> to vector<8xf32>
      %25 = vector.shape_cast %24 : vector<8xf32> to vector<8x1xf32>
      %26 = arith.addf %23, %25 : vector<8x1xf32>
      %c0_19 = arith.constant 0 : index
      %c0_20 = arith.constant 0 : index
      %27 = vector.load %arg9[%c0_19, %c0_20] : memref<8x1xf32, #tpu.memory_space<vmem>>, vector<8x1xf32>
      tpu.vector_store %arg9[%c0_19, %c0_20], %26 {strides = array<i32>} : memref<8x1xf32, #tpu.memory_space<vmem>>, vector<8x1xf32>,
      %c0_21 = arith.constant 0 : index
      %c0_22 = arith.constant 0 : index
      %28 = vector.load %arg10[%c0_21, %c0_22] : memref<8x1xf32, #tpu.memory_space<vmem>>, vector<8x1xf32>
      %29 = arith.mulf %11, %11 : vector<8x512xf32>
      %cst_23 = arith.constant dense<0.000000e+00> : vector<8xf32>
      %30 = vector.multi_reduction <add>, %29, %cst_23 [1] : vector<8x512xf32> to vector<8xf32>
      %31 = vector.shape_cast %30 : vector<8xf32> to vector<8x1xf32>
      %32 = arith.addf %28, %31 : vector<8x1xf32>
      %c0_24 = arith.constant 0 : index
      %c0_25 = arith.constant 0 : index
      %33 = vector.load %arg10[%c0_24, %c0_25] : memref<8x1xf32, #tpu.memory_space<vmem>>, vector<8x1xf32>
      tpu.vector_store %arg10[%c0_24, %c0_25], %32 {strides = array<i32>} : memref<8x1xf32, #tpu.memory_space<vmem>>, vector<8x1xf32>,
    } else {
    }
    %c1_i32 = arith.constant 1 : i32
    %15 = arith.cmpi eq, %arg0, %c1_i32 : i32
    %c0_i32_12 = arith.constant 0 : i32
    %16 = arith.cmpi eq, %arg1, %c0_i32_12 : i32
    %17 = arith.andi %15, %16 : i1
    %18 = arith.extui %17 : i1 to i32
    %c0_i32_13 = arith.constant 0 : i32
    %19 = arith.cmpi ne, %18, %c0_i32_13 : i32
    scf.if %19 {
      %c0_16 = arith.constant 0 : index
      %c0_17 = arith.constant 0 : index
      %23 = vector.load %arg9[%c0_16, %c0_17] : memref<8x1xf32, #tpu.memory_space<vmem>>, vector<8x1xf32>
      %cst_18 = arith.constant 0.001953125 : f32
      %24 = vector.broadcast %cst_18 : f32 to vector<8x1xf32>
      %25 = arith.mulf %23, %24 : vector<8x1xf32>
      %c0_19 = arith.constant 0 : index
      %c0_20 = arith.constant 0 : index
      %26 = vector.load %arg10[%c0_19, %c0_20] : memref<8x1xf32, #tpu.memory_space<vmem>>, vector<8x1xf32>
      %cst_21 = arith.constant 0.001953125 : f32
      %27 = vector.broadcast %cst_21 : f32 to vector<8x1xf32>
      %28 = arith.mulf %26, %27 : vector<8x1xf32>
      %29 = arith.mulf %25, %25 : vector<8x1xf32>
      %30 = arith.subf %28, %29 : vector<8x1xf32>
      %cst_22 = arith.constant 0.000000e+00 : f32
      %31 = vector.broadcast %cst_22 : f32 to vector<8x1xf32>
      %32 = arith.maximumf %30, %31 : vector<8x1xf32>
      %c0_23 = arith.constant 0 : index
      %c0_24 = arith.constant 0 : index
      %33 = vector.load %arg6[%c0_23, %c0_24] : memref<8x1xf32, #tpu.memory_space<vmem>>, vector<8x1xf32>
      %cst_25 = arith.constant 9.99999974E-6 : f32
      %34 = vector.broadcast %cst_25 : f32 to vector<8x1xf32>
      %35 = arith.addf %32, %34 : vector<8x1xf32>
      %36 = math.rsqrt %35 : vector<8x1xf32>
      %37 = arith.mulf %33, %36 : vector<8x1xf32>
      %c0_26 = arith.constant 0 : index
      %c0_27 = arith.constant 0 : index
      %38 = vector.load %arg9[%c0_26, %c0_27] : memref<8x1xf32, #tpu.memory_space<vmem>>, vector<8x1xf32>
      tpu.vector_store %arg9[%c0_26, %c0_27], %37 {strides = array<i32>} : memref<8x1xf32, #tpu.memory_space<vmem>>, vector<8x1xf32>,
      %c0_28 = arith.constant 0 : index
      %c0_29 = arith.constant 0 : index
      %39 = vector.load %arg7[%c0_28, %c0_29] : memref<8x1xf32, #tpu.memory_space<vmem>>, vector<8x1xf32>
      %40 = arith.mulf %25, %37 : vector<8x1xf32>
      %41 = arith.subf %39, %40 : vector<8x1xf32>
      %c0_30 = arith.constant 0 : index
      %c0_31 = arith.constant 0 : index
      %42 = vector.load %arg10[%c0_30, %c0_31] : memref<8x1xf32, #tpu.memory_space<vmem>>, vector<8x1xf32>
      tpu.vector_store %arg10[%c0_30, %c0_31], %41 {strides = array<i32>} : memref<8x1xf32, #tpu.memory_space<vmem>>, vector<8x1xf32>,
    } else {
    }
    %c1_i32_14 = arith.constant 1 : i32
    %20 = arith.cmpi eq, %arg0, %c1_i32_14 : i32
    %21 = arith.extui %20 : i1 to i32
    %c0_i32_15 = arith.constant 0 : i32
    %22 = arith.cmpi ne, %21, %c0_i32_15 : i32
    scf.if %22 {
      %c0_16 = arith.constant 0 : index
      %c0_17 = arith.constant 0 : index
      %23 = vector.load %arg9[%c0_16, %c0_17] : memref<8x1xf32, #tpu.memory_space<vmem>>, vector<8x1xf32>
      %24 = vector.broadcast %23 : vector<8x1xf32> to vector<8x512xf32>
      %25 = arith.mulf %11, %24 : vector<8x512xf32>
      %c0_18 = arith.constant 0 : index
      %c0_19 = arith.constant 0 : index
      %26 = vector.load %arg10[%c0_18, %c0_19] : memref<8x1xf32, #tpu.memory_space<vmem>>, vector<8x1xf32>
      %27 = vector.broadcast %26 : vector<8x1xf32> to vector<8x512xf32>
      %28 = arith.addf %25, %27 : vector<8x512xf32>
      %cst_20 = arith.constant 2.000000e+01 : f32
      %29 = vector.broadcast %cst_20 : f32 to vector<8x512xf32>
      %30 = arith.minimumf %28, %29 : vector<8x512xf32>
      %31 = math.exp %30 : vector<8x512xf32>
      %cst_21 = arith.constant 2.000000e+00 : f32
      %32 = vector.broadcast %cst_21 : f32 to vector<8x512xf32>
      %33 = arith.addf %31, %32 : vector<8x512xf32>
      %34 = arith.mulf %31, %33 : vector<8x512xf32>
      %cst_22 = arith.constant 2.000000e+00 : f32
      %35 = vector.broadcast %cst_22 : f32 to vector<8x512xf32>
      %36 = arith.addf %34, %35 : vector<8x512xf32>
      %37 = tpu.reciprocal %36 {approx = true} : vector<8x512xf32> -> vector<8x512xf32>
      %38 = arith.mulf %36, %37 : vector<8x512xf32>
      %cst_23 = arith.constant 2.000000e+00 : f32
      %39 = vector.broadcast %cst_23 : f32 to vector<8x512xf32>
      %40 = arith.subf %39, %38 : vector<8x512xf32>
      %41 = arith.mulf %37, %40 : vector<8x512xf32>
      %42 = arith.mulf %28, %34 : vector<8x512xf32>
      %43 = arith.mulf %42, %41 : vector<8x512xf32>
      %c0_24 = arith.constant 0 : index
      %c0_25 = arith.constant 0 : index
      %44 = vector.load %arg8[%c0_24, %c0_25] : memref<8x512xf32, #tpu.memory_space<vmem>>, vector<8x512xf32>
      tpu.vector_store %arg8[%c0_24, %c0_25], %43 {strides = array<i32>} : memref<8x512xf32, #tpu.memory_space<vmem>>, vector<8x512xf32>,
    } else {
    }
    return
  }
  func.func @transform_0(%arg0: i32, %arg1: i32) -> (i32, i32) {
    %c0_i32 = arith.constant 0 : i32
    %c0_i32_0 = arith.constant 0 : i32
    return %c0_i32, %arg1 : i32, i32
  }
  func.func @transform_1(%arg0: i32, %arg1: i32) -> (i32, i32) {
    %c0_i32 = arith.constant 0 : i32
    %c0_i32_0 = arith.constant 0 : i32
    return %c0_i32, %arg1 : i32, i32
  }
  func.func @transform_2(%arg0: i32, %arg1: i32) -> (i32, i32) {
    %c0_i32 = arith.constant 0 : i32
    %c0_i32_0 = arith.constant 0 : i32
    %c0_i32_1 = arith.constant 0 : i32
    return %c0_i32, %c0_i32_0 : i32, i32
  }
  func.func @transform_3(%arg0: i32, %arg1: i32) -> (i32, i32) {
    %c0_i32 = arith.constant 0 : i32
    %c0_i32_0 = arith.constant 0 : i32
    %c0_i32_1 = arith.constant 0 : i32
    return %c0_i32, %c0_i32_0 : i32, i32
  }
  func.func @transform_4(%arg0: i32, %arg1: i32) -> (i32, i32) {
    %c0_i32 = arith.constant 0 : i32
    %c0_i32_0 = arith.constant 0 : i32
    %c0_i32_1 = arith.constant 0 : i32
    return %c0_i32, %c0_i32_0 : i32, i32
  }
  func.func @transform_5(%arg0: i32, %arg1: i32) -> (i32, i32) {
    %c0_i32 = arith.constant 0 : i32
    %c0_i32_0 = arith.constant 0 : i32
    %c0_i32_1 = arith.constant 0 : i32
    return %c0_i32, %c0_i32_0 : i32, i32
  }
  func.func @transform_6(%arg0: i32, %arg1: i32) -> (i32, i32) {
    %0 = arith.muli %arg1, %arg0 : i32
    %c0_i32 = arith.constant 0 : i32
    %c0_i32_0 = arith.constant 0 : i32
    return %c0_i32, %0 : i32, i32
  }
}

module attributes {stable_mosaic.version = 11 : i64} {
  func.func @_bn_mish_fused_kernel(%arg0: i32, %arg1: i32, %arg2: memref<8x512xbf16, #tpu.memory_space<vmem>>, %arg3: memref<8x1xf32, #tpu.memory_space<vmem>>, %arg4: memref<8x1xf32, #tpu.memory_space<vmem>>, %arg5: memref<8x512xbf16, #tpu.memory_space<vmem>>, %arg6: memref<8x1xf32, #tpu.memory_space<vmem>>, %arg7: memref<8x1xf32, #tpu.memory_space<vmem>>) attributes {dimension_semantics = [#tpu.dimension_semantics<arbitrary>, #tpu.dimension_semantics<arbitrary>], iteration_bounds = array<i64: 2, 1>, scalar_prefetch = 0 : i64, scratch_operands = 2 : i64, tpu.core_type = #tpu.core_type<tc>, window_params = [{transform_indices = @transform_0, window_bounds = array<i64: 8, 512>}, {pipeline_mode = #tpu.pipeline_mode<synchronous>, transform_indices = @transform_1, window_bounds = array<i64: 8, 1>}, {pipeline_mode = #tpu.pipeline_mode<synchronous>, transform_indices = @transform_2, window_bounds = array<i64: 8, 1>}, {transform_indices = @transform_3, window_bounds = array<i64: 8, 512>}]} {
    %c0_i32 = arith.constant 0 : i32
    %0 = arith.cmpi eq, %arg0, %c0_i32 : i32
    %c0_i32_0 = arith.constant 0 : i32
    %1 = arith.cmpi eq, %arg1, %c0_i32_0 : i32
    %2 = arith.andi %0, %1 : i1
    %3 = arith.extui %2 : i1 to i32
    %c0_i32_1 = arith.constant 0 : i32
    %4 = arith.cmpi ne, %3, %c0_i32_1 : i32
    scf.if %4 {
      %cst = arith.constant 0.000000e+00 : f32
      %18 = vector.broadcast %cst : f32 to vector<8x1xf32>
      %c0_9 = arith.constant 0 : index
      %c0_10 = arith.constant 0 : index
      %19 = vector.load %arg6[%c0_9, %c0_10] : memref<8x1xf32, #tpu.memory_space<vmem>>, vector<8x1xf32>
      tpu.vector_store %arg6[%c0_9, %c0_10], %18 {strides = array<i32>} : memref<8x1xf32, #tpu.memory_space<vmem>>, vector<8x1xf32>,
      %cst_11 = arith.constant 0.000000e+00 : f32
      %20 = vector.broadcast %cst_11 : f32 to vector<8x1xf32>
      %c0_12 = arith.constant 0 : index
      %c0_13 = arith.constant 0 : index
      %21 = vector.load %arg7[%c0_12, %c0_13] : memref<8x1xf32, #tpu.memory_space<vmem>>, vector<8x1xf32>
      tpu.vector_store %arg7[%c0_12, %c0_13], %20 {strides = array<i32>} : memref<8x1xf32, #tpu.memory_space<vmem>>, vector<8x1xf32>,
    } else {
    }
    %c0 = arith.constant 0 : index
    %c0_2 = arith.constant 0 : index
    %5 = vector.load %arg2[%c0, %c0_2] : memref<8x512xbf16, #tpu.memory_space<vmem>>, vector<8x512xbf16>
    %6 = arith.extf %5 : vector<8x512xbf16> to vector<8x512xf32>
    %c0_i32_3 = arith.constant 0 : i32
    %7 = arith.cmpi eq, %arg0, %c0_i32_3 : i32
    %8 = arith.extui %7 : i1 to i32
    %c0_i32_4 = arith.constant 0 : i32
    %9 = arith.cmpi ne, %8, %c0_i32_4 : i32
    scf.if %9 {
      %c0_9 = arith.constant 0 : index
      %c0_10 = arith.constant 0 : index
      %18 = vector.load %arg6[%c0_9, %c0_10] : memref<8x1xf32, #tpu.memory_space<vmem>>, vector<8x1xf32>
      %cst = arith.constant dense<0.000000e+00> : vector<8xf32>
      %19 = vector.multi_reduction <add>, %6, %cst [1] : vector<8x512xf32> to vector<8xf32>
      %20 = vector.shape_cast %19 : vector<8xf32> to vector<8x1xf32>
      %21 = arith.addf %18, %20 : vector<8x1xf32>
      %c0_11 = arith.constant 0 : index
      %c0_12 = arith.constant 0 : index
      %22 = vector.load %arg6[%c0_11, %c0_12] : memref<8x1xf32, #tpu.memory_space<vmem>>, vector<8x1xf32>
      tpu.vector_store %arg6[%c0_11, %c0_12], %21 {strides = array<i32>} : memref<8x1xf32, #tpu.memory_space<vmem>>, vector<8x1xf32>,
      %c0_13 = arith.constant 0 : index
      %c0_14 = arith.constant 0 : index
      %23 = vector.load %arg7[%c0_13, %c0_14] : memref<8x1xf32, #tpu.memory_space<vmem>>, vector<8x1xf32>
      %24 = arith.mulf %6, %6 : vector<8x512xf32>
      %cst_15 = arith.constant dense<0.000000e+00> : vector<8xf32>
      %25 = vector.multi_reduction <add>, %24, %cst_15 [1] : vector<8x512xf32> to vector<8xf32>
      %26 = vector.shape_cast %25 : vector<8xf32> to vector<8x1xf32>
      %27 = arith.addf %23, %26 : vector<8x1xf32>
      %c0_16 = arith.constant 0 : index
      %c0_17 = arith.constant 0 : index
      %28 = vector.load %arg7[%c0_16, %c0_17] : memref<8x1xf32, #tpu.memory_space<vmem>>, vector<8x1xf32>
      tpu.vector_store %arg7[%c0_16, %c0_17], %27 {strides = array<i32>} : memref<8x1xf32, #tpu.memory_space<vmem>>, vector<8x1xf32>,
    } else {
    }
    %c1_i32 = arith.constant 1 : i32
    %10 = arith.cmpi eq, %arg0, %c1_i32 : i32
    %c0_i32_5 = arith.constant 0 : i32
    %11 = arith.cmpi eq, %arg1, %c0_i32_5 : i32
    %12 = arith.andi %10, %11 : i1
    %13 = arith.extui %12 : i1 to i32
    %c0_i32_6 = arith.constant 0 : i32
    %14 = arith.cmpi ne, %13, %c0_i32_6 : i32
    scf.if %14 {
      %c0_9 = arith.constant 0 : index
      %c0_10 = arith.constant 0 : index
      %18 = vector.load %arg6[%c0_9, %c0_10] : memref<8x1xf32, #tpu.memory_space<vmem>>, vector<8x1xf32>
      %cst = arith.constant 0.001953125 : f32
      %19 = vector.broadcast %cst : f32 to vector<8x1xf32>
      %20 = arith.mulf %18, %19 : vector<8x1xf32>
      %c0_11 = arith.constant 0 : index
      %c0_12 = arith.constant 0 : index
      %21 = vector.load %arg7[%c0_11, %c0_12] : memref<8x1xf32, #tpu.memory_space<vmem>>, vector<8x1xf32>
      %cst_13 = arith.constant 0.001953125 : f32
      %22 = vector.broadcast %cst_13 : f32 to vector<8x1xf32>
      %23 = arith.mulf %21, %22 : vector<8x1xf32>
      %24 = arith.mulf %20, %20 : vector<8x1xf32>
      %25 = arith.subf %23, %24 : vector<8x1xf32>
      %cst_14 = arith.constant 0.000000e+00 : f32
      %26 = vector.broadcast %cst_14 : f32 to vector<8x1xf32>
      %27 = arith.maximumf %25, %26 : vector<8x1xf32>
      %c0_15 = arith.constant 0 : index
      %c0_16 = arith.constant 0 : index
      %28 = vector.load %arg3[%c0_15, %c0_16] : memref<8x1xf32, #tpu.memory_space<vmem>>, vector<8x1xf32>
      %cst_17 = arith.constant 1.000000e-03 : f32
      %29 = vector.broadcast %cst_17 : f32 to vector<8x1xf32>
      %30 = arith.addf %27, %29 : vector<8x1xf32>
      %31 = math.rsqrt %30 : vector<8x1xf32>
      %32 = arith.mulf %28, %31 : vector<8x1xf32>
      %c0_18 = arith.constant 0 : index
      %c0_19 = arith.constant 0 : index
      %33 = vector.load %arg6[%c0_18, %c0_19] : memref<8x1xf32, #tpu.memory_space<vmem>>, vector<8x1xf32>
      tpu.vector_store %arg6[%c0_18, %c0_19], %32 {strides = array<i32>} : memref<8x1xf32, #tpu.memory_space<vmem>>, vector<8x1xf32>,
      %c0_20 = arith.constant 0 : index
      %c0_21 = arith.constant 0 : index
      %34 = vector.load %arg4[%c0_20, %c0_21] : memref<8x1xf32, #tpu.memory_space<vmem>>, vector<8x1xf32>
      %35 = arith.mulf %20, %32 : vector<8x1xf32>
      %36 = arith.subf %34, %35 : vector<8x1xf32>
      %c0_22 = arith.constant 0 : index
      %c0_23 = arith.constant 0 : index
      %37 = vector.load %arg7[%c0_22, %c0_23] : memref<8x1xf32, #tpu.memory_space<vmem>>, vector<8x1xf32>
      tpu.vector_store %arg7[%c0_22, %c0_23], %36 {strides = array<i32>} : memref<8x1xf32, #tpu.memory_space<vmem>>, vector<8x1xf32>,
    } else {
    }
    %c1_i32_7 = arith.constant 1 : i32
    %15 = arith.cmpi eq, %arg0, %c1_i32_7 : i32
    %16 = arith.extui %15 : i1 to i32
    %c0_i32_8 = arith.constant 0 : i32
    %17 = arith.cmpi ne, %16, %c0_i32_8 : i32
    scf.if %17 {
      %c0_9 = arith.constant 0 : index
      %c0_10 = arith.constant 0 : index
      %18 = vector.load %arg6[%c0_9, %c0_10] : memref<8x1xf32, #tpu.memory_space<vmem>>, vector<8x1xf32>
      %19 = vector.broadcast %18 : vector<8x1xf32> to vector<8x512xf32>
      %20 = arith.mulf %6, %19 : vector<8x512xf32>
      %c0_11 = arith.constant 0 : index
      %c0_12 = arith.constant 0 : index
      %21 = vector.load %arg7[%c0_11, %c0_12] : memref<8x1xf32, #tpu.memory_space<vmem>>, vector<8x1xf32>
      %22 = vector.broadcast %21 : vector<8x1xf32> to vector<8x512xf32>
      %23 = arith.addf %20, %22 : vector<8x512xf32>
      %cst = arith.constant 2.000000e+01 : f32
      %24 = vector.broadcast %cst : f32 to vector<8x512xf32>
      %25 = arith.minimumf %23, %24 : vector<8x512xf32>
      %26 = math.exp %25 : vector<8x512xf32>
      %cst_13 = arith.constant 2.000000e+00 : f32
      %27 = vector.broadcast %cst_13 : f32 to vector<8x512xf32>
      %28 = arith.addf %26, %27 : vector<8x512xf32>
      %29 = arith.mulf %26, %28 : vector<8x512xf32>
      %cst_14 = arith.constant 2.000000e+00 : f32
      %30 = vector.broadcast %cst_14 : f32 to vector<8x512xf32>
      %31 = arith.addf %29, %30 : vector<8x512xf32>
      %32 = tpu.reciprocal %31 {approx = true} : vector<8x512xf32> -> vector<8x512xf32>
      %33 = arith.mulf %31, %32 : vector<8x512xf32>
      %cst_15 = arith.constant 2.000000e+00 : f32
      %34 = vector.broadcast %cst_15 : f32 to vector<8x512xf32>
      %35 = arith.subf %34, %33 : vector<8x512xf32>
      %36 = arith.mulf %32, %35 : vector<8x512xf32>
      %37 = arith.mulf %23, %29 : vector<8x512xf32>
      %38 = arith.mulf %37, %36 : vector<8x512xf32>
      %39 = arith.truncf %38 : vector<8x512xf32> to vector<8x512xbf16>
      %c0_16 = arith.constant 0 : index
      %c0_17 = arith.constant 0 : index
      %40 = vector.load %arg5[%c0_16, %c0_17] : memref<8x512xbf16, #tpu.memory_space<vmem>>, vector<8x512xbf16>
      tpu.vector_store %arg5[%c0_16, %c0_17], %39 {strides = array<i32>} : memref<8x512xbf16, #tpu.memory_space<vmem>>, vector<8x512xbf16>,
    } else {
    }
    return
  }
  func.func @transform_0(%arg0: i32, %arg1: i32) -> (i32, i32) {
    %c0_i32 = arith.constant 0 : i32
    %c0_i32_0 = arith.constant 0 : i32
    return %c0_i32, %arg1 : i32, i32
  }
  func.func @transform_1(%arg0: i32, %arg1: i32) -> (i32, i32) {
    %c0_i32 = arith.constant 0 : i32
    %c0_i32_0 = arith.constant 0 : i32
    %c0_i32_1 = arith.constant 0 : i32
    return %c0_i32, %c0_i32_0 : i32, i32
  }
  func.func @transform_2(%arg0: i32, %arg1: i32) -> (i32, i32) {
    %c0_i32 = arith.constant 0 : i32
    %c0_i32_0 = arith.constant 0 : i32
    %c0_i32_1 = arith.constant 0 : i32
    return %c0_i32, %c0_i32_0 : i32, i32
  }
  func.func @transform_3(%arg0: i32, %arg1: i32) -> (i32, i32) {
    %0 = arith.muli %arg1, %arg0 : i32
    %c0_i32 = arith.constant 0 : i32
    %c0_i32_0 = arith.constant 0 : i32
    return %c0_i32, %0 : i32, i32
  }
}

</mosaic_0001>

<llo_original>
// kernel: csp_up_block_forward.10
$region0: #{csp_up_block_forward.10}
  #allocation0 [shape = 'u32[]', space=smem, size = 0x4, offset = 0x4, fixed_abs, tag = 'smem constant byte address 0x4 - core index']
  #allocation1 [shape = 'u32[72,128]{1,0:T(1,128)}', space=vmem, size = 0x9000, scoped, tag = 'internal scratch']
  #allocation2 [shape = 'f32[8,1]{1,0:T(8,128)}', space=vmem, size = 0x1000, scoped, tag = 'scratch operand']
  #allocation3 [shape = 'f32[8,1]{1,0:T(8,128)}', space=vmem, size = 0x1000, scoped, tag = 'scratch operand']
  %s0 = inlined_call_operand.vmem [shape: bf16[8,512], index: 0, kind: input, shape index: {}]
  %s1 = inlined_call_operand.vmem [shape: bf16[8,512], index: 1, kind: input, shape index: {}]
  %s2 = inlined_call_operand.vmem [shape: bf16[8,8], index: 2, kind: input, shape index: {}]
  %s3 = inlined_call_operand.vmem [shape: bf16[8,8], index: 3, kind: input, shape index: {}]
  %s4 = inlined_call_operand.vmem [shape: f32[8,1], index: 4, kind: input, shape index: {}]
  %s5 = inlined_call_operand.vmem [shape: f32[8,1], index: 5, kind: input, shape index: {}]
  %s6 = inlined_call_operand.vmem [shape: bf16[8,512], index: 6, kind: output, shape index: {}]
  %s7 = sld [smem:[#allocation0]]
  $region73: #{csp_up_block_forward.10} parent=0
    _
  %s9 = ssub.s32 1, %s7
  %s10 = scalar_select 0, %s9, %s7
  loop: start=0, step=1, limit=4
  $region2: #{csp_up_block_forward.10} parent=0 // loop_pre_header
    _
  $region3: #{csp_up_block_forward.10} parent=0 // loop_header
    %s12 = sphi 0, %s16
    %p13 = scmp.ge.s32.totalorder %s12, 4
    %s19 = sphi 0, %s31
    %s20 = sphi 0, %s27
    %s21 = sphi 0, %s19
    %s22 = sphi 0, %s20
    %s23 = sphi 0, %s21
    %s24 = sphi 0, %s22
    %s34 = sphi 0, %s36
    %s37 = sphi 0, %s34
    %s38 = sphi 0, %s37
    %s54 = sphi 0, %s38
    %s60 = sphi 0, %s62
    %s63 = sphi 0, %s60
    %s64 = sphi 0, %s63
    %s80 = sphi 0, %s64
    %s84 = sphi 0, %s84
    %s86 = sphi 0, %s84
    %s87 = sphi 0, %s86
    %s101 = sphi 0, %s87
    %s105 = sphi 0, %s105
    %s107 = sphi 0, %s105
    %s108 = sphi 0, %s107
    %s122 = sphi 0, %s108
    %s126 = sphi 0, %s126
    %s128 = sphi 0, %s126
    %s129 = sphi 0, %s128
    %s143 = sphi 0, %s129
    %s147 = sphi 0, %s147
    %s149 = sphi 0, %s147
    %s150 = sphi 0, %s149
    %s164 = sphi 0, %s150
    %s172 = sphi 0, %s174
    %s175 = sphi 0, %s172
    %s176 = sphi 0, %s175
    %s192 = sphi 0, %s176
  $region4: #{csp_up_block_forward.10} parent=0 // loop_header_branch
    %15 = sbr.rel (%p13) target = $region8
  $region5: #{csp_up_block_forward.10} parent=0 // loop_body
    %s17 = ssub.s32 %s12, 1
    %s18 = ssub.s32 %s12, 2
    %s25 = sadd.s32 1, %s20
    %p26 = scmp.ge.s32.totalorder %s25, 1
    %s27 = scalar_select %p26, 0, %s25
    %s28 = sadd.s32 1, %s19
    %s29 = scalar_select %p26, %s28, %s19
    %p30 = scmp.ge.s32.totalorder %s29, 2
    %s31 = scalar_select %p30, 0, %s29
    %s32 = ssub.s32 %s20, %s27
    %p33 = scmp.eq.s32.totalorder %s32, 0
    %s35 = sadd.s32 %s34, 1
    %s36 = scalar_select %p33, %s34, %s35
    %p39 = pneg %p33
    %p40 = scmp.eq.s32.totalorder %s12, 1
    %p41 = por %p39, %p40
    %p42 = scmp.ne.s32.totalorder %s34, %s37
    %p43 = scmp.eq.s32.totalorder %s12, 0
    %p44 = por %p42, %p43
    %p45 = scmp.ne.s32.totalorder %s34, %s37
    %p46 = scmp.eq.s32.totalorder %s17, 1
    %p47 = por %p45, %p46
    %p48 = scmp.ne.s32.totalorder %s37, %s38
    %p49 = scmp.eq.s32.totalorder %s17, 0
    %p50 = por %p48, %p49
    %p51 = scmp.ne.s32.totalorder %s37, %s38
    %p52 = scmp.eq.s32.totalorder %s18, 1
    %p53 = por %p51, %p52
    %p55 = scmp.ne.s32.totalorder %s38, %s54
    %p56 = scmp.eq.s32.totalorder %s18, 0
    %p57 = por %p55, %p56
    %s58 = ssub.s32 %s20, %s27
    %p59 = scmp.eq.s32.totalorder %s58, 0
    %s61 = sadd.s32 %s60, 1
    %s62 = scalar_select %p59, %s60, %s61
    %p65 = pneg %p59
    %p66 = scmp.eq.s32.totalorder %s12, 1
    %p67 = por %p65, %p66
    %p68 = scmp.ne.s32.totalorder %s60, %s63
    %p69 = scmp.eq.s32.totalorder %s12, 0
    %p70 = por %p68, %p69
    %p71 = scmp.ne.s32.totalorder %s60, %s63
    %p72 = scmp.eq.s32.totalorder %s17, 1
    %p73 = por %p71, %p72
    %p74 = scmp.ne.s32.totalorder %s63, %s64
    %p75 = scmp.eq.s32.totalorder %s17, 0
    %p76 = por %p74, %p75
    %p77 = scmp.ne.s32.totalorder %s63, %s64
    %p78 = scmp.eq.s32.totalorder %s18, 1
    %p79 = por %p77, %p78
    %p81 = scmp.ne.s32.totalorder %s64, %s80
    %p82 = scmp.eq.s32.totalorder %s18, 0
    %p83 = por %p81, %p82
    %s85 = sadd.s32 %s84, 1
    %p88 = scmp.eq.s32.totalorder %s12, 1
    %p89 = scmp.ne.s32.totalorder %s84, %s86
    %p90 = scmp.eq.s32.totalorder %s12, 0
    %p91 = por %p89, %p90
    %p92 = scmp.ne.s32.totalorder %s84, %s86
    %p93 = scmp.eq.s32.totalorder %s17, 1
    %p94 = por %p92, %p93
    %p95 = scmp.ne.s32.totalorder %s86, %s87
    %p96 = scmp.eq.s32.totalorder %s17, 0
    %p97 = por %p95, %p96
    %p98 = scmp.ne.s32.totalorder %s86, %s87
    %p99 = scmp.eq.s32.totalorder %s18, 1
    %p100 = por %p98, %p99
    %p102 = scmp.ne.s32.totalorder %s87, %s101
    %p103 = scmp.eq.s32.totalorder %s18, 0
    %p104 = por %p102, %p103
    %s106 = sadd.s32 %s105, 1
    %p109 = scmp.eq.s32.totalorder %s12, 1
    %p110 = scmp.ne.s32.totalorder %s105, %s107
    %p111 = scmp.eq.s32.totalorder %s12, 0
    %p112 = por %p110, %p111
    %p113 = scmp.ne.s32.totalorder %s105, %s107
    %p114 = scmp.eq.s32.totalorder %s17, 1
    %p115 = por %p113, %p114
    %p116 = scmp.ne.s32.totalorder %s107, %s108
    %p117 = scmp.eq.s32.totalorder %s17, 0
    %p118 = por %p116, %p117
    %p119 = scmp.ne.s32.totalorder %s107, %s108
    %p120 = scmp.eq.s32.totalorder %s18, 1
    %p121 = por %p119, %p120
    %p123 = scmp.ne.s32.totalorder %s108, %s122
    %p124 = scmp.eq.s32.totalorder %s18, 0
    %p125 = por %p123, %p124
    %s127 = sadd.s32 %s126, 1
    %p130 = scmp.eq.s32.totalorder %s12, 1
    %p131 = scmp.ne.s32.totalorder %s126, %s128
    %p132 = scmp.eq.s32.totalorder %s12, 0
    %p133 = por %p131, %p132
    %p134 = scmp.ne.s32.totalorder %s126, %s128
    %p135 = scmp.eq.s32.totalorder %s17, 1
    %p136 = por %p134, %p135
    %p137 = scmp.ne.s32.totalorder %s128, %s129
    %p138 = scmp.eq.s32.totalorder %s17, 0
    %p139 = por %p137, %p138
    %p140 = scmp.ne.s32.totalorder %s128, %s129
    %p141 = scmp.eq.s32.totalorder %s18, 1
    %p142 = por %p140, %p141
    %p144 = scmp.ne.s32.totalorder %s129, %s143
    %p145 = scmp.eq.s32.totalorder %s18, 0
    %p146 = por %p144, %p145
    %s148 = sadd.s32 %s147, 1
    %p151 = scmp.eq.s32.totalorder %s12, 1
    %p152 = scmp.ne.s32.totalorder %s147, %s149
    %p153 = scmp.eq.s32.totalorder %s12, 0
    %p154 = por %p152, %p153
    %p155 = scmp.ne.s32.totalorder %s147, %s149
    %p156 = scmp.eq.s32.totalorder %s17, 1
    %p157 = por %p155, %p156
    %p158 = scmp.ne.s32.totalorder %s149, %s150
    %p159 = scmp.eq.s32.totalorder %s17, 0
    %p160 = por %p158, %p159
    %p161 = scmp.ne.s32.totalorder %s149, %s150
    %p162 = scmp.eq.s32.totalorder %s18, 1
    %p163 = por %p161, %p162
    %p165 = scmp.ne.s32.totalorder %s150, %s164
    %p166 = scmp.eq.s32.totalorder %s18, 0
    %p167 = por %p165, %p166
    %s168 = smul.u32 %s20, %s19
    %s169 = smul.u32 %s27, %s31
    %s170 = ssub.s32 %s168, %s169
    %p171 = scmp.eq.s32.totalorder %s170, 0
    %s173 = sadd.s32 %s172, 1
    %s174 = scalar_select %p171, %s172, %s173
    %p177 = pneg %p171
    %p178 = scmp.eq.s32.totalorder %s12, 1
    %p179 = por %p177, %p178
    %p180 = scmp.ne.s32.totalorder %s172, %s175
    %p181 = scmp.eq.s32.totalorder %s12, 0
    %p182 = por %p180, %p181
    %p183 = scmp.ne.s32.totalorder %s172, %s175
    %p184 = scmp.eq.s32.totalorder %s17, 1
    %p185 = por %p183, %p184
    %p186 = scmp.ne.s32.totalorder %s175, %s176
    %p187 = scmp.eq.s32.totalorder %s17, 0
    %p188 = por %p186, %p187
    %p189 = scmp.ne.s32.totalorder %s175, %s176
    %p190 = scmp.eq.s32.totalorder %s18, 1
    %p191 = por %p189, %p190
    %p193 = scmp.ne.s32.totalorder %s176, %s192
    %p194 = scmp.eq.s32.totalorder %s18, 0
    %p195 = por %p193, %p194
    %p196 = scmp.le.s32.totalorder 1, %s12
    %p197 = scmp.lt.s32.totalorder %s12, 3
    %p198 = pnand %p196, %p197
    %p199 = pneg %p198
    // Predicated region
    $region9: #{csp_up_block_forward.10} parent=5 // pred_check
      _
    $region10: #{csp_up_block_forward.10} parent=5 // pred_check_branch
      %201 = sbr.rel (%p198) target = $region12
    $region11: #{csp_up_block_forward.10} parent=5 // pred_region
      %s202 = ssub.s32 %s12, 1
      // Predicated region
      $region13: #{csp_up_block_forward.10} parent=11 // pred_check
        %p203 = pneg %p50
      $region14: #{csp_up_block_forward.10} parent=11 // pred_check_branch
        %205 = sbr.rel (%p203) target = $region16
      $region15: #{csp_up_block_forward.10} parent=11 // pred_region
        %s206 = smul.u32 4, %s22
        %p207 = scmp.lt.s32.totalorder %s206, 3
        %s208 = scalar_select %p207, %s206, 3
        %s209 = smul.addr %s208, 4
        %s210 = scalar_lea.vmem %s0, %s209
        %s211 = smul.u32 4, %s22
      $region16: #{csp_up_block_forward.10} parent=11 // pred_fallthru
        _
      // Predicated region
      $region17: #{csp_up_block_forward.10} parent=11 // pred_check
        %p212 = pneg %p76
      $region18: #{csp_up_block_forward.10} parent=11 // pred_check_branch
        %214 = sbr.rel (%p212) target = $region20
      $region19: #{csp_up_block_forward.10} parent=11 // pred_region
        %s215 = smul.u32 4, %s22
        %p216 = scmp.lt.s32.totalorder %s215, 3
        %s217 = scalar_select %p216, %s215, 3
        %s218 = smul.addr %s217, 4
        %s219 = scalar_lea.vmem %s1, %s218
        %s220 = smul.u32 4, %s22
      $region20: #{csp_up_block_forward.10} parent=11 // pred_fallthru
        _
      // Predicated region
      $region21: #{csp_up_block_forward.10} parent=11 // pred_check
        %p221 = pneg %p97
      $region22: #{csp_up_block_forward.10} parent=11 // pred_check_branch
        %223 = sbr.rel (%p221) target = $region24
      $region23: #{csp_up_block_forward.10} parent=11 // pred_region
        _
      $region24: #{csp_up_block_forward.10} parent=11 // pred_fallthru
        _
      // Predicated region
      $region25: #{csp_up_block_forward.10} parent=11 // pred_check
        %p224 = pneg %p118
      $region26: #{csp_up_block_forward.10} parent=11 // pred_check_branch
        %226 = sbr.rel (%p224) target = $region28
      $region27: #{csp_up_block_forward.10} parent=11 // pred_region
        _
      $region28: #{csp_up_block_forward.10} parent=11 // pred_fallthru
        _
      // Predicated region
      $region29: #{csp_up_block_forward.10} parent=11 // pred_check
        %p227 = pneg %p139
      $region30: #{csp_up_block_forward.10} parent=11 // pred_check_branch
        %229 = sbr.rel (%p227) target = $region32
      $region31: #{csp_up_block_forward.10} parent=11 // pred_region
        _
      $region32: #{csp_up_block_forward.10} parent=11 // pred_fallthru
        _
      // Predicated region
      $region33: #{csp_up_block_forward.10} parent=11 // pred_check
        %p230 = pneg %p160
      $region34: #{csp_up_block_forward.10} parent=11 // pred_check_branch
        %232 = sbr.rel (%p230) target = $region36
      $region35: #{csp_up_block_forward.10} parent=11 // pred_region
        _
      $region36: #{csp_up_block_forward.10} parent=11 // pred_fallthru
        _
    $region12: #{csp_up_block_forward.10} parent=5 // pred_fallthru
      _
    %p233 = scmp.lt.s32.totalorder %s12, 2
    // Predicated region
    $region37: #{csp_up_block_forward.10} parent=5 // pred_check
      %p234 = pneg %p233
    $region38: #{csp_up_block_forward.10} parent=5 // pred_check_branch
      %236 = sbr.rel (%p234) target = $region40
    $region39: #{csp_up_block_forward.10} parent=5 // pred_region
      _
    $region40: #{csp_up_block_forward.10} parent=5 // pred_fallthru
      _
    %p237 = scmp.le.s32.totalorder 1, %s12
    %p238 = scmp.lt.s32.totalorder %s12, 3
    %p239 = pnand %p237, %p238
    %p240 = pneg %p239
    // Predicated region
    $region41: #{csp_up_block_forward.10} parent=5 // pred_check
      _
    $region42: #{csp_up_block_forward.10} parent=5 // pred_check_branch
      %242 = sbr.rel (%p239) target = $region44
    $region43: #{csp_up_block_forward.10} parent=5 // pred_region
      %s243 = ssub.s32 %s12, 1
      %s244 = smul.u32 4, %s22
      %p245 = scmp.lt.s32.totalorder %s244, 3
      %s246 = scalar_select %p245, %s244, 3
      %s247 = smul.addr %s246, 4
      %s248 = scalar_lea.vmem %s0, %s247
      %p249 = pneg %p50
      %p250 = pneg %p47
      %s251 = smul.u32 4, %s22
      %p252 = scmp.lt.s32.totalorder %s251, 3
      %s253 = scalar_select %p252, %s251, 3
      %s254 = smul.addr %s253, 4
      %s255 = scalar_lea.vmem %s1, %s254
      %p256 = pneg %p76
      %p257 = pneg %p73
      %p258 = pneg %p97
      %p259 = pneg %p94
      %p260 = pneg %p118
      %p261 = pneg %p115
      %p262 = pneg %p139
      %p263 = pneg %p136
      %p264 = pneg %p160
      %p265 = pneg %p157
      %p266 = pneg %p188
      %p267 = pneg %p185
      %s268 = smul.u32 %s22, %s21
      %s269 = smul.u32 4, %s268
      %p270 = scmp.lt.s32.totalorder %s269, 3
      %s271 = scalar_select %p270, %s269, 3
      %s272 = smul.addr %s271, 4
      %s273 = scalar_lea.vmem %s6, %s272
      %s274 = smul.u32 4, %s22
      %p275 = scmp.lt.s32.totalorder %s274, 3
      %s276 = scalar_select %p275, %s274, 3
      %s277 = smul.addr %s276, 4
      %s278 = scalar_lea.vmem %s0, %s277
      %s279 = smul.u32 4, %s22
      %s280 = smul.u32 4, %s22
      %p281 = scmp.lt.s32.totalorder %s280, 3
      %s282 = scalar_select %p281, %s280, 3
      %s283 = smul.addr %s282, 4
      %s284 = scalar_lea.vmem %s1, %s283
      %s285 = smul.u32 4, %s22
      %s286 = smul.u32 %s22, %s21
      %s287 = smul.u32 4, %s286
      %p288 = scmp.lt.s32.totalorder %s287, 3
      %s289 = scalar_select %p288, %s287, 3
      %s290 = smul.addr %s289, 4
      %s291 = scalar_lea.vmem %s6, %s290
      %s292 = smul.u32 %s22, %s21
      %s293 = smul.u32 4, %s292
      %p295 = scmp.eq.s32.totalorder %s21, 0
      %p296 = scmp.eq.s32.totalorder %s22, 0
      %p297 = pnand %p295, %p296
      %p298 = pneg %p297
      // Predicated region
      $region45: #{csp_up_block_forward.10} parent=43 // pred_check
        _
      $region46: #{csp_up_block_forward.10} parent=43 // pred_check_branch
        %300 = sbr.rel (%p297) target = $region48
      $region47: #{csp_up_block_forward.10} parent=43 // pred_region
        %vm301 = vcmask 7168
        %302 = vst.msk [vmem:[#allocation2] sm:$0xff] %vm301, 0.0
        %303 = vst.msk [vmem:[#allocation3] sm:$0xff] %vm301, 0.0
      $region48: #{csp_up_block_forward.10} parent=43 // pred_fallthru
        _
      %v304 = vld [vmem:[%s2] sm:$0xf]
      %v305 = vld [vmem:[%s278] sm:$0xff]
      %v306 = vld [vmem:[%s278 + $0x8] sm:$0xff]
      %v307 = vld [vmem:[%s3] sm:$0xf]
      %v308 = vld [vmem:[%s284] sm:$0xff]
      %v309 = vld [vmem:[%s284 + $0x8] sm:$0xff]
      %v312 = vunpack.c.l.b16 %v308
      %v313 = vunpack.c.h.b16 %v308
      %v314 = vunpack.c.l.b16 %v309
      %v315 = vunpack.c.h.b16 %v309
      %v316 = vpack.c.b16 %v312, %v312
      %v317 = vpack.c.b16 %v313, %v313
      %v318 = vpack.c.b16 %v314, %v314
      %v319 = vpack.c.b16 %v315, %v315
      %vm320 = vcmask 64512
      %v322 = vsel %vm320, %v307, 0
      %vm324 = vcmask 1043456
      %v326 = vsel %vm324, %v316, 0
      %v329 = vsel %vm324, %v317, 0
      %v332 = vsel %vm324, %v318, 0
      %v335 = vsel %vm324, %v319, 0
      %337 = vmatpush.bf16.msra.mxu0 0
      %338 = vmatpush.bf16.msra.mxu0 0
      %339 = vmatpush.bf16.msra.mxu0 0
      %340 = vmatpush.bf16.msra.mxu0 0
      %341 = vmatpush.bf16.msra.mxu0 0
      %342 = vmatpush.bf16.msra.mxu0 0
      %343 = vmatpush.bf16.msra.mxu0 0
      %344 = vmatpush.bf16.msra.mxu0 %v326
      %345 = vmatmul.bf16.gmra.mxu0 %v322
      %v346 = vpop.f32.mrf.mxu0
      %v347 = vadd.f32 0.0, %v346
      %v348 = vpop.f32.mrf.mxu0
      %349 = vdwg.mxu0
      %350 = vmatpush.bf16.msra.mxu0 0
      %351 = vmatpush.bf16.msra.mxu0 0
      %352 = vmatpush.bf16.msra.mxu0 0
      %353 = vmatpush.bf16.msra.mxu0 0
      %354 = vmatpush.bf16.msra.mxu0 0
      %355 = vmatpush.bf16.msra.mxu0 0
      %356 = vmatpush.bf16.msra.mxu0 0
      %357 = vmatpush.bf16.msra.mxu0 %v329
      %358 = vmatmul.bf16.gmra.mxu0 %v322
      %v359 = vpop.f32.mrf.mxu0
      %v360 = vadd.f32 0.0, %v359
      %v361 = vpop.f32.mrf.mxu0
      %362 = vdwg.mxu0
      %363 = vmatpush.bf16.msra.mxu0 0
      %364 = vmatpush.bf16.msra.mxu0 0
      %365 = vmatpush.bf16.msra.mxu0 0
      %366 = vmatpush.bf16.msra.mxu0 0
      %367 = vmatpush.bf16.msra.mxu0 0
      %368 = vmatpush.bf16.msra.mxu0 0
      %369 = vmatpush.bf16.msra.mxu0 0
      %370 = vmatpush.bf16.msra.mxu0 %v332
      %371 = vmatmul.bf16.gmra.mxu0 %v322
      %v372 = vpop.f32.mrf.mxu0
      %v373 = vadd.f32 0.0, %v372
      %v374 = vpop.f32.mrf.mxu0
      %375 = vdwg.mxu0
      %376 = vmatpush.bf16.msra.mxu0 0
      %377 = vmatpush.bf16.msra.mxu0 0
      %378 = vmatpush.bf16.msra.mxu0 0
      %379 = vmatpush.bf16.msra.mxu0 0
      %380 = vmatpush.bf16.msra.mxu0 0
      %381 = vmatpush.bf16.msra.mxu0 0
      %382 = vmatpush.bf16.msra.mxu0 0
      %383 = vmatpush.bf16.msra.mxu0 %v335
      %384 = vmatmul.bf16.gmra.mxu0 %v322
      %v385 = vpop.f32.mrf.mxu0
      %v386 = vadd.f32 0.0, %v385
      %v387 = vpop.f32.mrf.mxu0
      %388 = vdwg.mxu0
      %v391 = vunpack.c.l.b16 %v305
      %v392 = vunpack.c.h.b16 %v305
      %v393 = vunpack.c.l.b16 %v306
      %v394 = vunpack.c.h.b16 %v306
      %v395 = vpack.c.b16 %v391, %v391
      %v396 = vpack.c.b16 %v392, %v392
      %v397 = vpack.c.b16 %v393, %v393
      %v398 = vpack.c.b16 %v394, %v394
      %v400 = vsel %vm320, %v304, 0
      %v403 = vsel %vm324, %v395, 0
      %v406 = vsel %vm324, %v396, 0
      %v409 = vsel %vm324, %v397, 0
      %v412 = vsel %vm324, %v398, 0
      %414 = vmatpush.bf16.msra.mxu0 0
      %415 = vmatpush.bf16.msra.mxu0 0
      %416 = vmatpush.bf16.msra.mxu0 0
      %417 = vmatpush.bf16.msra.mxu0 0
      %418 = vmatpush.bf16.msra.mxu0 0
      %419 = vmatpush.bf16.msra.mxu0 0
      %420 = vmatpush.bf16.msra.mxu0 0
      %421 = vmatpush.bf16.msra.mxu0 %v403
      %422 = vmatmul.bf16.gmra.mxu0 %v400
      %v423 = vpop.f32.mrf.mxu0
      %v424 = vadd.f32 %v347, %v423
      %v425 = vpop.f32.mrf.mxu0
      %426 = vdwg.mxu0
      %427 = vmatpush.bf16.msra.mxu0 0
      %428 = vmatpush.bf16.msra.mxu0 0
      %429 = vmatpush.bf16.msra.mxu0 0
      %430 = vmatpush.bf16.msra.mxu0 0
      %431 = vmatpush.bf16.msra.mxu0 0
      %432 = vmatpush.bf16.msra.mxu0 0
      %433 = vmatpush.bf16.msra.mxu0 0
      %434 = vmatpush.bf16.msra.mxu0 %v406
      %435 = vmatmul.bf16.gmra.mxu0 %v400
      %v436 = vpop.f32.mrf.mxu0
      %v437 = vadd.f32 %v360, %v436
      %v438 = vpop.f32.mrf.mxu0
      %439 = vdwg.mxu0
      %440 = vmatpush.bf16.msra.mxu0 0
      %441 = vmatpush.bf16.msra.mxu0 0
      %442 = vmatpush.bf16.msra.mxu0 0
      %443 = vmatpush.bf16.msra.mxu0 0
      %444 = vmatpush.bf16.msra.mxu0 0
      %445 = vmatpush.bf16.msra.mxu0 0
      %446 = vmatpush.bf16.msra.mxu0 0
      %447 = vmatpush.bf16.msra.mxu0 %v409
      %448 = vmatmul.bf16.gmra.mxu0 %v400
      %v449 = vpop.f32.mrf.mxu0
      %v450 = vadd.f32 %v373, %v449
      %v451 = vpop.f32.mrf.mxu0
      %452 = vdwg.mxu0
      %453 = vmatpush.bf16.msra.mxu0 0
      %454 = vmatpush.bf16.msra.mxu0 0
      %455 = vmatpush.bf16.msra.mxu0 0
      %456 = vmatpush.bf16.msra.mxu0 0
      %457 = vmatpush.bf16.msra.mxu0 0
      %458 = vmatpush.bf16.msra.mxu0 0
      %459 = vmatpush.bf16.msra.mxu0 0
      %460 = vmatpush.bf16.msra.mxu0 %v412
      %461 = vmatmul.bf16.gmra.mxu0 %v400
      %v462 = vpop.f32.mrf.mxu0
      %v463 = vadd.f32 %v386, %v462
      %v464 = vpop.f32.mrf.mxu0
      %465 = vdwg.mxu0
      // Predicated region
      $region49: #{csp_up_block_forward.10} parent=43 // pred_check
        %p466 = pneg %p295
      $region50: #{csp_up_block_forward.10} parent=43 // pred_check_branch
        %468 = sbr.rel (%p466) target = $region52
      $region51: #{csp_up_block_forward.10} parent=43 // pred_region
        %v469 = vld [vmem:[#allocation2] sm:$0xff]
        %v470 = vadd.f32 %v424, %v437
        %v471 = vadd.f32 %v470, %v450
        %v472 = vadd.f32 %v471, %v463
        %473 = vadd.xlane.f32.xlu0 %v472
        %v474 = vpop.xlane.xlu0 %473
        %v475 = vadd.f32 %v469, %v474
        %vm476 = vcmask 7168
        %477 = vst.msk [vmem:[#allocation2] sm:$0xff] %vm476, %v475
        %v478 = vld [vmem:[#allocation3] sm:$0xff]
        %v479 = vmul.f32 %v424, %v424
        %v480 = vmul.f32 %v437, %v437
        %v481 = vmul.f32 %v450, %v450
        %v482 = vmul.f32 %v463, %v463
        %v483 = vadd.f32 %v479, %v480
        %v484 = vadd.f32 %v483, %v481
        %v485 = vadd.f32 %v484, %v482
        %486 = vadd.xlane.f32.xlu0 %v485
        %v487 = vpop.xlane.xlu0 %486
        %v488 = vadd.f32 %v478, %v487
        %489 = vst.msk [vmem:[#allocation3] sm:$0xff] %vm476, %v488
      $region52: #{csp_up_block_forward.10} parent=43 // pred_fallthru
        _
      %p490 = scmp.eq.s32.totalorder %s21, 1
      %p491 = pnand %p490, %p296
      %p492 = pneg %p491
      // Predicated region
      $region53: #{csp_up_block_forward.10} parent=43 // pred_check
        _
      $region54: #{csp_up_block_forward.10} parent=43 // pred_check_branch
        %494 = sbr.rel (%p491) target = $region56
      $region55: #{csp_up_block_forward.10} parent=43 // pred_region
        %v495 = vld [vmem:[#allocation2] sm:$0xff]
        %v496 = vmul.f32 %v495, 0.001953125
        %v497 = vld [vmem:[#allocation3] sm:$0xff]
        %v498 = vmul.f32 %v497, 0.001953125
        %v499 = vmul.f32 %v496, %v496
        %v500 = vsub.f32 %v498, %v499
        %v501 = vmax.f32 %v500, 0.0
        %v502 = vld [vmem:[%s4] sm:$0xff]
        %v503 = vadd.f32 %v501, 1e-05
        %v504 = vrsqrt.pop %v503
        %v505 = vmul.f32 %v504, %v503
        %v506 = vmul.f32 %v505, %v504
        %v507 = vmul.f32 0.5, %v506
        %v508 = vsub.f32 1.5, %v507
        %v509 = vmul.f32 %v504, %v508
        %vm510 = vweird.f32 %v503
        %vm511 = vweird.f32 %v504
        %vm512 = vmor %vm510, %vm511
        %v513 = vsel %vm512, %v504, %v509
        %v514 = vmul.f32 %v502, %v513
        %vm515 = vcmask 7168
        %516 = vst.msk [vmem:[#allocation2] sm:$0xff] %vm515, %v514
        %v517 = vld [vmem:[%s5] sm:$0xff]
        %v518 = vmul.f32 %v496, %v514
        %v519 = vsub.f32 %v517, %v518
        %520 = vst.msk [vmem:[#allocation3] sm:$0xff] %vm515, %v519
      $region56: #{csp_up_block_forward.10} parent=43 // pred_fallthru
        _
      // Predicated region
      $region57: #{csp_up_block_forward.10} parent=43 // pred_check
        %p521 = pneg %p490
      $region58: #{csp_up_block_forward.10} parent=43 // pred_check_branch
        %523 = sbr.rel (%p521) target = $region60
      $region59: #{csp_up_block_forward.10} parent=43 // pred_region
        %v524 = vld [vmem:[#allocation2] sm:$0xff]
        %526 = vset.pattern.permute.xlu0 0
        %527 = vperm.xlu0 %526, %v524
        %v528 = vpop.permute.xlu0 %527
        %v530 = vmul.f32 %v424, %v528
        %v531 = vmul.f32 %v437, %v528
        %v532 = vmul.f32 %v450, %v528
        %v533 = vmul.f32 %v463, %v528
        %v534 = vld [vmem:[#allocation3] sm:$0xff]
        %536 = vset.pattern.permute.xlu0 0
        %537 = vperm.xlu0 %536, %v534
        %v538 = vpop.permute.xlu0 %537
        %v540 = vadd.f32 %v530, %v538
        %v541 = vadd.f32 %v531, %v538
        %v542 = vadd.f32 %v532, %v538
        %v543 = vadd.f32 %v533, %v538
        %v544 = vmin.f32 %v540, 20.0
        %v545 = vmin.f32 %v541, 20.0
        %v546 = vmin.f32 %v542, 20.0
        %v547 = vmin.f32 %v543, 20.0
        %v548 = vmul.f32 %v544, 1.442695
        %v549 = vpow.pop %v548
        %v550 = vmul.f32 %v545, 1.442695
        %v551 = vpow.pop %v550
        %v552 = vmul.f32 %v546, 1.442695
        %v553 = vpow.pop %v552
        %v554 = vmul.f32 %v547, 1.442695
        %v555 = vpow.pop %v554
        %v556 = vadd.f32 %v549, 2.0
        %v557 = vadd.f32 %v551, 2.0
        %v558 = vadd.f32 %v553, 2.0
        %v559 = vadd.f32 %v555, 2.0
        %v560 = vmul.f32 %v549, %v556
        %v561 = vmul.f32 %v551, %v557
        %v562 = vmul.f32 %v553, %v558
        %v563 = vmul.f32 %v555, %v559
        %v564 = vadd.f32 %v560, 2.0
        %v565 = vadd.f32 %v561, 2.0
        %v566 = vadd.f32 %v562, 2.0
        %v567 = vadd.f32 %v563, 2.0
        %v568 = vrcp.pop %v564
        %v569 = vrcp.pop %v565
        %v570 = vrcp.pop %v566
        %v571 = vrcp.pop %v567
        %v572 = vmul.f32 %v564, %v568
        %v573 = vmul.f32 %v565, %v569
        %v574 = vmul.f32 %v566, %v570
        %v575 = vmul.f32 %v567, %v571
        %v576 = vsub.f32 2.0, %v572
        %v577 = vsub.f32 2.0, %v573
        %v578 = vsub.f32 2.0, %v574
        %v579 = vsub.f32 2.0, %v575
        %v580 = vmul.f32 %v568, %v576
        %v581 = vmul.f32 %v569, %v577
        %v582 = vmul.f32 %v570, %v578
        %v583 = vmul.f32 %v571, %v579
        %v584 = vmul.f32 %v540, %v560
        %v585 = vmul.f32 %v541, %v561
        %v586 = vmul.f32 %v542, %v562
        %v587 = vmul.f32 %v543, %v563
        %v588 = vmul.f32 %v584, %v580
        %v589 = vmul.f32 %v585, %v581
        %v590 = vmul.f32 %v586, %v582
        %v591 = vmul.f32 %v587, %v583
        %v592 = vpack.c.bf16 %v589, %v588
        %v593 = vpack.c.bf16 %v591, %v590
        %594 = vst [vmem:[%s291] sm:$0xff] %v592
        %595 = vst [vmem:[%s291 + $0x8] sm:$0xff] %v593
      $region60: #{csp_up_block_forward.10} parent=43 // pred_fallthru
        _
      %s596 = smul.u32 %s22, %s21
      %s597 = smul.u32 4, %s596
      %p598 = scmp.lt.s32.totalorder %s597, 3
      %s599 = scalar_select %p598, %s597, 3
      %s600 = smul.addr %s599, 4
      %s601 = scalar_lea.vmem %s6, %s600
      // Predicated region
      $region61: #{csp_up_block_forward.10} parent=43 // pred_check
        %p602 = pneg %p185
      $region62: #{csp_up_block_forward.10} parent=43 // pred_check_branch
        %604 = sbr.rel (%p602) target = $region64
      $region63: #{csp_up_block_forward.10} parent=43 // pred_region
        %s605 = smul.u32 %s22, %s21
        %s606 = smul.u32 4, %s605
      $region64: #{csp_up_block_forward.10} parent=43 // pred_fallthru
        _
    $region44: #{csp_up_block_forward.10} parent=5 // pred_fallthru
      _
    %p607 = scmp.le.s32.totalorder 2, %s12
    // Predicated region
    $region65: #{csp_up_block_forward.10} parent=5 // pred_check
      %p608 = pneg %p607
    $region66: #{csp_up_block_forward.10} parent=5 // pred_check_branch
      %610 = sbr.rel (%p608) target = $region68
    $region67: #{csp_up_block_forward.10} parent=5 // pred_region
      %s611 = ssub.s32 %s12, 2
      // Predicated region
      $region69: #{csp_up_block_forward.10} parent=67 // pred_check
        %p612 = pneg %p191
      $region70: #{csp_up_block_forward.10} parent=67 // pred_check_branch
        %614 = sbr.rel (%p612) target = $region72
      $region71: #{csp_up_block_forward.10} parent=67 // pred_region
        %s615 = smul.u32 %s24, %s23
        %s616 = smul.u32 4, %s615
        %p617 = scmp.lt.s32.totalorder %s616, 3
        %s618 = scalar_select %p617, %s616, 3
        %s619 = smul.addr %s618, 4
        %s620 = scalar_lea.vmem %s6, %s619
      $region72: #{csp_up_block_forward.10} parent=67 // pred_fallthru
        _
    $region68: #{csp_up_block_forward.10} parent=5 // pred_fallthru
      _
  $region6: #{csp_up_block_forward.10} parent=0 // loop_footer
    %s16 = sadd.s32 1, %s12
  $region7: #{csp_up_block_forward.10} parent=0 // loop_footer_branch
    %11 = sbr.rel target = $region3
  $region8: #{csp_up_block_forward.10} parent=0 // loop_exit
    _

// kernel: csp_up_block_forward.9
$region0: #{csp_up_block_forward.9}
  #allocation0 [shape = 'u32[]', space=smem, size = 0x4, offset = 0x4, fixed_abs, tag = 'smem constant byte address 0x4 - core index']
  #allocation1 [shape = 'u32[72,128]{1,0:T(1,128)}', space=vmem, size = 0x9000, scoped, tag = 'internal scratch']
  #allocation2 [shape = 'f32[8,1]{1,0:T(8,128)}', space=vmem, size = 0x1000, scoped, tag = 'scratch operand']
  #allocation3 [shape = 'f32[8,1]{1,0:T(8,128)}', space=vmem, size = 0x1000, scoped, tag = 'scratch operand']
  %s0 = inlined_call_operand.vmem [shape: bf16[4,512], index: 0, kind: input, shape index: {}]
  %s1 = inlined_call_operand.vmem [shape: bf16[8,4], index: 1, kind: input, shape index: {}]
  %s2 = inlined_call_operand.vmem [shape: f32[8,1], index: 2, kind: input, shape index: {}]
  %s3 = inlined_call_operand.vmem [shape: f32[8,1], index: 3, kind: input, shape index: {}]
  %s4 = inlined_call_operand.vmem [shape: bf16[8,512], index: 4, kind: output, shape index: {}]
  %s5 = sld [smem:[#allocation0]]
  $region65: #{csp_up_block_forward.9} parent=0
    _
  %s7 = ssub.s32 1, %s5
  %s8 = scalar_select 0, %s7, %s5
  loop: start=0, step=1, limit=4
  $region2: #{csp_up_block_forward.9} parent=0 // loop_pre_header
    _
  $region3: #{csp_up_block_forward.9} parent=0 // loop_header
    %s10 = sphi 0, %s14
    %p11 = scmp.ge.s32.totalorder %s10, 4
    %s17 = sphi 0, %s29
    %s18 = sphi 0, %s25
    %s19 = sphi 0, %s17
    %s20 = sphi 0, %s18
    %s21 = sphi 0, %s19
    %s22 = sphi 0, %s20
    %s32 = sphi 0, %s34
    %s35 = sphi 0, %s32
    %s36 = sphi 0, %s35
    %s52 = sphi 0, %s36
    %s56 = sphi 0, %s56
    %s58 = sphi 0, %s56
    %s59 = sphi 0, %s58
    %s73 = sphi 0, %s59
    %s77 = sphi 0, %s77
    %s79 = sphi 0, %s77
    %s80 = sphi 0, %s79
    %s94 = sphi 0, %s80
    %s98 = sphi 0, %s98
    %s100 = sphi 0, %s98
    %s101 = sphi 0, %s100
    %s115 = sphi 0, %s101
    %s123 = sphi 0, %s125
    %s126 = sphi 0, %s123
    %s127 = sphi 0, %s126
    %s143 = sphi 0, %s127
  $region4: #{csp_up_block_forward.9} parent=0 // loop_header_branch
    %13 = sbr.rel (%p11) target = $region8
  $region5: #{csp_up_block_forward.9} parent=0 // loop_body
    %s15 = ssub.s32 %s10, 1
    %s16 = ssub.s32 %s10, 2
    %s23 = sadd.s32 1, %s18
    %p24 = scmp.ge.s32.totalorder %s23, 1
    %s25 = scalar_select %p24, 0, %s23
    %s26 = sadd.s32 1, %s17
    %s27 = scalar_select %p24, %s26, %s17
    %p28 = scmp.ge.s32.totalorder %s27, 2
    %s29 = scalar_select %p28, 0, %s27
    %s30 = ssub.s32 %s18, %s25
    %p31 = scmp.eq.s32.totalorder %s30, 0
    %s33 = sadd.s32 %s32, 1
    %s34 = scalar_select %p31, %s32, %s33
    %p37 = pneg %p31
    %p38 = scmp.eq.s32.totalorder %s10, 1
    %p39 = por %p37, %p38
    %p40 = scmp.ne.s32.totalorder %s32, %s35
    %p41 = scmp.eq.s32.totalorder %s10, 0
    %p42 = por %p40, %p41
    %p43 = scmp.ne.s32.totalorder %s32, %s35
    %p44 = scmp.eq.s32.totalorder %s15, 1
    %p45 = por %p43, %p44
    %p46 = scmp.ne.s32.totalorder %s35, %s36
    %p47 = scmp.eq.s32.totalorder %s15, 0
    %p48 = por %p46, %p47
    %p49 = scmp.ne.s32.totalorder %s35, %s36
    %p50 = scmp.eq.s32.totalorder %s16, 1
    %p51 = por %p49, %p50
    %p53 = scmp.ne.s32.totalorder %s36, %s52
    %p54 = scmp.eq.s32.totalorder %s16, 0
    %p55 = por %p53, %p54
    %s57 = sadd.s32 %s56, 1
    %p60 = scmp.eq.s32.totalorder %s10, 1
    %p61 = scmp.ne.s32.totalorder %s56, %s58
    %p62 = scmp.eq.s32.totalorder %s10, 0
    %p63 = por %p61, %p62
    %p64 = scmp.ne.s32.totalorder %s56, %s58
    %p65 = scmp.eq.s32.totalorder %s15, 1
    %p66 = por %p64, %p65
    %p67 = scmp.ne.s32.totalorder %s58, %s59
    %p68 = scmp.eq.s32.totalorder %s15, 0
    %p69 = por %p67, %p68
    %p70 = scmp.ne.s32.totalorder %s58, %s59
    %p71 = scmp.eq.s32.totalorder %s16, 1
    %p72 = por %p70, %p71
    %p74 = scmp.ne.s32.totalorder %s59, %s73
    %p75 = scmp.eq.s32.totalorder %s16, 0
    %p76 = por %p74, %p75
    %s78 = sadd.s32 %s77, 1
    %p81 = scmp.eq.s32.totalorder %s10, 1
    %p82 = scmp.ne.s32.totalorder %s77, %s79
    %p83 = scmp.eq.s32.totalorder %s10, 0
    %p84 = por %p82, %p83
    %p85 = scmp.ne.s32.totalorder %s77, %s79
    %p86 = scmp.eq.s32.totalorder %s15, 1
    %p87 = por %p85, %p86
    %p88 = scmp.ne.s32.totalorder %s79, %s80
    %p89 = scmp.eq.s32.totalorder %s15, 0
    %p90 = por %p88, %p89
    %p91 = scmp.ne.s32.totalorder %s79, %s80
    %p92 = scmp.eq.s32.totalorder %s16, 1
    %p93 = por %p91, %p92
    %p95 = scmp.ne.s32.totalorder %s80, %s94
    %p96 = scmp.eq.s32.totalorder %s16, 0
    %p97 = por %p95, %p96
    %s99 = sadd.s32 %s98, 1
    %p102 = scmp.eq.s32.totalorder %s10, 1
    %p103 = scmp.ne.s32.totalorder %s98, %s100
    %p104 = scmp.eq.s32.totalorder %s10, 0
    %p105 = por %p103, %p104
    %p106 = scmp.ne.s32.totalorder %s98, %s100
    %p107 = scmp.eq.s32.totalorder %s15, 1
    %p108 = por %p106, %p107
    %p109 = scmp.ne.s32.totalorder %s100, %s101
    %p110 = scmp.eq.s32.totalorder %s15, 0
    %p111 = por %p109, %p110
    %p112 = scmp.ne.s32.totalorder %s100, %s101
    %p113 = scmp.eq.s32.totalorder %s16, 1
    %p114 = por %p112, %p113
    %p116 = scmp.ne.s32.totalorder %s101, %s115
    %p117 = scmp.eq.s32.totalorder %s16, 0
    %p118 = por %p116, %p117
    %s119 = smul.u32 %s18, %s17
    %s120 = smul.u32 %s25, %s29
    %s121 = ssub.s32 %s119, %s120
    %p122 = scmp.eq.s32.totalorder %s121, 0
    %s124 = sadd.s32 %s123, 1
    %s125 = scalar_select %p122, %s123, %s124
    %p128 = pneg %p122
    %p129 = scmp.eq.s32.totalorder %s10, 1
    %p130 = por %p128, %p129
    %p131 = scmp.ne.s32.totalorder %s123, %s126
    %p132 = scmp.eq.s32.totalorder %s10, 0
    %p133 = por %p131, %p132
    %p134 = scmp.ne.s32.totalorder %s123, %s126
    %p135 = scmp.eq.s32.totalorder %s15, 1
    %p136 = por %p134, %p135
    %p137 = scmp.ne.s32.totalorder %s126, %s127
    %p138 = scmp.eq.s32.totalorder %s15, 0
    %p139 = por %p137, %p138
    %p140 = scmp.ne.s32.totalorder %s126, %s127
    %p141 = scmp.eq.s32.totalorder %s16, 1
    %p142 = por %p140, %p141
    %p144 = scmp.ne.s32.totalorder %s127, %s143
    %p145 = scmp.eq.s32.totalorder %s16, 0
    %p146 = por %p144, %p145
    %p147 = scmp.le.s32.totalorder 1, %s10
    %p148 = scmp.lt.s32.totalorder %s10, 3
    %p149 = pnand %p147, %p148
    %p150 = pneg %p149
    // Predicated region
    $region9: #{csp_up_block_forward.9} parent=5 // pred_check
      _
    $region10: #{csp_up_block_forward.9} parent=5 // pred_check_branch
      %152 = sbr.rel (%p149) target = $region12
    $region11: #{csp_up_block_forward.9} parent=5 // pred_region
      %s153 = ssub.s32 %s10, 1
      // Predicated region
      $region13: #{csp_up_block_forward.9} parent=11 // pred_check
        %p154 = pneg %p48
      $region14: #{csp_up_block_forward.9} parent=11 // pred_check_branch
        %156 = sbr.rel (%p154) target = $region16
      $region15: #{csp_up_block_forward.9} parent=11 // pred_region
        %s157 = smul.u32 4, %s20
        %p158 = scmp.lt.s32.totalorder %s157, 3
        %s159 = scalar_select %p158, %s157, 3
        %s160 = smul.addr %s159, 2
        %s161 = scalar_lea.vmem %s0, %s160
        %s162 = smul.u32 4, %s20
      $region16: #{csp_up_block_forward.9} parent=11 // pred_fallthru
        _
      // Predicated region
      $region17: #{csp_up_block_forward.9} parent=11 // pred_check
        %p163 = pneg %p69
      $region18: #{csp_up_block_forward.9} parent=11 // pred_check_branch
        %165 = sbr.rel (%p163) target = $region20
      $region19: #{csp_up_block_forward.9} parent=11 // pred_region
        _
      $region20: #{csp_up_block_forward.9} parent=11 // pred_fallthru
        _
      // Predicated region
      $region21: #{csp_up_block_forward.9} parent=11 // pred_check
        %p166 = pneg %p90
      $region22: #{csp_up_block_forward.9} parent=11 // pred_check_branch
        %168 = sbr.rel (%p166) target = $region24
      $region23: #{csp_up_block_forward.9} parent=11 // pred_region
        _
      $region24: #{csp_up_block_forward.9} parent=11 // pred_fallthru
        _
      // Predicated region
      $region25: #{csp_up_block_forward.9} parent=11 // pred_check
        %p169 = pneg %p111
      $region26: #{csp_up_block_forward.9} parent=11 // pred_check_branch
        %171 = sbr.rel (%p169) target = $region28
      $region27: #{csp_up_block_forward.9} parent=11 // pred_region
        _
      $region28: #{csp_up_block_forward.9} parent=11 // pred_fallthru
        _
    $region12: #{csp_up_block_forward.9} parent=5 // pred_fallthru
      _
    %p172 = scmp.lt.s32.totalorder %s10, 2
    // Predicated region
    $region29: #{csp_up_block_forward.9} parent=5 // pred_check
      %p173 = pneg %p172
    $region30: #{csp_up_block_forward.9} parent=5 // pred_check_branch
      %175 = sbr.rel (%p173) target = $region32
    $region31: #{csp_up_block_forward.9} parent=5 // pred_region
      _
    $region32: #{csp_up_block_forward.9} parent=5 // pred_fallthru
      _
    %p176 = scmp.le.s32.totalorder 1, %s10
    %p177 = scmp.lt.s32.totalorder %s10, 3
    %p178 = pnand %p176, %p177
    %p179 = pneg %p178
    // Predicated region
    $region33: #{csp_up_block_forward.9} parent=5 // pred_check
      _
    $region34: #{csp_up_block_forward.9} parent=5 // pred_check_branch
      %181 = sbr.rel (%p178) target = $region36
    $region35: #{csp_up_block_forward.9} parent=5 // pred_region
      %s182 = ssub.s32 %s10, 1
      %s183 = smul.u32 4, %s20
      %p184 = scmp.lt.s32.totalorder %s183, 3
      %s185 = scalar_select %p184, %s183, 3
      %s186 = smul.addr %s185, 2
      %s187 = scalar_lea.vmem %s0, %s186
      %p188 = pneg %p48
      %p189 = pneg %p45
      %p190 = pneg %p69
      %p191 = pneg %p66
      %p192 = pneg %p90
      %p193 = pneg %p87
      %p194 = pneg %p111
      %p195 = pneg %p108
      %p196 = pneg %p139
      %p197 = pneg %p136
      %s198 = smul.u32 %s20, %s19
      %s199 = smul.u32 4, %s198
      %p200 = scmp.lt.s32.totalorder %s199, 3
      %s201 = scalar_select %p200, %s199, 3
      %s202 = smul.addr %s201, 4
      %s203 = scalar_lea.vmem %s4, %s202
      %s204 = smul.u32 4, %s20
      %p205 = scmp.lt.s32.totalorder %s204, 3
      %s206 = scalar_select %p205, %s204, 3
      %s207 = smul.addr %s206, 2
      %s208 = scalar_lea.vmem %s0, %s207
      %s209 = smul.u32 4, %s20
      %s210 = smul.u32 %s20, %s19
      %s211 = smul.u32 4, %s210
      %p212 = scmp.lt.s32.totalorder %s211, 3
      %s213 = scalar_select %p212, %s211, 3
      %s214 = smul.addr %s213, 4
      %s215 = scalar_lea.vmem %s4, %s214
      %s216 = smul.u32 %s20, %s19
      %s217 = smul.u32 4, %s216
      %p219 = scmp.eq.s32.totalorder %s19, 0
      %p220 = scmp.eq.s32.totalorder %s20, 0
      %p221 = pnand %p219, %p220
      %p222 = pneg %p221
      // Predicated region
      $region37: #{csp_up_block_forward.9} parent=35 // pred_check
        _
      $region38: #{csp_up_block_forward.9} parent=35 // pred_check_branch
        %224 = sbr.rel (%p221) target = $region40
      $region39: #{csp_up_block_forward.9} parent=35 // pred_region
        %vm225 = vcmask 7168
        %226 = vst.msk [vmem:[#allocation2] sm:$0xff] %vm225, 0.0
        %227 = vst.msk [vmem:[#allocation3] sm:$0xff] %vm225, 0.0
      $region40: #{csp_up_block_forward.9} parent=35 // pred_fallthru
        _
      %v228 = vld [vmem:[%s1] sm:$0xf]
      %v229 = vld [vmem:[%s208] sm:$0xff]
      %231 = vst [vmem:[#allocation1] ss:$4 sm:$0xff] %v229
      %v232 = vld.sshfl [vmem:[#allocation1] sm:$0xff pattern:$0x73625140]
      %v233 = vld.sshfl [vmem:[#allocation1 + $0x8] sm:$0xff pattern:$0x73625140]
      %v234 = vld.sshfl [vmem:[#allocation1 + $0x10] sm:$0xff pattern:$0x73625140]
      %v235 = vld.sshfl [vmem:[#allocation1 + $0x18] sm:$0xff pattern:$0x73625140]
      %vm236 = vcmask 31744
      %v238 = vsel %vm236, %v228, 0
      %vm240 = vcmask 1041408
      %v241 = vsel %vm240, %v232, 0
      %v243 = vsel %vm240, %v233, 0
      %v245 = vsel %vm240, %v234, 0
      %v247 = vsel %vm240, %v235, 0
      %249 = vmatpush.bf16.msra.mxu0 0
      %250 = vmatpush.bf16.msra.mxu0 0
      %251 = vmatpush.bf16.msra.mxu0 0
      %252 = vmatpush.bf16.msra.mxu0 0
      %253 = vmatpush.bf16.msra.mxu0 0
      %254 = vmatpush.bf16.msra.mxu0 0
      %255 = vmatpush.bf16.msra.mxu0 0
      %256 = vmatpush.bf16.msra.mxu0 %v241
      %257 = vmatmul.bf16.gmra.mxu0 %v238
      %v258 = vpop.f32.mrf.mxu0
      %v259 = vadd.f32 0.0, %v258
      %v260 = vpop.f32.mrf.mxu0
      %261 = vdwg.mxu0
      %262 = vmatpush.bf16.msra.mxu0 0
      %263 = vmatpush.bf16.msra.mxu0 0
      %264 = vmatpush.bf16.msra.mxu0 0
      %265 = vmatpush.bf16.msra.mxu0 0
      %266 = vmatpush.bf16.msra.mxu0 0
      %267 = vmatpush.bf16.msra.mxu0 0
      %268 = vmatpush.bf16.msra.mxu0 0
      %269 = vmatpush.bf16.msra.mxu0 %v243
      %270 = vmatmul.bf16.gmra.mxu0 %v238
      %v271 = vpop.f32.mrf.mxu0
      %v272 = vadd.f32 0.0, %v271
      %v273 = vpop.f32.mrf.mxu0
      %274 = vdwg.mxu0
      %275 = vmatpush.bf16.msra.mxu0 0
      %276 = vmatpush.bf16.msra.mxu0 0
      %277 = vmatpush.bf16.msra.mxu0 0
      %278 = vmatpush.bf16.msra.mxu0 0
      %279 = vmatpush.bf16.msra.mxu0 0
      %280 = vmatpush.bf16.msra.mxu0 0
      %281 = vmatpush.bf16.msra.mxu0 0
      %282 = vmatpush.bf16.msra.mxu0 %v245
      %283 = vmatmul.bf16.gmra.mxu0 %v238
      %v284 = vpop.f32.mrf.mxu0
      %v285 = vadd.f32 0.0, %v284
      %v286 = vpop.f32.mrf.mxu0
      %287 = vdwg.mxu0
      %288 = vmatpush.bf16.msra.mxu0 0
      %289 = vmatpush.bf16.msra.mxu0 0
      %290 = vmatpush.bf16.msra.mxu0 0
      %291 = vmatpush.bf16.msra.mxu0 0
      %292 = vmatpush.bf16.msra.mxu0 0
      %293 = vmatpush.bf16.msra.mxu0 0
      %294 = vmatpush.bf16.msra.mxu0 0
      %295 = vmatpush.bf16.msra.mxu0 %v247
      %296 = vmatmul.bf16.gmra.mxu0 %v238
      %v297 = vpop.f32.mrf.mxu0
      %v298 = vadd.f32 0.0, %v297
      %v299 = vpop.f32.mrf.mxu0
      %300 = vdwg.mxu0
      // Predicated region
      $region41: #{csp_up_block_forward.9} parent=35 // pred_check
        %p301 = pneg %p219
      $region42: #{csp_up_block_forward.9} parent=35 // pred_check_branch
        %303 = sbr.rel (%p301) target = $region44
      $region43: #{csp_up_block_forward.9} parent=35 // pred_region
        %v304 = vld [vmem:[#allocation2] sm:$0xff]
        %v305 = vadd.f32 %v259, %v272
        %v306 = vadd.f32 %v305, %v285
        %v307 = vadd.f32 %v306, %v298
        %308 = vadd.xlane.f32.xlu0 %v307
        %v309 = vpop.xlane.xlu0 %308
        %v310 = vadd.f32 %v304, %v309
        %vm311 = vcmask 7168
        %312 = vst.msk [vmem:[#allocation2] sm:$0xff] %vm311, %v310
        %v313 = vld [vmem:[#allocation3] sm:$0xff]
        %v314 = vmul.f32 %v259, %v259
        %v315 = vmul.f32 %v272, %v272
        %v316 = vmul.f32 %v285, %v285
        %v317 = vmul.f32 %v298, %v298
        %v318 = vadd.f32 %v314, %v315
        %v319 = vadd.f32 %v318, %v316
        %v320 = vadd.f32 %v319, %v317
        %321 = vadd.xlane.f32.xlu0 %v320
        %v322 = vpop.xlane.xlu0 %321
        %v323 = vadd.f32 %v313, %v322
        %324 = vst.msk [vmem:[#allocation3] sm:$0xff] %vm311, %v323
      $region44: #{csp_up_block_forward.9} parent=35 // pred_fallthru
        _
      %p325 = scmp.eq.s32.totalorder %s19, 1
      %p326 = pnand %p325, %p220
      %p327 = pneg %p326
      // Predicated region
      $region45: #{csp_up_block_forward.9} parent=35 // pred_check
        _
      $region46: #{csp_up_block_forward.9} parent=35 // pred_check_branch
        %329 = sbr.rel (%p326) target = $region48
      $region47: #{csp_up_block_forward.9} parent=35 // pred_region
        %v330 = vld [vmem:[#allocation2] sm:$0xff]
        %v331 = vmul.f32 %v330, 0.001953125
        %v332 = vld [vmem:[#allocation3] sm:$0xff]
        %v333 = vmul.f32 %v332, 0.001953125
        %v334 = vmul.f32 %v331, %v331
        %v335 = vsub.f32 %v333, %v334
        %v336 = vmax.f32 %v335, 0.0
        %v337 = vld [vmem:[%s2] sm:$0xff]
        %v338 = vadd.f32 %v336, 1e-05
        %v339 = vrsqrt.pop %v338
        %v340 = vmul.f32 %v339, %v338
        %v341 = vmul.f32 %v340, %v339
        %v342 = vmul.f32 0.5, %v341
        %v343 = vsub.f32 1.5, %v342
        %v344 = vmul.f32 %v339, %v343
        %vm345 = vweird.f32 %v338
        %vm346 = vweird.f32 %v339
        %vm347 = vmor %vm345, %vm346
        %v348 = vsel %vm347, %v339, %v344
        %v349 = vmul.f32 %v337, %v348
        %vm350 = vcmask 7168
        %351 = vst.msk [vmem:[#allocation2] sm:$0xff] %vm350, %v349
        %v352 = vld [vmem:[%s3] sm:$0xff]
        %v353 = vmul.f32 %v331, %v349
        %v354 = vsub.f32 %v352, %v353
        %355 = vst.msk [vmem:[#allocation3] sm:$0xff] %vm350, %v354
      $region48: #{csp_up_block_forward.9} parent=35 // pred_fallthru
        _
      // Predicated region
      $region49: #{csp_up_block_forward.9} parent=35 // pred_check
        %p356 = pneg %p325
      $region50: #{csp_up_block_forward.9} parent=35 // pred_check_branch
        %358 = sbr.rel (%p356) target = $region52
      $region51: #{csp_up_block_forward.9} parent=35 // pred_region
        %v359 = vld [vmem:[#allocation2] sm:$0xff]
        %361 = vset.pattern.permute.xlu0 0
        %362 = vperm.xlu0 %361, %v359
        %v363 = vpop.permute.xlu0 %362
        %v365 = vmul.f32 %v259, %v363
        %v366 = vmul.f32 %v272, %v363
        %v367 = vmul.f32 %v285, %v363
        %v368 = vmul.f32 %v298, %v363
        %v369 = vld [vmem:[#allocation3] sm:$0xff]
        %371 = vset.pattern.permute.xlu0 0
        %372 = vperm.xlu0 %371, %v369
        %v373 = vpop.permute.xlu0 %372
        %v375 = vadd.f32 %v365, %v373
        %v376 = vadd.f32 %v366, %v373
        %v377 = vadd.f32 %v367, %v373
        %v378 = vadd.f32 %v368, %v373
        %v379 = vmin.f32 %v375, 20.0
        %v380 = vmin.f32 %v376, 20.0
        %v381 = vmin.f32 %v377, 20.0
        %v382 = vmin.f32 %v378, 20.0
        %v383 = vmul.f32 %v379, 1.442695
        %v384 = vpow.pop %v383
        %v385 = vmul.f32 %v380, 1.442695
        %v386 = vpow.pop %v385
        %v387 = vmul.f32 %v381, 1.442695
        %v388 = vpow.pop %v387
        %v389 = vmul.f32 %v382, 1.442695
        %v390 = vpow.pop %v389
        %v391 = vadd.f32 %v384, 2.0
        %v392 = vadd.f32 %v386, 2.0
        %v393 = vadd.f32 %v388, 2.0
        %v394 = vadd.f32 %v390, 2.0
        %v395 = vmul.f32 %v384, %v391
        %v396 = vmul.f32 %v386, %v392
        %v397 = vmul.f32 %v388, %v393
        %v398 = vmul.f32 %v390, %v394
        %v399 = vadd.f32 %v395, 2.0
        %v400 = vadd.f32 %v396, 2.0
        %v401 = vadd.f32 %v397, 2.0
        %v402 = vadd.f32 %v398, 2.0
        %v403 = vrcp.pop %v399
        %v404 = vrcp.pop %v400
        %v405 = vrcp.pop %v401
        %v406 = vrcp.pop %v402
        %v407 = vmul.f32 %v399, %v403
        %v408 = vmul.f32 %v400, %v404
        %v409 = vmul.f32 %v401, %v405
        %v410 = vmul.f32 %v402, %v406
        %v411 = vsub.f32 2.0, %v407
        %v412 = vsub.f32 2.0, %v408
        %v413 = vsub.f32 2.0, %v409
        %v414 = vsub.f32 2.0, %v410
        %v415 = vmul.f32 %v403, %v411
        %v416 = vmul.f32 %v404, %v412
        %v417 = vmul.f32 %v405, %v413
        %v418 = vmul.f32 %v406, %v414
        %v419 = vmul.f32 %v375, %v395
        %v420 = vmul.f32 %v376, %v396
        %v421 = vmul.f32 %v377, %v397
        %v422 = vmul.f32 %v378, %v398
        %v423 = vmul.f32 %v419, %v415
        %v424 = vmul.f32 %v420, %v416
        %v425 = vmul.f32 %v421, %v417
        %v426 = vmul.f32 %v422, %v418
        %v427 = vpack.c.bf16 %v424, %v423
        %v428 = vpack.c.bf16 %v426, %v425
        %429 = vst [vmem:[%s215] sm:$0xff] %v427
        %430 = vst [vmem:[%s215 + $0x8] sm:$0xff] %v428
      $region52: #{csp_up_block_forward.9} parent=35 // pred_fallthru
        _
      %s431 = smul.u32 %s20, %s19
      %s432 = smul.u32 4, %s431
      %p433 = scmp.lt.s32.totalorder %s432, 3
      %s434 = scalar_select %p433, %s432, 3
      %s435 = smul.addr %s434, 4
      %s436 = scalar_lea.vmem %s4, %s435
      // Predicated region
      $region53: #{csp_up_block_forward.9} parent=35 // pred_check
        %p437 = pneg %p136
      $region54: #{csp_up_block_forward.9} parent=35 // pred_check_branch
        %439 = sbr.rel (%p437) target = $region56
      $region55: #{csp_up_block_forward.9} parent=35 // pred_region
        %s440 = smul.u32 %s20, %s19
        %s441 = smul.u32 4, %s440
      $region56: #{csp_up_block_forward.9} parent=35 // pred_fallthru
        _
    $region36: #{csp_up_block_forward.9} parent=5 // pred_fallthru
      _
    %p442 = scmp.le.s32.totalorder 2, %s10
    // Predicated region
    $region57: #{csp_up_block_forward.9} parent=5 // pred_check
      %p443 = pneg %p442
    $region58: #{csp_up_block_forward.9} parent=5 // pred_check_branch
      %445 = sbr.rel (%p443) target = $region60
    $region59: #{csp_up_block_forward.9} parent=5 // pred_region
      %s446 = ssub.s32 %s10, 2
      // Predicated region
      $region61: #{csp_up_block_forward.9} parent=59 // pred_check
        %p447 = pneg %p142
      $region62: #{csp_up_block_forward.9} parent=59 // pred_check_branch
        %449 = sbr.rel (%p447) target = $region64
      $region63: #{csp_up_block_forward.9} parent=59 // pred_region
        %s450 = smul.u32 %s22, %s21
        %s451 = smul.u32 4, %s450
        %p452 = scmp.lt.s32.totalorder %s451, 3
        %s453 = scalar_select %p452, %s451, 3
        %s454 = smul.addr %s453, 4
        %s455 = scalar_lea.vmem %s4, %s454
      $region64: #{csp_up_block_forward.9} parent=59 // pred_fallthru
        _
    $region60: #{csp_up_block_forward.9} parent=5 // pred_fallthru
      _
  $region6: #{csp_up_block_forward.9} parent=0 // loop_footer
    %s14 = sadd.s32 1, %s10
  $region7: #{csp_up_block_forward.9} parent=0 // loop_footer_branch
    %9 = sbr.rel target = $region3
  $region8: #{csp_up_block_forward.9} parent=0 // loop_exit
    _

// kernel: csp_up_block_forward.8
$region0: #{csp_up_block_forward.8}
  #allocation0 [shape = 'u32[]', space=smem, size = 0x4, offset = 0x4, fixed_abs, tag = 'smem constant byte address 0x4 - core index']
  #allocation1 [shape = 'u32[72,128]{1,0:T(1,128)}', space=vmem, size = 0x9000, scoped, tag = 'internal scratch']
  #allocation2 [shape = 'f32[8,1]{1,0:T(8,128)}', space=vmem, size = 0x1000, scoped, tag = 'scratch operand']
  #allocation3 [shape = 'f32[8,1]{1,0:T(8,128)}', space=vmem, size = 0x1000, scoped, tag = 'scratch operand']
  %s0 = inlined_call_operand.vmem [shape: bf16[8,128], index: 0, kind: input, shape index: {}]
  %s1 = inlined_call_operand.vmem [shape: bf16[8,8], index: 1, kind: input, shape index: {}]
  %s2 = inlined_call_operand.vmem [shape: f32[8,1], index: 2, kind: input, shape index: {}]
  %s3 = inlined_call_operand.vmem [shape: f32[8,1], index: 3, kind: input, shape index: {}]
  %s4 = inlined_call_operand.vmem [shape: bf16[8,128], index: 4, kind: output, shape index: {}]
  %s5 = sld [smem:[#allocation0]]
  $region65: #{csp_up_block_forward.8} parent=0
    _
  %s7 = ssub.s32 1, %s5
  %s8 = scalar_select 0, %s7, %s5
  loop: start=0, step=1, limit=4
  $region2: #{csp_up_block_forward.8} parent=0 // loop_pre_header
    _
  $region3: #{csp_up_block_forward.8} parent=0 // loop_header
    %s10 = sphi 0, %s14
    %p11 = scmp.ge.s32.totalorder %s10, 4
    %s17 = sphi 0, %s29
    %s18 = sphi 0, %s25
    %s19 = sphi 0, %s17
    %s20 = sphi 0, %s18
    %s21 = sphi 0, %s19
    %s22 = sphi 0, %s20
    %s32 = sphi 0, %s34
    %s35 = sphi 0, %s32
    %s36 = sphi 0, %s35
    %s52 = sphi 0, %s36
    %s56 = sphi 0, %s56
    %s58 = sphi 0, %s56
    %s59 = sphi 0, %s58
    %s73 = sphi 0, %s59
    %s77 = sphi 0, %s77
    %s79 = sphi 0, %s77
    %s80 = sphi 0, %s79
    %s94 = sphi 0, %s80
    %s98 = sphi 0, %s98
    %s100 = sphi 0, %s98
    %s101 = sphi 0, %s100
    %s115 = sphi 0, %s101
    %s123 = sphi 0, %s125
    %s126 = sphi 0, %s123
    %s127 = sphi 0, %s126
    %s143 = sphi 0, %s127
  $region4: #{csp_up_block_forward.8} parent=0 // loop_header_branch
    %13 = sbr.rel (%p11) target = $region8
  $region5: #{csp_up_block_forward.8} parent=0 // loop_body
    %s15 = ssub.s32 %s10, 1
    %s16 = ssub.s32 %s10, 2
    %s23 = sadd.s32 1, %s18
    %p24 = scmp.ge.s32.totalorder %s23, 1
    %s25 = scalar_select %p24, 0, %s23
    %s26 = sadd.s32 1, %s17
    %s27 = scalar_select %p24, %s26, %s17
    %p28 = scmp.ge.s32.totalorder %s27, 2
    %s29 = scalar_select %p28, 0, %s27
    %s30 = ssub.s32 %s18, %s25
    %p31 = scmp.eq.s32.totalorder %s30, 0
    %s33 = sadd.s32 %s32, 1
    %s34 = scalar_select %p31, %s32, %s33
    %p37 = pneg %p31
    %p38 = scmp.eq.s32.totalorder %s10, 1
    %p39 = por %p37, %p38
    %p40 = scmp.ne.s32.totalorder %s32, %s35
    %p41 = scmp.eq.s32.totalorder %s10, 0
    %p42 = por %p40, %p41
    %p43 = scmp.ne.s32.totalorder %s32, %s35
    %p44 = scmp.eq.s32.totalorder %s15, 1
    %p45 = por %p43, %p44
    %p46 = scmp.ne.s32.totalorder %s35, %s36
    %p47 = scmp.eq.s32.totalorder %s15, 0
    %p48 = por %p46, %p47
    %p49 = scmp.ne.s32.totalorder %s35, %s36
    %p50 = scmp.eq.s32.totalorder %s16, 1
    %p51 = por %p49, %p50
    %p53 = scmp.ne.s32.totalorder %s36, %s52
    %p54 = scmp.eq.s32.totalorder %s16, 0
    %p55 = por %p53, %p54
    %s57 = sadd.s32 %s56, 1
    %p60 = scmp.eq.s32.totalorder %s10, 1
    %p61 = scmp.ne.s32.totalorder %s56, %s58
    %p62 = scmp.eq.s32.totalorder %s10, 0
    %p63 = por %p61, %p62
    %p64 = scmp.ne.s32.totalorder %s56, %s58
    %p65 = scmp.eq.s32.totalorder %s15, 1
    %p66 = por %p64, %p65
    %p67 = scmp.ne.s32.totalorder %s58, %s59
    %p68 = scmp.eq.s32.totalorder %s15, 0
    %p69 = por %p67, %p68
    %p70 = scmp.ne.s32.totalorder %s58, %s59
    %p71 = scmp.eq.s32.totalorder %s16, 1
    %p72 = por %p70, %p71
    %p74 = scmp.ne.s32.totalorder %s59, %s73
    %p75 = scmp.eq.s32.totalorder %s16, 0
    %p76 = por %p74, %p75
    %s78 = sadd.s32 %s77, 1
    %p81 = scmp.eq.s32.totalorder %s10, 1
    %p82 = scmp.ne.s32.totalorder %s77, %s79
    %p83 = scmp.eq.s32.totalorder %s10, 0
    %p84 = por %p82, %p83
    %p85 = scmp.ne.s32.totalorder %s77, %s79
    %p86 = scmp.eq.s32.totalorder %s15, 1
    %p87 = por %p85, %p86
    %p88 = scmp.ne.s32.totalorder %s79, %s80
    %p89 = scmp.eq.s32.totalorder %s15, 0
    %p90 = por %p88, %p89
    %p91 = scmp.ne.s32.totalorder %s79, %s80
    %p92 = scmp.eq.s32.totalorder %s16, 1
    %p93 = por %p91, %p92
    %p95 = scmp.ne.s32.totalorder %s80, %s94
    %p96 = scmp.eq.s32.totalorder %s16, 0
    %p97 = por %p95, %p96
    %s99 = sadd.s32 %s98, 1
    %p102 = scmp.eq.s32.totalorder %s10, 1
    %p103 = scmp.ne.s32.totalorder %s98, %s100
    %p104 = scmp.eq.s32.totalorder %s10, 0
    %p105 = por %p103, %p104
    %p106 = scmp.ne.s32.totalorder %s98, %s100
    %p107 = scmp.eq.s32.totalorder %s15, 1
    %p108 = por %p106, %p107
    %p109 = scmp.ne.s32.totalorder %s100, %s101
    %p110 = scmp.eq.s32.totalorder %s15, 0
    %p111 = por %p109, %p110
    %p112 = scmp.ne.s32.totalorder %s100, %s101
    %p113 = scmp.eq.s32.totalorder %s16, 1
    %p114 = por %p112, %p113
    %p116 = scmp.ne.s32.totalorder %s101, %s115
    %p117 = scmp.eq.s32.totalorder %s16, 0
    %p118 = por %p116, %p117
    %s119 = smul.u32 %s18, %s17
    %s120 = smul.u32 %s25, %s29
    %s121 = ssub.s32 %s119, %s120
    %p122 = scmp.eq.s32.totalorder %s121, 0
    %s124 = sadd.s32 %s123, 1
    %s125 = scalar_select %p122, %s123, %s124
    %p128 = pneg %p122
    %p129 = scmp.eq.s32.totalorder %s10, 1
    %p130 = por %p128, %p129
    %p131 = scmp.ne.s32.totalorder %s123, %s126
    %p132 = scmp.eq.s32.totalorder %s10, 0
    %p133 = por %p131, %p132
    %p134 = scmp.ne.s32.totalorder %s123, %s126
    %p135 = scmp.eq.s32.totalorder %s15, 1
    %p136 = por %p134, %p135
    %p137 = scmp.ne.s32.totalorder %s126, %s127
    %p138 = scmp.eq.s32.totalorder %s15, 0
    %p139 = por %p137, %p138
    %p140 = scmp.ne.s32.totalorder %s126, %s127
    %p141 = scmp.eq.s32.totalorder %s16, 1
    %p142 = por %p140, %p141
    %p144 = scmp.ne.s32.totalorder %s127, %s143
    %p145 = scmp.eq.s32.totalorder %s16, 0
    %p146 = por %p144, %p145
    %p147 = scmp.le.s32.totalorder 1, %s10
    %p148 = scmp.lt.s32.totalorder %s10, 3
    %p149 = pnand %p147, %p148
    %p150 = pneg %p149
    // Predicated region
    $region9: #{csp_up_block_forward.8} parent=5 // pred_check
      _
    $region10: #{csp_up_block_forward.8} parent=5 // pred_check_branch
      %152 = sbr.rel (%p149) target = $region12
    $region11: #{csp_up_block_forward.8} parent=5 // pred_region
      %s153 = ssub.s32 %s10, 1
      // Predicated region
      $region13: #{csp_up_block_forward.8} parent=11 // pred_check
        %p154 = pneg %p48
      $region14: #{csp_up_block_forward.8} parent=11 // pred_check_branch
        %156 = sbr.rel (%p154) target = $region16
      $region15: #{csp_up_block_forward.8} parent=11 // pred_region
        %p157 = scmp.lt.s32.totalorder %s20, 0
        %s158 = scalar_select %p157, %s20, 0
        %s159 = smul.addr %s158, 4
        %s160 = scalar_lea.vmem %s0, %s159
      $region16: #{csp_up_block_forward.8} parent=11 // pred_fallthru
        _
      // Predicated region
      $region17: #{csp_up_block_forward.8} parent=11 // pred_check
        %p161 = pneg %p69
      $region18: #{csp_up_block_forward.8} parent=11 // pred_check_branch
        %163 = sbr.rel (%p161) target = $region20
      $region19: #{csp_up_block_forward.8} parent=11 // pred_region
        _
      $region20: #{csp_up_block_forward.8} parent=11 // pred_fallthru
        _
      // Predicated region
      $region21: #{csp_up_block_forward.8} parent=11 // pred_check
        %p164 = pneg %p90
      $region22: #{csp_up_block_forward.8} parent=11 // pred_check_branch
        %166 = sbr.rel (%p164) target = $region24
      $region23: #{csp_up_block_forward.8} parent=11 // pred_region
        _
      $region24: #{csp_up_block_forward.8} parent=11 // pred_fallthru
        _
      // Predicated region
      $region25: #{csp_up_block_forward.8} parent=11 // pred_check
        %p167 = pneg %p111
      $region26: #{csp_up_block_forward.8} parent=11 // pred_check_branch
        %169 = sbr.rel (%p167) target = $region28
      $region27: #{csp_up_block_forward.8} parent=11 // pred_region
        _
      $region28: #{csp_up_block_forward.8} parent=11 // pred_fallthru
        _
    $region12: #{csp_up_block_forward.8} parent=5 // pred_fallthru
      _
    %p170 = scmp.lt.s32.totalorder %s10, 2
    // Predicated region
    $region29: #{csp_up_block_forward.8} parent=5 // pred_check
      %p171 = pneg %p170
    $region30: #{csp_up_block_forward.8} parent=5 // pred_check_branch
      %173 = sbr.rel (%p171) target = $region32
    $region31: #{csp_up_block_forward.8} parent=5 // pred_region
      _
    $region32: #{csp_up_block_forward.8} parent=5 // pred_fallthru
      _
    %p174 = scmp.le.s32.totalorder 1, %s10
    %p175 = scmp.lt.s32.totalorder %s10, 3
    %p176 = pnand %p174, %p175
    %p177 = pneg %p176
    // Predicated region
    $region33: #{csp_up_block_forward.8} parent=5 // pred_check
      _
    $region34: #{csp_up_block_forward.8} parent=5 // pred_check_branch
      %179 = sbr.rel (%p176) target = $region36
    $region35: #{csp_up_block_forward.8} parent=5 // pred_region
      %s180 = ssub.s32 %s10, 1
      %p181 = scmp.lt.s32.totalorder %s20, 0
      %s182 = scalar_select %p181, %s20, 0
      %s183 = smul.addr %s182, 4
      %s184 = scalar_lea.vmem %s0, %s183
      %p185 = pneg %p48
      %p186 = pneg %p45
      %p187 = pneg %p69
      %p188 = pneg %p66
      %p189 = pneg %p90
      %p190 = pneg %p87
      %p191 = pneg %p111
      %p192 = pneg %p108
      %p193 = pneg %p139
      %p194 = pneg %p136
      %s195 = smul.u32 %s20, %s19
      %p196 = scmp.lt.s32.totalorder %s195, 0
      %s197 = scalar_select %p196, %s195, 0
      %s198 = smul.addr %s197, 4
      %s199 = scalar_lea.vmem %s4, %s198
      %p200 = scmp.lt.s32.totalorder %s20, 0
      %s201 = scalar_select %p200, %s20, 0
      %s202 = smul.addr %s201, 4
      %s203 = scalar_lea.vmem %s0, %s202
      %s204 = smul.u32 %s20, %s19
      %p205 = scmp.lt.s32.totalorder %s204, 0
      %s206 = scalar_select %p205, %s204, 0
      %s207 = smul.addr %s206, 4
      %s208 = scalar_lea.vmem %s4, %s207
      %s209 = smul.u32 %s20, %s19
      %p211 = scmp.eq.s32.totalorder %s19, 0
      %p212 = scmp.eq.s32.totalorder %s20, 0
      %p213 = pnand %p211, %p212
      %p214 = pneg %p213
      // Predicated region
      $region37: #{csp_up_block_forward.8} parent=35 // pred_check
        _
      $region38: #{csp_up_block_forward.8} parent=35 // pred_check_branch
        %216 = sbr.rel (%p213) target = $region40
      $region39: #{csp_up_block_forward.8} parent=35 // pred_region
        %vm217 = vcmask 7168
        %218 = vst.msk [vmem:[#allocation2] sm:$0xff] %vm217, 0.0
        %219 = vst.msk [vmem:[#allocation3] sm:$0xff] %vm217, 0.0
      $region40: #{csp_up_block_forward.8} parent=35 // pred_fallthru
        _
      %v220 = vld [vmem:[%s1] sm:$0xf]
      %v221 = vld [vmem:[%s203] sm:$0xf]
      %vm222 = vcmask 64512
      %v224 = vsel %vm222, %v220, 0
      %vm226 = vcmask 1043456
      %v228 = vsel %vm226, %v221, 0
      %230 = vmatpush.bf16.msra.mxu0 0
      %231 = vmatpush.bf16.msra.mxu0 0
      %232 = vmatpush.bf16.msra.mxu0 0
      %233 = vmatpush.bf16.msra.mxu0 0
      %234 = vmatpush.bf16.msra.mxu0 0
      %235 = vmatpush.bf16.msra.mxu0 0
      %236 = vmatpush.bf16.msra.mxu0 0
      %237 = vmatpush.bf16.msra.mxu0 %v228
      %238 = vmatmul.bf16.gmra.mxu0 %v224
      %v239 = vpop.f32.mrf.mxu0
      %v240 = vadd.f32 0.0, %v239
      %v241 = vpop.f32.mrf.mxu0
      %242 = vdwg.mxu0
      // Predicated region
      $region41: #{csp_up_block_forward.8} parent=35 // pred_check
        %p243 = pneg %p211
      $region42: #{csp_up_block_forward.8} parent=35 // pred_check_branch
        %245 = sbr.rel (%p243) target = $region44
      $region43: #{csp_up_block_forward.8} parent=35 // pred_region
        %v246 = vld [vmem:[#allocation2] sm:$0xff]
        %247 = vadd.xlane.f32.xlu0 %v240
        %v248 = vpop.xlane.xlu0 %247
        %v249 = vadd.f32 %v246, %v248
        %vm250 = vcmask 7168
        %251 = vst.msk [vmem:[#allocation2] sm:$0xff] %vm250, %v249
        %v252 = vld [vmem:[#allocation3] sm:$0xff]
        %v253 = vmul.f32 %v240, %v240
        %254 = vadd.xlane.f32.xlu0 %v253
        %v255 = vpop.xlane.xlu0 %254
        %v256 = vadd.f32 %v252, %v255
        %257 = vst.msk [vmem:[#allocation3] sm:$0xff] %vm250, %v256
      $region44: #{csp_up_block_forward.8} parent=35 // pred_fallthru
        _
      %p258 = scmp.eq.s32.totalorder %s19, 1
      %p259 = pnand %p258, %p212
      %p260 = pneg %p259
      // Predicated region
      $region45: #{csp_up_block_forward.8} parent=35 // pred_check
        _
      $region46: #{csp_up_block_forward.8} parent=35 // pred_check_branch
        %262 = sbr.rel (%p259) target = $region48
      $region47: #{csp_up_block_forward.8} parent=35 // pred_region
        %v263 = vld [vmem:[#allocation2] sm:$0xff]
        %v264 = vmul.f32 %v263, 0.0078125
        %v265 = vld [vmem:[#allocation3] sm:$0xff]
        %v266 = vmul.f32 %v265, 0.0078125
        %v267 = vmul.f32 %v264, %v264
        %v268 = vsub.f32 %v266, %v267
        %v269 = vmax.f32 %v268, 0.0
        %v270 = vld [vmem:[%s2] sm:$0xff]
        %v271 = vadd.f32 %v269, 1e-05
        %v272 = vrsqrt.pop %v271
        %v273 = vmul.f32 %v272, %v271
        %v274 = vmul.f32 %v273, %v272
        %v275 = vmul.f32 0.5, %v274
        %v276 = vsub.f32 1.5, %v275
        %v277 = vmul.f32 %v272, %v276
        %vm278 = vweird.f32 %v271
        %vm279 = vweird.f32 %v272
        %vm280 = vmor %vm278, %vm279
        %v281 = vsel %vm280, %v272, %v277
        %v282 = vmul.f32 %v270, %v281
        %vm283 = vcmask 7168
        %284 = vst.msk [vmem:[#allocation2] sm:$0xff] %vm283, %v282
        %v285 = vld [vmem:[%s3] sm:$0xff]
        %v286 = vmul.f32 %v264, %v282
        %v287 = vsub.f32 %v285, %v286
        %288 = vst.msk [vmem:[#allocation3] sm:$0xff] %vm283, %v287
      $region48: #{csp_up_block_forward.8} parent=35 // pred_fallthru
        _
      // Predicated region
      $region49: #{csp_up_block_forward.8} parent=35 // pred_check
        %p289 = pneg %p258
      $region50: #{csp_up_block_forward.8} parent=35 // pred_check_branch
        %291 = sbr.rel (%p289) target = $region52
      $region51: #{csp_up_block_forward.8} parent=35 // pred_region
        %v292 = vld [vmem:[#allocation2] sm:$0xff]
        %294 = vset.pattern.permute.xlu0 0
        %295 = vperm.xlu0 %294, %v292
        %v296 = vpop.permute.xlu0 %295
        %v298 = vmul.f32 %v240, %v296
        %v299 = vld [vmem:[#allocation3] sm:$0xff]
        %301 = vset.pattern.permute.xlu0 0
        %302 = vperm.xlu0 %301, %v299
        %v303 = vpop.permute.xlu0 %302
        %v305 = vadd.f32 %v298, %v303
        %v306 = vmin.f32 %v305, 20.0
        %v307 = vmul.f32 %v306, 1.442695
        %v308 = vpow.pop %v307
        %v309 = vadd.f32 %v308, 2.0
        %v310 = vmul.f32 %v308, %v309
        %v311 = vadd.f32 %v310, 2.0
        %v312 = vrcp.pop %v311
        %v313 = vmul.f32 %v311, %v312
        %v314 = vsub.f32 2.0, %v313
        %v315 = vmul.f32 %v312, %v314
        %v316 = vmul.f32 %v305, %v310
        %v317 = vmul.f32 %v316, %v315
        %v318 = vpack.c.bf16 %v317, %v317
        %319 = vst [vmem:[%s208] sm:$0xf] %v318
      $region52: #{csp_up_block_forward.8} parent=35 // pred_fallthru
        _
      %s320 = smul.u32 %s20, %s19
      %p321 = scmp.lt.s32.totalorder %s320, 0
      %s322 = scalar_select %p321, %s320, 0
      %s323 = smul.addr %s322, 4
      %s324 = scalar_lea.vmem %s4, %s323
      // Predicated region
      $region53: #{csp_up_block_forward.8} parent=35 // pred_check
        %p325 = pneg %p136
      $region54: #{csp_up_block_forward.8} parent=35 // pred_check_branch
        %327 = sbr.rel (%p325) target = $region56
      $region55: #{csp_up_block_forward.8} parent=35 // pred_region
        %s328 = smul.u32 %s20, %s19
      $region56: #{csp_up_block_forward.8} parent=35 // pred_fallthru
        _
    $region36: #{csp_up_block_forward.8} parent=5 // pred_fallthru
      _
    %p329 = scmp.le.s32.totalorder 2, %s10
    // Predicated region
    $region57: #{csp_up_block_forward.8} parent=5 // pred_check
      %p330 = pneg %p329
    $region58: #{csp_up_block_forward.8} parent=5 // pred_check_branch
      %332 = sbr.rel (%p330) target = $region60
    $region59: #{csp_up_block_forward.8} parent=5 // pred_region
      %s333 = ssub.s32 %s10, 2
      // Predicated region
      $region61: #{csp_up_block_forward.8} parent=59 // pred_check
        %p334 = pneg %p142
      $region62: #{csp_up_block_forward.8} parent=59 // pred_check_branch
        %336 = sbr.rel (%p334) target = $region64
      $region63: #{csp_up_block_forward.8} parent=59 // pred_region
        %s337 = smul.u32 %s22, %s21
        %p338 = scmp.lt.s32.totalorder %s337, 0
        %s339 = scalar_select %p338, %s337, 0
        %s340 = smul.addr %s339, 4
        %s341 = scalar_lea.vmem %s4, %s340
      $region64: #{csp_up_block_forward.8} parent=59 // pred_fallthru
        _
    $region60: #{csp_up_block_forward.8} parent=5 // pred_fallthru
      _
  $region6: #{csp_up_block_forward.8} parent=0 // loop_footer
    %s14 = sadd.s32 1, %s10
  $region7: #{csp_up_block_forward.8} parent=0 // loop_footer_branch
    %9 = sbr.rel target = $region3
  $region8: #{csp_up_block_forward.8} parent=0 // loop_exit
    _

// kernel: csp_up_block_forward.14
$region0: #{csp_up_block_forward.14}
  #allocation0 [shape = 'u32[]', space=smem, size = 0x4, offset = 0x4, fixed_abs, tag = 'smem constant byte address 0x4 - core index']
  #allocation1 [shape = 'u32[72,128]{1,0:T(1,128)}', space=vmem, size = 0x9000, scoped, tag = 'internal scratch']
  #allocation2 [shape = 'f32[8,1]{1,0:T(8,128)}', space=vmem, size = 0x1000, scoped, tag = 'scratch operand']
  #allocation3 [shape = 'f32[8,1]{1,0:T(8,128)}', space=vmem, size = 0x1000, scoped, tag = 'scratch operand']
  %s0 = inlined_call_operand.vmem [shape: bf16[8,512], index: 0, kind: input, shape index: {}]
  %s1 = inlined_call_operand.vmem [shape: bf16[8,8], index: 1, kind: input, shape index: {}]
  %s2 = inlined_call_operand.vmem [shape: f32[8,1], index: 2, kind: input, shape index: {}]
  %s3 = inlined_call_operand.vmem [shape: f32[8,1], index: 3, kind: input, shape index: {}]
  %s4 = inlined_call_operand.vmem [shape: bf16[8,512], index: 4, kind: output, shape index: {}]
  %s5 = sld [smem:[#allocation0]]
  $region65: #{csp_up_block_forward.14} parent=0
    _
  %s7 = ssub.s32 1, %s5
  %s8 = scalar_select 0, %s7, %s5
  loop: start=0, step=1, limit=4
  $region2: #{csp_up_block_forward.14} parent=0 // loop_pre_header
    _
  $region3: #{csp_up_block_forward.14} parent=0 // loop_header
    %s10 = sphi 0, %s14
    %p11 = scmp.ge.s32.totalorder %s10, 4
    %s17 = sphi 0, %s29
    %s18 = sphi 0, %s25
    %s19 = sphi 0, %s17
    %s20 = sphi 0, %s18
    %s21 = sphi 0, %s19
    %s22 = sphi 0, %s20
    %s32 = sphi 0, %s34
    %s35 = sphi 0, %s32
    %s36 = sphi 0, %s35
    %s52 = sphi 0, %s36
    %s56 = sphi 0, %s56
    %s58 = sphi 0, %s56
    %s59 = sphi 0, %s58
    %s73 = sphi 0, %s59
    %s77 = sphi 0, %s77
    %s79 = sphi 0, %s77
    %s80 = sphi 0, %s79
    %s94 = sphi 0, %s80
    %s98 = sphi 0, %s98
    %s100 = sphi 0, %s98
    %s101 = sphi 0, %s100
    %s115 = sphi 0, %s101
    %s123 = sphi 0, %s125
    %s126 = sphi 0, %s123
    %s127 = sphi 0, %s126
    %s143 = sphi 0, %s127
  $region4: #{csp_up_block_forward.14} parent=0 // loop_header_branch
    %13 = sbr.rel (%p11) target = $region8
  $region5: #{csp_up_block_forward.14} parent=0 // loop_body
    %s15 = ssub.s32 %s10, 1
    %s16 = ssub.s32 %s10, 2
    %s23 = sadd.s32 1, %s18
    %p24 = scmp.ge.s32.totalorder %s23, 1
    %s25 = scalar_select %p24, 0, %s23
    %s26 = sadd.s32 1, %s17
    %s27 = scalar_select %p24, %s26, %s17
    %p28 = scmp.ge.s32.totalorder %s27, 2
    %s29 = scalar_select %p28, 0, %s27
    %s30 = ssub.s32 %s18, %s25
    %p31 = scmp.eq.s32.totalorder %s30, 0
    %s33 = sadd.s32 %s32, 1
    %s34 = scalar_select %p31, %s32, %s33
    %p37 = pneg %p31
    %p38 = scmp.eq.s32.totalorder %s10, 1
    %p39 = por %p37, %p38
    %p40 = scmp.ne.s32.totalorder %s32, %s35
    %p41 = scmp.eq.s32.totalorder %s10, 0
    %p42 = por %p40, %p41
    %p43 = scmp.ne.s32.totalorder %s32, %s35
    %p44 = scmp.eq.s32.totalorder %s15, 1
    %p45 = por %p43, %p44
    %p46 = scmp.ne.s32.totalorder %s35, %s36
    %p47 = scmp.eq.s32.totalorder %s15, 0
    %p48 = por %p46, %p47
    %p49 = scmp.ne.s32.totalorder %s35, %s36
    %p50 = scmp.eq.s32.totalorder %s16, 1
    %p51 = por %p49, %p50
    %p53 = scmp.ne.s32.totalorder %s36, %s52
    %p54 = scmp.eq.s32.totalorder %s16, 0
    %p55 = por %p53, %p54
    %s57 = sadd.s32 %s56, 1
    %p60 = scmp.eq.s32.totalorder %s10, 1
    %p61 = scmp.ne.s32.totalorder %s56, %s58
    %p62 = scmp.eq.s32.totalorder %s10, 0
    %p63 = por %p61, %p62
    %p64 = scmp.ne.s32.totalorder %s56, %s58
    %p65 = scmp.eq.s32.totalorder %s15, 1
    %p66 = por %p64, %p65
    %p67 = scmp.ne.s32.totalorder %s58, %s59
    %p68 = scmp.eq.s32.totalorder %s15, 0
    %p69 = por %p67, %p68
    %p70 = scmp.ne.s32.totalorder %s58, %s59
    %p71 = scmp.eq.s32.totalorder %s16, 1
    %p72 = por %p70, %p71
    %p74 = scmp.ne.s32.totalorder %s59, %s73
    %p75 = scmp.eq.s32.totalorder %s16, 0
    %p76 = por %p74, %p75
    %s78 = sadd.s32 %s77, 1
    %p81 = scmp.eq.s32.totalorder %s10, 1
    %p82 = scmp.ne.s32.totalorder %s77, %s79
    %p83 = scmp.eq.s32.totalorder %s10, 0
    %p84 = por %p82, %p83
    %p85 = scmp.ne.s32.totalorder %s77, %s79
    %p86 = scmp.eq.s32.totalorder %s15, 1
    %p87 = por %p85, %p86
    %p88 = scmp.ne.s32.totalorder %s79, %s80
    %p89 = scmp.eq.s32.totalorder %s15, 0
    %p90 = por %p88, %p89
    %p91 = scmp.ne.s32.totalorder %s79, %s80
    %p92 = scmp.eq.s32.totalorder %s16, 1
    %p93 = por %p91, %p92
    %p95 = scmp.ne.s32.totalorder %s80, %s94
    %p96 = scmp.eq.s32.totalorder %s16, 0
    %p97 = por %p95, %p96
    %s99 = sadd.s32 %s98, 1
    %p102 = scmp.eq.s32.totalorder %s10, 1
    %p103 = scmp.ne.s32.totalorder %s98, %s100
    %p104 = scmp.eq.s32.totalorder %s10, 0
    %p105 = por %p103, %p104
    %p106 = scmp.ne.s32.totalorder %s98, %s100
    %p107 = scmp.eq.s32.totalorder %s15, 1
    %p108 = por %p106, %p107
    %p109 = scmp.ne.s32.totalorder %s100, %s101
    %p110 = scmp.eq.s32.totalorder %s15, 0
    %p111 = por %p109, %p110
    %p112 = scmp.ne.s32.totalorder %s100, %s101
    %p113 = scmp.eq.s32.totalorder %s16, 1
    %p114 = por %p112, %p113
    %p116 = scmp.ne.s32.totalorder %s101, %s115
    %p117 = scmp.eq.s32.totalorder %s16, 0
    %p118 = por %p116, %p117
    %s119 = smul.u32 %s18, %s17
    %s120 = smul.u32 %s25, %s29
    %s121 = ssub.s32 %s119, %s120
    %p122 = scmp.eq.s32.totalorder %s121, 0
    %s124 = sadd.s32 %s123, 1
    %s125 = scalar_select %p122, %s123, %s124
    %p128 = pneg %p122
    %p129 = scmp.eq.s32.totalorder %s10, 1
    %p130 = por %p128, %p129
    %p131 = scmp.ne.s32.totalorder %s123, %s126
    %p132 = scmp.eq.s32.totalorder %s10, 0
    %p133 = por %p131, %p132
    %p134 = scmp.ne.s32.totalorder %s123, %s126
    %p135 = scmp.eq.s32.totalorder %s15, 1
    %p136 = por %p134, %p135
    %p137 = scmp.ne.s32.totalorder %s126, %s127
    %p138 = scmp.eq.s32.totalorder %s15, 0
    %p139 = por %p137, %p138
    %p140 = scmp.ne.s32.totalorder %s126, %s127
    %p141 = scmp.eq.s32.totalorder %s16, 1
    %p142 = por %p140, %p141
    %p144 = scmp.ne.s32.totalorder %s127, %s143
    %p145 = scmp.eq.s32.totalorder %s16, 0
    %p146 = por %p144, %p145
    %p147 = scmp.le.s32.totalorder 1, %s10
    %p148 = scmp.lt.s32.totalorder %s10, 3
    %p149 = pnand %p147, %p148
    %p150 = pneg %p149
    // Predicated region
    $region9: #{csp_up_block_forward.14} parent=5 // pred_check
      _
    $region10: #{csp_up_block_forward.14} parent=5 // pred_check_branch
      %152 = sbr.rel (%p149) target = $region12
    $region11: #{csp_up_block_forward.14} parent=5 // pred_region
      %s153 = ssub.s32 %s10, 1
      // Predicated region
      $region13: #{csp_up_block_forward.14} parent=11 // pred_check
        %p154 = pneg %p48
      $region14: #{csp_up_block_forward.14} parent=11 // pred_check_branch
        %156 = sbr.rel (%p154) target = $region16
      $region15: #{csp_up_block_forward.14} parent=11 // pred_region
        %s157 = smul.u32 4, %s20
        %p158 = scmp.lt.s32.totalorder %s157, 3
        %s159 = scalar_select %p158, %s157, 3
        %s160 = smul.addr %s159, 4
        %s161 = scalar_lea.vmem %s0, %s160
        %s162 = smul.u32 4, %s20
      $region16: #{csp_up_block_forward.14} parent=11 // pred_fallthru
        _
      // Predicated region
      $region17: #{csp_up_block_forward.14} parent=11 // pred_check
        %p163 = pneg %p69
      $region18: #{csp_up_block_forward.14} parent=11 // pred_check_branch
        %165 = sbr.rel (%p163) target = $region20
      $region19: #{csp_up_block_forward.14} parent=11 // pred_region
        _
      $region20: #{csp_up_block_forward.14} parent=11 // pred_fallthru
        _
      // Predicated region
      $region21: #{csp_up_block_forward.14} parent=11 // pred_check
        %p166 = pneg %p90
      $region22: #{csp_up_block_forward.14} parent=11 // pred_check_branch
        %168 = sbr.rel (%p166) target = $region24
      $region23: #{csp_up_block_forward.14} parent=11 // pred_region
        _
      $region24: #{csp_up_block_forward.14} parent=11 // pred_fallthru
        _
      // Predicated region
      $region25: #{csp_up_block_forward.14} parent=11 // pred_check
        %p169 = pneg %p111
      $region26: #{csp_up_block_forward.14} parent=11 // pred_check_branch
        %171 = sbr.rel (%p169) target = $region28
      $region27: #{csp_up_block_forward.14} parent=11 // pred_region
        _
      $region28: #{csp_up_block_forward.14} parent=11 // pred_fallthru
        _
    $region12: #{csp_up_block_forward.14} parent=5 // pred_fallthru
      _
    %p172 = scmp.lt.s32.totalorder %s10, 2
    // Predicated region
    $region29: #{csp_up_block_forward.14} parent=5 // pred_check
      %p173 = pneg %p172
    $region30: #{csp_up_block_forward.14} parent=5 // pred_check_branch
      %175 = sbr.rel (%p173) target = $region32
    $region31: #{csp_up_block_forward.14} parent=5 // pred_region
      _
    $region32: #{csp_up_block_forward.14} parent=5 // pred_fallthru
      _
    %p176 = scmp.le.s32.totalorder 1, %s10
    %p177 = scmp.lt.s32.totalorder %s10, 3
    %p178 = pnand %p176, %p177
    %p179 = pneg %p178
    // Predicated region
    $region33: #{csp_up_block_forward.14} parent=5 // pred_check
      _
    $region34: #{csp_up_block_forward.14} parent=5 // pred_check_branch
      %181 = sbr.rel (%p178) target = $region36
    $region35: #{csp_up_block_forward.14} parent=5 // pred_region
      %s182 = ssub.s32 %s10, 1
      %s183 = smul.u32 4, %s20
      %p184 = scmp.lt.s32.totalorder %s183, 3
      %s185 = scalar_select %p184, %s183, 3
      %s186 = smul.addr %s185, 4
      %s187 = scalar_lea.vmem %s0, %s186
      %p188 = pneg %p48
      %p189 = pneg %p45
      %p190 = pneg %p69
      %p191 = pneg %p66
      %p192 = pneg %p90
      %p193 = pneg %p87
      %p194 = pneg %p111
      %p195 = pneg %p108
      %p196 = pneg %p139
      %p197 = pneg %p136
      %s198 = smul.u32 %s20, %s19
      %s199 = smul.u32 4, %s198
      %p200 = scmp.lt.s32.totalorder %s199, 3
      %s201 = scalar_select %p200, %s199, 3
      %s202 = smul.addr %s201, 4
      %s203 = scalar_lea.vmem %s4, %s202
      %s204 = smul.u32 4, %s20
      %p205 = scmp.lt.s32.totalorder %s204, 3
      %s206 = scalar_select %p205, %s204, 3
      %s207 = smul.addr %s206, 4
      %s208 = scalar_lea.vmem %s0, %s207
      %s209 = smul.u32 4, %s20
      %s210 = smul.u32 %s20, %s19
      %s211 = smul.u32 4, %s210
      %p212 = scmp.lt.s32.totalorder %s211, 3
      %s213 = scalar_select %p212, %s211, 3
      %s214 = smul.addr %s213, 4
      %s215 = scalar_lea.vmem %s4, %s214
      %s216 = smul.u32 %s20, %s19
      %s217 = smul.u32 4, %s216
      %p219 = scmp.eq.s32.totalorder %s19, 0
      %p220 = scmp.eq.s32.totalorder %s20, 0
      %p221 = pnand %p219, %p220
      %p222 = pneg %p221
      // Predicated region
      $region37: #{csp_up_block_forward.14} parent=35 // pred_check
        _
      $region38: #{csp_up_block_forward.14} parent=35 // pred_check_branch
        %224 = sbr.rel (%p221) target = $region40
      $region39: #{csp_up_block_forward.14} parent=35 // pred_region
        %vm225 = vcmask 7168
        %226 = vst.msk [vmem:[#allocation2] sm:$0xff] %vm225, 0.0
        %227 = vst.msk [vmem:[#allocation3] sm:$0xff] %vm225, 0.0
      $region40: #{csp_up_block_forward.14} parent=35 // pred_fallthru
        _
      %v228 = vld [vmem:[%s1] sm:$0xf]
      %v229 = vld [vmem:[%s208] sm:$0xff]
      %v230 = vld [vmem:[%s208 + $0x8] sm:$0xff]
      %v233 = vunpack.c.l.b16 %v229
      %v234 = vunpack.c.h.b16 %v229
      %v235 = vunpack.c.l.b16 %v230
      %v236 = vunpack.c.h.b16 %v230
      %v237 = vpack.c.b16 %v233, %v233
      %v238 = vpack.c.b16 %v234, %v234
      %v239 = vpack.c.b16 %v235, %v235
      %v240 = vpack.c.b16 %v236, %v236
      %vm241 = vcmask 64512
      %v243 = vsel %vm241, %v228, 0
      %vm245 = vcmask 1043456
      %v247 = vsel %vm245, %v237, 0
      %v250 = vsel %vm245, %v238, 0
      %v253 = vsel %vm245, %v239, 0
      %v256 = vsel %vm245, %v240, 0
      %258 = vmatpush.bf16.msra.mxu0 0
      %259 = vmatpush.bf16.msra.mxu0 0
      %260 = vmatpush.bf16.msra.mxu0 0
      %261 = vmatpush.bf16.msra.mxu0 0
      %262 = vmatpush.bf16.msra.mxu0 0
      %263 = vmatpush.bf16.msra.mxu0 0
      %264 = vmatpush.bf16.msra.mxu0 0
      %265 = vmatpush.bf16.msra.mxu0 %v247
      %266 = vmatmul.bf16.gmra.mxu0 %v243
      %v267 = vpop.f32.mrf.mxu0
      %v268 = vadd.f32 0.0, %v267
      %v269 = vpop.f32.mrf.mxu0
      %270 = vdwg.mxu0
      %271 = vmatpush.bf16.msra.mxu0 0
      %272 = vmatpush.bf16.msra.mxu0 0
      %273 = vmatpush.bf16.msra.mxu0 0
      %274 = vmatpush.bf16.msra.mxu0 0
      %275 = vmatpush.bf16.msra.mxu0 0
      %276 = vmatpush.bf16.msra.mxu0 0
      %277 = vmatpush.bf16.msra.mxu0 0
      %278 = vmatpush.bf16.msra.mxu0 %v250
      %279 = vmatmul.bf16.gmra.mxu0 %v243
      %v280 = vpop.f32.mrf.mxu0
      %v281 = vadd.f32 0.0, %v280
      %v282 = vpop.f32.mrf.mxu0
      %283 = vdwg.mxu0
      %284 = vmatpush.bf16.msra.mxu0 0
      %285 = vmatpush.bf16.msra.mxu0 0
      %286 = vmatpush.bf16.msra.mxu0 0
      %287 = vmatpush.bf16.msra.mxu0 0
      %288 = vmatpush.bf16.msra.mxu0 0
      %289 = vmatpush.bf16.msra.mxu0 0
      %290 = vmatpush.bf16.msra.mxu0 0
      %291 = vmatpush.bf16.msra.mxu0 %v253
      %292 = vmatmul.bf16.gmra.mxu0 %v243
      %v293 = vpop.f32.mrf.mxu0
      %v294 = vadd.f32 0.0, %v293
      %v295 = vpop.f32.mrf.mxu0
      %296 = vdwg.mxu0
      %297 = vmatpush.bf16.msra.mxu0 0
      %298 = vmatpush.bf16.msra.mxu0 0
      %299 = vmatpush.bf16.msra.mxu0 0
      %300 = vmatpush.bf16.msra.mxu0 0
      %301 = vmatpush.bf16.msra.mxu0 0
      %302 = vmatpush.bf16.msra.mxu0 0
      %303 = vmatpush.bf16.msra.mxu0 0
      %304 = vmatpush.bf16.msra.mxu0 %v256
      %305 = vmatmul.bf16.gmra.mxu0 %v243
      %v306 = vpop.f32.mrf.mxu0
      %v307 = vadd.f32 0.0, %v306
      %v308 = vpop.f32.mrf.mxu0
      %309 = vdwg.mxu0
      // Predicated region
      $region41: #{csp_up_block_forward.14} parent=35 // pred_check
        %p310 = pneg %p219
      $region42: #{csp_up_block_forward.14} parent=35 // pred_check_branch
        %312 = sbr.rel (%p310) target = $region44
      $region43: #{csp_up_block_forward.14} parent=35 // pred_region
        %v313 = vld [vmem:[#allocation2] sm:$0xff]
        %v314 = vadd.f32 %v268, %v281
        %v315 = vadd.f32 %v314, %v294
        %v316 = vadd.f32 %v315, %v307
        %317 = vadd.xlane.f32.xlu0 %v316
        %v318 = vpop.xlane.xlu0 %317
        %v319 = vadd.f32 %v313, %v318
        %vm320 = vcmask 7168
        %321 = vst.msk [vmem:[#allocation2] sm:$0xff] %vm320, %v319
        %v322 = vld [vmem:[#allocation3] sm:$0xff]
        %v323 = vmul.f32 %v268, %v268
        %v324 = vmul.f32 %v281, %v281
        %v325 = vmul.f32 %v294, %v294
        %v326 = vmul.f32 %v307, %v307
        %v327 = vadd.f32 %v323, %v324
        %v328 = vadd.f32 %v327, %v325
        %v329 = vadd.f32 %v328, %v326
        %330 = vadd.xlane.f32.xlu0 %v329
        %v331 = vpop.xlane.xlu0 %330
        %v332 = vadd.f32 %v322, %v331
        %333 = vst.msk [vmem:[#allocation3] sm:$0xff] %vm320, %v332
      $region44: #{csp_up_block_forward.14} parent=35 // pred_fallthru
        _
      %p334 = scmp.eq.s32.totalorder %s19, 1
      %p335 = pnand %p334, %p220
      %p336 = pneg %p335
      // Predicated region
      $region45: #{csp_up_block_forward.14} parent=35 // pred_check
        _
      $region46: #{csp_up_block_forward.14} parent=35 // pred_check_branch
        %338 = sbr.rel (%p335) target = $region48
      $region47: #{csp_up_block_forward.14} parent=35 // pred_region
        %v339 = vld [vmem:[#allocation2] sm:$0xff]
        %v340 = vmul.f32 %v339, 0.001953125
        %v341 = vld [vmem:[#allocation3] sm:$0xff]
        %v342 = vmul.f32 %v341, 0.001953125
        %v343 = vmul.f32 %v340, %v340
        %v344 = vsub.f32 %v342, %v343
        %v345 = vmax.f32 %v344, 0.0
        %v346 = vld [vmem:[%s2] sm:$0xff]
        %v347 = vadd.f32 %v345, 0.001
        %v348 = vrsqrt.pop %v347
        %v349 = vmul.f32 %v348, %v347
        %v350 = vmul.f32 %v349, %v348
        %v351 = vmul.f32 0.5, %v350
        %v352 = vsub.f32 1.5, %v351
        %v353 = vmul.f32 %v348, %v352
        %vm354 = vweird.f32 %v347
        %vm355 = vweird.f32 %v348
        %vm356 = vmor %vm354, %vm355
        %v357 = vsel %vm356, %v348, %v353
        %v358 = vmul.f32 %v346, %v357
        %vm359 = vcmask 7168
        %360 = vst.msk [vmem:[#allocation2] sm:$0xff] %vm359, %v358
        %v361 = vld [vmem:[%s3] sm:$0xff]
        %v362 = vmul.f32 %v340, %v358
        %v363 = vsub.f32 %v361, %v362
        %364 = vst.msk [vmem:[#allocation3] sm:$0xff] %vm359, %v363
      $region48: #{csp_up_block_forward.14} parent=35 // pred_fallthru
        _
      // Predicated region
      $region49: #{csp_up_block_forward.14} parent=35 // pred_check
        %p365 = pneg %p334
      $region50: #{csp_up_block_forward.14} parent=35 // pred_check_branch
        %367 = sbr.rel (%p365) target = $region52
      $region51: #{csp_up_block_forward.14} parent=35 // pred_region
        %v368 = vld [vmem:[#allocation2] sm:$0xff]
        %370 = vset.pattern.permute.xlu0 0
        %371 = vperm.xlu0 %370, %v368
        %v372 = vpop.permute.xlu0 %371
        %v374 = vmul.f32 %v268, %v372
        %v375 = vmul.f32 %v281, %v372
        %v376 = vmul.f32 %v294, %v372
        %v377 = vmul.f32 %v307, %v372
        %v378 = vld [vmem:[#allocation3] sm:$0xff]
        %380 = vset.pattern.permute.xlu0 0
        %381 = vperm.xlu0 %380, %v378
        %v382 = vpop.permute.xlu0 %381
        %v384 = vadd.f32 %v374, %v382
        %v385 = vadd.f32 %v375, %v382
        %v386 = vadd.f32 %v376, %v382
        %v387 = vadd.f32 %v377, %v382
        %v388 = vmin.f32 %v384, 20.0
        %v389 = vmin.f32 %v385, 20.0
        %v390 = vmin.f32 %v386, 20.0
        %v391 = vmin.f32 %v387, 20.0
        %v392 = vmul.f32 %v388, 1.442695
        %v393 = vpow.pop %v392
        %v394 = vmul.f32 %v389, 1.442695
        %v395 = vpow.pop %v394
        %v396 = vmul.f32 %v390, 1.442695
        %v397 = vpow.pop %v396
        %v398 = vmul.f32 %v391, 1.442695
        %v399 = vpow.pop %v398
        %v400 = vadd.f32 %v393, 2.0
        %v401 = vadd.f32 %v395, 2.0
        %v402 = vadd.f32 %v397, 2.0
        %v403 = vadd.f32 %v399, 2.0
        %v404 = vmul.f32 %v393, %v400
        %v405 = vmul.f32 %v395, %v401
        %v406 = vmul.f32 %v397, %v402
        %v407 = vmul.f32 %v399, %v403
        %v408 = vadd.f32 %v404, 2.0
        %v409 = vadd.f32 %v405, 2.0
        %v410 = vadd.f32 %v406, 2.0
        %v411 = vadd.f32 %v407, 2.0
        %v412 = vrcp.pop %v408
        %v413 = vrcp.pop %v409
        %v414 = vrcp.pop %v410
        %v415 = vrcp.pop %v411
        %v416 = vmul.f32 %v408, %v412
        %v417 = vmul.f32 %v409, %v413
        %v418 = vmul.f32 %v410, %v414
        %v419 = vmul.f32 %v411, %v415
        %v420 = vsub.f32 2.0, %v416
        %v421 = vsub.f32 2.0, %v417
        %v422 = vsub.f32 2.0, %v418
        %v423 = vsub.f32 2.0, %v419
        %v424 = vmul.f32 %v412, %v420
        %v425 = vmul.f32 %v413, %v421
        %v426 = vmul.f32 %v414, %v422
        %v427 = vmul.f32 %v415, %v423
        %v428 = vmul.f32 %v384, %v404
        %v429 = vmul.f32 %v385, %v405
        %v430 = vmul.f32 %v386, %v406
        %v431 = vmul.f32 %v387, %v407
        %v432 = vmul.f32 %v428, %v424
        %v433 = vmul.f32 %v429, %v425
        %v434 = vmul.f32 %v430, %v426
        %v435 = vmul.f32 %v431, %v427
        %v436 = vpack.c.bf16 %v433, %v432
        %v437 = vpack.c.bf16 %v435, %v434
        %438 = vst [vmem:[%s215] sm:$0xff] %v436
        %439 = vst [vmem:[%s215 + $0x8] sm:$0xff] %v437
      $region52: #{csp_up_block_forward.14} parent=35 // pred_fallthru
        _
      %s440 = smul.u32 %s20, %s19
      %s441 = smul.u32 4, %s440
      %p442 = scmp.lt.s32.totalorder %s441, 3
      %s443 = scalar_select %p442, %s441, 3
      %s444 = smul.addr %s443, 4
      %s445 = scalar_lea.vmem %s4, %s444
      // Predicated region
      $region53: #{csp_up_block_forward.14} parent=35 // pred_check
        %p446 = pneg %p136
      $region54: #{csp_up_block_forward.14} parent=35 // pred_check_branch
        %448 = sbr.rel (%p446) target = $region56
      $region55: #{csp_up_block_forward.14} parent=35 // pred_region
        %s449 = smul.u32 %s20, %s19
        %s450 = smul.u32 4, %s449
      $region56: #{csp_up_block_forward.14} parent=35 // pred_fallthru
        _
    $region36: #{csp_up_block_forward.14} parent=5 // pred_fallthru
      _
    %p451 = scmp.le.s32.totalorder 2, %s10
    // Predicated region
    $region57: #{csp_up_block_forward.14} parent=5 // pred_check
      %p452 = pneg %p451
    $region58: #{csp_up_block_forward.14} parent=5 // pred_check_branch
      %454 = sbr.rel (%p452) target = $region60
    $region59: #{csp_up_block_forward.14} parent=5 // pred_region
      %s455 = ssub.s32 %s10, 2
      // Predicated region
      $region61: #{csp_up_block_forward.14} parent=59 // pred_check
        %p456 = pneg %p142
      $region62: #{csp_up_block_forward.14} parent=59 // pred_check_branch
        %458 = sbr.rel (%p456) target = $region64
      $region63: #{csp_up_block_forward.14} parent=59 // pred_region
        %s459 = smul.u32 %s22, %s21
        %s460 = smul.u32 4, %s459
        %p461 = scmp.lt.s32.totalorder %s460, 3
        %s462 = scalar_select %p461, %s460, 3
        %s463 = smul.addr %s462, 4
        %s464 = scalar_lea.vmem %s4, %s463
      $region64: #{csp_up_block_forward.14} parent=59 // pred_fallthru
        _
    $region60: #{csp_up_block_forward.14} parent=5 // pred_fallthru
      _
  $region6: #{csp_up_block_forward.14} parent=0 // loop_footer
    %s14 = sadd.s32 1, %s10
  $region7: #{csp_up_block_forward.14} parent=0 // loop_footer_branch
    %9 = sbr.rel target = $region3
  $region8: #{csp_up_block_forward.14} parent=0 // loop_exit
    _

// kernel: csp_up_block_forward.11
$region0: #{csp_up_block_forward.11}
  #allocation0 [shape = 'u32[]', space=smem, size = 0x4, offset = 0x4, fixed_abs, tag = 'smem constant byte address 0x4 - core index']
  #allocation1 [shape = 'u32[72,128]{1,0:T(1,128)}', space=vmem, size = 0x9000, scoped, tag = 'internal scratch']
  #allocation2 [shape = 'f32[8,1]{1,0:T(8,128)}', space=vmem, size = 0x1000, scoped, tag = 'scratch operand']
  #allocation3 [shape = 'f32[8,1]{1,0:T(8,128)}', space=vmem, size = 0x1000, scoped, tag = 'scratch operand']
  %s0 = inlined_call_operand.vmem [shape: bf16[8,512], index: 0, kind: input, shape index: {}]
  %s1 = inlined_call_operand.vmem [shape: bf16[8,8], index: 1, kind: input, shape index: {}]
  %s2 = inlined_call_operand.vmem [shape: f32[8,1], index: 2, kind: input, shape index: {}]
  %s3 = inlined_call_operand.vmem [shape: f32[8,1], index: 3, kind: input, shape index: {}]
  %s4 = inlined_call_operand.vmem [shape: bf16[8,512], index: 4, kind: output, shape index: {}]
  %s5 = sld [smem:[#allocation0]]
  $region65: #{csp_up_block_forward.11} parent=0
    _
  %s7 = ssub.s32 1, %s5
  %s8 = scalar_select 0, %s7, %s5
  loop: start=0, step=1, limit=4
  $region2: #{csp_up_block_forward.11} parent=0 // loop_pre_header
    _
  $region3: #{csp_up_block_forward.11} parent=0 // loop_header
    %s10 = sphi 0, %s14
    %p11 = scmp.ge.s32.totalorder %s10, 4
    %s17 = sphi 0, %s29
    %s18 = sphi 0, %s25
    %s19 = sphi 0, %s17
    %s20 = sphi 0, %s18
    %s21 = sphi 0, %s19
    %s22 = sphi 0, %s20
    %s32 = sphi 0, %s34
    %s35 = sphi 0, %s32
    %s36 = sphi 0, %s35
    %s52 = sphi 0, %s36
    %s56 = sphi 0, %s56
    %s58 = sphi 0, %s56
    %s59 = sphi 0, %s58
    %s73 = sphi 0, %s59
    %s77 = sphi 0, %s77
    %s79 = sphi 0, %s77
    %s80 = sphi 0, %s79
    %s94 = sphi 0, %s80
    %s98 = sphi 0, %s98
    %s100 = sphi 0, %s98
    %s101 = sphi 0, %s100
    %s115 = sphi 0, %s101
    %s123 = sphi 0, %s125
    %s126 = sphi 0, %s123
    %s127 = sphi 0, %s126
    %s143 = sphi 0, %s127
  $region4: #{csp_up_block_forward.11} parent=0 // loop_header_branch
    %13 = sbr.rel (%p11) target = $region8
  $region5: #{csp_up_block_forward.11} parent=0 // loop_body
    %s15 = ssub.s32 %s10, 1
    %s16 = ssub.s32 %s10, 2
    %s23 = sadd.s32 1, %s18
    %p24 = scmp.ge.s32.totalorder %s23, 1
    %s25 = scalar_select %p24, 0, %s23
    %s26 = sadd.s32 1, %s17
    %s27 = scalar_select %p24, %s26, %s17
    %p28 = scmp.ge.s32.totalorder %s27, 2
    %s29 = scalar_select %p28, 0, %s27
    %s30 = ssub.s32 %s18, %s25
    %p31 = scmp.eq.s32.totalorder %s30, 0
    %s33 = sadd.s32 %s32, 1
    %s34 = scalar_select %p31, %s32, %s33
    %p37 = pneg %p31
    %p38 = scmp.eq.s32.totalorder %s10, 1
    %p39 = por %p37, %p38
    %p40 = scmp.ne.s32.totalorder %s32, %s35
    %p41 = scmp.eq.s32.totalorder %s10, 0
    %p42 = por %p40, %p41
    %p43 = scmp.ne.s32.totalorder %s32, %s35
    %p44 = scmp.eq.s32.totalorder %s15, 1
    %p45 = por %p43, %p44
    %p46 = scmp.ne.s32.totalorder %s35, %s36
    %p47 = scmp.eq.s32.totalorder %s15, 0
    %p48 = por %p46, %p47
    %p49 = scmp.ne.s32.totalorder %s35, %s36
    %p50 = scmp.eq.s32.totalorder %s16, 1
    %p51 = por %p49, %p50
    %p53 = scmp.ne.s32.totalorder %s36, %s52
    %p54 = scmp.eq.s32.totalorder %s16, 0
    %p55 = por %p53, %p54
    %s57 = sadd.s32 %s56, 1
    %p60 = scmp.eq.s32.totalorder %s10, 1
    %p61 = scmp.ne.s32.totalorder %s56, %s58
    %p62 = scmp.eq.s32.totalorder %s10, 0
    %p63 = por %p61, %p62
    %p64 = scmp.ne.s32.totalorder %s56, %s58
    %p65 = scmp.eq.s32.totalorder %s15, 1
    %p66 = por %p64, %p65
    %p67 = scmp.ne.s32.totalorder %s58, %s59
    %p68 = scmp.eq.s32.totalorder %s15, 0
    %p69 = por %p67, %p68
    %p70 = scmp.ne.s32.totalorder %s58, %s59
    %p71 = scmp.eq.s32.totalorder %s16, 1
    %p72 = por %p70, %p71
    %p74 = scmp.ne.s32.totalorder %s59, %s73
    %p75 = scmp.eq.s32.totalorder %s16, 0
    %p76 = por %p74, %p75
    %s78 = sadd.s32 %s77, 1
    %p81 = scmp.eq.s32.totalorder %s10, 1
    %p82 = scmp.ne.s32.totalorder %s77, %s79
    %p83 = scmp.eq.s32.totalorder %s10, 0
    %p84 = por %p82, %p83
    %p85 = scmp.ne.s32.totalorder %s77, %s79
    %p86 = scmp.eq.s32.totalorder %s15, 1
    %p87 = por %p85, %p86
    %p88 = scmp.ne.s32.totalorder %s79, %s80
    %p89 = scmp.eq.s32.totalorder %s15, 0
    %p90 = por %p88, %p89
    %p91 = scmp.ne.s32.totalorder %s79, %s80
    %p92 = scmp.eq.s32.totalorder %s16, 1
    %p93 = por %p91, %p92
    %p95 = scmp.ne.s32.totalorder %s80, %s94
    %p96 = scmp.eq.s32.totalorder %s16, 0
    %p97 = por %p95, %p96
    %s99 = sadd.s32 %s98, 1
    %p102 = scmp.eq.s32.totalorder %s10, 1
    %p103 = scmp.ne.s32.totalorder %s98, %s100
    %p104 = scmp.eq.s32.totalorder %s10, 0
    %p105 = por %p103, %p104
    %p106 = scmp.ne.s32.totalorder %s98, %s100
    %p107 = scmp.eq.s32.totalorder %s15, 1
    %p108 = por %p106, %p107
    %p109 = scmp.ne.s32.totalorder %s100, %s101
    %p110 = scmp.eq.s32.totalorder %s15, 0
    %p111 = por %p109, %p110
    %p112 = scmp.ne.s32.totalorder %s100, %s101
    %p113 = scmp.eq.s32.totalorder %s16, 1
    %p114 = por %p112, %p113
    %p116 = scmp.ne.s32.totalorder %s101, %s115
    %p117 = scmp.eq.s32.totalorder %s16, 0
    %p118 = por %p116, %p117
    %s119 = smul.u32 %s18, %s17
    %s120 = smul.u32 %s25, %s29
    %s121 = ssub.s32 %s119, %s120
    %p122 = scmp.eq.s32.totalorder %s121, 0
    %s124 = sadd.s32 %s123, 1
    %s125 = scalar_select %p122, %s123, %s124
    %p128 = pneg %p122
    %p129 = scmp.eq.s32.totalorder %s10, 1
    %p130 = por %p128, %p129
    %p131 = scmp.ne.s32.totalorder %s123, %s126
    %p132 = scmp.eq.s32.totalorder %s10, 0
    %p133 = por %p131, %p132
    %p134 = scmp.ne.s32.totalorder %s123, %s126
    %p135 = scmp.eq.s32.totalorder %s15, 1
    %p136 = por %p134, %p135
    %p137 = scmp.ne.s32.totalorder %s126, %s127
    %p138 = scmp.eq.s32.totalorder %s15, 0
    %p139 = por %p137, %p138
    %p140 = scmp.ne.s32.totalorder %s126, %s127
    %p141 = scmp.eq.s32.totalorder %s16, 1
    %p142 = por %p140, %p141
    %p144 = scmp.ne.s32.totalorder %s127, %s143
    %p145 = scmp.eq.s32.totalorder %s16, 0
    %p146 = por %p144, %p145
    %p147 = scmp.le.s32.totalorder 1, %s10
    %p148 = scmp.lt.s32.totalorder %s10, 3
    %p149 = pnand %p147, %p148
    %p150 = pneg %p149
    // Predicated region
    $region9: #{csp_up_block_forward.11} parent=5 // pred_check
      _
    $region10: #{csp_up_block_forward.11} parent=5 // pred_check_branch
      %152 = sbr.rel (%p149) target = $region12
    $region11: #{csp_up_block_forward.11} parent=5 // pred_region
      %s153 = ssub.s32 %s10, 1
      // Predicated region
      $region13: #{csp_up_block_forward.11} parent=11 // pred_check
        %p154 = pneg %p48
      $region14: #{csp_up_block_forward.11} parent=11 // pred_check_branch
        %156 = sbr.rel (%p154) target = $region16
      $region15: #{csp_up_block_forward.11} parent=11 // pred_region
        %s157 = smul.u32 4, %s20
        %p158 = scmp.lt.s32.totalorder %s157, 3
        %s159 = scalar_select %p158, %s157, 3
        %s160 = smul.addr %s159, 4
        %s161 = scalar_lea.vmem %s0, %s160
        %s162 = smul.u32 4, %s20
      $region16: #{csp_up_block_forward.11} parent=11 // pred_fallthru
        _
      // Predicated region
      $region17: #{csp_up_block_forward.11} parent=11 // pred_check
        %p163 = pneg %p69
      $region18: #{csp_up_block_forward.11} parent=11 // pred_check_branch
        %165 = sbr.rel (%p163) target = $region20
      $region19: #{csp_up_block_forward.11} parent=11 // pred_region
        _
      $region20: #{csp_up_block_forward.11} parent=11 // pred_fallthru
        _
      // Predicated region
      $region21: #{csp_up_block_forward.11} parent=11 // pred_check
        %p166 = pneg %p90
      $region22: #{csp_up_block_forward.11} parent=11 // pred_check_branch
        %168 = sbr.rel (%p166) target = $region24
      $region23: #{csp_up_block_forward.11} parent=11 // pred_region
        _
      $region24: #{csp_up_block_forward.11} parent=11 // pred_fallthru
        _
      // Predicated region
      $region25: #{csp_up_block_forward.11} parent=11 // pred_check
        %p169 = pneg %p111
      $region26: #{csp_up_block_forward.11} parent=11 // pred_check_branch
        %171 = sbr.rel (%p169) target = $region28
      $region27: #{csp_up_block_forward.11} parent=11 // pred_region
        _
      $region28: #{csp_up_block_forward.11} parent=11 // pred_fallthru
        _
    $region12: #{csp_up_block_forward.11} parent=5 // pred_fallthru
      _
    %p172 = scmp.lt.s32.totalorder %s10, 2
    // Predicated region
    $region29: #{csp_up_block_forward.11} parent=5 // pred_check
      %p173 = pneg %p172
    $region30: #{csp_up_block_forward.11} parent=5 // pred_check_branch
      %175 = sbr.rel (%p173) target = $region32
    $region31: #{csp_up_block_forward.11} parent=5 // pred_region
      _
    $region32: #{csp_up_block_forward.11} parent=5 // pred_fallthru
      _
    %p176 = scmp.le.s32.totalorder 1, %s10
    %p177 = scmp.lt.s32.totalorder %s10, 3
    %p178 = pnand %p176, %p177
    %p179 = pneg %p178
    // Predicated region
    $region33: #{csp_up_block_forward.11} parent=5 // pred_check
      _
    $region34: #{csp_up_block_forward.11} parent=5 // pred_check_branch
      %181 = sbr.rel (%p178) target = $region36
    $region35: #{csp_up_block_forward.11} parent=5 // pred_region
      %s182 = ssub.s32 %s10, 1
      %s183 = smul.u32 4, %s20
      %p184 = scmp.lt.s32.totalorder %s183, 3
      %s185 = scalar_select %p184, %s183, 3
      %s186 = smul.addr %s185, 4
      %s187 = scalar_lea.vmem %s0, %s186
      %p188 = pneg %p48
      %p189 = pneg %p45
      %p190 = pneg %p69
      %p191 = pneg %p66
      %p192 = pneg %p90
      %p193 = pneg %p87
      %p194 = pneg %p111
      %p195 = pneg %p108
      %p196 = pneg %p139
      %p197 = pneg %p136
      %s198 = smul.u32 %s20, %s19
      %s199 = smul.u32 4, %s198
      %p200 = scmp.lt.s32.totalorder %s199, 3
      %s201 = scalar_select %p200, %s199, 3
      %s202 = smul.addr %s201, 4
      %s203 = scalar_lea.vmem %s4, %s202
      %s204 = smul.u32 4, %s20
      %p205 = scmp.lt.s32.totalorder %s204, 3
      %s206 = scalar_select %p205, %s204, 3
      %s207 = smul.addr %s206, 4
      %s208 = scalar_lea.vmem %s0, %s207
      %s209 = smul.u32 4, %s20
      %s210 = smul.u32 %s20, %s19
      %s211 = smul.u32 4, %s210
      %p212 = scmp.lt.s32.totalorder %s211, 3
      %s213 = scalar_select %p212, %s211, 3
      %s214 = smul.addr %s213, 4
      %s215 = scalar_lea.vmem %s4, %s214
      %s216 = smul.u32 %s20, %s19
      %s217 = smul.u32 4, %s216
      %p219 = scmp.eq.s32.totalorder %s19, 0
      %p220 = scmp.eq.s32.totalorder %s20, 0
      %p221 = pnand %p219, %p220
      %p222 = pneg %p221
      // Predicated region
      $region37: #{csp_up_block_forward.11} parent=35 // pred_check
        _
      $region38: #{csp_up_block_forward.11} parent=35 // pred_check_branch
        %224 = sbr.rel (%p221) target = $region40
      $region39: #{csp_up_block_forward.11} parent=35 // pred_region
        %vm225 = vcmask 7168
        %226 = vst.msk [vmem:[#allocation2] sm:$0xff] %vm225, 0.0
        %227 = vst.msk [vmem:[#allocation3] sm:$0xff] %vm225, 0.0
      $region40: #{csp_up_block_forward.11} parent=35 // pred_fallthru
        _
      %v228 = vld [vmem:[%s1] sm:$0xf]
      %v229 = vld [vmem:[%s208] sm:$0xff]
      %v230 = vld [vmem:[%s208 + $0x8] sm:$0xff]
      %v233 = vunpack.c.l.b16 %v229
      %v234 = vunpack.c.h.b16 %v229
      %v235 = vunpack.c.l.b16 %v230
      %v236 = vunpack.c.h.b16 %v230
      %v237 = vpack.c.b16 %v233, %v233
      %v238 = vpack.c.b16 %v234, %v234
      %v239 = vpack.c.b16 %v235, %v235
      %v240 = vpack.c.b16 %v236, %v236
      %vm241 = vcmask 64512
      %v243 = vsel %vm241, %v228, 0
      %vm245 = vcmask 1043456
      %v247 = vsel %vm245, %v237, 0
      %v250 = vsel %vm245, %v238, 0
      %v253 = vsel %vm245, %v239, 0
      %v256 = vsel %vm245, %v240, 0
      %258 = vmatpush.bf16.msra.mxu0 0
      %259 = vmatpush.bf16.msra.mxu0 0
      %260 = vmatpush.bf16.msra.mxu0 0
      %261 = vmatpush.bf16.msra.mxu0 0
      %262 = vmatpush.bf16.msra.mxu0 0
      %263 = vmatpush.bf16.msra.mxu0 0
      %264 = vmatpush.bf16.msra.mxu0 0
      %265 = vmatpush.bf16.msra.mxu0 %v247
      %266 = vmatmul.bf16.gmra.mxu0 %v243
      %v267 = vpop.f32.mrf.mxu0
      %v268 = vadd.f32 0.0, %v267
      %v269 = vpop.f32.mrf.mxu0
      %270 = vdwg.mxu0
      %271 = vmatpush.bf16.msra.mxu0 0
      %272 = vmatpush.bf16.msra.mxu0 0
      %273 = vmatpush.bf16.msra.mxu0 0
      %274 = vmatpush.bf16.msra.mxu0 0
      %275 = vmatpush.bf16.msra.mxu0 0
      %276 = vmatpush.bf16.msra.mxu0 0
      %277 = vmatpush.bf16.msra.mxu0 0
      %278 = vmatpush.bf16.msra.mxu0 %v250
      %279 = vmatmul.bf16.gmra.mxu0 %v243
      %v280 = vpop.f32.mrf.mxu0
      %v281 = vadd.f32 0.0, %v280
      %v282 = vpop.f32.mrf.mxu0
      %283 = vdwg.mxu0
      %284 = vmatpush.bf16.msra.mxu0 0
      %285 = vmatpush.bf16.msra.mxu0 0
      %286 = vmatpush.bf16.msra.mxu0 0
      %287 = vmatpush.bf16.msra.mxu0 0
      %288 = vmatpush.bf16.msra.mxu0 0
      %289 = vmatpush.bf16.msra.mxu0 0
      %290 = vmatpush.bf16.msra.mxu0 0
      %291 = vmatpush.bf16.msra.mxu0 %v253
      %292 = vmatmul.bf16.gmra.mxu0 %v243
      %v293 = vpop.f32.mrf.mxu0
      %v294 = vadd.f32 0.0, %v293
      %v295 = vpop.f32.mrf.mxu0
      %296 = vdwg.mxu0
      %297 = vmatpush.bf16.msra.mxu0 0
      %298 = vmatpush.bf16.msra.mxu0 0
      %299 = vmatpush.bf16.msra.mxu0 0
      %300 = vmatpush.bf16.msra.mxu0 0
      %301 = vmatpush.bf16.msra.mxu0 0
      %302 = vmatpush.bf16.msra.mxu0 0
      %303 = vmatpush.bf16.msra.mxu0 0
      %304 = vmatpush.bf16.msra.mxu0 %v256
      %305 = vmatmul.bf16.gmra.mxu0 %v243
      %v306 = vpop.f32.mrf.mxu0
      %v307 = vadd.f32 0.0, %v306
      %v308 = vpop.f32.mrf.mxu0
      %309 = vdwg.mxu0
      // Predicated region
      $region41: #{csp_up_block_forward.11} parent=35 // pred_check
        %p310 = pneg %p219
      $region42: #{csp_up_block_forward.11} parent=35 // pred_check_branch
        %312 = sbr.rel (%p310) target = $region44
      $region43: #{csp_up_block_forward.11} parent=35 // pred_region
        %v313 = vld [vmem:[#allocation2] sm:$0xff]
        %v314 = vadd.f32 %v268, %v281
        %v315 = vadd.f32 %v314, %v294
        %v316 = vadd.f32 %v315, %v307
        %317 = vadd.xlane.f32.xlu0 %v316
        %v318 = vpop.xlane.xlu0 %317
        %v319 = vadd.f32 %v313, %v318
        %vm320 = vcmask 7168
        %321 = vst.msk [vmem:[#allocation2] sm:$0xff] %vm320, %v319
        %v322 = vld [vmem:[#allocation3] sm:$0xff]
        %v323 = vmul.f32 %v268, %v268
        %v324 = vmul.f32 %v281, %v281
        %v325 = vmul.f32 %v294, %v294
        %v326 = vmul.f32 %v307, %v307
        %v327 = vadd.f32 %v323, %v324
        %v328 = vadd.f32 %v327, %v325
        %v329 = vadd.f32 %v328, %v326
        %330 = vadd.xlane.f32.xlu0 %v329
        %v331 = vpop.xlane.xlu0 %330
        %v332 = vadd.f32 %v322, %v331
        %333 = vst.msk [vmem:[#allocation3] sm:$0xff] %vm320, %v332
      $region44: #{csp_up_block_forward.11} parent=35 // pred_fallthru
        _
      %p334 = scmp.eq.s32.totalorder %s19, 1
      %p335 = pnand %p334, %p220
      %p336 = pneg %p335
      // Predicated region
      $region45: #{csp_up_block_forward.11} parent=35 // pred_check
        _
      $region46: #{csp_up_block_forward.11} parent=35 // pred_check_branch
        %338 = sbr.rel (%p335) target = $region48
      $region47: #{csp_up_block_forward.11} parent=35 // pred_region
        %v339 = vld [vmem:[#allocation2] sm:$0xff]
        %v340 = vmul.f32 %v339, 0.001953125
        %v341 = vld [vmem:[#allocation3] sm:$0xff]
        %v342 = vmul.f32 %v341, 0.001953125
        %v343 = vmul.f32 %v340, %v340
        %v344 = vsub.f32 %v342, %v343
        %v345 = vmax.f32 %v344, 0.0
        %v346 = vld [vmem:[%s2] sm:$0xff]
        %v347 = vadd.f32 %v345, 1e-05
        %v348 = vrsqrt.pop %v347
        %v349 = vmul.f32 %v348, %v347
        %v350 = vmul.f32 %v349, %v348
        %v351 = vmul.f32 0.5, %v350
        %v352 = vsub.f32 1.5, %v351
        %v353 = vmul.f32 %v348, %v352
        %vm354 = vweird.f32 %v347
        %vm355 = vweird.f32 %v348
        %vm356 = vmor %vm354, %vm355
        %v357 = vsel %vm356, %v348, %v353
        %v358 = vmul.f32 %v346, %v357
        %vm359 = vcmask 7168
        %360 = vst.msk [vmem:[#allocation2] sm:$0xff] %vm359, %v358
        %v361 = vld [vmem:[%s3] sm:$0xff]
        %v362 = vmul.f32 %v340, %v358
        %v363 = vsub.f32 %v361, %v362
        %364 = vst.msk [vmem:[#allocation3] sm:$0xff] %vm359, %v363
      $region48: #{csp_up_block_forward.11} parent=35 // pred_fallthru
        _
      // Predicated region
      $region49: #{csp_up_block_forward.11} parent=35 // pred_check
        %p365 = pneg %p334
      $region50: #{csp_up_block_forward.11} parent=35 // pred_check_branch
        %367 = sbr.rel (%p365) target = $region52
      $region51: #{csp_up_block_forward.11} parent=35 // pred_region
        %v368 = vld [vmem:[#allocation2] sm:$0xff]
        %370 = vset.pattern.permute.xlu0 0
        %371 = vperm.xlu0 %370, %v368
        %v372 = vpop.permute.xlu0 %371
        %v374 = vmul.f32 %v268, %v372
        %v375 = vmul.f32 %v281, %v372
        %v376 = vmul.f32 %v294, %v372
        %v377 = vmul.f32 %v307, %v372
        %v378 = vld [vmem:[#allocation3] sm:$0xff]
        %380 = vset.pattern.permute.xlu0 0
        %381 = vperm.xlu0 %380, %v378
        %v382 = vpop.permute.xlu0 %381
        %v384 = vadd.f32 %v374, %v382
        %v385 = vadd.f32 %v375, %v382
        %v386 = vadd.f32 %v376, %v382
        %v387 = vadd.f32 %v377, %v382
        %v388 = vmin.f32 %v384, 20.0
        %v389 = vmin.f32 %v385, 20.0
        %v390 = vmin.f32 %v386, 20.0
        %v391 = vmin.f32 %v387, 20.0
        %v392 = vmul.f32 %v388, 1.442695
        %v393 = vpow.pop %v392
        %v394 = vmul.f32 %v389, 1.442695
        %v395 = vpow.pop %v394
        %v396 = vmul.f32 %v390, 1.442695
        %v397 = vpow.pop %v396
        %v398 = vmul.f32 %v391, 1.442695
        %v399 = vpow.pop %v398
        %v400 = vadd.f32 %v393, 2.0
        %v401 = vadd.f32 %v395, 2.0
        %v402 = vadd.f32 %v397, 2.0
        %v403 = vadd.f32 %v399, 2.0
        %v404 = vmul.f32 %v393, %v400
        %v405 = vmul.f32 %v395, %v401
        %v406 = vmul.f32 %v397, %v402
        %v407 = vmul.f32 %v399, %v403
        %v408 = vadd.f32 %v404, 2.0
        %v409 = vadd.f32 %v405, 2.0
        %v410 = vadd.f32 %v406, 2.0
        %v411 = vadd.f32 %v407, 2.0
        %v412 = vrcp.pop %v408
        %v413 = vrcp.pop %v409
        %v414 = vrcp.pop %v410
        %v415 = vrcp.pop %v411
        %v416 = vmul.f32 %v408, %v412
        %v417 = vmul.f32 %v409, %v413
        %v418 = vmul.f32 %v410, %v414
        %v419 = vmul.f32 %v411, %v415
        %v420 = vsub.f32 2.0, %v416
        %v421 = vsub.f32 2.0, %v417
        %v422 = vsub.f32 2.0, %v418
        %v423 = vsub.f32 2.0, %v419
        %v424 = vmul.f32 %v412, %v420
        %v425 = vmul.f32 %v413, %v421
        %v426 = vmul.f32 %v414, %v422
        %v427 = vmul.f32 %v415, %v423
        %v428 = vmul.f32 %v384, %v404
        %v429 = vmul.f32 %v385, %v405
        %v430 = vmul.f32 %v386, %v406
        %v431 = vmul.f32 %v387, %v407
        %v432 = vmul.f32 %v428, %v424
        %v433 = vmul.f32 %v429, %v425
        %v434 = vmul.f32 %v430, %v426
        %v435 = vmul.f32 %v431, %v427
        %v436 = vpack.c.bf16 %v433, %v432
        %v437 = vpack.c.bf16 %v435, %v434
        %438 = vst [vmem:[%s215] sm:$0xff] %v436
        %439 = vst [vmem:[%s215 + $0x8] sm:$0xff] %v437
      $region52: #{csp_up_block_forward.11} parent=35 // pred_fallthru
        _
      %s440 = smul.u32 %s20, %s19
      %s441 = smul.u32 4, %s440
      %p442 = scmp.lt.s32.totalorder %s441, 3
      %s443 = scalar_select %p442, %s441, 3
      %s444 = smul.addr %s443, 4
      %s445 = scalar_lea.vmem %s4, %s444
      // Predicated region
      $region53: #{csp_up_block_forward.11} parent=35 // pred_check
        %p446 = pneg %p136
      $region54: #{csp_up_block_forward.11} parent=35 // pred_check_branch
        %448 = sbr.rel (%p446) target = $region56
      $region55: #{csp_up_block_forward.11} parent=35 // pred_region
        %s449 = smul.u32 %s20, %s19
        %s450 = smul.u32 4, %s449
      $region56: #{csp_up_block_forward.11} parent=35 // pred_fallthru
        _
    $region36: #{csp_up_block_forward.11} parent=5 // pred_fallthru
      _
    %p451 = scmp.le.s32.totalorder 2, %s10
    // Predicated region
    $region57: #{csp_up_block_forward.11} parent=5 // pred_check
      %p452 = pneg %p451
    $region58: #{csp_up_block_forward.11} parent=5 // pred_check_branch
      %454 = sbr.rel (%p452) target = $region60
    $region59: #{csp_up_block_forward.11} parent=5 // pred_region
      %s455 = ssub.s32 %s10, 2
      // Predicated region
      $region61: #{csp_up_block_forward.11} parent=59 // pred_check
        %p456 = pneg %p142
      $region62: #{csp_up_block_forward.11} parent=59 // pred_check_branch
        %458 = sbr.rel (%p456) target = $region64
      $region63: #{csp_up_block_forward.11} parent=59 // pred_region
        %s459 = smul.u32 %s22, %s21
        %s460 = smul.u32 4, %s459
        %p461 = scmp.lt.s32.totalorder %s460, 3
        %s462 = scalar_select %p461, %s460, 3
        %s463 = smul.addr %s462, 4
        %s464 = scalar_lea.vmem %s4, %s463
      $region64: #{csp_up_block_forward.11} parent=59 // pred_fallthru
        _
    $region60: #{csp_up_block_forward.11} parent=5 // pred_fallthru
      _
  $region6: #{csp_up_block_forward.11} parent=0 // loop_footer
    %s14 = sadd.s32 1, %s10
  $region7: #{csp_up_block_forward.11} parent=0 // loop_footer_branch
    %9 = sbr.rel target = $region3
  $region8: #{csp_up_block_forward.11} parent=0 // loop_exit
    _

// kernel: csp_up_block_forward.12
$region0: #{csp_up_block_forward.12}
  #allocation0 [shape = 'u32[]', space=smem, size = 0x4, offset = 0x4, fixed_abs, tag = 'smem constant byte address 0x4 - core index']
  #allocation1 [shape = 'u32[72,128]{1,0:T(1,128)}', space=vmem, size = 0x9000, scoped, tag = 'internal scratch']
  #allocation2 [shape = 'f32[8,1]{1,0:T(8,128)}', space=vmem, size = 0x1000, scoped, tag = 'scratch operand']
  #allocation3 [shape = 'f32[8,1]{1,0:T(8,128)}', space=vmem, size = 0x1000, scoped, tag = 'scratch operand']
  #allocation4 [shape = 'bf16[72,768]{1,0:T(8,128)(2,1)}', space=vmem, size = 0x1b000, scoped, tag = 'scratch operand']
  %s0 = inlined_call_operand.vmem [shape: bf16[8,1536], index: 0, kind: input, shape index: {}, may-alias: {0,1}]
  %s1 = inlined_call_operand.vmem [shape: bf16[8,1536], index: 1, kind: input, shape index: {}, may-alias: {0,1}]
  %s2 = inlined_call_operand.vmem [shape: bf16[8,72], index: 2, kind: input, shape index: {}]
  %s3 = inlined_call_operand.vmem [shape: f32[1,768], index: 3, kind: input, shape index: {}]
  %s4 = inlined_call_operand.vmem [shape: f32[8,1], index: 4, kind: input, shape index: {}]
  %s5 = inlined_call_operand.vmem [shape: f32[8,1], index: 5, kind: input, shape index: {}]
  %s6 = inlined_call_operand.vmem [shape: bf16[8,768], index: 6, kind: output, shape index: {}]
  %s7 = sld [smem:[#allocation0]]
  $region73: #{csp_up_block_forward.12} parent=0
    _
  %s9 = ssub.s32 1, %s7
  %s10 = scalar_select 0, %s9, %s7
  loop: start=0, step=1, limit=4
  $region2: #{csp_up_block_forward.12} parent=0 // loop_pre_header
    _
  $region3: #{csp_up_block_forward.12} parent=0 // loop_header
    %s12 = sphi 0, %s16
    %p13 = scmp.ge.s32.totalorder %s12, 4
    %s19 = sphi 0, %s31
    %s20 = sphi 0, %s27
    %s21 = sphi 0, %s19
    %s22 = sphi 0, %s20
    %s23 = sphi 0, %s21
    %s24 = sphi 0, %s22
    %s34 = sphi 0, %s36
    %s37 = sphi 0, %s34
    %s38 = sphi 0, %s37
    %s54 = sphi 0, %s38
    %s64 = sphi 0, %s66
    %s67 = sphi 0, %s64
    %s68 = sphi 0, %s67
    %s84 = sphi 0, %s68
    %s88 = sphi 0, %s88
    %s90 = sphi 0, %s88
    %s91 = sphi 0, %s90
    %s105 = sphi 0, %s91
    %s111 = sphi 0, %s113
    %s114 = sphi 0, %s111
    %s115 = sphi 0, %s114
    %s131 = sphi 0, %s115
    %s135 = sphi 0, %s135
    %s137 = sphi 0, %s135
    %s138 = sphi 0, %s137
    %s152 = sphi 0, %s138
    %s156 = sphi 0, %s156
    %s158 = sphi 0, %s156
    %s159 = sphi 0, %s158
    %s173 = sphi 0, %s159
    %s181 = sphi 0, %s183
    %s184 = sphi 0, %s181
    %s185 = sphi 0, %s184
    %s201 = sphi 0, %s185
  $region4: #{csp_up_block_forward.12} parent=0 // loop_header_branch
    %15 = sbr.rel (%p13) target = $region8
  $region5: #{csp_up_block_forward.12} parent=0 // loop_body
    %s17 = ssub.s32 %s12, 1
    %s18 = ssub.s32 %s12, 2
    %s25 = sadd.s32 1, %s20
    %p26 = scmp.ge.s32.totalorder %s25, 1
    %s27 = scalar_select %p26, 0, %s25
    %s28 = sadd.s32 1, %s19
    %s29 = scalar_select %p26, %s28, %s19
    %p30 = scmp.ge.s32.totalorder %s29, 2
    %s31 = scalar_select %p30, 0, %s29
    %s32 = ssub.s32 %s20, %s27
    %p33 = scmp.eq.s32.totalorder %s32, 0
    %s35 = sadd.s32 %s34, 1
    %s36 = scalar_select %p33, %s34, %s35
    %p39 = pneg %p33
    %p40 = scmp.eq.s32.totalorder %s12, 1
    %p41 = por %p39, %p40
    %p42 = scmp.ne.s32.totalorder %s34, %s37
    %p43 = scmp.eq.s32.totalorder %s12, 0
    %p44 = por %p42, %p43
    %p45 = scmp.ne.s32.totalorder %s34, %s37
    %p46 = scmp.eq.s32.totalorder %s17, 1
    %p47 = por %p45, %p46
    %p48 = scmp.ne.s32.totalorder %s37, %s38
    %p49 = scmp.eq.s32.totalorder %s17, 0
    %p50 = por %p48, %p49
    %p51 = scmp.ne.s32.totalorder %s37, %s38
    %p52 = scmp.eq.s32.totalorder %s18, 1
    %p53 = por %p51, %p52
    %p55 = scmp.ne.s32.totalorder %s38, %s54
    %p56 = scmp.eq.s32.totalorder %s18, 0
    %p57 = por %p55, %p56
    %s58 = sadd.s32 %s20, 1
    %s59 = smul.u32 %s58, 6
    %s60 = sadd.s32 %s27, 1
    %s61 = smul.u32 %s60, 6
    %s62 = ssub.s32 %s59, %s61
    %p63 = scmp.eq.s32.totalorder %s62, 0
    %s65 = sadd.s32 %s64, 1
    %s66 = scalar_select %p63, %s64, %s65
    %p69 = pneg %p63
    %p70 = scmp.eq.s32.totalorder %s12, 1
    %p71 = por %p69, %p70
    %p72 = scmp.ne.s32.totalorder %s64, %s67
    %p73 = scmp.eq.s32.totalorder %s12, 0
    %p74 = por %p72, %p73
    %p75 = scmp.ne.s32.totalorder %s64, %s67
    %p76 = scmp.eq.s32.totalorder %s17, 1
    %p77 = por %p75, %p76
    %p78 = scmp.ne.s32.totalorder %s67, %s68
    %p79 = scmp.eq.s32.totalorder %s17, 0
    %p80 = por %p78, %p79
    %p81 = scmp.ne.s32.totalorder %s67, %s68
    %p82 = scmp.eq.s32.totalorder %s18, 1
    %p83 = por %p81, %p82
    %p85 = scmp.ne.s32.totalorder %s68, %s84
    %p86 = scmp.eq.s32.totalorder %s18, 0
    %p87 = por %p85, %p86
    %s89 = sadd.s32 %s88, 1
    %p92 = scmp.eq.s32.totalorder %s12, 1
    %p93 = scmp.ne.s32.totalorder %s88, %s90
    %p94 = scmp.eq.s32.totalorder %s12, 0
    %p95 = por %p93, %p94
    %p96 = scmp.ne.s32.totalorder %s88, %s90
    %p97 = scmp.eq.s32.totalorder %s17, 1
    %p98 = por %p96, %p97
    %p99 = scmp.ne.s32.totalorder %s90, %s91
    %p100 = scmp.eq.s32.totalorder %s17, 0
    %p101 = por %p99, %p100
    %p102 = scmp.ne.s32.totalorder %s90, %s91
    %p103 = scmp.eq.s32.totalorder %s18, 1
    %p104 = por %p102, %p103
    %p106 = scmp.ne.s32.totalorder %s91, %s105
    %p107 = scmp.eq.s32.totalorder %s18, 0
    %p108 = por %p106, %p107
    %s109 = ssub.s32 %s20, %s27
    %p110 = scmp.eq.s32.totalorder %s109, 0
    %s112 = sadd.s32 %s111, 1
    %s113 = scalar_select %p110, %s111, %s112
    %p116 = pneg %p110
    %p117 = scmp.eq.s32.totalorder %s12, 1
    %p118 = por %p116, %p117
    %p119 = scmp.ne.s32.totalorder %s111, %s114
    %p120 = scmp.eq.s32.totalorder %s12, 0
    %p121 = por %p119, %p120
    %p122 = scmp.ne.s32.totalorder %s111, %s114
    %p123 = scmp.eq.s32.totalorder %s17, 1
    %p124 = por %p122, %p123
    %p125 = scmp.ne.s32.totalorder %s114, %s115
    %p126 = scmp.eq.s32.totalorder %s17, 0
    %p127 = por %p125, %p126
    %p128 = scmp.ne.s32.totalorder %s114, %s115
    %p129 = scmp.eq.s32.totalorder %s18, 1
    %p130 = por %p128, %p129
    %p132 = scmp.ne.s32.totalorder %s115, %s131
    %p133 = scmp.eq.s32.totalorder %s18, 0
    %p134 = por %p132, %p133
    %s136 = sadd.s32 %s135, 1
    %p139 = scmp.eq.s32.totalorder %s12, 1
    %p140 = scmp.ne.s32.totalorder %s135, %s137
    %p141 = scmp.eq.s32.totalorder %s12, 0
    %p142 = por %p140, %p141
    %p143 = scmp.ne.s32.totalorder %s135, %s137
    %p144 = scmp.eq.s32.totalorder %s17, 1
    %p145 = por %p143, %p144
    %p146 = scmp.ne.s32.totalorder %s137, %s138
    %p147 = scmp.eq.s32.totalorder %s17, 0
    %p148 = por %p146, %p147
    %p149 = scmp.ne.s32.totalorder %s137, %s138
    %p150 = scmp.eq.s32.totalorder %s18, 1
    %p151 = por %p149, %p150
    %p153 = scmp.ne.s32.totalorder %s138, %s152
    %p154 = scmp.eq.s32.totalorder %s18, 0
    %p155 = por %p153, %p154
    %s157 = sadd.s32 %s156, 1
    %p160 = scmp.eq.s32.totalorder %s12, 1
    %p161 = scmp.ne.s32.totalorder %s156, %s158
    %p162 = scmp.eq.s32.totalorder %s12, 0
    %p163 = por %p161, %p162
    %p164 = scmp.ne.s32.totalorder %s156, %s158
    %p165 = scmp.eq.s32.totalorder %s17, 1
    %p166 = por %p164, %p165
    %p167 = scmp.ne.s32.totalorder %s158, %s159
    %p168 = scmp.eq.s32.totalorder %s17, 0
    %p169 = por %p167, %p168
    %p170 = scmp.ne.s32.totalorder %s158, %s159
    %p171 = scmp.eq.s32.totalorder %s18, 1
    %p172 = por %p170, %p171
    %p174 = scmp.ne.s32.totalorder %s159, %s173
    %p175 = scmp.eq.s32.totalorder %s18, 0
    %p176 = por %p174, %p175
    %s177 = smul.u32 %s20, %s19
    %s178 = smul.u32 %s27, %s31
    %s179 = ssub.s32 %s177, %s178
    %p180 = scmp.eq.s32.totalorder %s179, 0
    %s182 = sadd.s32 %s181, 1
    %s183 = scalar_select %p180, %s181, %s182
    %p186 = pneg %p180
    %p187 = scmp.eq.s32.totalorder %s12, 1
    %p188 = por %p186, %p187
    %p189 = scmp.ne.s32.totalorder %s181, %s184
    %p190 = scmp.eq.s32.totalorder %s12, 0
    %p191 = por %p189, %p190
    %p192 = scmp.ne.s32.totalorder %s181, %s184
    %p193 = scmp.eq.s32.totalorder %s17, 1
    %p194 = por %p192, %p193
    %p195 = scmp.ne.s32.totalorder %s184, %s185
    %p196 = scmp.eq.s32.totalorder %s17, 0
    %p197 = por %p195, %p196
    %p198 = scmp.ne.s32.totalorder %s184, %s185
    %p199 = scmp.eq.s32.totalorder %s18, 1
    %p200 = por %p198, %p199
    %p202 = scmp.ne.s32.totalorder %s185, %s201
    %p203 = scmp.eq.s32.totalorder %s18, 0
    %p204 = por %p202, %p203
    %p205 = scmp.le.s32.totalorder 1, %s12
    %p206 = scmp.lt.s32.totalorder %s12, 3
    %p207 = pnand %p205, %p206
    %p208 = pneg %p207
    // Predicated region
    $region9: #{csp_up_block_forward.12} parent=5 // pred_check
      _
    $region10: #{csp_up_block_forward.12} parent=5 // pred_check_branch
      %210 = sbr.rel (%p207) target = $region12
    $region11: #{csp_up_block_forward.12} parent=5 // pred_region
      %s211 = ssub.s32 %s12, 1
      // Predicated region
      $region13: #{csp_up_block_forward.12} parent=11 // pred_check
        %p212 = pneg %p50
      $region14: #{csp_up_block_forward.12} parent=11 // pred_check_branch
        %214 = sbr.rel (%p212) target = $region16
      $region15: #{csp_up_block_forward.12} parent=11 // pred_region
        %s215 = smul.u32 6, %s22
        %p216 = scmp.lt.s32.totalorder %s215, 11
        %s217 = scalar_select %p216, %s215, 11
        %s218 = smul.addr %s217, 4
        %s219 = scalar_lea.vmem %s0, %s218
        %s220 = smul.u32 6, %s22
      $region16: #{csp_up_block_forward.12} parent=11 // pred_fallthru
        _
      // Predicated region
      $region17: #{csp_up_block_forward.12} parent=11 // pred_check
        %p221 = pneg %p80
      $region18: #{csp_up_block_forward.12} parent=11 // pred_check_branch
        %223 = sbr.rel (%p221) target = $region20
      $region19: #{csp_up_block_forward.12} parent=11 // pred_region
        %s224 = sadd.s32 %s22, 1
        %s225 = smul.u32 %s224, 6
        %p226 = scmp.lt.s32.totalorder %s225, 11
        %s227 = scalar_select %p226, %s225, 11
        %s228 = smul.addr %s227, 4
        %s229 = scalar_lea.vmem %s1, %s228
        %s230 = sadd.s32 %s22, 1
        %s231 = smul.u32 %s230, 6
      $region20: #{csp_up_block_forward.12} parent=11 // pred_fallthru
        _
      // Predicated region
      $region21: #{csp_up_block_forward.12} parent=11 // pred_check
        %p232 = pneg %p101
      $region22: #{csp_up_block_forward.12} parent=11 // pred_check_branch
        %234 = sbr.rel (%p232) target = $region24
      $region23: #{csp_up_block_forward.12} parent=11 // pred_region
        _
      $region24: #{csp_up_block_forward.12} parent=11 // pred_fallthru
        _
      // Predicated region
      $region25: #{csp_up_block_forward.12} parent=11 // pred_check
        %p235 = pneg %p127
      $region26: #{csp_up_block_forward.12} parent=11 // pred_check_branch
        %237 = sbr.rel (%p235) target = $region28
      $region27: #{csp_up_block_forward.12} parent=11 // pred_region
        %s238 = smul.u32 6, %s22
        %p239 = scmp.lt.s32.totalorder %s238, 5
        %s240 = scalar_select %p239, %s238, 5
        %s241 = scalar_lea.vmem %s3, %s240
        %s242 = smul.u32 6, %s22
      $region28: #{csp_up_block_forward.12} parent=11 // pred_fallthru
        _
      // Predicated region
      $region29: #{csp_up_block_forward.12} parent=11 // pred_check
        %p243 = pneg %p148
      $region30: #{csp_up_block_forward.12} parent=11 // pred_check_branch
        %245 = sbr.rel (%p243) target = $region32
      $region31: #{csp_up_block_forward.12} parent=11 // pred_region
        _
      $region32: #{csp_up_block_forward.12} parent=11 // pred_fallthru
        _
      // Predicated region
      $region33: #{csp_up_block_forward.12} parent=11 // pred_check
        %p246 = pneg %p169
      $region34: #{csp_up_block_forward.12} parent=11 // pred_check_branch
        %248 = sbr.rel (%p246) target = $region36
      $region35: #{csp_up_block_forward.12} parent=11 // pred_region
        _
      $region36: #{csp_up_block_forward.12} parent=11 // pred_fallthru
        _
    $region12: #{csp_up_block_forward.12} parent=5 // pred_fallthru
      _
    %p249 = scmp.lt.s32.totalorder %s12, 2
    // Predicated region
    $region37: #{csp_up_block_forward.12} parent=5 // pred_check
      %p250 = pneg %p249
    $region38: #{csp_up_block_forward.12} parent=5 // pred_check_branch
      %252 = sbr.rel (%p250) target = $region40
    $region39: #{csp_up_block_forward.12} parent=5 // pred_region
      _
    $region40: #{csp_up_block_forward.12} parent=5 // pred_fallthru
      _
    %p253 = scmp.le.s32.totalorder 1, %s12
    %p254 = scmp.lt.s32.totalorder %s12, 3
    %p255 = pnand %p253, %p254
    %p256 = pneg %p255
    // Predicated region
    $region41: #{csp_up_block_forward.12} parent=5 // pred_check
      _
    $region42: #{csp_up_block_forward.12} parent=5 // pred_check_branch
      %258 = sbr.rel (%p255) target = $region44
    $region43: #{csp_up_block_forward.12} parent=5 // pred_region
      %s259 = ssub.s32 %s12, 1
      %s260 = smul.u32 6, %s22
      %p261 = scmp.lt.s32.totalorder %s260, 11
      %s262 = scalar_select %p261, %s260, 11
      %s263 = smul.addr %s262, 4
      %s264 = scalar_lea.vmem %s0, %s263
      %p265 = pneg %p50
      %p266 = pneg %p47
      %s267 = sadd.s32 %s22, 1
      %s268 = smul.u32 %s267, 6
      %p269 = scmp.lt.s32.totalorder %s268, 11
      %s270 = scalar_select %p269, %s268, 11
      %s271 = smul.addr %s270, 4
      %s272 = scalar_lea.vmem %s1, %s271
      %p273 = pneg %p80
      %p274 = pneg %p77
      %p275 = pneg %p101
      %p276 = pneg %p98
      %s277 = smul.u32 6, %s22
      %p278 = scmp.lt.s32.totalorder %s277, 5
      %s279 = scalar_select %p278, %s277, 5
      %s280 = scalar_lea.vmem %s3, %s279
      %p281 = pneg %p127
      %p282 = pneg %p124
      %p283 = pneg %p148
      %p284 = pneg %p145
      %p285 = pneg %p169
      %p286 = pneg %p166
      %p287 = pneg %p197
      %p288 = pneg %p194
      %s289 = smul.u32 %s22, %s21
      %s290 = smul.u32 6, %s289
      %p291 = scmp.lt.s32.totalorder %s290, 5
      %s292 = scalar_select %p291, %s290, 5
      %s293 = smul.addr %s292, 4
      %s294 = scalar_lea.vmem %s6, %s293
      %s295 = smul.u32 6, %s22
      %p296 = scmp.lt.s32.totalorder %s295, 11
      %s297 = scalar_select %p296, %s295, 11
      %s298 = smul.addr %s297, 4
      %s299 = scalar_lea.vmem %s0, %s298
      %s300 = smul.u32 6, %s22
      %s301 = sadd.s32 %s22, 1
      %s302 = smul.u32 %s301, 6
      %p303 = scmp.lt.s32.totalorder %s302, 11
      %s304 = scalar_select %p303, %s302, 11
      %s305 = smul.addr %s304, 4
      %s306 = scalar_lea.vmem %s1, %s305
      %s307 = sadd.s32 %s22, 1
      %s308 = smul.u32 %s307, 6
      %s309 = smul.u32 6, %s22
      %p310 = scmp.lt.s32.totalorder %s309, 5
      %s311 = scalar_select %p310, %s309, 5
      %s312 = scalar_lea.vmem %s3, %s311
      %s313 = smul.u32 6, %s22
      %s314 = smul.u32 %s22, %s21
      %s315 = smul.u32 6, %s314
      %p316 = scmp.lt.s32.totalorder %s315, 5
      %s317 = scalar_select %p316, %s315, 5
      %s318 = smul.addr %s317, 4
      %s319 = scalar_lea.vmem %s6, %s318
      %s320 = smul.u32 %s22, %s21
      %s321 = smul.u32 6, %s320
      %p323 = scmp.eq.s32.totalorder %s21, 0
      %p324 = scmp.eq.s32.totalorder %s22, 0
      %p325 = pnand %p323, %p324
      %p326 = pneg %p325
      // Predicated region
      $region45: #{csp_up_block_forward.12} parent=43 // pred_check
        _
      $region46: #{csp_up_block_forward.12} parent=43 // pred_check_branch
        %328 = sbr.rel (%p325) target = $region48
      $region47: #{csp_up_block_forward.12} parent=43 // pred_region
        %vm329 = vcmask 7168
        %330 = vst.msk [vmem:[#allocation2] sm:$0xff] %vm329, 0.0
        %331 = vst.msk [vmem:[#allocation3] sm:$0xff] %vm329, 0.0
      $region48: #{csp_up_block_forward.12} parent=43 // pred_fallthru
        _
      %v332 = vld [vmem:[%s299] sm:$0xff]
      %v333 = vld [vmem:[%s299 + $0x8] sm:$0xff]
      %v334 = vld [vmem:[%s299 + $0x10] sm:$0xff]
      %335 = vst [vmem:[#allocation4] sm:$0xff] %v332
      %336 = vst [vmem:[#allocation4 + $0x8] sm:$0xff] %v333
      %337 = vst [vmem:[#allocation4 + $0x10] sm:$0xff] %v334
      %v338 = vld [vmem:[%s299] sm:$0xff]
      %v339 = vld [vmem:[%s299 + $0x8] sm:$0xff]
      %v340 = vld [vmem:[%s299 + $0x10] sm:$0xff]
      %344 = vrot.lane.b32.xlu0 %v338, 127
      %v345 = vpop.permute.xlu0 %344
      %346 = vrot.lane.b32.xlu0 %v339, 127
      %v347 = vpop.permute.xlu0 %346
      %348 = vrot.lane.b32.xlu0 %v340, 127
      %v349 = vpop.permute.xlu0 %348
      %v350 = vrot.slane %v345, 4
      %v351 = vrot.slane %v347, 4
      %v352 = vrot.slane %v349, 4
      %vm353 = vcmask 1043456
      %v354 = vsel %vm353, %v350, %v351
      %vm355 = vcmask 1039360
      %v356 = vsel %vm355, %v345, %v354
      %v357 = vsel %vm353, %v351, %v352
      %v358 = vsel %vm355, %v347, %v357
      %v359 = vsel %vm355, %v349, %v352
      %363 = vst [vmem:[#allocation4 + $0x18] sm:$0xff] %v356
      %364 = vst [vmem:[#allocation4 + $0x20] sm:$0xff] %v358
      %vm365 = vcmask 1043456
      %vm366 = vcmask 1039364
      %vm367 = vmor %vm366, %vm365
      %368 = vst.msk [vmem:[#allocation4 + $0x28] sm:$0xff] %vm367, %v359
      %v369 = vld [vmem:[%s306] sm:$0xf]
      %371 = vrot.lane.b32.xlu0 %v369, 127
      %v372 = vpop.permute.xlu0 %371
      %vm374 = vcmask 1044472
      %375 = vst.msk [vmem:[#allocation4 + $0x2c] sm:$0xf] %vm374, %v372
      %v376 = vld [vmem:[%s299] sm:$0xff]
      %v377 = vld [vmem:[%s299 + $0x8] sm:$0xff]
      %v378 = vld [vmem:[%s299 + $0x10] sm:$0xff]
      %382 = vrot.lane.b32.xlu0 %v376, 126
      %v383 = vpop.permute.xlu0 %382
      %384 = vrot.lane.b32.xlu0 %v377, 126
      %v385 = vpop.permute.xlu0 %384
      %386 = vrot.lane.b32.xlu0 %v378, 126
      %v387 = vpop.permute.xlu0 %386
      %v388 = vrot.slane %v383, 4
      %v389 = vrot.slane %v385, 4
      %v390 = vrot.slane %v387, 4
      %v391 = vsel %vm353, %v388, %v389
      %vm392 = vcmask 1031168
      %v393 = vsel %vm392, %v383, %v391
      %v394 = vsel %vm353, %v389, %v390
      %v395 = vsel %vm392, %v385, %v394
      %v396 = vsel %vm392, %v387, %v390
      %400 = vst [vmem:[#allocation4 + $0x30] sm:$0xff] %v393
      %401 = vst [vmem:[#allocation4 + $0x38] sm:$0xff] %v395
      %vm402 = vcmask 1031172
      %vm403 = vmor %vm402, %vm365
      %404 = vst.msk [vmem:[#allocation4 + $0x40] sm:$0xff] %vm403, %v396
      %v405 = vld [vmem:[%s306] sm:$0xf]
      %407 = vrot.lane.b32.xlu0 %v405, 126
      %v408 = vpop.permute.xlu0 %407
      %vm410 = vcmask 1044464
      %411 = vst.msk [vmem:[#allocation4 + $0x44] sm:$0xf] %vm410, %v408
      %v412 = vld [vmem:[%s299] sm:$0xff]
      %v413 = vld [vmem:[%s299 + $0x8] sm:$0xff]
      %v414 = vld [vmem:[%s299 + $0x10] sm:$0xff]
      %418 = vrot.lane.b32.xlu0 %v412, 110
      %v419 = vpop.permute.xlu0 %418
      %420 = vrot.lane.b32.xlu0 %v413, 110
      %v421 = vpop.permute.xlu0 %420
      %422 = vrot.lane.b32.xlu0 %v414, 110
      %v423 = vpop.permute.xlu0 %422
      %v424 = vrot.slane %v419, 4
      %v425 = vrot.slane %v421, 4
      %v426 = vrot.slane %v423, 4
      %v427 = vsel %vm353, %v424, %v425
      %vm428 = vcmask 900096
      %v429 = vsel %vm428, %v419, %v427
      %v430 = vsel %vm353, %v425, %v426
      %v431 = vsel %vm428, %v421, %v430
      %v432 = vsel %vm428, %v423, %v426
      %436 = vst [vmem:[#allocation4 + $0x48] sm:$0xff] %v429
      %437 = vst [vmem:[#allocation4 + $0x50] sm:$0xff] %v431
      %vm438 = vcmask 900100
      %vm439 = vmor %vm438, %vm365
      %440 = vst.msk [vmem:[#allocation4 + $0x58] sm:$0xff] %vm439, %v432
      %v441 = vld [vmem:[%s306] sm:$0xf]
      %443 = vrot.lane.b32.xlu0 %v441, 110
      %v444 = vpop.permute.xlu0 %443
      %vm446 = vcmask 1044336
      %447 = vst.msk [vmem:[#allocation4 + $0x5c] sm:$0xf] %vm446, %v444
      %v448 = vld [vmem:[%s299] sm:$0xff]
      %v449 = vld [vmem:[%s299 + $0x8] sm:$0xff]
      %v450 = vld [vmem:[%s299 + $0x10] sm:$0xff]
      %454 = vrot.lane.b32.xlu0 %v448, 109
      %v455 = vpop.permute.xlu0 %454
      %456 = vrot.lane.b32.xlu0 %v449, 109
      %v457 = vpop.permute.xlu0 %456
      %458 = vrot.lane.b32.xlu0 %v450, 109
      %v459 = vpop.permute.xlu0 %458
      %v460 = vrot.slane %v455, 4
      %v461 = vrot.slane %v457, 4
      %v462 = vrot.slane %v459, 4
      %v463 = vsel %vm353, %v460, %v461
      %vm464 = vcmask 891904
      %v465 = vsel %vm464, %v455, %v463
      %v466 = vsel %vm353, %v461, %v462
      %v467 = vsel %vm464, %v457, %v466
      %v468 = vsel %vm464, %v459, %v462
      %472 = vst [vmem:[#allocation4 + $0x60] sm:$0xff] %v465
      %473 = vst [vmem:[#allocation4 + $0x68] sm:$0xff] %v467
      %vm474 = vcmask 891908
      %vm475 = vmor %vm474, %vm365
      %476 = vst.msk [vmem:[#allocation4 + $0x70] sm:$0xff] %vm475, %v468
      %v477 = vld [vmem:[%s306] sm:$0xf]
      %479 = vrot.lane.b32.xlu0 %v477, 109
      %v480 = vpop.permute.xlu0 %479
      %vm482 = vcmask 1044328
      %483 = vst.msk [vmem:[#allocation4 + $0x74] sm:$0xf] %vm482, %v480
      %v484 = vld [vmem:[%s299] sm:$0xff]
      %v485 = vld [vmem:[%s299 + $0x8] sm:$0xff]
      %v486 = vld [vmem:[%s299 + $0x10] sm:$0xff]
      %490 = vrot.lane.b32.xlu0 %v484, 108
      %v491 = vpop.permute.xlu0 %490
      %492 = vrot.lane.b32.xlu0 %v485, 108
      %v493 = vpop.permute.xlu0 %492
      %494 = vrot.lane.b32.xlu0 %v486, 108
      %v495 = vpop.permute.xlu0 %494
      %v496 = vrot.slane %v491, 4
      %v497 = vrot.slane %v493, 4
      %v498 = vrot.slane %v495, 4
      %v499 = vsel %vm353, %v496, %v497
      %vm500 = vcmask 883712
      %v501 = vsel %vm500, %v491, %v499
      %v502 = vsel %vm353, %v497, %v498
      %v503 = vsel %vm500, %v493, %v502
      %v504 = vsel %vm500, %v495, %v498
      %508 = vst [vmem:[#allocation4 + $0x78] sm:$0xff] %v501
      %509 = vst [vmem:[#allocation4 + $0x80] sm:$0xff] %v503
      %vm510 = vcmask 883716
      %vm511 = vmor %vm510, %vm365
      %512 = vst.msk [vmem:[#allocation4 + $0x88] sm:$0xff] %vm511, %v504
      %v513 = vld [vmem:[%s306] sm:$0xf]
      %515 = vrot.lane.b32.xlu0 %v513, 108
      %v516 = vpop.permute.xlu0 %515
      %vm518 = vcmask 1044320
      %519 = vst.msk [vmem:[#allocation4 + $0x8c] sm:$0xf] %vm518, %v516
      %v520 = vld [vmem:[%s299] sm:$0xff]
      %v521 = vld [vmem:[%s299 + $0x8] sm:$0xff]
      %v522 = vld [vmem:[%s299 + $0x10] sm:$0xff]
      %526 = vrot.lane.b32.xlu0 %v520, 92
      %v527 = vpop.permute.xlu0 %526
      %528 = vrot.lane.b32.xlu0 %v521, 92
      %v529 = vpop.permute.xlu0 %528
      %530 = vrot.lane.b32.xlu0 %v522, 92
      %v531 = vpop.permute.xlu0 %530
      %v532 = vrot.slane %v527, 4
      %v533 = vrot.slane %v529, 4
      %v534 = vrot.slane %v531, 4
      %v535 = vsel %vm353, %v532, %v533
      %vm536 = vcmask 752640
      %v537 = vsel %vm536, %v527, %v535
      %v538 = vsel %vm353, %v533, %v534
      %v539 = vsel %vm536, %v529, %v538
      %v540 = vsel %vm536, %v531, %v534
      %544 = vst [vmem:[#allocation4 + $0x90] sm:$0xff] %v537
      %545 = vst [vmem:[#allocation4 + $0x98] sm:$0xff] %v539
      %vm546 = vcmask 752644
      %vm547 = vmor %vm546, %vm365
      %548 = vst.msk [vmem:[#allocation4 + $0xa0] sm:$0xff] %vm547, %v540
      %v549 = vld [vmem:[%s306] sm:$0xf]
      %551 = vrot.lane.b32.xlu0 %v549, 92
      %v552 = vpop.permute.xlu0 %551
      %vm554 = vcmask 1044192
      %555 = vst.msk [vmem:[#allocation4 + $0xa4] sm:$0xf] %vm554, %v552
      %v556 = vld [vmem:[%s299] sm:$0xff]
      %v557 = vld [vmem:[%s299 + $0x8] sm:$0xff]
      %v558 = vld [vmem:[%s299 + $0x10] sm:$0xff]
      %562 = vrot.lane.b32.xlu0 %v556, 91
      %v563 = vpop.permute.xlu0 %562
      %564 = vrot.lane.b32.xlu0 %v557, 91
      %v565 = vpop.permute.xlu0 %564
      %566 = vrot.lane.b32.xlu0 %v558, 91
      %v567 = vpop.permute.xlu0 %566
      %v568 = vrot.slane %v563, 4
      %v569 = vrot.slane %v565, 4
      %v570 = vrot.slane %v567, 4
      %v571 = vsel %vm353, %v568, %v569
      %vm572 = vcmask 744448
      %v573 = vsel %vm572, %v563, %v571
      %v574 = vsel %vm353, %v569, %v570
      %v575 = vsel %vm572, %v565, %v574
      %v576 = vsel %vm572, %v567, %v570
      %580 = vst [vmem:[#allocation4 + $0xa8] sm:$0xff] %v573
      %581 = vst [vmem:[#allocation4 + $0xb0] sm:$0xff] %v575
      %vm582 = vcmask 744452
      %vm583 = vmor %vm582, %vm365
      %584 = vst.msk [vmem:[#allocation4 + $0xb8] sm:$0xff] %vm583, %v576
      %v585 = vld [vmem:[%s306] sm:$0xf]
      %587 = vrot.lane.b32.xlu0 %v585, 91
      %v588 = vpop.permute.xlu0 %587
      %vm590 = vcmask 1044184
      %591 = vst.msk [vmem:[#allocation4 + $0xbc] sm:$0xf] %vm590, %v588
      %v592 = vld [vmem:[%s299] sm:$0xff]
      %v593 = vld [vmem:[%s299 + $0x8] sm:$0xff]
      %v594 = vld [vmem:[%s299 + $0x10] sm:$0xff]
      %598 = vrot.lane.b32.xlu0 %v592, 90
      %v599 = vpop.permute.xlu0 %598
      %600 = vrot.lane.b32.xlu0 %v593, 90
      %v601 = vpop.permute.xlu0 %600
      %602 = vrot.lane.b32.xlu0 %v594, 90
      %v603 = vpop.permute.xlu0 %602
      %v604 = vrot.slane %v599, 4
      %v605 = vrot.slane %v601, 4
      %v606 = vrot.slane %v603, 4
      %v607 = vsel %vm353, %v604, %v605
      %vm608 = vcmask 736256
      %v609 = vsel %vm608, %v599, %v607
      %v610 = vsel %vm353, %v605, %v606
      %v611 = vsel %vm608, %v601, %v610
      %v612 = vsel %vm608, %v603, %v606
      %616 = vst [vmem:[#allocation4 + $0xc0] sm:$0xff] %v609
      %617 = vst [vmem:[#allocation4 + $0xc8] sm:$0xff] %v611
      %vm618 = vcmask 736260
      %vm619 = vmor %vm618, %vm365
      %620 = vst.msk [vmem:[#allocation4 + $0xd0] sm:$0xff] %vm619, %v612
      %v621 = vld [vmem:[%s306] sm:$0xf]
      %623 = vrot.lane.b32.xlu0 %v621, 90
      %v624 = vpop.permute.xlu0 %623
      %vm626 = vcmask 1044176
      %627 = vst.msk [vmem:[#allocation4 + $0xd4] sm:$0xf] %vm626, %v624
      %v628 = vld [vmem:[%s2] sm:$0xf]
      %v629 = vld [vmem:[#allocation4] sm:$0xff]
      %v630 = vld [vmem:[#allocation4 + $0x8] sm:$0xff]
      %v631 = vld [vmem:[#allocation4 + $0x10] sm:$0xff]
      %v632 = vld [vmem:[#allocation4 + $0x18] sm:$0xff]
      %v633 = vld [vmem:[#allocation4 + $0x20] sm:$0xff]
      %v634 = vld [vmem:[#allocation4 + $0x28] sm:$0xff]
      %v635 = vld [vmem:[#allocation4 + $0x30] sm:$0xff]
      %v636 = vld [vmem:[#allocation4 + $0x38] sm:$0xff]
      %v637 = vld [vmem:[#allocation4 + $0x40] sm:$0xff]
      %v638 = vld [vmem:[#allocation4 + $0x48] sm:$0xff]
      %v639 = vld [vmem:[#allocation4 + $0x50] sm:$0xff]
      %v640 = vld [vmem:[#allocation4 + $0x58] sm:$0xff]
      %v641 = vld [vmem:[#allocation4 + $0x60] sm:$0xff]
      %v642 = vld [vmem:[#allocation4 + $0x68] sm:$0xff]
      %v643 = vld [vmem:[#allocation4 + $0x70] sm:$0xff]
      %v644 = vld [vmem:[#allocation4 + $0x78] sm:$0xff]
      %v645 = vld [vmem:[#allocation4 + $0x80] sm:$0xff]
      %v646 = vld [vmem:[#allocation4 + $0x88] sm:$0xff]
      %v647 = vld [vmem:[#allocation4 + $0x90] sm:$0xff]
      %v648 = vld [vmem:[#allocation4 + $0x98] sm:$0xff]
      %v649 = vld [vmem:[#allocation4 + $0xa0] sm:$0xff]
      %v650 = vld [vmem:[#allocation4 + $0xa8] sm:$0xff]
      %v651 = vld [vmem:[#allocation4 + $0xb0] sm:$0xff]
      %v652 = vld [vmem:[#allocation4 + $0xb8] sm:$0xff]
      %v653 = vld [vmem:[#allocation4 + $0xc0] sm:$0xff]
      %v654 = vld [vmem:[#allocation4 + $0xc8] sm:$0xff]
      %v655 = vld [vmem:[#allocation4 + $0xd0] sm:$0xff]
      %v683 = vunpack.c.l.b16 %v629
      %v684 = vunpack.c.h.b16 %v629
      %v685 = vunpack.c.l.b16 %v630
      %v686 = vunpack.c.h.b16 %v630
      %v687 = vunpack.c.l.b16 %v631
      %v688 = vunpack.c.h.b16 %v631
      %v689 = vunpack.c.l.b16 %v632
      %v690 = vunpack.c.h.b16 %v632
      %v691 = vunpack.c.l.b16 %v633
      %v692 = vunpack.c.h.b16 %v633
      %v693 = vunpack.c.l.b16 %v634
      %v694 = vunpack.c.h.b16 %v634
      %v695 = vunpack.c.l.b16 %v635
      %v696 = vunpack.c.h.b16 %v635
      %v697 = vunpack.c.l.b16 %v636
      %v698 = vunpack.c.h.b16 %v636
      %v699 = vunpack.c.l.b16 %v637
      %v700 = vunpack.c.h.b16 %v637
      %v701 = vunpack.c.l.b16 %v638
      %v702 = vunpack.c.h.b16 %v638
      %v703 = vunpack.c.l.b16 %v639
      %v704 = vunpack.c.h.b16 %v639
      %v705 = vunpack.c.l.b16 %v640
      %v706 = vunpack.c.h.b16 %v640
      %v707 = vunpack.c.l.b16 %v641
      %v708 = vunpack.c.h.b16 %v641
      %v709 = vunpack.c.l.b16 %v642
      %v710 = vunpack.c.h.b16 %v642
      %v711 = vunpack.c.l.b16 %v643
      %v712 = vunpack.c.h.b16 %v643
      %v713 = vunpack.c.l.b16 %v644
      %v714 = vunpack.c.h.b16 %v644
      %v715 = vunpack.c.l.b16 %v645
      %v716 = vunpack.c.h.b16 %v645
      %v717 = vunpack.c.l.b16 %v646
      %v718 = vunpack.c.h.b16 %v646
      %v719 = vunpack.c.l.b16 %v647
      %v720 = vunpack.c.h.b16 %v647
      %v721 = vunpack.c.l.b16 %v648
      %v722 = vunpack.c.h.b16 %v648
      %v723 = vunpack.c.l.b16 %v649
      %v724 = vunpack.c.h.b16 %v649
      %v725 = vunpack.c.l.b16 %v650
      %v726 = vunpack.c.h.b16 %v650
      %v727 = vunpack.c.l.b16 %v651
      %v728 = vunpack.c.h.b16 %v651
      %v729 = vunpack.c.l.b16 %v652
      %v730 = vunpack.c.h.b16 %v652
      %v731 = vunpack.c.l.b16 %v653
      %v732 = vunpack.c.h.b16 %v653
      %v733 = vunpack.c.l.b16 %v654
      %v734 = vunpack.c.h.b16 %v654
      %v735 = vunpack.c.l.b16 %v655
      %v736 = vunpack.c.h.b16 %v655
      %v737 = vpack.c.b16 %v689, %v683
      %v738 = vpack.c.b16 %v690, %v684
      %v739 = vpack.c.b16 %v691, %v685
      %v740 = vpack.c.b16 %v692, %v686
      %v741 = vpack.c.b16 %v693, %v687
      %v742 = vpack.c.b16 %v694, %v688
      %v743 = vpack.c.b16 %v701, %v695
      %v744 = vpack.c.b16 %v702, %v696
      %v745 = vpack.c.b16 %v703, %v697
      %v746 = vpack.c.b16 %v704, %v698
      %v747 = vpack.c.b16 %v705, %v699
      %v748 = vpack.c.b16 %v706, %v700
      %v749 = vpack.c.b16 %v713, %v707
      %v750 = vpack.c.b16 %v714, %v708
      %v751 = vpack.c.b16 %v715, %v709
      %v752 = vpack.c.b16 %v716, %v710
      %v753 = vpack.c.b16 %v717, %v711
      %v754 = vpack.c.b16 %v718, %v712
      %v755 = vpack.c.b16 %v725, %v719
      %v756 = vpack.c.b16 %v726, %v720
      %v757 = vpack.c.b16 %v727, %v721
      %v758 = vpack.c.b16 %v728, %v722
      %v759 = vpack.c.b16 %v729, %v723
      %v760 = vpack.c.b16 %v730, %v724
      %v761 = vpack.c.b16 %v731, %v731
      %v762 = vpack.c.b16 %v732, %v732
      %v763 = vpack.c.b16 %v733, %v733
      %v764 = vpack.c.b16 %v734, %v734
      %v765 = vpack.c.b16 %v735, %v735
      %v766 = vpack.c.b16 %v736, %v736
      %vm791 = vcmask 588800
      %v793 = vsel %vm791, %v628, 0
      %v796 = vsel %vm365, %v761, 0
      %v799 = vsel %vm365, %v762, 0
      %v802 = vsel %vm365, %v763, 0
      %v805 = vsel %vm365, %v764, 0
      %v808 = vsel %vm365, %v765, 0
      %v811 = vsel %vm365, %v766, 0
      %813 = vmatpush.bf16.msra.mxu0 0
      %814 = vmatpush.bf16.msra.mxu0 0
      %815 = vmatpush.bf16.msra.mxu0 0
      %816 = vmatpush.bf16.msra.mxu0 %v796
      %817 = vmatpush.bf16.msra.mxu0 %v755
      %818 = vmatpush.bf16.msra.mxu0 %v749
      %819 = vmatpush.bf16.msra.mxu0 %v743
      %820 = vmatpush.bf16.msra.mxu0 %v737
      %821 = vmatmul.bf16.gmra.mxu0 %v793
      %v822 = vpop.f32.mrf.mxu0
      %v823 = vadd.f32 0.0, %v822
      %v824 = vpop.f32.mrf.mxu0
      %825 = vdwg.mxu0
      %826 = vmatpush.bf16.msra.mxu0 0
      %827 = vmatpush.bf16.msra.mxu0 0
      %828 = vmatpush.bf16.msra.mxu0 0
      %829 = vmatpush.bf16.msra.mxu0 %v799
      %830 = vmatpush.bf16.msra.mxu0 %v756
      %831 = vmatpush.bf16.msra.mxu0 %v750
      %832 = vmatpush.bf16.msra.mxu0 %v744
      %833 = vmatpush.bf16.msra.mxu0 %v738
      %834 = vmatmul.bf16.gmra.mxu0 %v793
      %v835 = vpop.f32.mrf.mxu0
      %v836 = vadd.f32 0.0, %v835
      %v837 = vpop.f32.mrf.mxu0
      %838 = vdwg.mxu0
      %839 = vmatpush.bf16.msra.mxu0 0
      %840 = vmatpush.bf16.msra.mxu0 0
      %841 = vmatpush.bf16.msra.mxu0 0
      %842 = vmatpush.bf16.msra.mxu0 %v802
      %843 = vmatpush.bf16.msra.mxu0 %v757
      %844 = vmatpush.bf16.msra.mxu0 %v751
      %845 = vmatpush.bf16.msra.mxu0 %v745
      %846 = vmatpush.bf16.msra.mxu0 %v739
      %847 = vmatmul.bf16.gmra.mxu0 %v793
      %v848 = vpop.f32.mrf.mxu0
      %v849 = vadd.f32 0.0, %v848
      %v850 = vpop.f32.mrf.mxu0
      %851 = vdwg.mxu0
      %852 = vmatpush.bf16.msra.mxu0 0
      %853 = vmatpush.bf16.msra.mxu0 0
      %854 = vmatpush.bf16.msra.mxu0 0
      %855 = vmatpush.bf16.msra.mxu0 %v805
      %856 = vmatpush.bf16.msra.mxu0 %v758
      %857 = vmatpush.bf16.msra.mxu0 %v752
      %858 = vmatpush.bf16.msra.mxu0 %v746
      %859 = vmatpush.bf16.msra.mxu0 %v740
      %860 = vmatmul.bf16.gmra.mxu0 %v793
      %v861 = vpop.f32.mrf.mxu0
      %v862 = vadd.f32 0.0, %v861
      %v863 = vpop.f32.mrf.mxu0
      %864 = vdwg.mxu0
      %865 = vmatpush.bf16.msra.mxu0 0
      %866 = vmatpush.bf16.msra.mxu0 0
      %867 = vmatpush.bf16.msra.mxu0 0
      %868 = vmatpush.bf16.msra.mxu0 %v808
      %869 = vmatpush.bf16.msra.mxu0 %v759
      %870 = vmatpush.bf16.msra.mxu0 %v753
      %871 = vmatpush.bf16.msra.mxu0 %v747
      %872 = vmatpush.bf16.msra.mxu0 %v741
      %873 = vmatmul.bf16.gmra.mxu0 %v793
      %v874 = vpop.f32.mrf.mxu0
      %v875 = vadd.f32 0.0, %v874
      %v876 = vpop.f32.mrf.mxu0
      %877 = vdwg.mxu0
      %878 = vmatpush.bf16.msra.mxu0 0
      %879 = vmatpush.bf16.msra.mxu0 0
      %880 = vmatpush.bf16.msra.mxu0 0
      %881 = vmatpush.bf16.msra.mxu0 %v811
      %882 = vmatpush.bf16.msra.mxu0 %v760
      %883 = vmatpush.bf16.msra.mxu0 %v754
      %884 = vmatpush.bf16.msra.mxu0 %v748
      %885 = vmatpush.bf16.msra.mxu0 %v742
      %886 = vmatmul.bf16.gmra.mxu0 %v793
      %v887 = vpop.f32.mrf.mxu0
      %v888 = vadd.f32 0.0, %v887
      %v889 = vpop.f32.mrf.mxu0
      %890 = vdwg.mxu0
      // Predicated region
      $region49: #{csp_up_block_forward.12} parent=43 // pred_check
        %p891 = pneg %p323
      $region50: #{csp_up_block_forward.12} parent=43 // pred_check_branch
        %893 = sbr.rel (%p891) target = $region52
      $region51: #{csp_up_block_forward.12} parent=43 // pred_region
        %v894 = vld [vmem:[%s312] sm:$0x3f]
        %v896 = vperm.slane %v894, 0
        %v897 = vperm.slane %v894, 1
        %v898 = vperm.slane %v894, 2
        %v899 = vperm.slane %v894, 3
        %v900 = vperm.slane %v894, 4
        %v901 = vperm.slane %v894, 5
        %v908 = vmul.f32 %v823, %v896
        %v909 = vmul.f32 %v836, %v897
        %v910 = vmul.f32 %v849, %v898
        %v911 = vmul.f32 %v862, %v899
        %v912 = vmul.f32 %v875, %v900
        %v913 = vmul.f32 %v888, %v901
        %v914 = vld [vmem:[#allocation2] sm:$0xff]
        %v915 = vadd.f32 %v908, %v909
        %v916 = vadd.f32 %v915, %v910
        %v917 = vadd.f32 %v916, %v911
        %v918 = vadd.f32 %v917, %v912
        %v919 = vadd.f32 %v918, %v913
        %920 = vadd.xlane.f32.xlu0 %v919
        %v921 = vpop.xlane.xlu0 %920
        %v922 = vadd.f32 %v914, %v921
        %vm923 = vcmask 7168
        %924 = vst.msk [vmem:[#allocation2] sm:$0xff] %vm923, %v922
        %v925 = vld [vmem:[#allocation3] sm:$0xff]
        %v926 = vmul.f32 %v908, %v823
        %v927 = vmul.f32 %v909, %v836
        %v928 = vmul.f32 %v910, %v849
        %v929 = vmul.f32 %v911, %v862
        %v930 = vmul.f32 %v912, %v875
        %v931 = vmul.f32 %v913, %v888
        %v932 = vadd.f32 %v926, %v927
        %v933 = vadd.f32 %v932, %v928
        %v934 = vadd.f32 %v933, %v929
        %v935 = vadd.f32 %v934, %v930
        %v936 = vadd.f32 %v935, %v931
        %937 = vadd.xlane.f32.xlu0 %v936
        %v938 = vpop.xlane.xlu0 %937
        %v939 = vadd.f32 %v925, %v938
        %940 = vst.msk [vmem:[#allocation3] sm:$0xff] %vm923, %v939
      $region52: #{csp_up_block_forward.12} parent=43 // pred_fallthru
        _
      %p941 = scmp.eq.s32.totalorder %s21, 1
      %p942 = pnand %p941, %p324
      %p943 = pneg %p942
      // Predicated region
      $region53: #{csp_up_block_forward.12} parent=43 // pred_check
        _
      $region54: #{csp_up_block_forward.12} parent=43 // pred_check_branch
        %945 = sbr.rel (%p942) target = $region56
      $region55: #{csp_up_block_forward.12} parent=43 // pred_region
        %v946 = vld [vmem:[#allocation2] sm:$0xff]
        %v947 = vmul.f32 %v946, 0.001953125
        %v948 = vld [vmem:[#allocation3] sm:$0xff]
        %v949 = vmul.f32 %v948, 0.001953125
        %v950 = vmul.f32 %v947, %v947
        %v951 = vsub.f32 %v949, %v950
        %v952 = vmax.f32 %v951, 0.0
        %v953 = vld [vmem:[%s4] sm:$0xff]
        %v954 = vadd.f32 %v952, 1e-05
        %v955 = vrsqrt.pop %v954
        %v956 = vmul.f32 %v955, %v954
        %v957 = vmul.f32 %v956, %v955
        %v958 = vmul.f32 0.5, %v957
        %v959 = vsub.f32 1.5, %v958
        %v960 = vmul.f32 %v955, %v959
        %vm961 = vweird.f32 %v954
        %vm962 = vweird.f32 %v955
        %vm963 = vmor %vm961, %vm962
        %v964 = vsel %vm963, %v955, %v960
        %v965 = vmul.f32 %v953, %v964
        %vm966 = vcmask 7168
        %967 = vst.msk [vmem:[#allocation2] sm:$0xff] %vm966, %v965
        %v968 = vld [vmem:[%s5] sm:$0xff]
        %v969 = vmul.f32 %v947, %v965
        %v970 = vsub.f32 %v968, %v969
        %971 = vst.msk [vmem:[#allocation3] sm:$0xff] %vm966, %v970
      $region56: #{csp_up_block_forward.12} parent=43 // pred_fallthru
        _
      // Predicated region
      $region57: #{csp_up_block_forward.12} parent=43 // pred_check
        %p972 = pneg %p941
      $region58: #{csp_up_block_forward.12} parent=43 // pred_check_branch
        %974 = sbr.rel (%p972) target = $region60
      $region59: #{csp_up_block_forward.12} parent=43 // pred_region
        %v975 = vld [vmem:[#allocation2] sm:$0xff]
        %977 = vset.pattern.permute.xlu0 0
        %978 = vperm.xlu0 %977, %v975
        %v979 = vpop.permute.xlu0 %978
        %v981 = vmul.f32 %v823, %v979
        %v982 = vmul.f32 %v836, %v979
        %v983 = vmul.f32 %v849, %v979
        %v984 = vmul.f32 %v862, %v979
        %v985 = vmul.f32 %v875, %v979
        %v986 = vmul.f32 %v888, %v979
        %v987 = vld [vmem:[#allocation3] sm:$0xff]
        %989 = vset.pattern.permute.xlu0 0
        %990 = vperm.xlu0 %989, %v987
        %v991 = vpop.permute.xlu0 %990
        %v993 = vadd.f32 %v981, %v991
        %v994 = vadd.f32 %v982, %v991
        %v995 = vadd.f32 %v983, %v991
        %v996 = vadd.f32 %v984, %v991
        %v997 = vadd.f32 %v985, %v991
        %v998 = vadd.f32 %v986, %v991
        %v999 = vmin.f32 %v993, 20.0
        %v1000 = vmin.f32 %v994, 20.0
        %v1001 = vmin.f32 %v995, 20.0
        %v1002 = vmin.f32 %v996, 20.0
        %v1003 = vmin.f32 %v997, 20.0
        %v1004 = vmin.f32 %v998, 20.0
        %v1005 = vmul.f32 %v999, 1.442695
        %v1006 = vpow.pop %v1005
        %v1007 = vmul.f32 %v1000, 1.442695
        %v1008 = vpow.pop %v1007
        %v1009 = vmul.f32 %v1001, 1.442695
        %v1010 = vpow.pop %v1009
        %v1011 = vmul.f32 %v1002, 1.442695
        %v1012 = vpow.pop %v1011
        %v1013 = vmul.f32 %v1003, 1.442695
        %v1014 = vpow.pop %v1013
        %v1015 = vmul.f32 %v1004, 1.442695
        %v1016 = vpow.pop %v1015
        %v1017 = vadd.f32 %v1006, 2.0
        %v1018 = vadd.f32 %v1008, 2.0
        %v1019 = vadd.f32 %v1010, 2.0
        %v1020 = vadd.f32 %v1012, 2.0
        %v1021 = vadd.f32 %v1014, 2.0
        %v1022 = vadd.f32 %v1016, 2.0
        %v1023 = vmul.f32 %v1006, %v1017
        %v1024 = vmul.f32 %v1008, %v1018
        %v1025 = vmul.f32 %v1010, %v1019
        %v1026 = vmul.f32 %v1012, %v1020
        %v1027 = vmul.f32 %v1014, %v1021
        %v1028 = vmul.f32 %v1016, %v1022
        %v1029 = vadd.f32 %v1023, 2.0
        %v1030 = vadd.f32 %v1024, 2.0
        %v1031 = vadd.f32 %v1025, 2.0
        %v1032 = vadd.f32 %v1026, 2.0
        %v1033 = vadd.f32 %v1027, 2.0
        %v1034 = vadd.f32 %v1028, 2.0
        %v1035 = vrcp.pop %v1029
        %v1036 = vrcp.pop %v1030
        %v1037 = vrcp.pop %v1031
        %v1038 = vrcp.pop %v1032
        %v1039 = vrcp.pop %v1033
        %v1040 = vrcp.pop %v1034
        %v1041 = vmul.f32 %v1029, %v1035
        %v1042 = vmul.f32 %v1030, %v1036
        %v1043 = vmul.f32 %v1031, %v1037
        %v1044 = vmul.f32 %v1032, %v1038
        %v1045 = vmul.f32 %v1033, %v1039
        %v1046 = vmul.f32 %v1034, %v1040
        %v1047 = vsub.f32 2.0, %v1041
        %v1048 = vsub.f32 2.0, %v1042
        %v1049 = vsub.f32 2.0, %v1043
        %v1050 = vsub.f32 2.0, %v1044
        %v1051 = vsub.f32 2.0, %v1045
        %v1052 = vsub.f32 2.0, %v1046
        %v1053 = vmul.f32 %v1035, %v1047
        %v1054 = vmul.f32 %v1036, %v1048
        %v1055 = vmul.f32 %v1037, %v1049
        %v1056 = vmul.f32 %v1038, %v1050
        %v1057 = vmul.f32 %v1039, %v1051
        %v1058 = vmul.f32 %v1040, %v1052
        %v1059 = vmul.f32 %v993, %v1023
        %v1060 = vmul.f32 %v994, %v1024
        %v1061 = vmul.f32 %v995, %v1025
        %v1062 = vmul.f32 %v996, %v1026
        %v1063 = vmul.f32 %v997, %v1027
        %v1064 = vmul.f32 %v998, %v1028
        %v1065 = vmul.f32 %v1059, %v1053
        %v1066 = vmul.f32 %v1060, %v1054
        %v1067 = vmul.f32 %v1061, %v1055
        %v1068 = vmul.f32 %v1062, %v1056
        %v1069 = vmul.f32 %v1063, %v1057
        %v1070 = vmul.f32 %v1064, %v1058
        %v1071 = vpack.c.bf16 %v1066, %v1065
        %v1072 = vpack.c.bf16 %v1068, %v1067
        %v1073 = vpack.c.bf16 %v1070, %v1069
        %1074 = vst [vmem:[%s319] sm:$0xff] %v1071
        %1075 = vst [vmem:[%s319 + $0x8] sm:$0xff] %v1072
        %1076 = vst [vmem:[%s319 + $0x10] sm:$0xff] %v1073
      $region60: #{csp_up_block_forward.12} parent=43 // pred_fallthru
        _
      %s1077 = smul.u32 %s22, %s21
      %s1078 = smul.u32 6, %s1077
      %p1079 = scmp.lt.s32.totalorder %s1078, 5
      %s1080 = scalar_select %p1079, %s1078, 5
      %s1081 = smul.addr %s1080, 4
      %s1082 = scalar_lea.vmem %s6, %s1081
      // Predicated region
      $region61: #{csp_up_block_forward.12} parent=43 // pred_check
        %p1083 = pneg %p194
      $region62: #{csp_up_block_forward.12} parent=43 // pred_check_branch
        %1085 = sbr.rel (%p1083) target = $region64
      $region63: #{csp_up_block_forward.12} parent=43 // pred_region
        %s1086 = smul.u32 %s22, %s21
        %s1087 = smul.u32 6, %s1086
      $region64: #{csp_up_block_forward.12} parent=43 // pred_fallthru
        _
    $region44: #{csp_up_block_forward.12} parent=5 // pred_fallthru
      _
    %p1088 = scmp.le.s32.totalorder 2, %s12
    // Predicated region
    $region65: #{csp_up_block_forward.12} parent=5 // pred_check
      %p1089 = pneg %p1088
    $region66: #{csp_up_block_forward.12} parent=5 // pred_check_branch
      %1091 = sbr.rel (%p1089) target = $region68
    $region67: #{csp_up_block_forward.12} parent=5 // pred_region
      %s1092 = ssub.s32 %s12, 2
      // Predicated region
      $region69: #{csp_up_block_forward.12} parent=67 // pred_check
        %p1093 = pneg %p200
      $region70: #{csp_up_block_forward.12} parent=67 // pred_check_branch
        %1095 = sbr.rel (%p1093) target = $region72
      $region71: #{csp_up_block_forward.12} parent=67 // pred_region
        %s1096 = smul.u32 %s24, %s23
        %s1097 = smul.u32 6, %s1096
        %p1098 = scmp.lt.s32.totalorder %s1097, 5
        %s1099 = scalar_select %p1098, %s1097, 5
        %s1100 = smul.addr %s1099, 4
        %s1101 = scalar_lea.vmem %s6, %s1100
      $region72: #{csp_up_block_forward.12} parent=67 // pred_fallthru
        _
    $region68: #{csp_up_block_forward.12} parent=5 // pred_fallthru
      _
  $region6: #{csp_up_block_forward.12} parent=0 // loop_footer
    %s16 = sadd.s32 1, %s12
  $region7: #{csp_up_block_forward.12} parent=0 // loop_footer_branch
    %11 = sbr.rel target = $region3
  $region8: #{csp_up_block_forward.12} parent=0 // loop_exit
    _

// kernel: csp_up_block_forward.13
$region0: #{csp_up_block_forward.13}
  #allocation0 [shape = 'u32[]', space=smem, size = 0x4, offset = 0x4, fixed_abs, tag = 'smem constant byte address 0x4 - core index']
  #allocation1 [shape = 'u32[72,128]{1,0:T(1,128)}', space=vmem, size = 0x9000, scoped, tag = 'internal scratch']
  #allocation2 [shape = 'f32[8,1]{1,0:T(8,128)}', space=vmem, size = 0x1000, scoped, tag = 'scratch operand']
  #allocation3 [shape = 'f32[8,1]{1,0:T(8,128)}', space=vmem, size = 0x1000, scoped, tag = 'scratch operand']
  %s0 = inlined_call_operand.vmem [shape: bf16[8,512], index: 0, kind: input, shape index: {}]
  %s1 = inlined_call_operand.vmem [shape: f32[8,1], index: 1, kind: input, shape index: {}]
  %s2 = inlined_call_operand.vmem [shape: f32[8,1], index: 2, kind: input, shape index: {}]
  %s3 = inlined_call_operand.vmem [shape: bf16[8,512], index: 3, kind: output, shape index: {}]
  %s4 = sld [smem:[#allocation0]]
  $region61: #{csp_up_block_forward.13} parent=0
    _
  %s6 = ssub.s32 1, %s4
  %s7 = scalar_select 0, %s6, %s4
  loop: start=0, step=1, limit=4
  $region2: #{csp_up_block_forward.13} parent=0 // loop_pre_header
    _
  $region3: #{csp_up_block_forward.13} parent=0 // loop_header
    %s9 = sphi 0, %s13
    %p10 = scmp.ge.s32.totalorder %s9, 4
    %s16 = sphi 0, %s28
    %s17 = sphi 0, %s24
    %s18 = sphi 0, %s16
    %s19 = sphi 0, %s17
    %s20 = sphi 0, %s18
    %s21 = sphi 0, %s19
    %s31 = sphi 0, %s33
    %s34 = sphi 0, %s31
    %s35 = sphi 0, %s34
    %s51 = sphi 0, %s35
    %s55 = sphi 0, %s55
    %s57 = sphi 0, %s55
    %s58 = sphi 0, %s57
    %s72 = sphi 0, %s58
    %s76 = sphi 0, %s76
    %s78 = sphi 0, %s76
    %s79 = sphi 0, %s78
    %s93 = sphi 0, %s79
    %s101 = sphi 0, %s103
    %s104 = sphi 0, %s101
    %s105 = sphi 0, %s104
    %s121 = sphi 0, %s105
  $region4: #{csp_up_block_forward.13} parent=0 // loop_header_branch
    %12 = sbr.rel (%p10) target = $region8
  $region5: #{csp_up_block_forward.13} parent=0 // loop_body
    %s14 = ssub.s32 %s9, 1
    %s15 = ssub.s32 %s9, 2
    %s22 = sadd.s32 1, %s17
    %p23 = scmp.ge.s32.totalorder %s22, 1
    %s24 = scalar_select %p23, 0, %s22
    %s25 = sadd.s32 1, %s16
    %s26 = scalar_select %p23, %s25, %s16
    %p27 = scmp.ge.s32.totalorder %s26, 2
    %s28 = scalar_select %p27, 0, %s26
    %s29 = ssub.s32 %s17, %s24
    %p30 = scmp.eq.s32.totalorder %s29, 0
    %s32 = sadd.s32 %s31, 1
    %s33 = scalar_select %p30, %s31, %s32
    %p36 = pneg %p30
    %p37 = scmp.eq.s32.totalorder %s9, 1
    %p38 = por %p36, %p37
    %p39 = scmp.ne.s32.totalorder %s31, %s34
    %p40 = scmp.eq.s32.totalorder %s9, 0
    %p41 = por %p39, %p40
    %p42 = scmp.ne.s32.totalorder %s31, %s34
    %p43 = scmp.eq.s32.totalorder %s14, 1
    %p44 = por %p42, %p43
    %p45 = scmp.ne.s32.totalorder %s34, %s35
    %p46 = scmp.eq.s32.totalorder %s14, 0
    %p47 = por %p45, %p46
    %p48 = scmp.ne.s32.totalorder %s34, %s35
    %p49 = scmp.eq.s32.totalorder %s15, 1
    %p50 = por %p48, %p49
    %p52 = scmp.ne.s32.totalorder %s35, %s51
    %p53 = scmp.eq.s32.totalorder %s15, 0
    %p54 = por %p52, %p53
    %s56 = sadd.s32 %s55, 1
    %p59 = scmp.eq.s32.totalorder %s9, 1
    %p60 = scmp.ne.s32.totalorder %s55, %s57
    %p61 = scmp.eq.s32.totalorder %s9, 0
    %p62 = por %p60, %p61
    %p63 = scmp.ne.s32.totalorder %s55, %s57
    %p64 = scmp.eq.s32.totalorder %s14, 1
    %p65 = por %p63, %p64
    %p66 = scmp.ne.s32.totalorder %s57, %s58
    %p67 = scmp.eq.s32.totalorder %s14, 0
    %p68 = por %p66, %p67
    %p69 = scmp.ne.s32.totalorder %s57, %s58
    %p70 = scmp.eq.s32.totalorder %s15, 1
    %p71 = por %p69, %p70
    %p73 = scmp.ne.s32.totalorder %s58, %s72
    %p74 = scmp.eq.s32.totalorder %s15, 0
    %p75 = por %p73, %p74
    %s77 = sadd.s32 %s76, 1
    %p80 = scmp.eq.s32.totalorder %s9, 1
    %p81 = scmp.ne.s32.totalorder %s76, %s78
    %p82 = scmp.eq.s32.totalorder %s9, 0
    %p83 = por %p81, %p82
    %p84 = scmp.ne.s32.totalorder %s76, %s78
    %p85 = scmp.eq.s32.totalorder %s14, 1
    %p86 = por %p84, %p85
    %p87 = scmp.ne.s32.totalorder %s78, %s79
    %p88 = scmp.eq.s32.totalorder %s14, 0
    %p89 = por %p87, %p88
    %p90 = scmp.ne.s32.totalorder %s78, %s79
    %p91 = scmp.eq.s32.totalorder %s15, 1
    %p92 = por %p90, %p91
    %p94 = scmp.ne.s32.totalorder %s79, %s93
    %p95 = scmp.eq.s32.totalorder %s15, 0
    %p96 = por %p94, %p95
    %s97 = smul.u32 %s17, %s16
    %s98 = smul.u32 %s24, %s28
    %s99 = ssub.s32 %s97, %s98
    %p100 = scmp.eq.s32.totalorder %s99, 0
    %s102 = sadd.s32 %s101, 1
    %s103 = scalar_select %p100, %s101, %s102
    %p106 = pneg %p100
    %p107 = scmp.eq.s32.totalorder %s9, 1
    %p108 = por %p106, %p107
    %p109 = scmp.ne.s32.totalorder %s101, %s104
    %p110 = scmp.eq.s32.totalorder %s9, 0
    %p111 = por %p109, %p110
    %p112 = scmp.ne.s32.totalorder %s101, %s104
    %p113 = scmp.eq.s32.totalorder %s14, 1
    %p114 = por %p112, %p113
    %p115 = scmp.ne.s32.totalorder %s104, %s105
    %p116 = scmp.eq.s32.totalorder %s14, 0
    %p117 = por %p115, %p116
    %p118 = scmp.ne.s32.totalorder %s104, %s105
    %p119 = scmp.eq.s32.totalorder %s15, 1
    %p120 = por %p118, %p119
    %p122 = scmp.ne.s32.totalorder %s105, %s121
    %p123 = scmp.eq.s32.totalorder %s15, 0
    %p124 = por %p122, %p123
    %p125 = scmp.le.s32.totalorder 1, %s9
    %p126 = scmp.lt.s32.totalorder %s9, 3
    %p127 = pnand %p125, %p126
    %p128 = pneg %p127
    // Predicated region
    $region9: #{csp_up_block_forward.13} parent=5 // pred_check
      _
    $region10: #{csp_up_block_forward.13} parent=5 // pred_check_branch
      %130 = sbr.rel (%p127) target = $region12
    $region11: #{csp_up_block_forward.13} parent=5 // pred_region
      %s131 = ssub.s32 %s9, 1
      // Predicated region
      $region13: #{csp_up_block_forward.13} parent=11 // pred_check
        %p132 = pneg %p47
      $region14: #{csp_up_block_forward.13} parent=11 // pred_check_branch
        %134 = sbr.rel (%p132) target = $region16
      $region15: #{csp_up_block_forward.13} parent=11 // pred_region
        %s135 = smul.u32 4, %s19
        %p136 = scmp.lt.s32.totalorder %s135, 3
        %s137 = scalar_select %p136, %s135, 3
        %s138 = smul.addr %s137, 4
        %s139 = scalar_lea.vmem %s0, %s138
        %s140 = smul.u32 4, %s19
      $region16: #{csp_up_block_forward.13} parent=11 // pred_fallthru
        _
      // Predicated region
      $region17: #{csp_up_block_forward.13} parent=11 // pred_check
        %p141 = pneg %p68
      $region18: #{csp_up_block_forward.13} parent=11 // pred_check_branch
        %143 = sbr.rel (%p141) target = $region20
      $region19: #{csp_up_block_forward.13} parent=11 // pred_region
        _
      $region20: #{csp_up_block_forward.13} parent=11 // pred_fallthru
        _
      // Predicated region
      $region21: #{csp_up_block_forward.13} parent=11 // pred_check
        %p144 = pneg %p89
      $region22: #{csp_up_block_forward.13} parent=11 // pred_check_branch
        %146 = sbr.rel (%p144) target = $region24
      $region23: #{csp_up_block_forward.13} parent=11 // pred_region
        _
      $region24: #{csp_up_block_forward.13} parent=11 // pred_fallthru
        _
    $region12: #{csp_up_block_forward.13} parent=5 // pred_fallthru
      _
    %p147 = scmp.lt.s32.totalorder %s9, 2
    // Predicated region
    $region25: #{csp_up_block_forward.13} parent=5 // pred_check
      %p148 = pneg %p147
    $region26: #{csp_up_block_forward.13} parent=5 // pred_check_branch
      %150 = sbr.rel (%p148) target = $region28
    $region27: #{csp_up_block_forward.13} parent=5 // pred_region
      _
    $region28: #{csp_up_block_forward.13} parent=5 // pred_fallthru
      _
    %p151 = scmp.le.s32.totalorder 1, %s9
    %p152 = scmp.lt.s32.totalorder %s9, 3
    %p153 = pnand %p151, %p152
    %p154 = pneg %p153
    // Predicated region
    $region29: #{csp_up_block_forward.13} parent=5 // pred_check
      _
    $region30: #{csp_up_block_forward.13} parent=5 // pred_check_branch
      %156 = sbr.rel (%p153) target = $region32
    $region31: #{csp_up_block_forward.13} parent=5 // pred_region
      %s157 = ssub.s32 %s9, 1
      %s158 = smul.u32 4, %s19
      %p159 = scmp.lt.s32.totalorder %s158, 3
      %s160 = scalar_select %p159, %s158, 3
      %s161 = smul.addr %s160, 4
      %s162 = scalar_lea.vmem %s0, %s161
      %p163 = pneg %p47
      %p164 = pneg %p44
      %p165 = pneg %p68
      %p166 = pneg %p65
      %p167 = pneg %p89
      %p168 = pneg %p86
      %p169 = pneg %p117
      %p170 = pneg %p114
      %s171 = smul.u32 %s19, %s18
      %s172 = smul.u32 4, %s171
      %p173 = scmp.lt.s32.totalorder %s172, 3
      %s174 = scalar_select %p173, %s172, 3
      %s175 = smul.addr %s174, 4
      %s176 = scalar_lea.vmem %s3, %s175
      %s177 = smul.u32 4, %s19
      %p178 = scmp.lt.s32.totalorder %s177, 3
      %s179 = scalar_select %p178, %s177, 3
      %s180 = smul.addr %s179, 4
      %s181 = scalar_lea.vmem %s0, %s180
      %s182 = smul.u32 4, %s19
      %s183 = smul.u32 %s19, %s18
      %s184 = smul.u32 4, %s183
      %p185 = scmp.lt.s32.totalorder %s184, 3
      %s186 = scalar_select %p185, %s184, 3
      %s187 = smul.addr %s186, 4
      %s188 = scalar_lea.vmem %s3, %s187
      %s189 = smul.u32 %s19, %s18
      %s190 = smul.u32 4, %s189
      %p191 = scmp.eq.s32.totalorder %s18, 0
      %p192 = scmp.eq.s32.totalorder %s19, 0
      %p193 = pnand %p191, %p192
      %p194 = pneg %p193
      // Predicated region
      $region33: #{csp_up_block_forward.13} parent=31 // pred_check
        _
      $region34: #{csp_up_block_forward.13} parent=31 // pred_check_branch
        %196 = sbr.rel (%p193) target = $region36
      $region35: #{csp_up_block_forward.13} parent=31 // pred_region
        %vm197 = vcmask 7168
        %198 = vst.msk [vmem:[#allocation2] sm:$0xff] %vm197, 0.0
        %199 = vst.msk [vmem:[#allocation3] sm:$0xff] %vm197, 0.0
      $region36: #{csp_up_block_forward.13} parent=31 // pred_fallthru
        _
      %v200 = vld [vmem:[%s181] sm:$0xff]
      %v201 = vld [vmem:[%s181 + $0x8] sm:$0xff]
      %v202 = vunpack.c.l.bf16 %v200
      %v203 = vunpack.c.h.bf16 %v200
      %v204 = vunpack.c.l.bf16 %v201
      %v205 = vunpack.c.h.bf16 %v201
      // Predicated region
      $region37: #{csp_up_block_forward.13} parent=31 // pred_check
        %p206 = pneg %p191
      $region38: #{csp_up_block_forward.13} parent=31 // pred_check_branch
        %208 = sbr.rel (%p206) target = $region40
      $region39: #{csp_up_block_forward.13} parent=31 // pred_region
        %v209 = vld [vmem:[#allocation2] sm:$0xff]
        %v210 = vadd.f32 %v202, %v203
        %v211 = vadd.f32 %v210, %v204
        %v212 = vadd.f32 %v211, %v205
        %213 = vadd.xlane.f32.xlu0 %v212
        %v214 = vpop.xlane.xlu0 %213
        %v215 = vadd.f32 %v209, %v214
        %vm216 = vcmask 7168
        %217 = vst.msk [vmem:[#allocation2] sm:$0xff] %vm216, %v215
        %v218 = vld [vmem:[#allocation3] sm:$0xff]
        %v219 = vmul.f32 %v202, %v202
        %v220 = vmul.f32 %v203, %v203
        %v221 = vmul.f32 %v204, %v204
        %v222 = vmul.f32 %v205, %v205
        %v223 = vadd.f32 %v219, %v220
        %v224 = vadd.f32 %v223, %v221
        %v225 = vadd.f32 %v224, %v222
        %226 = vadd.xlane.f32.xlu0 %v225
        %v227 = vpop.xlane.xlu0 %226
        %v228 = vadd.f32 %v218, %v227
        %229 = vst.msk [vmem:[#allocation3] sm:$0xff] %vm216, %v228
      $region40: #{csp_up_block_forward.13} parent=31 // pred_fallthru
        _
      %p230 = scmp.eq.s32.totalorder %s18, 1
      %p231 = pnand %p230, %p192
      %p232 = pneg %p231
      // Predicated region
      $region41: #{csp_up_block_forward.13} parent=31 // pred_check
        _
      $region42: #{csp_up_block_forward.13} parent=31 // pred_check_branch
        %234 = sbr.rel (%p231) target = $region44
      $region43: #{csp_up_block_forward.13} parent=31 // pred_region
        %v235 = vld [vmem:[#allocation2] sm:$0xff]
        %v236 = vmul.f32 %v235, 0.001953125
        %v237 = vld [vmem:[#allocation3] sm:$0xff]
        %v238 = vmul.f32 %v237, 0.001953125
        %v239 = vmul.f32 %v236, %v236
        %v240 = vsub.f32 %v238, %v239
        %v241 = vmax.f32 %v240, 0.0
        %v242 = vld [vmem:[%s1] sm:$0xff]
        %v243 = vadd.f32 %v241, 0.001
        %v244 = vrsqrt.pop %v243
        %v245 = vmul.f32 %v244, %v243
        %v246 = vmul.f32 %v245, %v244
        %v247 = vmul.f32 0.5, %v246
        %v248 = vsub.f32 1.5, %v247
        %v249 = vmul.f32 %v244, %v248
        %vm250 = vweird.f32 %v243
        %vm251 = vweird.f32 %v244
        %vm252 = vmor %vm250, %vm251
        %v253 = vsel %vm252, %v244, %v249
        %v254 = vmul.f32 %v242, %v253
        %vm255 = vcmask 7168
        %256 = vst.msk [vmem:[#allocation2] sm:$0xff] %vm255, %v254
        %v257 = vld [vmem:[%s2] sm:$0xff]
        %v258 = vmul.f32 %v236, %v254
        %v259 = vsub.f32 %v257, %v258
        %260 = vst.msk [vmem:[#allocation3] sm:$0xff] %vm255, %v259
      $region44: #{csp_up_block_forward.13} parent=31 // pred_fallthru
        _
      // Predicated region
      $region45: #{csp_up_block_forward.13} parent=31 // pred_check
        %p261 = pneg %p230
      $region46: #{csp_up_block_forward.13} parent=31 // pred_check_branch
        %263 = sbr.rel (%p261) target = $region48
      $region47: #{csp_up_block_forward.13} parent=31 // pred_region
        %v264 = vld [vmem:[#allocation2] sm:$0xff]
        %266 = vset.pattern.permute.xlu0 0
        %267 = vperm.xlu0 %266, %v264
        %v268 = vpop.permute.xlu0 %267
        %v270 = vmul.f32 %v202, %v268
        %v271 = vmul.f32 %v203, %v268
        %v272 = vmul.f32 %v204, %v268
        %v273 = vmul.f32 %v205, %v268
        %v274 = vld [vmem:[#allocation3] sm:$0xff]
        %276 = vset.pattern.permute.xlu0 0
        %277 = vperm.xlu0 %276, %v274
        %v278 = vpop.permute.xlu0 %277
        %v280 = vadd.f32 %v270, %v278
        %v281 = vadd.f32 %v271, %v278
        %v282 = vadd.f32 %v272, %v278
        %v283 = vadd.f32 %v273, %v278
        %v284 = vmin.f32 %v280, 20.0
        %v285 = vmin.f32 %v281, 20.0
        %v286 = vmin.f32 %v282, 20.0
        %v287 = vmin.f32 %v283, 20.0
        %v288 = vmul.f32 %v284, 1.442695
        %v289 = vpow.pop %v288
        %v290 = vmul.f32 %v285, 1.442695
        %v291 = vpow.pop %v290
        %v292 = vmul.f32 %v286, 1.442695
        %v293 = vpow.pop %v292
        %v294 = vmul.f32 %v287, 1.442695
        %v295 = vpow.pop %v294
        %v296 = vadd.f32 %v289, 2.0
        %v297 = vadd.f32 %v291, 2.0
        %v298 = vadd.f32 %v293, 2.0
        %v299 = vadd.f32 %v295, 2.0
        %v300 = vmul.f32 %v289, %v296
        %v301 = vmul.f32 %v291, %v297
        %v302 = vmul.f32 %v293, %v298
        %v303 = vmul.f32 %v295, %v299
        %v304 = vadd.f32 %v300, 2.0
        %v305 = vadd.f32 %v301, 2.0
        %v306 = vadd.f32 %v302, 2.0
        %v307 = vadd.f32 %v303, 2.0
        %v308 = vrcp.pop %v304
        %v309 = vrcp.pop %v305
        %v310 = vrcp.pop %v306
        %v311 = vrcp.pop %v307
        %v312 = vmul.f32 %v304, %v308
        %v313 = vmul.f32 %v305, %v309
        %v314 = vmul.f32 %v306, %v310
        %v315 = vmul.f32 %v307, %v311
        %v316 = vsub.f32 2.0, %v312
        %v317 = vsub.f32 2.0, %v313
        %v318 = vsub.f32 2.0, %v314
        %v319 = vsub.f32 2.0, %v315
        %v320 = vmul.f32 %v308, %v316
        %v321 = vmul.f32 %v309, %v317
        %v322 = vmul.f32 %v310, %v318
        %v323 = vmul.f32 %v311, %v319
        %v324 = vmul.f32 %v280, %v300
        %v325 = vmul.f32 %v281, %v301
        %v326 = vmul.f32 %v282, %v302
        %v327 = vmul.f32 %v283, %v303
        %v328 = vmul.f32 %v324, %v320
        %v329 = vmul.f32 %v325, %v321
        %v330 = vmul.f32 %v326, %v322
        %v331 = vmul.f32 %v327, %v323
        %v332 = vpack.c.bf16 %v329, %v328
        %v333 = vpack.c.bf16 %v331, %v330
        %334 = vst [vmem:[%s188] sm:$0xff] %v332
        %335 = vst [vmem:[%s188 + $0x8] sm:$0xff] %v333
      $region48: #{csp_up_block_forward.13} parent=31 // pred_fallthru
        _
      %s336 = smul.u32 %s19, %s18
      %s337 = smul.u32 4, %s336
      %p338 = scmp.lt.s32.totalorder %s337, 3
      %s339 = scalar_select %p338, %s337, 3
      %s340 = smul.addr %s339, 4
      %s341 = scalar_lea.vmem %s3, %s340
      // Predicated region
      $region49: #{csp_up_block_forward.13} parent=31 // pred_check
        %p342 = pneg %p114
      $region50: #{csp_up_block_forward.13} parent=31 // pred_check_branch
        %344 = sbr.rel (%p342) target = $region52
      $region51: #{csp_up_block_forward.13} parent=31 // pred_region
        %s345 = smul.u32 %s19, %s18
        %s346 = smul.u32 4, %s345
      $region52: #{csp_up_block_forward.13} parent=31 // pred_fallthru
        _
    $region32: #{csp_up_block_forward.13} parent=5 // pred_fallthru
      _
    %p347 = scmp.le.s32.totalorder 2, %s9
    // Predicated region
    $region53: #{csp_up_block_forward.13} parent=5 // pred_check
      %p348 = pneg %p347
    $region54: #{csp_up_block_forward.13} parent=5 // pred_check_branch
      %350 = sbr.rel (%p348) target = $region56
    $region55: #{csp_up_block_forward.13} parent=5 // pred_region
      %s351 = ssub.s32 %s9, 2
      // Predicated region
      $region57: #{csp_up_block_forward.13} parent=55 // pred_check
        %p352 = pneg %p120
      $region58: #{csp_up_block_forward.13} parent=55 // pred_check_branch
        %354 = sbr.rel (%p352) target = $region60
      $region59: #{csp_up_block_forward.13} parent=55 // pred_region
        %s355 = smul.u32 %s21, %s20
        %s356 = smul.u32 4, %s355
        %p357 = scmp.lt.s32.totalorder %s356, 3
        %s358 = scalar_select %p357, %s356, 3
        %s359 = smul.addr %s358, 4
        %s360 = scalar_lea.vmem %s3, %s359
      $region60: #{csp_up_block_forward.13} parent=55 // pred_fallthru
        _
    $region56: #{csp_up_block_forward.13} parent=5 // pred_fallthru
      _
  $region6: #{csp_up_block_forward.13} parent=0 // loop_footer
    %s13 = sadd.s32 1, %s9
  $region7: #{csp_up_block_forward.13} parent=0 // loop_footer_branch
    %8 = sbr.rel target = $region3
  $region8: #{csp_up_block_forward.13} parent=0 // loop_exit
    _

// kernel: csp_up_block_forward.15
$region0: #{csp_up_block_forward.15}
  #allocation0 [shape = 'u32[]', space=smem, size = 0x4, offset = 0x4, fixed_abs, tag = 'smem constant byte address 0x4 - core index']
  #allocation1 [shape = 'u32[72,128]{1,0:T(1,128)}', space=vmem, size = 0x9000, scoped, tag = 'internal scratch']
  #allocation2 [shape = 'f32[8,1]{1,0:T(8,128)}', space=vmem, size = 0x1000, scoped, tag = 'scratch operand']
  #allocation3 [shape = 'f32[8,1]{1,0:T(8,128)}', space=vmem, size = 0x1000, scoped, tag = 'scratch operand']
  %s0 = inlined_call_operand.vmem [shape: bf16[8,512], index: 0, kind: input, shape index: {}]
  %s1 = inlined_call_operand.vmem [shape: bf16[8,512], index: 1, kind: input, shape index: {}]
  %s2 = inlined_call_operand.vmem [shape: bf16[8,8], index: 2, kind: input, shape index: {}]
  %s3 = inlined_call_operand.vmem [shape: bf16[8,8], index: 3, kind: input, shape index: {}]
  %s4 = inlined_call_operand.vmem [shape: f32[8,1], index: 4, kind: input, shape index: {}]
  %s5 = inlined_call_operand.vmem [shape: f32[8,1], index: 5, kind: input, shape index: {}]
  %s6 = inlined_call_operand.vmem [shape: f32[8,512], index: 6, kind: output, shape index: {}]
  %s7 = sld [smem:[#allocation0]]
  $region73: #{csp_up_block_forward.15} parent=0
    _
  %s9 = ssub.s32 1, %s7
  %s10 = scalar_select 0, %s9, %s7
  loop: start=0, step=1, limit=4
  $region2: #{csp_up_block_forward.15} parent=0 // loop_pre_header
    _
  $region3: #{csp_up_block_forward.15} parent=0 // loop_header
    %s12 = sphi 0, %s16
    %p13 = scmp.ge.s32.totalorder %s12, 4
    %s19 = sphi 0, %s31
    %s20 = sphi 0, %s27
    %s21 = sphi 0, %s19
    %s22 = sphi 0, %s20
    %s23 = sphi 0, %s21
    %s24 = sphi 0, %s22
    %s34 = sphi 0, %s36
    %s37 = sphi 0, %s34
    %s38 = sphi 0, %s37
    %s54 = sphi 0, %s38
    %s60 = sphi 0, %s62
    %s63 = sphi 0, %s60
    %s64 = sphi 0, %s63
    %s80 = sphi 0, %s64
    %s84 = sphi 0, %s84
    %s86 = sphi 0, %s84
    %s87 = sphi 0, %s86
    %s101 = sphi 0, %s87
    %s105 = sphi 0, %s105
    %s107 = sphi 0, %s105
    %s108 = sphi 0, %s107
    %s122 = sphi 0, %s108
    %s126 = sphi 0, %s126
    %s128 = sphi 0, %s126
    %s129 = sphi 0, %s128
    %s143 = sphi 0, %s129
    %s147 = sphi 0, %s147
    %s149 = sphi 0, %s147
    %s150 = sphi 0, %s149
    %s164 = sphi 0, %s150
    %s172 = sphi 0, %s174
    %s175 = sphi 0, %s172
    %s176 = sphi 0, %s175
    %s192 = sphi 0, %s176
  $region4: #{csp_up_block_forward.15} parent=0 // loop_header_branch
    %15 = sbr.rel (%p13) target = $region8
  $region5: #{csp_up_block_forward.15} parent=0 // loop_body
    %s17 = ssub.s32 %s12, 1
    %s18 = ssub.s32 %s12, 2
    %s25 = sadd.s32 1, %s20
    %p26 = scmp.ge.s32.totalorder %s25, 1
    %s27 = scalar_select %p26, 0, %s25
    %s28 = sadd.s32 1, %s19
    %s29 = scalar_select %p26, %s28, %s19
    %p30 = scmp.ge.s32.totalorder %s29, 2
    %s31 = scalar_select %p30, 0, %s29
    %s32 = ssub.s32 %s20, %s27
    %p33 = scmp.eq.s32.totalorder %s32, 0
    %s35 = sadd.s32 %s34, 1
    %s36 = scalar_select %p33, %s34, %s35
    %p39 = pneg %p33
    %p40 = scmp.eq.s32.totalorder %s12, 1
    %p41 = por %p39, %p40
    %p42 = scmp.ne.s32.totalorder %s34, %s37
    %p43 = scmp.eq.s32.totalorder %s12, 0
    %p44 = por %p42, %p43
    %p45 = scmp.ne.s32.totalorder %s34, %s37
    %p46 = scmp.eq.s32.totalorder %s17, 1
    %p47 = por %p45, %p46
    %p48 = scmp.ne.s32.totalorder %s37, %s38
    %p49 = scmp.eq.s32.totalorder %s17, 0
    %p50 = por %p48, %p49
    %p51 = scmp.ne.s32.totalorder %s37, %s38
    %p52 = scmp.eq.s32.totalorder %s18, 1
    %p53 = por %p51, %p52
    %p55 = scmp.ne.s32.totalorder %s38, %s54
    %p56 = scmp.eq.s32.totalorder %s18, 0
    %p57 = por %p55, %p56
    %s58 = ssub.s32 %s20, %s27
    %p59 = scmp.eq.s32.totalorder %s58, 0
    %s61 = sadd.s32 %s60, 1
    %s62 = scalar_select %p59, %s60, %s61
    %p65 = pneg %p59
    %p66 = scmp.eq.s32.totalorder %s12, 1
    %p67 = por %p65, %p66
    %p68 = scmp.ne.s32.totalorder %s60, %s63
    %p69 = scmp.eq.s32.totalorder %s12, 0
    %p70 = por %p68, %p69
    %p71 = scmp.ne.s32.totalorder %s60, %s63
    %p72 = scmp.eq.s32.totalorder %s17, 1
    %p73 = por %p71, %p72
    %p74 = scmp.ne.s32.totalorder %s63, %s64
    %p75 = scmp.eq.s32.totalorder %s17, 0
    %p76 = por %p74, %p75
    %p77 = scmp.ne.s32.totalorder %s63, %s64
    %p78 = scmp.eq.s32.totalorder %s18, 1
    %p79 = por %p77, %p78
    %p81 = scmp.ne.s32.totalorder %s64, %s80
    %p82 = scmp.eq.s32.totalorder %s18, 0
    %p83 = por %p81, %p82
    %s85 = sadd.s32 %s84, 1
    %p88 = scmp.eq.s32.totalorder %s12, 1
    %p89 = scmp.ne.s32.totalorder %s84, %s86
    %p90 = scmp.eq.s32.totalorder %s12, 0
    %p91 = por %p89, %p90
    %p92 = scmp.ne.s32.totalorder %s84, %s86
    %p93 = scmp.eq.s32.totalorder %s17, 1
    %p94 = por %p92, %p93
    %p95 = scmp.ne.s32.totalorder %s86, %s87
    %p96 = scmp.eq.s32.totalorder %s17, 0
    %p97 = por %p95, %p96
    %p98 = scmp.ne.s32.totalorder %s86, %s87
    %p99 = scmp.eq.s32.totalorder %s18, 1
    %p100 = por %p98, %p99
    %p102 = scmp.ne.s32.totalorder %s87, %s101
    %p103 = scmp.eq.s32.totalorder %s18, 0
    %p104 = por %p102, %p103
    %s106 = sadd.s32 %s105, 1
    %p109 = scmp.eq.s32.totalorder %s12, 1
    %p110 = scmp.ne.s32.totalorder %s105, %s107
    %p111 = scmp.eq.s32.totalorder %s12, 0
    %p112 = por %p110, %p111
    %p113 = scmp.ne.s32.totalorder %s105, %s107
    %p114 = scmp.eq.s32.totalorder %s17, 1
    %p115 = por %p113, %p114
    %p116 = scmp.ne.s32.totalorder %s107, %s108
    %p117 = scmp.eq.s32.totalorder %s17, 0
    %p118 = por %p116, %p117
    %p119 = scmp.ne.s32.totalorder %s107, %s108
    %p120 = scmp.eq.s32.totalorder %s18, 1
    %p121 = por %p119, %p120
    %p123 = scmp.ne.s32.totalorder %s108, %s122
    %p124 = scmp.eq.s32.totalorder %s18, 0
    %p125 = por %p123, %p124
    %s127 = sadd.s32 %s126, 1
    %p130 = scmp.eq.s32.totalorder %s12, 1
    %p131 = scmp.ne.s32.totalorder %s126, %s128
    %p132 = scmp.eq.s32.totalorder %s12, 0
    %p133 = por %p131, %p132
    %p134 = scmp.ne.s32.totalorder %s126, %s128
    %p135 = scmp.eq.s32.totalorder %s17, 1
    %p136 = por %p134, %p135
    %p137 = scmp.ne.s32.totalorder %s128, %s129
    %p138 = scmp.eq.s32.totalorder %s17, 0
    %p139 = por %p137, %p138
    %p140 = scmp.ne.s32.totalorder %s128, %s129
    %p141 = scmp.eq.s32.totalorder %s18, 1
    %p142 = por %p140, %p141
    %p144 = scmp.ne.s32.totalorder %s129, %s143
    %p145 = scmp.eq.s32.totalorder %s18, 0
    %p146 = por %p144, %p145
    %s148 = sadd.s32 %s147, 1
    %p151 = scmp.eq.s32.totalorder %s12, 1
    %p152 = scmp.ne.s32.totalorder %s147, %s149
    %p153 = scmp.eq.s32.totalorder %s12, 0
    %p154 = por %p152, %p153
    %p155 = scmp.ne.s32.totalorder %s147, %s149
    %p156 = scmp.eq.s32.totalorder %s17, 1
    %p157 = por %p155, %p156
    %p158 = scmp.ne.s32.totalorder %s149, %s150
    %p159 = scmp.eq.s32.totalorder %s17, 0
    %p160 = por %p158, %p159
    %p161 = scmp.ne.s32.totalorder %s149, %s150
    %p162 = scmp.eq.s32.totalorder %s18, 1
    %p163 = por %p161, %p162
    %p165 = scmp.ne.s32.totalorder %s150, %s164
    %p166 = scmp.eq.s32.totalorder %s18, 0
    %p167 = por %p165, %p166
    %s168 = smul.u32 %s20, %s19
    %s169 = smul.u32 %s27, %s31
    %s170 = ssub.s32 %s168, %s169
    %p171 = scmp.eq.s32.totalorder %s170, 0
    %s173 = sadd.s32 %s172, 1
    %s174 = scalar_select %p171, %s172, %s173
    %p177 = pneg %p171
    %p178 = scmp.eq.s32.totalorder %s12, 1
    %p179 = por %p177, %p178
    %p180 = scmp.ne.s32.totalorder %s172, %s175
    %p181 = scmp.eq.s32.totalorder %s12, 0
    %p182 = por %p180, %p181
    %p183 = scmp.ne.s32.totalorder %s172, %s175
    %p184 = scmp.eq.s32.totalorder %s17, 1
    %p185 = por %p183, %p184
    %p186 = scmp.ne.s32.totalorder %s175, %s176
    %p187 = scmp.eq.s32.totalorder %s17, 0
    %p188 = por %p186, %p187
    %p189 = scmp.ne.s32.totalorder %s175, %s176
    %p190 = scmp.eq.s32.totalorder %s18, 1
    %p191 = por %p189, %p190
    %p193 = scmp.ne.s32.totalorder %s176, %s192
    %p194 = scmp.eq.s32.totalorder %s18, 0
    %p195 = por %p193, %p194
    %p196 = scmp.le.s32.totalorder 1, %s12
    %p197 = scmp.lt.s32.totalorder %s12, 3
    %p198 = pnand %p196, %p197
    %p199 = pneg %p198
    // Predicated region
    $region9: #{csp_up_block_forward.15} parent=5 // pred_check
      _
    $region10: #{csp_up_block_forward.15} parent=5 // pred_check_branch
      %201 = sbr.rel (%p198) target = $region12
    $region11: #{csp_up_block_forward.15} parent=5 // pred_region
      %s202 = ssub.s32 %s12, 1
      // Predicated region
      $region13: #{csp_up_block_forward.15} parent=11 // pred_check
        %p203 = pneg %p50
      $region14: #{csp_up_block_forward.15} parent=11 // pred_check_branch
        %205 = sbr.rel (%p203) target = $region16
      $region15: #{csp_up_block_forward.15} parent=11 // pred_region
        %s206 = smul.u32 4, %s22
        %p207 = scmp.lt.s32.totalorder %s206, 3
        %s208 = scalar_select %p207, %s206, 3
        %s209 = smul.addr %s208, 4
        %s210 = scalar_lea.vmem %s0, %s209
        %s211 = smul.u32 4, %s22
      $region16: #{csp_up_block_forward.15} parent=11 // pred_fallthru
        _
      // Predicated region
      $region17: #{csp_up_block_forward.15} parent=11 // pred_check
        %p212 = pneg %p76
      $region18: #{csp_up_block_forward.15} parent=11 // pred_check_branch
        %214 = sbr.rel (%p212) target = $region20
      $region19: #{csp_up_block_forward.15} parent=11 // pred_region
        %s215 = smul.u32 4, %s22
        %p216 = scmp.lt.s32.totalorder %s215, 3
        %s217 = scalar_select %p216, %s215, 3
        %s218 = smul.addr %s217, 4
        %s219 = scalar_lea.vmem %s1, %s218
        %s220 = smul.u32 4, %s22
      $region20: #{csp_up_block_forward.15} parent=11 // pred_fallthru
        _
      // Predicated region
      $region21: #{csp_up_block_forward.15} parent=11 // pred_check
        %p221 = pneg %p97
      $region22: #{csp_up_block_forward.15} parent=11 // pred_check_branch
        %223 = sbr.rel (%p221) target = $region24
      $region23: #{csp_up_block_forward.15} parent=11 // pred_region
        _
      $region24: #{csp_up_block_forward.15} parent=11 // pred_fallthru
        _
      // Predicated region
      $region25: #{csp_up_block_forward.15} parent=11 // pred_check
        %p224 = pneg %p118
      $region26: #{csp_up_block_forward.15} parent=11 // pred_check_branch
        %226 = sbr.rel (%p224) target = $region28
      $region27: #{csp_up_block_forward.15} parent=11 // pred_region
        _
      $region28: #{csp_up_block_forward.15} parent=11 // pred_fallthru
        _
      // Predicated region
      $region29: #{csp_up_block_forward.15} parent=11 // pred_check
        %p227 = pneg %p139
      $region30: #{csp_up_block_forward.15} parent=11 // pred_check_branch
        %229 = sbr.rel (%p227) target = $region32
      $region31: #{csp_up_block_forward.15} parent=11 // pred_region
        _
      $region32: #{csp_up_block_forward.15} parent=11 // pred_fallthru
        _
      // Predicated region
      $region33: #{csp_up_block_forward.15} parent=11 // pred_check
        %p230 = pneg %p160
      $region34: #{csp_up_block_forward.15} parent=11 // pred_check_branch
        %232 = sbr.rel (%p230) target = $region36
      $region35: #{csp_up_block_forward.15} parent=11 // pred_region
        _
      $region36: #{csp_up_block_forward.15} parent=11 // pred_fallthru
        _
    $region12: #{csp_up_block_forward.15} parent=5 // pred_fallthru
      _
    %p233 = scmp.lt.s32.totalorder %s12, 2
    // Predicated region
    $region37: #{csp_up_block_forward.15} parent=5 // pred_check
      %p234 = pneg %p233
    $region38: #{csp_up_block_forward.15} parent=5 // pred_check_branch
      %236 = sbr.rel (%p234) target = $region40
    $region39: #{csp_up_block_forward.15} parent=5 // pred_region
      _
    $region40: #{csp_up_block_forward.15} parent=5 // pred_fallthru
      _
    %p237 = scmp.le.s32.totalorder 1, %s12
    %p238 = scmp.lt.s32.totalorder %s12, 3
    %p239 = pnand %p237, %p238
    %p240 = pneg %p239
    // Predicated region
    $region41: #{csp_up_block_forward.15} parent=5 // pred_check
      _
    $region42: #{csp_up_block_forward.15} parent=5 // pred_check_branch
      %242 = sbr.rel (%p239) target = $region44
    $region43: #{csp_up_block_forward.15} parent=5 // pred_region
      %s243 = ssub.s32 %s12, 1
      %s244 = smul.u32 4, %s22
      %p245 = scmp.lt.s32.totalorder %s244, 3
      %s246 = scalar_select %p245, %s244, 3
      %s247 = smul.addr %s246, 4
      %s248 = scalar_lea.vmem %s0, %s247
      %p249 = pneg %p50
      %p250 = pneg %p47
      %s251 = smul.u32 4, %s22
      %p252 = scmp.lt.s32.totalorder %s251, 3
      %s253 = scalar_select %p252, %s251, 3
      %s254 = smul.addr %s253, 4
      %s255 = scalar_lea.vmem %s1, %s254
      %p256 = pneg %p76
      %p257 = pneg %p73
      %p258 = pneg %p97
      %p259 = pneg %p94
      %p260 = pneg %p118
      %p261 = pneg %p115
      %p262 = pneg %p139
      %p263 = pneg %p136
      %p264 = pneg %p160
      %p265 = pneg %p157
      %p266 = pneg %p188
      %p267 = pneg %p185
      %s268 = smul.u32 %s22, %s21
      %s269 = smul.u32 4, %s268
      %p270 = scmp.lt.s32.totalorder %s269, 3
      %s271 = scalar_select %p270, %s269, 3
      %s272 = smul.addr %s271, 8
      %s273 = scalar_lea.vmem %s6, %s272
      %s274 = smul.u32 4, %s22
      %p275 = scmp.lt.s32.totalorder %s274, 3
      %s276 = scalar_select %p275, %s274, 3
      %s277 = smul.addr %s276, 4
      %s278 = scalar_lea.vmem %s0, %s277
      %s279 = smul.u32 4, %s22
      %s280 = smul.u32 4, %s22
      %p281 = scmp.lt.s32.totalorder %s280, 3
      %s282 = scalar_select %p281, %s280, 3
      %s283 = smul.addr %s282, 4
      %s284 = scalar_lea.vmem %s1, %s283
      %s285 = smul.u32 4, %s22
      %s286 = smul.u32 %s22, %s21
      %s287 = smul.u32 4, %s286
      %p288 = scmp.lt.s32.totalorder %s287, 3
      %s289 = scalar_select %p288, %s287, 3
      %s290 = smul.addr %s289, 8
      %s291 = scalar_lea.vmem %s6, %s290
      %s292 = smul.u32 %s22, %s21
      %s293 = smul.u32 4, %s292
      %p295 = scmp.eq.s32.totalorder %s21, 0
      %p296 = scmp.eq.s32.totalorder %s22, 0
      %p297 = pnand %p295, %p296
      %p298 = pneg %p297
      // Predicated region
      $region45: #{csp_up_block_forward.15} parent=43 // pred_check
        _
      $region46: #{csp_up_block_forward.15} parent=43 // pred_check_branch
        %300 = sbr.rel (%p297) target = $region48
      $region47: #{csp_up_block_forward.15} parent=43 // pred_region
        %vm301 = vcmask 7168
        %302 = vst.msk [vmem:[#allocation2] sm:$0xff] %vm301, 0.0
        %303 = vst.msk [vmem:[#allocation3] sm:$0xff] %vm301, 0.0
      $region48: #{csp_up_block_forward.15} parent=43 // pred_fallthru
        _
      %v304 = vld [vmem:[%s2] sm:$0xf]
      %v305 = vld [vmem:[%s278] sm:$0xff]
      %v306 = vld [vmem:[%s278 + $0x8] sm:$0xff]
      %v307 = vld [vmem:[%s3] sm:$0xf]
      %v308 = vld [vmem:[%s284] sm:$0xff]
      %v309 = vld [vmem:[%s284 + $0x8] sm:$0xff]
      %v312 = vunpack.c.l.b16 %v308
      %v313 = vunpack.c.h.b16 %v308
      %v314 = vunpack.c.l.b16 %v309
      %v315 = vunpack.c.h.b16 %v309
      %v316 = vpack.c.b16 %v312, %v312
      %v317 = vpack.c.b16 %v313, %v313
      %v318 = vpack.c.b16 %v314, %v314
      %v319 = vpack.c.b16 %v315, %v315
      %vm320 = vcmask 64512
      %v322 = vsel %vm320, %v307, 0
      %vm324 = vcmask 1043456
      %v326 = vsel %vm324, %v316, 0
      %v329 = vsel %vm324, %v317, 0
      %v332 = vsel %vm324, %v318, 0
      %v335 = vsel %vm324, %v319, 0
      %337 = vmatpush.bf16.msra.mxu0 0
      %338 = vmatpush.bf16.msra.mxu0 0
      %339 = vmatpush.bf16.msra.mxu0 0
      %340 = vmatpush.bf16.msra.mxu0 0
      %341 = vmatpush.bf16.msra.mxu0 0
      %342 = vmatpush.bf16.msra.mxu0 0
      %343 = vmatpush.bf16.msra.mxu0 0
      %344 = vmatpush.bf16.msra.mxu0 %v326
      %345 = vmatmul.bf16.gmra.mxu0 %v322
      %v346 = vpop.f32.mrf.mxu0
      %v347 = vadd.f32 0.0, %v346
      %v348 = vpop.f32.mrf.mxu0
      %349 = vdwg.mxu0
      %350 = vmatpush.bf16.msra.mxu0 0
      %351 = vmatpush.bf16.msra.mxu0 0
      %352 = vmatpush.bf16.msra.mxu0 0
      %353 = vmatpush.bf16.msra.mxu0 0
      %354 = vmatpush.bf16.msra.mxu0 0
      %355 = vmatpush.bf16.msra.mxu0 0
      %356 = vmatpush.bf16.msra.mxu0 0
      %357 = vmatpush.bf16.msra.mxu0 %v329
      %358 = vmatmul.bf16.gmra.mxu0 %v322
      %v359 = vpop.f32.mrf.mxu0
      %v360 = vadd.f32 0.0, %v359
      %v361 = vpop.f32.mrf.mxu0
      %362 = vdwg.mxu0
      %363 = vmatpush.bf16.msra.mxu0 0
      %364 = vmatpush.bf16.msra.mxu0 0
      %365 = vmatpush.bf16.msra.mxu0 0
      %366 = vmatpush.bf16.msra.mxu0 0
      %367 = vmatpush.bf16.msra.mxu0 0
      %368 = vmatpush.bf16.msra.mxu0 0
      %369 = vmatpush.bf16.msra.mxu0 0
      %370 = vmatpush.bf16.msra.mxu0 %v332
      %371 = vmatmul.bf16.gmra.mxu0 %v322
      %v372 = vpop.f32.mrf.mxu0
      %v373 = vadd.f32 0.0, %v372
      %v374 = vpop.f32.mrf.mxu0
      %375 = vdwg.mxu0
      %376 = vmatpush.bf16.msra.mxu0 0
      %377 = vmatpush.bf16.msra.mxu0 0
      %378 = vmatpush.bf16.msra.mxu0 0
      %379 = vmatpush.bf16.msra.mxu0 0
      %380 = vmatpush.bf16.msra.mxu0 0
      %381 = vmatpush.bf16.msra.mxu0 0
      %382 = vmatpush.bf16.msra.mxu0 0
      %383 = vmatpush.bf16.msra.mxu0 %v335
      %384 = vmatmul.bf16.gmra.mxu0 %v322
      %v385 = vpop.f32.mrf.mxu0
      %v386 = vadd.f32 0.0, %v385
      %v387 = vpop.f32.mrf.mxu0
      %388 = vdwg.mxu0
      %v391 = vunpack.c.l.b16 %v305
      %v392 = vunpack.c.h.b16 %v305
      %v393 = vunpack.c.l.b16 %v306
      %v394 = vunpack.c.h.b16 %v306
      %v395 = vpack.c.b16 %v391, %v391
      %v396 = vpack.c.b16 %v392, %v392
      %v397 = vpack.c.b16 %v393, %v393
      %v398 = vpack.c.b16 %v394, %v394
      %v400 = vsel %vm320, %v304, 0
      %v403 = vsel %vm324, %v395, 0
      %v406 = vsel %vm324, %v396, 0
      %v409 = vsel %vm324, %v397, 0
      %v412 = vsel %vm324, %v398, 0
      %414 = vmatpush.bf16.msra.mxu0 0
      %415 = vmatpush.bf16.msra.mxu0 0
      %416 = vmatpush.bf16.msra.mxu0 0
      %417 = vmatpush.bf16.msra.mxu0 0
      %418 = vmatpush.bf16.msra.mxu0 0
      %419 = vmatpush.bf16.msra.mxu0 0
      %420 = vmatpush.bf16.msra.mxu0 0
      %421 = vmatpush.bf16.msra.mxu0 %v403
      %422 = vmatmul.bf16.gmra.mxu0 %v400
      %v423 = vpop.f32.mrf.mxu0
      %v424 = vadd.f32 %v347, %v423
      %v425 = vpop.f32.mrf.mxu0
      %426 = vdwg.mxu0
      %427 = vmatpush.bf16.msra.mxu0 0
      %428 = vmatpush.bf16.msra.mxu0 0
      %429 = vmatpush.bf16.msra.mxu0 0
      %430 = vmatpush.bf16.msra.mxu0 0
      %431 = vmatpush.bf16.msra.mxu0 0
      %432 = vmatpush.bf16.msra.mxu0 0
      %433 = vmatpush.bf16.msra.mxu0 0
      %434 = vmatpush.bf16.msra.mxu0 %v406
      %435 = vmatmul.bf16.gmra.mxu0 %v400
      %v436 = vpop.f32.mrf.mxu0
      %v437 = vadd.f32 %v360, %v436
      %v438 = vpop.f32.mrf.mxu0
      %439 = vdwg.mxu0
      %440 = vmatpush.bf16.msra.mxu0 0
      %441 = vmatpush.bf16.msra.mxu0 0
      %442 = vmatpush.bf16.msra.mxu0 0
      %443 = vmatpush.bf16.msra.mxu0 0
      %444 = vmatpush.bf16.msra.mxu0 0
      %445 = vmatpush.bf16.msra.mxu0 0
      %446 = vmatpush.bf16.msra.mxu0 0
      %447 = vmatpush.bf16.msra.mxu0 %v409
      %448 = vmatmul.bf16.gmra.mxu0 %v400
      %v449 = vpop.f32.mrf.mxu0
      %v450 = vadd.f32 %v373, %v449
      %v451 = vpop.f32.mrf.mxu0
      %452 = vdwg.mxu0
      %453 = vmatpush.bf16.msra.mxu0 0
      %454 = vmatpush.bf16.msra.mxu0 0
      %455 = vmatpush.bf16.msra.mxu0 0
      %456 = vmatpush.bf16.msra.mxu0 0
      %457 = vmatpush.bf16.msra.mxu0 0
      %458 = vmatpush.bf16.msra.mxu0 0
      %459 = vmatpush.bf16.msra.mxu0 0
      %460 = vmatpush.bf16.msra.mxu0 %v412
      %461 = vmatmul.bf16.gmra.mxu0 %v400
      %v462 = vpop.f32.mrf.mxu0
      %v463 = vadd.f32 %v386, %v462
      %v464 = vpop.f32.mrf.mxu0
      %465 = vdwg.mxu0
      // Predicated region
      $region49: #{csp_up_block_forward.15} parent=43 // pred_check
        %p466 = pneg %p295
      $region50: #{csp_up_block_forward.15} parent=43 // pred_check_branch
        %468 = sbr.rel (%p466) target = $region52
      $region51: #{csp_up_block_forward.15} parent=43 // pred_region
        %v469 = vld [vmem:[#allocation2] sm:$0xff]
        %v470 = vadd.f32 %v424, %v437
        %v471 = vadd.f32 %v470, %v450
        %v472 = vadd.f32 %v471, %v463
        %473 = vadd.xlane.f32.xlu0 %v472
        %v474 = vpop.xlane.xlu0 %473
        %v475 = vadd.f32 %v469, %v474
        %vm476 = vcmask 7168
        %477 = vst.msk [vmem:[#allocation2] sm:$0xff] %vm476, %v475
        %v478 = vld [vmem:[#allocation3] sm:$0xff]
        %v479 = vmul.f32 %v424, %v424
        %v480 = vmul.f32 %v437, %v437
        %v481 = vmul.f32 %v450, %v450
        %v482 = vmul.f32 %v463, %v463
        %v483 = vadd.f32 %v479, %v480
        %v484 = vadd.f32 %v483, %v481
        %v485 = vadd.f32 %v484, %v482
        %486 = vadd.xlane.f32.xlu0 %v485
        %v487 = vpop.xlane.xlu0 %486
        %v488 = vadd.f32 %v478, %v487
        %489 = vst.msk [vmem:[#allocation3] sm:$0xff] %vm476, %v488
      $region52: #{csp_up_block_forward.15} parent=43 // pred_fallthru
        _
      %p490 = scmp.eq.s32.totalorder %s21, 1
      %p491 = pnand %p490, %p296
      %p492 = pneg %p491
      // Predicated region
      $region53: #{csp_up_block_forward.15} parent=43 // pred_check
        _
      $region54: #{csp_up_block_forward.15} parent=43 // pred_check_branch
        %494 = sbr.rel (%p491) target = $region56
      $region55: #{csp_up_block_forward.15} parent=43 // pred_region
        %v495 = vld [vmem:[#allocation2] sm:$0xff]
        %v496 = vmul.f32 %v495, 0.001953125
        %v497 = vld [vmem:[#allocation3] sm:$0xff]
        %v498 = vmul.f32 %v497, 0.001953125
        %v499 = vmul.f32 %v496, %v496
        %v500 = vsub.f32 %v498, %v499
        %v501 = vmax.f32 %v500, 0.0
        %v502 = vld [vmem:[%s4] sm:$0xff]
        %v503 = vadd.f32 %v501, 1e-05
        %v504 = vrsqrt.pop %v503
        %v505 = vmul.f32 %v504, %v503
        %v506 = vmul.f32 %v505, %v504
        %v507 = vmul.f32 0.5, %v506
        %v508 = vsub.f32 1.5, %v507
        %v509 = vmul.f32 %v504, %v508
        %vm510 = vweird.f32 %v503
        %vm511 = vweird.f32 %v504
        %vm512 = vmor %vm510, %vm511
        %v513 = vsel %vm512, %v504, %v509
        %v514 = vmul.f32 %v502, %v513
        %vm515 = vcmask 7168
        %516 = vst.msk [vmem:[#allocation2] sm:$0xff] %vm515, %v514
        %v517 = vld [vmem:[%s5] sm:$0xff]
        %v518 = vmul.f32 %v496, %v514
        %v519 = vsub.f32 %v517, %v518
        %520 = vst.msk [vmem:[#allocation3] sm:$0xff] %vm515, %v519
      $region56: #{csp_up_block_forward.15} parent=43 // pred_fallthru
        _
      // Predicated region
      $region57: #{csp_up_block_forward.15} parent=43 // pred_check
        %p521 = pneg %p490
      $region58: #{csp_up_block_forward.15} parent=43 // pred_check_branch
        %523 = sbr.rel (%p521) target = $region60
      $region59: #{csp_up_block_forward.15} parent=43 // pred_region
        %v524 = vld [vmem:[#allocation2] sm:$0xff]
        %526 = vset.pattern.permute.xlu0 0
        %527 = vperm.xlu0 %526, %v524
        %v528 = vpop.permute.xlu0 %527
        %v530 = vmul.f32 %v424, %v528
        %v531 = vmul.f32 %v437, %v528
        %v532 = vmul.f32 %v450, %v528
        %v533 = vmul.f32 %v463, %v528
        %v534 = vld [vmem:[#allocation3] sm:$0xff]
        %536 = vset.pattern.permute.xlu0 0
        %537 = vperm.xlu0 %536, %v534
        %v538 = vpop.permute.xlu0 %537
        %v540 = vadd.f32 %v530, %v538
        %v541 = vadd.f32 %v531, %v538
        %v542 = vadd.f32 %v532, %v538
        %v543 = vadd.f32 %v533, %v538
        %v544 = vmin.f32 %v540, 20.0
        %v545 = vmin.f32 %v541, 20.0
        %v546 = vmin.f32 %v542, 20.0
        %v547 = vmin.f32 %v543, 20.0
        %v548 = vmul.f32 %v544, 1.442695
        %v549 = vpow.pop %v548
        %v550 = vmul.f32 %v545, 1.442695
        %v551 = vpow.pop %v550
        %v552 = vmul.f32 %v546, 1.442695
        %v553 = vpow.pop %v552
        %v554 = vmul.f32 %v547, 1.442695
        %v555 = vpow.pop %v554
        %v556 = vadd.f32 %v549, 2.0
        %v557 = vadd.f32 %v551, 2.0
        %v558 = vadd.f32 %v553, 2.0
        %v559 = vadd.f32 %v555, 2.0
        %v560 = vmul.f32 %v549, %v556
        %v561 = vmul.f32 %v551, %v557
        %v562 = vmul.f32 %v553, %v558
        %v563 = vmul.f32 %v555, %v559
        %v564 = vadd.f32 %v560, 2.0
        %v565 = vadd.f32 %v561, 2.0
        %v566 = vadd.f32 %v562, 2.0
        %v567 = vadd.f32 %v563, 2.0
        %v568 = vrcp.pop %v564
        %v569 = vrcp.pop %v565
        %v570 = vrcp.pop %v566
        %v571 = vrcp.pop %v567
        %v572 = vmul.f32 %v564, %v568
        %v573 = vmul.f32 %v565, %v569
        %v574 = vmul.f32 %v566, %v570
        %v575 = vmul.f32 %v567, %v571
        %v576 = vsub.f32 2.0, %v572
        %v577 = vsub.f32 2.0, %v573
        %v578 = vsub.f32 2.0, %v574
        %v579 = vsub.f32 2.0, %v575
        %v580 = vmul.f32 %v568, %v576
        %v581 = vmul.f32 %v569, %v577
        %v582 = vmul.f32 %v570, %v578
        %v583 = vmul.f32 %v571, %v579
        %v584 = vmul.f32 %v540, %v560
        %v585 = vmul.f32 %v541, %v561
        %v586 = vmul.f32 %v542, %v562
        %v587 = vmul.f32 %v543, %v563
        %v588 = vmul.f32 %v584, %v580
        %v589 = vmul.f32 %v585, %v581
        %v590 = vmul.f32 %v586, %v582
        %v591 = vmul.f32 %v587, %v583
        %592 = vst [vmem:[%s291] sm:$0xff] %v588
        %593 = vst [vmem:[%s291 + $0x8] sm:$0xff] %v589
        %594 = vst [vmem:[%s291 + $0x10] sm:$0xff] %v590
        %595 = vst [vmem:[%s291 + $0x18] sm:$0xff] %v591
      $region60: #{csp_up_block_forward.15} parent=43 // pred_fallthru
        _
      %s596 = smul.u32 %s22, %s21
      %s597 = smul.u32 4, %s596
      %p598 = scmp.lt.s32.totalorder %s597, 3
      %s599 = scalar_select %p598, %s597, 3
      %s600 = smul.addr %s599, 8
      %s601 = scalar_lea.vmem %s6, %s600
      // Predicated region
      $region61: #{csp_up_block_forward.15} parent=43 // pred_check
        %p602 = pneg %p185
      $region62: #{csp_up_block_forward.15} parent=43 // pred_check_branch
        %604 = sbr.rel (%p602) target = $region64
      $region63: #{csp_up_block_forward.15} parent=43 // pred_region
        %s605 = smul.u32 %s22, %s21
        %s606 = smul.u32 4, %s605
      $region64: #{csp_up_block_forward.15} parent=43 // pred_fallthru
        _
    $region44: #{csp_up_block_forward.15} parent=5 // pred_fallthru
      _
    %p607 = scmp.le.s32.totalorder 2, %s12
    // Predicated region
    $region65: #{csp_up_block_forward.15} parent=5 // pred_check
      %p608 = pneg %p607
    $region66: #{csp_up_block_forward.15} parent=5 // pred_check_branch
      %610 = sbr.rel (%p608) target = $region68
    $region67: #{csp_up_block_forward.15} parent=5 // pred_region
      %s611 = ssub.s32 %s12, 2
      // Predicated region
      $region69: #{csp_up_block_forward.15} parent=67 // pred_check
        %p612 = pneg %p191
      $region70: #{csp_up_block_forward.15} parent=67 // pred_check_branch
        %614 = sbr.rel (%p612) target = $region72
      $region71: #{csp_up_block_forward.15} parent=67 // pred_region
        %s615 = smul.u32 %s24, %s23
        %s616 = smul.u32 4, %s615
        %p617 = scmp.lt.s32.totalorder %s616, 3
        %s618 = scalar_select %p617, %s616, 3
        %s619 = smul.addr %s618, 8
        %s620 = scalar_lea.vmem %s6, %s619
      $region72: #{csp_up_block_forward.15} parent=67 // pred_fallthru
        _
    $region68: #{csp_up_block_forward.15} parent=5 // pred_fallthru
      _
  $region6: #{csp_up_block_forward.15} parent=0 // loop_footer
    %s16 = sadd.s32 1, %s12
  $region7: #{csp_up_block_forward.15} parent=0 // loop_footer_branch
    %11 = sbr.rel target = $region3
  $region8: #{csp_up_block_forward.15} parent=0 // loop_exit
    _

</llo_original>
